<compile_context>
chip_gen: v5e
topology: v5e:2x2
jax: 0.10.0
libtpu: 0.0.40
codegen_flags: <defaults>
</compile_context>

<pallas_src>
import math

import jax
import jax.numpy as jnp
from jax.experimental import pallas as pl
from jax.experimental.pallas import tpu as pltpu

# ------------------------- problem sizes (small, consistent with the module) ------------
F_IN, F_OUT = 90, 5                   # nfeature_in, nfeature_out
KSIZE = (3, 3, 3)                     # kernel_size
# TODO(synk): compute_rotations() (the real SO(3) discretization) is not provided;
# we synthesize a small deterministic rotation group (4 rotations about z).
NUM_ROT = 4
GRID = 7
BATCH = 2

KX, KY, KZ = KSIZE
OX, OY, OZ = GRID - KX + 1, GRID - KY + 1, GRID - KZ + 1       # 5, 5, 5
NTAP = KX * KY * KZ                                            # 27 taps
GF = NUM_ROT * F_OUT                                           # 20 output channels (rot-major)
S_IN = GRID * GRID * GRID                                      # 343 flat input positions
D_MAX = (KX - 1) * GRID * GRID + (KY - 1) * GRID + (KZ - 1)    # 114 = largest flat tap offset
P_PAD = ((S_IN + 7) // 8) * 8                                  # 344 output rows (all base pos.)
S_PAD = ((D_MAX + P_PAD + 7) // 8) * 8                         # 464 padded input rows


# ---------------------------------------------------------------------------
# Pallas kernel (hot path): lifting conv with im2col fused as 27 tap matmuls
# ---------------------------------------------------------------------------
def _lifting_tap_kernel(x_ref, w_ref, b_ref, o_ref):
    """One batch element of the lifting conv.

    x_ref: (S_PAD, F_IN) f32  channels-last, flat (x,y,z) spatial axis, zero-padded
    w_ref: (NTAP, F_IN, GF) f32  per-tap weights, tap index = (a,b,c) row-major
    b_ref: (1, GF) f32        bias already repeated per rotation
    o_ref: (P_PAD, GF) f32    conv value at every flat base position q
    """
    # Initialize the accumulator from the bias (review: drop the epilogue bias add).
    acc = jnp.broadcast_to(b_ref[...], (P_PAD, GF))
    t = 0
    for a in range(KX):
        for b in range(KY):
            for c in range(KZ):
                d = a * GRID * GRID + b * GRID + c            # static flat tap offset
                # x[q + d, :] for every base position q: a static sublane-offset
                # window -- no HBM im2col, no in-kernel lane shuffling.
                xs = x_ref[pl.ds(d, P_PAD), :]                # (P_PAD, F_IN)
                acc = acc + jnp.dot(xs, w_ref[t],
                                    preferred_element_type=jnp.float32)
                t += 1
    o_ref[...] = acc


def _lifting_conv(x_cl, w_taps, bias_row):
    """x_cl: (B, S_PAD, F_IN) f32; w_taps: (NTAP, F_IN, GF) f32; bias_row: (1, GF) f32."""
    B = x_cl.shape[0]
    return pl.pallas_call(
        _lifting_tap_kernel,
        out_shape=jax.ShapeDtypeStruct((B, P_PAD, GF), jnp.float32),
        grid=(B,),
        in_specs=[
            pl.BlockSpec((None, S_PAD, F_IN), lambda b: (b, 0, 0)),   # per-batch x tile
            pl.BlockSpec((NTAP, F_IN, GF), lambda b: (0, 0, 0)),      # revisited -> 1 DMA
            pl.BlockSpec((1, GF), lambda b: (0, 0)),                  # revisited -> 1 DMA
        ],
        out_specs=pl.BlockSpec((None, P_PAD, GF), lambda b: (b, 0, 0)),
        compiler_params=pltpu.CompilerParams(
            dimension_semantics=("parallel",)),   # v7x: one batch element per TensorCore
    )(x_cl, w_taps, bias_row)


# ---------------------------------------------------------------------------
# ClassicalLifting.forward
# ---------------------------------------------------------------------------
def classical_lifting_forward(x, w_taps, bias_row):
    """x: (B, F_IN, X, Y, Z) f32 -> (B, NUM_ROT, F_OUT, OX, OY, OZ) f32."""
    B = x.shape[0]
    # Channels-last, flat spatial axis, zero-padded so every tap window is in-bounds.
    # Touches only raw x (~0.25 MB) -- no 27x im2col blowup through HBM.
    x_cl = jnp.transpose(x.reshape(B, F_IN, S_IN), (0, 2, 1))        # (B, 343, F_IN)
    x_cl = jnp.pad(x_cl, ((0, 0), (0, S_PAD - S_IN), (0, 0)))        # (B, S_PAD, F_IN)
    out_full = _lifting_conv(x_cl, w_taps, bias_row)                 # (B, P_PAD, GF)
    # Crop the valid 5x5x5 window (tiny, <60 KB) and split channels into (rot, f_out).
    out = out_full[:, :S_IN, :].reshape(B, GRID, GRID, GRID, GF)
    out = out[:, :OX, :OY, :OZ, :]                                   # valid positions only
    out = jnp.transpose(out, (0, 4, 1, 2, 3))                        # (B, GF, OX, OY, OZ)
    return out.reshape(B, NUM_ROT, F_OUT, OX, OY, OZ)


# ---------------------------------------------------------------------------
# Plain-JAX glue (parameter-only preprocessing, not in the hot path):
# F.affine_grid / F.grid_sample equivalents (align_corners=False, zero padding,
# trilinear) used to rotate the shared spatial kernel once.
# ---------------------------------------------------------------------------
def _affine_grid_3d(theta, size):
    # theta: (N, 3, 4); size: (N, C, D, H, W). Matches torch.nn.functional.affine_grid.
    N, C, D, H, W = size

    def coords(S):
        return (2.0 * jnp.arange(S, dtype=jnp.float32) + 1.0) / S - 1.0

    zz, yy, xx = jnp.meshgrid(coords(D), coords(H), coords(W), indexing="ij")
    base = jnp.stack([xx, yy, zz, jnp.ones_like(xx)], axis=-1)          # (D, H, W, 4)
    return jnp.einsum("nij,dhwj->ndhwi", theta, base)                   # (N, D, H, W, 3)


def _grid_sample_3d(inp, grid):
    # inp: (N, C, D, H, W); grid: (N, Do, Ho, Wo, 3) xyz order. Trilinear, zero padding.
    N, C, D, H, W = inp.shape
    x, y, z = grid[..., 0], grid[..., 1], grid[..., 2]
    ix = ((x + 1.0) * W - 1.0) * 0.5
    iy = ((y + 1.0) * H - 1.0) * 0.5
    iz = ((z + 1.0) * D - 1.0) * 0.5
    ix0, iy0, iz0 = jnp.floor(ix), jnp.floor(iy), jnp.floor(iz)
    tx, ty, tz = ix - ix0, iy - iy0, iz - iz0

    def gather(zc, yc, xc):
        valid = ((xc >= 0) & (xc <= W - 1) & (yc >= 0) & (yc <= H - 1)
                 & (zc >= 0) & (zc <= D - 1))
        zi = jnp.clip(zc, 0, D - 1).astype(jnp.int32)
        yi = jnp.clip(yc, 0, H - 1).astype(jnp.int32)
        xi = jnp.clip(xc, 0, W - 1).astype(jnp.int32)
        vals = jax.vmap(lambda im, a, b, c: im[:, a, b, c])(inp, zi, yi, xi)
        return vals * valid[:, None].astype(inp.dtype)

    out = jnp.zeros((N, C) + grid.shape[1:4], dtype=inp.dtype)
    for zc, wz in ((iz0, 1.0 - tz), (iz0 + 1.0, tz)):
        for yc, wy in ((iy0, 1.0 - ty), (iy0 + 1.0, ty)):
            for xc, wx in ((ix0, 1.0 - tx), (ix0 + 1.0, tx)):
                out = out + gather(zc, yc, xc) * (wz * wy * wx)[:, None]
    return out


def rotated_weight_taps(kernel_flat, inter_grid):
    """kernel_flat: (F_OUT*F_IN, kx, ky, kz) -> (w_conv (GF,F_IN,3,3,3), w_taps (NTAP,F_IN,GF)).

    Depends only on the parameters, so it runs once, outside the forward hot path."""
    kn = jnp.broadcast_to(kernel_flat[None], (NUM_ROT,) + kernel_flat.shape)
    rk = _grid_sample_3d(kn, inter_grid)                     # (G, F_OUT*F_IN, kx, ky, kz)
    w_conv = rk.reshape(GF, F_IN, KX, KY, KZ)                # conv3d weight layout, rot-major
    w_taps = jnp.transpose(w_conv.reshape(GF, F_IN, NTAP), (2, 1, 0))   # (NTAP, F_IN, GF)
    return w_conv, w_taps


def _rotation_matrices(num_rot):
    ang = jnp.arange(num_rot, dtype=jnp.float32) * (2.0 * jnp.pi / num_rot)
    c, s = jnp.cos(ang), jnp.sin(ang)
    z0, o1 = jnp.zeros(num_rot, jnp.float32), jnp.ones(num_rot, jnp.float32)
    row0 = jnp.stack([c, -s, z0], axis=-1)
    row1 = jnp.stack([s, c, z0], axis=-1)
    row2 = jnp.stack([z0, z0, o1], axis=-1)
    return jnp.stack([row0, row1, row2], axis=-2)            # (num_rot, 3, 3)


def _reference_forward(x, w_conv, bias):
    # Straightforward f32 im2col + einsum reference (== stacked F.conv3d results).
    taps = []
    for a in range(KX):
        for b in range(KY):
            for c in range(KZ):
                taps.append(x[:, :, a:a + OX, b:b + OY, c:c + OZ])
    p = jnp.stack(taps, axis=2).reshape(x.shape[0], F_IN * NTAP, OX * OY * OZ)
    w2 = w_conv.reshape(GF, F_IN * NTAP)
    ref = jnp.einsum("gk,bkp->bgp", w2, p, precision="highest")
    ref = ref + jnp.tile(bias, NUM_ROT)[None, :, None]
    return ref.reshape(x.shape[0], NUM_ROT, F_OUT, OX, OY, OZ)


if __name__ == "__main__":
    key = jax.random.PRNGKey(0)
    kx_, kk = jax.random.split(key, 2)

    # self.kernel: (f_out*f_in, kx, ky, kz), xavier-normal-style init
    rf = KX * KY * KZ
    std = math.sqrt(2.0 / ((F_OUT + F_IN) * rf))
    kernel_flat = jax.random.normal(kk, (F_OUT * F_IN,) + KSIZE, dtype=jnp.float32) * std
    bias = jnp.full((F_OUT,), 0.01, jnp.float32)              # torch.ones(f_out) * 0.01

    # inter_grid = F.affine_grid(rotation_matrices ++ 0, (num_rot, *kernel.shape))
    theta = jnp.concatenate(
        [_rotation_matrices(NUM_ROT), jnp.zeros((NUM_ROT, 3, 1), jnp.float32)], axis=-1)
    inter_grid = _affine_grid_3d(theta, (NUM_ROT, 1) + KSIZE)  # (G, kx, ky, kz, 3)

    # Parameter-only preprocessing: rotate the shared kernel once (not per-forward).
    w_conv, w_taps = rotated_weight_taps(kernel_flat, inter_grid)
    bias_row = jnp.tile(bias, NUM_ROT).reshape(1, GF)          # bias.repeat(num_rot)

    x = jax.random.normal(kx_, (BATCH, F_IN, GRID, GRID, GRID), dtype=jnp.float32)

    fwd = jax.jit(classical_lifting_forward)
    out = fwd(x, w_taps, bias_row)
    jax.block_until_ready(out)
    assert out.shape == (BATCH, NUM_ROT, F_OUT, OX, OY, OZ), out.shape

    # Validate the fused-tap f32 MXU path against a full-precision reference.
    ref = _reference_forward(x, w_conv, bias)
    err = float(jnp.max(jnp.abs(out - ref)))
    assert jnp.allclose(out, ref, rtol=2e-2, atol=2e-2), err

    print("KERNEL_OK")
</pallas_src>

<mosaic_0001>
module attributes {stable_mosaic.version = 11 : i64} {
  func.func @_lifting_tap_kernel(%arg0: i32, %arg1: memref<1x464x90xf32, #tpu.memory_space<vmem>>, %arg2: memref<27x90x20xf32, #tpu.memory_space<vmem>>, %arg3: memref<1x20xf32, #tpu.memory_space<vmem>>, %arg4: memref<1x344x20xf32, #tpu.memory_space<vmem>>) attributes {dimension_semantics = [#tpu.dimension_semantics<parallel>], iteration_bounds = array<i64: 2>, scalar_prefetch = 0 : i64, scratch_operands = 0 : i64, tpu.core_type = #tpu.core_type<tc>, window_params = [{transform_indices = @transform_0, window_bounds = array<i64: 1, 464, 90>}, {pipeline_mode = #tpu.pipeline_mode<synchronous>, transform_indices = @transform_1, window_bounds = array<i64: 27, 90, 20>}, {pipeline_mode = #tpu.pipeline_mode<synchronous>, transform_indices = @transform_2, window_bounds = array<i64: 1, 20>}, {transform_indices = @transform_3, window_bounds = array<i64: 1, 344, 20>}]} {
    %c0 = arith.constant 0 : index
    %c0_0 = arith.constant 0 : index
    %0 = vector.load %arg3[%c0, %c0_0] : memref<1x20xf32, #tpu.memory_space<vmem>>, vector<1x20xf32>
    %1 = vector.shape_cast %0 : vector<1x20xf32> to vector<1x20xf32>
    %2 = vector.broadcast %1 : vector<1x20xf32> to vector<344x20xf32>
    %c0_1 = arith.constant 0 : index
    %c0_2 = arith.constant 0 : index
    %c0_3 = arith.constant 0 : index
    %3 = vector.load %arg1[%c0_1, %c0_2, %c0_3] : memref<1x464x90xf32, #tpu.memory_space<vmem>>, vector<1x344x90xf32>
    %4 = vector.shape_cast %3 : vector<1x344x90xf32> to vector<344x90xf32>
    %c0_4 = arith.constant 0 : index
    %c0_5 = arith.constant 0 : index
    %c0_6 = arith.constant 0 : index
    %5 = vector.load %arg2[%c0_4, %c0_5, %c0_6] : memref<27x90x20xf32, #tpu.memory_space<vmem>>, vector<1x90x20xf32>
    %6 = vector.shape_cast %5 : vector<1x90x20xf32> to vector<90x20xf32>
    %cst = arith.constant dense<0.000000e+00> : vector<344x20xf32>
    %7 = tpu.matmul %4, %6, %cst {dimension_numbers = #tpu.dot_dimension_numbers<[1], [0], [0], [1], [0, 0, 1, 1], [], []>} : vector<344x90xf32>, vector<90x20xf32>, vector<344x20xf32> -> vector<344x20xf32>
    %8 = arith.addf %2, %7 : vector<344x20xf32>
    %c0_7 = arith.constant 0 : index
    %c1 = arith.constant 1 : index
    %c0_8 = arith.constant 0 : index
    %9 = vector.load %arg1[%c0_7, %c1, %c0_8] : memref<1x464x90xf32, #tpu.memory_space<vmem>>, vector<1x344x90xf32>
    %10 = vector.shape_cast %9 : vector<1x344x90xf32> to vector<344x90xf32>
    %c1_9 = arith.constant 1 : index
    %c0_10 = arith.constant 0 : index
    %c0_11 = arith.constant 0 : index
    %11 = vector.load %arg2[%c1_9, %c0_10, %c0_11] : memref<27x90x20xf32, #tpu.memory_space<vmem>>, vector<1x90x20xf32>
    %12 = vector.shape_cast %11 : vector<1x90x20xf32> to vector<90x20xf32>
    %cst_12 = arith.constant dense<0.000000e+00> : vector<344x20xf32>
    %13 = tpu.matmul %10, %12, %cst_12 {dimension_numbers = #tpu.dot_dimension_numbers<[1], [0], [0], [1], [0, 0, 1, 1], [], []>} : vector<344x90xf32>, vector<90x20xf32>, vector<344x20xf32> -> vector<344x20xf32>
    %14 = arith.addf %8, %13 : vector<344x20xf32>
    %c0_13 = arith.constant 0 : index
    %c2 = arith.constant 2 : index
    %c0_14 = arith.constant 0 : index
    %15 = vector.load %arg1[%c0_13, %c2, %c0_14] : memref<1x464x90xf32, #tpu.memory_space<vmem>>, vector<1x344x90xf32>
    %16 = vector.shape_cast %15 : vector<1x344x90xf32> to vector<344x90xf32>
    %c2_15 = arith.constant 2 : index
    %c0_16 = arith.constant 0 : index
    %c0_17 = arith.constant 0 : index
    %17 = vector.load %arg2[%c2_15, %c0_16, %c0_17] : memref<27x90x20xf32, #tpu.memory_space<vmem>>, vector<1x90x20xf32>
    %18 = vector.shape_cast %17 : vector<1x90x20xf32> to vector<90x20xf32>
    %cst_18 = arith.constant dense<0.000000e+00> : vector<344x20xf32>
    %19 = tpu.matmul %16, %18, %cst_18 {dimension_numbers = #tpu.dot_dimension_numbers<[1], [0], [0], [1], [0, 0, 1, 1], [], []>} : vector<344x90xf32>, vector<90x20xf32>, vector<344x20xf32> -> vector<344x20xf32>
    %20 = arith.addf %14, %19 : vector<344x20xf32>
    %c0_19 = arith.constant 0 : index
    %c7 = arith.constant 7 : index
    %c0_20 = arith.constant 0 : index
    %21 = vector.load %arg1[%c0_19, %c7, %c0_20] : memref<1x464x90xf32, #tpu.memory_space<vmem>>, vector<1x344x90xf32>
    %22 = vector.shape_cast %21 : vector<1x344x90xf32> to vector<344x90xf32>
    %c3 = arith.constant 3 : index
    %c0_21 = arith.constant 0 : index
    %c0_22 = arith.constant 0 : index
    %23 = vector.load %arg2[%c3, %c0_21, %c0_22] : memref<27x90x20xf32, #tpu.memory_space<vmem>>, vector<1x90x20xf32>
    %24 = vector.shape_cast %23 : vector<1x90x20xf32> to vector<90x20xf32>
    %cst_23 = arith.constant dense<0.000000e+00> : vector<344x20xf32>
    %25 = tpu.matmul %22, %24, %cst_23 {dimension_numbers = #tpu.dot_dimension_numbers<[1], [0], [0], [1], [0, 0, 1, 1], [], []>} : vector<344x90xf32>, vector<90x20xf32>, vector<344x20xf32> -> vector<344x20xf32>
    %26 = arith.addf %20, %25 : vector<344x20xf32>
    %c0_24 = arith.constant 0 : index
    %c8 = arith.constant 8 : index
    %c0_25 = arith.constant 0 : index
    %27 = vector.load %arg1[%c0_24, %c8, %c0_25] : memref<1x464x90xf32, #tpu.memory_space<vmem>>, vector<1x344x90xf32>
    %28 = vector.shape_cast %27 : vector<1x344x90xf32> to vector<344x90xf32>
    %c4 = arith.constant 4 : index
    %c0_26 = arith.constant 0 : index
    %c0_27 = arith.constant 0 : index
    %29 = vector.load %arg2[%c4, %c0_26, %c0_27] : memref<27x90x20xf32, #tpu.memory_space<vmem>>, vector<1x90x20xf32>
    %30 = vector.shape_cast %29 : vector<1x90x20xf32> to vector<90x20xf32>
    %cst_28 = arith.constant dense<0.000000e+00> : vector<344x20xf32>
    %31 = tpu.matmul %28, %30, %cst_28 {dimension_numbers = #tpu.dot_dimension_numbers<[1], [0], [0], [1], [0, 0, 1, 1], [], []>} : vector<344x90xf32>, vector<90x20xf32>, vector<344x20xf32> -> vector<344x20xf32>
    %32 = arith.addf %26, %31 : vector<344x20xf32>
    %c0_29 = arith.constant 0 : index
    %c9 = arith.constant 9 : index
    %c0_30 = arith.constant 0 : index
    %33 = vector.load %arg1[%c0_29, %c9, %c0_30] : memref<1x464x90xf32, #tpu.memory_space<vmem>>, vector<1x344x90xf32>
    %34 = vector.shape_cast %33 : vector<1x344x90xf32> to vector<344x90xf32>
    %c5 = arith.constant 5 : index
    %c0_31 = arith.constant 0 : index
    %c0_32 = arith.constant 0 : index
    %35 = vector.load %arg2[%c5, %c0_31, %c0_32] : memref<27x90x20xf32, #tpu.memory_space<vmem>>, vector<1x90x20xf32>
    %36 = vector.shape_cast %35 : vector<1x90x20xf32> to vector<90x20xf32>
    %cst_33 = arith.constant dense<0.000000e+00> : vector<344x20xf32>
    %37 = tpu.matmul %34, %36, %cst_33 {dimension_numbers = #tpu.dot_dimension_numbers<[1], [0], [0], [1], [0, 0, 1, 1], [], []>} : vector<344x90xf32>, vector<90x20xf32>, vector<344x20xf32> -> vector<344x20xf32>
    %38 = arith.addf %32, %37 : vector<344x20xf32>
    %c0_34 = arith.constant 0 : index
    %c14 = arith.constant 14 : index
    %c0_35 = arith.constant 0 : index
    %39 = vector.load %arg1[%c0_34, %c14, %c0_35] : memref<1x464x90xf32, #tpu.memory_space<vmem>>, vector<1x344x90xf32>
    %40 = vector.shape_cast %39 : vector<1x344x90xf32> to vector<344x90xf32>
    %c6 = arith.constant 6 : index
    %c0_36 = arith.constant 0 : index
    %c0_37 = arith.constant 0 : index
    %41 = vector.load %arg2[%c6, %c0_36, %c0_37] : memref<27x90x20xf32, #tpu.memory_space<vmem>>, vector<1x90x20xf32>
    %42 = vector.shape_cast %41 : vector<1x90x20xf32> to vector<90x20xf32>
    %cst_38 = arith.constant dense<0.000000e+00> : vector<344x20xf32>
    %43 = tpu.matmul %40, %42, %cst_38 {dimension_numbers = #tpu.dot_dimension_numbers<[1], [0], [0], [1], [0, 0, 1, 1], [], []>} : vector<344x90xf32>, vector<90x20xf32>, vector<344x20xf32> -> vector<344x20xf32>
    %44 = arith.addf %38, %43 : vector<344x20xf32>
    %c0_39 = arith.constant 0 : index
    %c15 = arith.constant 15 : index
    %c0_40 = arith.constant 0 : index
    %45 = vector.load %arg1[%c0_39, %c15, %c0_40] : memref<1x464x90xf32, #tpu.memory_space<vmem>>, vector<1x344x90xf32>
    %46 = vector.shape_cast %45 : vector<1x344x90xf32> to vector<344x90xf32>
    %c7_41 = arith.constant 7 : index
    %c0_42 = arith.constant 0 : index
    %c0_43 = arith.constant 0 : index
    %47 = vector.load %arg2[%c7_41, %c0_42, %c0_43] : memref<27x90x20xf32, #tpu.memory_space<vmem>>, vector<1x90x20xf32>
    %48 = vector.shape_cast %47 : vector<1x90x20xf32> to vector<90x20xf32>
    %cst_44 = arith.constant dense<0.000000e+00> : vector<344x20xf32>
    %49 = tpu.matmul %46, %48, %cst_44 {dimension_numbers = #tpu.dot_dimension_numbers<[1], [0], [0], [1], [0, 0, 1, 1], [], []>} : vector<344x90xf32>, vector<90x20xf32>, vector<344x20xf32> -> vector<344x20xf32>
    %50 = arith.addf %44, %49 : vector<344x20xf32>
    %c0_45 = arith.constant 0 : index
    %c16 = arith.constant 16 : index
    %c0_46 = arith.constant 0 : index
    %51 = vector.load %arg1[%c0_45, %c16, %c0_46] : memref<1x464x90xf32, #tpu.memory_space<vmem>>, vector<1x344x90xf32>
    %52 = vector.shape_cast %51 : vector<1x344x90xf32> to vector<344x90xf32>
    %c8_47 = arith.constant 8 : index
    %c0_48 = arith.constant 0 : index
    %c0_49 = arith.constant 0 : index
    %53 = vector.load %arg2[%c8_47, %c0_48, %c0_49] : memref<27x90x20xf32, #tpu.memory_space<vmem>>, vector<1x90x20xf32>
    %54 = vector.shape_cast %53 : vector<1x90x20xf32> to vector<90x20xf32>
    %cst_50 = arith.constant dense<0.000000e+00> : vector<344x20xf32>
    %55 = tpu.matmul %52, %54, %cst_50 {dimension_numbers = #tpu.dot_dimension_numbers<[1], [0], [0], [1], [0, 0, 1, 1], [], []>} : vector<344x90xf32>, vector<90x20xf32>, vector<344x20xf32> -> vector<344x20xf32>
    %56 = arith.addf %50, %55 : vector<344x20xf32>
    %c0_51 = arith.constant 0 : index
    %c49 = arith.constant 49 : index
    %c0_52 = arith.constant 0 : index
    %57 = vector.load %arg1[%c0_51, %c49, %c0_52] : memref<1x464x90xf32, #tpu.memory_space<vmem>>, vector<1x344x90xf32>
    %58 = vector.shape_cast %57 : vector<1x344x90xf32> to vector<344x90xf32>
    %c9_53 = arith.constant 9 : index
    %c0_54 = arith.constant 0 : index
    %c0_55 = arith.constant 0 : index
    %59 = vector.load %arg2[%c9_53, %c0_54, %c0_55] : memref<27x90x20xf32, #tpu.memory_space<vmem>>, vector<1x90x20xf32>
    %60 = vector.shape_cast %59 : vector<1x90x20xf32> to vector<90x20xf32>
    %cst_56 = arith.constant dense<0.000000e+00> : vector<344x20xf32>
    %61 = tpu.matmul %58, %60, %cst_56 {dimension_numbers = #tpu.dot_dimension_numbers<[1], [0], [0], [1], [0, 0, 1, 1], [], []>} : vector<344x90xf32>, vector<90x20xf32>, vector<344x20xf32> -> vector<344x20xf32>
    %62 = arith.addf %56, %61 : vector<344x20xf32>
    %c0_57 = arith.constant 0 : index
    %c50 = arith.constant 50 : index
    %c0_58 = arith.constant 0 : index
    %63 = vector.load %arg1[%c0_57, %c50, %c0_58] : memref<1x464x90xf32, #tpu.memory_space<vmem>>, vector<1x344x90xf32>
    %64 = vector.shape_cast %63 : vector<1x344x90xf32> to vector<344x90xf32>
    %c10 = arith.constant 10 : index
    %c0_59 = arith.constant 0 : index
    %c0_60 = arith.constant 0 : index
    %65 = vector.load %arg2[%c10, %c0_59, %c0_60] : memref<27x90x20xf32, #tpu.memory_space<vmem>>, vector<1x90x20xf32>
    %66 = vector.shape_cast %65 : vector<1x90x20xf32> to vector<90x20xf32>
    %cst_61 = arith.constant dense<0.000000e+00> : vector<344x20xf32>
    %67 = tpu.matmul %64, %66, %cst_61 {dimension_numbers = #tpu.dot_dimension_numbers<[1], [0], [0], [1], [0, 0, 1, 1], [], []>} : vector<344x90xf32>, vector<90x20xf32>, vector<344x20xf32> -> vector<344x20xf32>
    %68 = arith.addf %62, %67 : vector<344x20xf32>
    %c0_62 = arith.constant 0 : index
    %c51 = arith.constant 51 : index
    %c0_63 = arith.constant 0 : index
    %69 = vector.load %arg1[%c0_62, %c51, %c0_63] : memref<1x464x90xf32, #tpu.memory_space<vmem>>, vector<1x344x90xf32>
    %70 = vector.shape_cast %69 : vector<1x344x90xf32> to vector<344x90xf32>
    %c11 = arith.constant 11 : index
    %c0_64 = arith.constant 0 : index
    %c0_65 = arith.constant 0 : index
    %71 = vector.load %arg2[%c11, %c0_64, %c0_65] : memref<27x90x20xf32, #tpu.memory_space<vmem>>, vector<1x90x20xf32>
    %72 = vector.shape_cast %71 : vector<1x90x20xf32> to vector<90x20xf32>
    %cst_66 = arith.constant dense<0.000000e+00> : vector<344x20xf32>
    %73 = tpu.matmul %70, %72, %cst_66 {dimension_numbers = #tpu.dot_dimension_numbers<[1], [0], [0], [1], [0, 0, 1, 1], [], []>} : vector<344x90xf32>, vector<90x20xf32>, vector<344x20xf32> -> vector<344x20xf32>
    %74 = arith.addf %68, %73 : vector<344x20xf32>
    %c0_67 = arith.constant 0 : index
    %c56 = arith.constant 56 : index
    %c0_68 = arith.constant 0 : index
    %75 = vector.load %arg1[%c0_67, %c56, %c0_68] : memref<1x464x90xf32, #tpu.memory_space<vmem>>, vector<1x344x90xf32>
    %76 = vector.shape_cast %75 : vector<1x344x90xf32> to vector<344x90xf32>
    %c12 = arith.constant 12 : index
    %c0_69 = arith.constant 0 : index
    %c0_70 = arith.constant 0 : index
    %77 = vector.load %arg2[%c12, %c0_69, %c0_70] : memref<27x90x20xf32, #tpu.memory_space<vmem>>, vector<1x90x20xf32>
    %78 = vector.shape_cast %77 : vector<1x90x20xf32> to vector<90x20xf32>
    %cst_71 = arith.constant dense<0.000000e+00> : vector<344x20xf32>
    %79 = tpu.matmul %76, %78, %cst_71 {dimension_numbers = #tpu.dot_dimension_numbers<[1], [0], [0], [1], [0, 0, 1, 1], [], []>} : vector<344x90xf32>, vector<90x20xf32>, vector<344x20xf32> -> vector<344x20xf32>
    %80 = arith.addf %74, %79 : vector<344x20xf32>
    %c0_72 = arith.constant 0 : index
    %c57 = arith.constant 57 : index
    %c0_73 = arith.constant 0 : index
    %81 = vector.load %arg1[%c0_72, %c57, %c0_73] : memref<1x464x90xf32, #tpu.memory_space<vmem>>, vector<1x344x90xf32>
    %82 = vector.shape_cast %81 : vector<1x344x90xf32> to vector<344x90xf32>
    %c13 = arith.constant 13 : index
    %c0_74 = arith.constant 0 : index
    %c0_75 = arith.constant 0 : index
    %83 = vector.load %arg2[%c13, %c0_74, %c0_75] : memref<27x90x20xf32, #tpu.memory_space<vmem>>, vector<1x90x20xf32>
    %84 = vector.shape_cast %83 : vector<1x90x20xf32> to vector<90x20xf32>
    %cst_76 = arith.constant dense<0.000000e+00> : vector<344x20xf32>
    %85 = tpu.matmul %82, %84, %cst_76 {dimension_numbers = #tpu.dot_dimension_numbers<[1], [0], [0], [1], [0, 0, 1, 1], [], []>} : vector<344x90xf32>, vector<90x20xf32>, vector<344x20xf32> -> vector<344x20xf32>
    %86 = arith.addf %80, %85 : vector<344x20xf32>
    %c0_77 = arith.constant 0 : index
    %c58 = arith.constant 58 : index
    %c0_78 = arith.constant 0 : index
    %87 = vector.load %arg1[%c0_77, %c58, %c0_78] : memref<1x464x90xf32, #tpu.memory_space<vmem>>, vector<1x344x90xf32>
    %88 = vector.shape_cast %87 : vector<1x344x90xf32> to vector<344x90xf32>
    %c14_79 = arith.constant 14 : index
    %c0_80 = arith.constant 0 : index
    %c0_81 = arith.constant 0 : index
    %89 = vector.load %arg2[%c14_79, %c0_80, %c0_81] : memref<27x90x20xf32, #tpu.memory_space<vmem>>, vector<1x90x20xf32>
    %90 = vector.shape_cast %89 : vector<1x90x20xf32> to vector<90x20xf32>
    %cst_82 = arith.constant dense<0.000000e+00> : vector<344x20xf32>
    %91 = tpu.matmul %88, %90, %cst_82 {dimension_numbers = #tpu.dot_dimension_numbers<[1], [0], [0], [1], [0, 0, 1, 1], [], []>} : vector<344x90xf32>, vector<90x20xf32>, vector<344x20xf32> -> vector<344x20xf32>
    %92 = arith.addf %86, %91 : vector<344x20xf32>
    %c0_83 = arith.constant 0 : index
    %c63 = arith.constant 63 : index
    %c0_84 = arith.constant 0 : index
    %93 = vector.load %arg1[%c0_83, %c63, %c0_84] : memref<1x464x90xf32, #tpu.memory_space<vmem>>, vector<1x344x90xf32>
    %94 = vector.shape_cast %93 : vector<1x344x90xf32> to vector<344x90xf32>
    %c15_85 = arith.constant 15 : index
    %c0_86 = arith.constant 0 : index
    %c0_87 = arith.constant 0 : index
    %95 = vector.load %arg2[%c15_85, %c0_86, %c0_87] : memref<27x90x20xf32, #tpu.memory_space<vmem>>, vector<1x90x20xf32>
    %96 = vector.shape_cast %95 : vector<1x90x20xf32> to vector<90x20xf32>
    %cst_88 = arith.constant dense<0.000000e+00> : vector<344x20xf32>
    %97 = tpu.matmul %94, %96, %cst_88 {dimension_numbers = #tpu.dot_dimension_numbers<[1], [0], [0], [1], [0, 0, 1, 1], [], []>} : vector<344x90xf32>, vector<90x20xf32>, vector<344x20xf32> -> vector<344x20xf32>
    %98 = arith.addf %92, %97 : vector<344x20xf32>
    %c0_89 = arith.constant 0 : index
    %c64 = arith.constant 64 : index
    %c0_90 = arith.constant 0 : index
    %99 = vector.load %arg1[%c0_89, %c64, %c0_90] : memref<1x464x90xf32, #tpu.memory_space<vmem>>, vector<1x344x90xf32>
    %100 = vector.shape_cast %99 : vector<1x344x90xf32> to vector<344x90xf32>
    %c16_91 = arith.constant 16 : index
    %c0_92 = arith.constant 0 : index
    %c0_93 = arith.constant 0 : index
    %101 = vector.load %arg2[%c16_91, %c0_92, %c0_93] : memref<27x90x20xf32, #tpu.memory_space<vmem>>, vector<1x90x20xf32>
    %102 = vector.shape_cast %101 : vector<1x90x20xf32> to vector<90x20xf32>
    %cst_94 = arith.constant dense<0.000000e+00> : vector<344x20xf32>
    %103 = tpu.matmul %100, %102, %cst_94 {dimension_numbers = #tpu.dot_dimension_numbers<[1], [0], [0], [1], [0, 0, 1, 1], [], []>} : vector<344x90xf32>, vector<90x20xf32>, vector<344x20xf32> -> vector<344x20xf32>
    %104 = arith.addf %98, %103 : vector<344x20xf32>
    %c0_95 = arith.constant 0 : index
    %c65 = arith.constant 65 : index
    %c0_96 = arith.constant 0 : index
    %105 = vector.load %arg1[%c0_95, %c65, %c0_96] : memref<1x464x90xf32, #tpu.memory_space<vmem>>, vector<1x344x90xf32>
    %106 = vector.shape_cast %105 : vector<1x344x90xf32> to vector<344x90xf32>
    %c17 = arith.constant 17 : index
    %c0_97 = arith.constant 0 : index
    %c0_98 = arith.constant 0 : index
    %107 = vector.load %arg2[%c17, %c0_97, %c0_98] : memref<27x90x20xf32, #tpu.memory_space<vmem>>, vector<1x90x20xf32>
    %108 = vector.shape_cast %107 : vector<1x90x20xf32> to vector<90x20xf32>
    %cst_99 = arith.constant dense<0.000000e+00> : vector<344x20xf32>
    %109 = tpu.matmul %106, %108, %cst_99 {dimension_numbers = #tpu.dot_dimension_numbers<[1], [0], [0], [1], [0, 0, 1, 1], [], []>} : vector<344x90xf32>, vector<90x20xf32>, vector<344x20xf32> -> vector<344x20xf32>
    %110 = arith.addf %104, %109 : vector<344x20xf32>
    %c0_100 = arith.constant 0 : index
    %c98 = arith.constant 98 : index
    %c0_101 = arith.constant 0 : index
    %111 = vector.load %arg1[%c0_100, %c98, %c0_101] : memref<1x464x90xf32, #tpu.memory_space<vmem>>, vector<1x344x90xf32>
    %112 = vector.shape_cast %111 : vector<1x344x90xf32> to vector<344x90xf32>
    %c18 = arith.constant 18 : index
    %c0_102 = arith.constant 0 : index
    %c0_103 = arith.constant 0 : index
    %113 = vector.load %arg2[%c18, %c0_102, %c0_103] : memref<27x90x20xf32, #tpu.memory_space<vmem>>, vector<1x90x20xf32>
    %114 = vector.shape_cast %113 : vector<1x90x20xf32> to vector<90x20xf32>
    %cst_104 = arith.constant dense<0.000000e+00> : vector<344x20xf32>
    %115 = tpu.matmul %112, %114, %cst_104 {dimension_numbers = #tpu.dot_dimension_numbers<[1], [0], [0], [1], [0, 0, 1, 1], [], []>} : vector<344x90xf32>, vector<90x20xf32>, vector<344x20xf32> -> vector<344x20xf32>
    %116 = arith.addf %110, %115 : vector<344x20xf32>
    %c0_105 = arith.constant 0 : index
    %c99 = arith.constant 99 : index
    %c0_106 = arith.constant 0 : index
    %117 = vector.load %arg1[%c0_105, %c99, %c0_106] : memref<1x464x90xf32, #tpu.memory_space<vmem>>, vector<1x344x90xf32>
    %118 = vector.shape_cast %117 : vector<1x344x90xf32> to vector<344x90xf32>
    %c19 = arith.constant 19 : index
    %c0_107 = arith.constant 0 : index
    %c0_108 = arith.constant 0 : index
    %119 = vector.load %arg2[%c19, %c0_107, %c0_108] : memref<27x90x20xf32, #tpu.memory_space<vmem>>, vector<1x90x20xf32>
    %120 = vector.shape_cast %119 : vector<1x90x20xf32> to vector<90x20xf32>
    %cst_109 = arith.constant dense<0.000000e+00> : vector<344x20xf32>
    %121 = tpu.matmul %118, %120, %cst_109 {dimension_numbers = #tpu.dot_dimension_numbers<[1], [0], [0], [1], [0, 0, 1, 1], [], []>} : vector<344x90xf32>, vector<90x20xf32>, vector<344x20xf32> -> vector<344x20xf32>
    %122 = arith.addf %116, %121 : vector<344x20xf32>
    %c0_110 = arith.constant 0 : index
    %c100 = arith.constant 100 : index
    %c0_111 = arith.constant 0 : index
    %123 = vector.load %arg1[%c0_110, %c100, %c0_111] : memref<1x464x90xf32, #tpu.memory_space<vmem>>, vector<1x344x90xf32>
    %124 = vector.shape_cast %123 : vector<1x344x90xf32> to vector<344x90xf32>
    %c20 = arith.constant 20 : index
    %c0_112 = arith.constant 0 : index
    %c0_113 = arith.constant 0 : index
    %125 = vector.load %arg2[%c20, %c0_112, %c0_113] : memref<27x90x20xf32, #tpu.memory_space<vmem>>, vector<1x90x20xf32>
    %126 = vector.shape_cast %125 : vector<1x90x20xf32> to vector<90x20xf32>
    %cst_114 = arith.constant dense<0.000000e+00> : vector<344x20xf32>
    %127 = tpu.matmul %124, %126, %cst_114 {dimension_numbers = #tpu.dot_dimension_numbers<[1], [0], [0], [1], [0, 0, 1, 1], [], []>} : vector<344x90xf32>, vector<90x20xf32>, vector<344x20xf32> -> vector<344x20xf32>
    %128 = arith.addf %122, %127 : vector<344x20xf32>
    %c0_115 = arith.constant 0 : index
    %c105 = arith.constant 105 : index
    %c0_116 = arith.constant 0 : index
    %129 = vector.load %arg1[%c0_115, %c105, %c0_116] : memref<1x464x90xf32, #tpu.memory_space<vmem>>, vector<1x344x90xf32>
    %130 = vector.shape_cast %129 : vector<1x344x90xf32> to vector<344x90xf32>
    %c21 = arith.constant 21 : index
    %c0_117 = arith.constant 0 : index
    %c0_118 = arith.constant 0 : index
    %131 = vector.load %arg2[%c21, %c0_117, %c0_118] : memref<27x90x20xf32, #tpu.memory_space<vmem>>, vector<1x90x20xf32>
    %132 = vector.shape_cast %131 : vector<1x90x20xf32> to vector<90x20xf32>
    %cst_119 = arith.constant dense<0.000000e+00> : vector<344x20xf32>
    %133 = tpu.matmul %130, %132, %cst_119 {dimension_numbers = #tpu.dot_dimension_numbers<[1], [0], [0], [1], [0, 0, 1, 1], [], []>} : vector<344x90xf32>, vector<90x20xf32>, vector<344x20xf32> -> vector<344x20xf32>
    %134 = arith.addf %128, %133 : vector<344x20xf32>
    %c0_120 = arith.constant 0 : index
    %c106 = arith.constant 106 : index
    %c0_121 = arith.constant 0 : index
    %135 = vector.load %arg1[%c0_120, %c106, %c0_121] : memref<1x464x90xf32, #tpu.memory_space<vmem>>, vector<1x344x90xf32>
    %136 = vector.shape_cast %135 : vector<1x344x90xf32> to vector<344x90xf32>
    %c22 = arith.constant 22 : index
    %c0_122 = arith.constant 0 : index
    %c0_123 = arith.constant 0 : index
    %137 = vector.load %arg2[%c22, %c0_122, %c0_123] : memref<27x90x20xf32, #tpu.memory_space<vmem>>, vector<1x90x20xf32>
    %138 = vector.shape_cast %137 : vector<1x90x20xf32> to vector<90x20xf32>
    %cst_124 = arith.constant dense<0.000000e+00> : vector<344x20xf32>
    %139 = tpu.matmul %136, %138, %cst_124 {dimension_numbers = #tpu.dot_dimension_numbers<[1], [0], [0], [1], [0, 0, 1, 1], [], []>} : vector<344x90xf32>, vector<90x20xf32>, vector<344x20xf32> -> vector<344x20xf32>
    %140 = arith.addf %134, %139 : vector<344x20xf32>
    %c0_125 = arith.constant 0 : index
    %c107 = arith.constant 107 : index
    %c0_126 = arith.constant 0 : index
    %141 = vector.load %arg1[%c0_125, %c107, %c0_126] : memref<1x464x90xf32, #tpu.memory_space<vmem>>, vector<1x344x90xf32>
    %142 = vector.shape_cast %141 : vector<1x344x90xf32> to vector<344x90xf32>
    %c23 = arith.constant 23 : index
    %c0_127 = arith.constant 0 : index
    %c0_128 = arith.constant 0 : index
    %143 = vector.load %arg2[%c23, %c0_127, %c0_128] : memref<27x90x20xf32, #tpu.memory_space<vmem>>, vector<1x90x20xf32>
    %144 = vector.shape_cast %143 : vector<1x90x20xf32> to vector<90x20xf32>
    %cst_129 = arith.constant dense<0.000000e+00> : vector<344x20xf32>
    %145 = tpu.matmul %142, %144, %cst_129 {dimension_numbers = #tpu.dot_dimension_numbers<[1], [0], [0], [1], [0, 0, 1, 1], [], []>} : vector<344x90xf32>, vector<90x20xf32>, vector<344x20xf32> -> vector<344x20xf32>
    %146 = arith.addf %140, %145 : vector<344x20xf32>
    %c0_130 = arith.constant 0 : index
    %c112 = arith.constant 112 : index
    %c0_131 = arith.constant 0 : index
    %147 = vector.load %arg1[%c0_130, %c112, %c0_131] : memref<1x464x90xf32, #tpu.memory_space<vmem>>, vector<1x344x90xf32>
    %148 = vector.shape_cast %147 : vector<1x344x90xf32> to vector<344x90xf32>
    %c24 = arith.constant 24 : index
    %c0_132 = arith.constant 0 : index
    %c0_133 = arith.constant 0 : index
    %149 = vector.load %arg2[%c24, %c0_132, %c0_133] : memref<27x90x20xf32, #tpu.memory_space<vmem>>, vector<1x90x20xf32>
    %150 = vector.shape_cast %149 : vector<1x90x20xf32> to vector<90x20xf32>
    %cst_134 = arith.constant dense<0.000000e+00> : vector<344x20xf32>
    %151 = tpu.matmul %148, %150, %cst_134 {dimension_numbers = #tpu.dot_dimension_numbers<[1], [0], [0], [1], [0, 0, 1, 1], [], []>} : vector<344x90xf32>, vector<90x20xf32>, vector<344x20xf32> -> vector<344x20xf32>
    %152 = arith.addf %146, %151 : vector<344x20xf32>
    %c0_135 = arith.constant 0 : index
    %c113 = arith.constant 113 : index
    %c0_136 = arith.constant 0 : index
    %153 = vector.load %arg1[%c0_135, %c113, %c0_136] : memref<1x464x90xf32, #tpu.memory_space<vmem>>, vector<1x344x90xf32>
    %154 = vector.shape_cast %153 : vector<1x344x90xf32> to vector<344x90xf32>
    %c25 = arith.constant 25 : index
    %c0_137 = arith.constant 0 : index
    %c0_138 = arith.constant 0 : index
    %155 = vector.load %arg2[%c25, %c0_137, %c0_138] : memref<27x90x20xf32, #tpu.memory_space<vmem>>, vector<1x90x20xf32>
    %156 = vector.shape_cast %155 : vector<1x90x20xf32> to vector<90x20xf32>
    %cst_139 = arith.constant dense<0.000000e+00> : vector<344x20xf32>
    %157 = tpu.matmul %154, %156, %cst_139 {dimension_numbers = #tpu.dot_dimension_numbers<[1], [0], [0], [1], [0, 0, 1, 1], [], []>} : vector<344x90xf32>, vector<90x20xf32>, vector<344x20xf32> -> vector<344x20xf32>
    %158 = arith.addf %152, %157 : vector<344x20xf32>
    %c0_140 = arith.constant 0 : index
    %c114 = arith.constant 114 : index
    %c0_141 = arith.constant 0 : index
    %159 = vector.load %arg1[%c0_140, %c114, %c0_141] : memref<1x464x90xf32, #tpu.memory_space<vmem>>, vector<1x344x90xf32>
    %160 = vector.shape_cast %159 : vector<1x344x90xf32> to vector<344x90xf32>
    %c26 = arith.constant 26 : index
    %c0_142 = arith.constant 0 : index
    %c0_143 = arith.constant 0 : index
    %161 = vector.load %arg2[%c26, %c0_142, %c0_143] : memref<27x90x20xf32, #tpu.memory_space<vmem>>, vector<1x90x20xf32>
    %162 = vector.shape_cast %161 : vector<1x90x20xf32> to vector<90x20xf32>
    %cst_144 = arith.constant dense<0.000000e+00> : vector<344x20xf32>
    %163 = tpu.matmul %160, %162, %cst_144 {dimension_numbers = #tpu.dot_dimension_numbers<[1], [0], [0], [1], [0, 0, 1, 1], [], []>} : vector<344x90xf32>, vector<90x20xf32>, vector<344x20xf32> -> vector<344x20xf32>
    %164 = arith.addf %158, %163 : vector<344x20xf32>
    %c0_145 = arith.constant 0 : index
    %c0_146 = arith.constant 0 : index
    %c0_147 = arith.constant 0 : index
    %165 = vector.load %arg4[%c0_145, %c0_146, %c0_147] : memref<1x344x20xf32, #tpu.memory_space<vmem>>, vector<1x344x20xf32>
    %166 = vector.shape_cast %165 : vector<1x344x20xf32> to vector<344x20xf32>
    %167 = vector.shape_cast %164 : vector<344x20xf32> to vector<1x344x20xf32>
    tpu.vector_store %arg4[%c0_145, %c0_146, %c0_147], %167 {strides = array<i32>} : memref<1x344x20xf32, #tpu.memory_space<vmem>>, vector<1x344x20xf32>,
    return
  }
  func.func @transform_0(%arg0: i32) -> (i32, i32, i32) {
    %c0_i32 = arith.constant 0 : i32
    %c0_i32_0 = arith.constant 0 : i32
    %c0_i32_1 = arith.constant 0 : i32
    return %arg0, %c0_i32, %c0_i32_0 : i32, i32, i32
  }
  func.func @transform_1(%arg0: i32) -> (i32, i32, i32) {
    %c0_i32 = arith.constant 0 : i32
    %c0_i32_0 = arith.constant 0 : i32
    %c0_i32_1 = arith.constant 0 : i32
    %c0_i32_2 = arith.constant 0 : i32
    return %c0_i32, %c0_i32_0, %c0_i32_1 : i32, i32, i32
  }
  func.func @transform_2(%arg0: i32) -> (i32, i32) {
    %c0_i32 = arith.constant 0 : i32
    %c0_i32_0 = arith.constant 0 : i32
    %c0_i32_1 = arith.constant 0 : i32
    return %c0_i32, %c0_i32_0 : i32, i32
  }
  func.func @transform_3(%arg0: i32) -> (i32, i32, i32) {
    %c0_i32 = arith.constant 0 : i32
    %c0_i32_0 = arith.constant 0 : i32
    %c0_i32_1 = arith.constant 0 : i32
    return %arg0, %c0_i32, %c0_i32_0 : i32, i32, i32
  }
}

</mosaic_0001>

<llo_original>
// kernel: classical_lifting_forward.1
$region0: #{classical_lifting_forward.1}
  #allocation0 [shape = 'u32[]', space=smem, size = 0x4, offset = 0x4, fixed_abs, tag = 'smem constant byte address 0x4 - core index']
  #allocation1 [shape = 'u32[72,128]{1,0:T(1,128)}', space=vmem, size = 0x9000, scoped, tag = 'internal scratch']
  %s0 = inlined_call_operand.vmem [shape: f32[2,464,90], index: 0, kind: input, shape index: {}]
  %s1 = inlined_call_operand.vmem [shape: f32[27,90,20], index: 1, kind: input, shape index: {}]
  %s2 = inlined_call_operand.vmem [shape: f32[1,20], index: 2, kind: input, shape index: {}]
  %s3 = inlined_call_operand.vmem [shape: f32[2,344,20], index: 3, kind: output, shape index: {}]
  %s4 = sld [smem:[#allocation0]]
  $region45: #{classical_lifting_forward.1} parent=0
    _
  %s6 = ssub.s32 1, %s4
  %s7 = scalar_select 0, %s6, %s4
  loop: start=0, step=1, limit=4
  $region2: #{classical_lifting_forward.1} parent=0 // loop_pre_header
    _
  $region3: #{classical_lifting_forward.1} parent=0 // loop_header
    %s9 = sphi 0, %s13
    %p10 = scmp.ge.s32.totalorder %s9, 4
    %s19 = sphi 0, %s21
    %s22 = sphi 0, %s19
    %s23 = sphi 0, %s22
    %s39 = sphi 0, %s23
    %s43 = sphi 0, %s43
    %s45 = sphi 0, %s43
    %s46 = sphi 0, %s45
    %s60 = sphi 0, %s46
    %s64 = sphi 0, %s64
    %s66 = sphi 0, %s64
    %s67 = sphi 0, %s66
    %s81 = sphi 0, %s67
    %s87 = sphi 0, %s89
    %s90 = sphi 0, %s87
    %s91 = sphi 0, %s90
    %s107 = sphi 0, %s91
  $region4: #{classical_lifting_forward.1} parent=0 // loop_header_branch
    %12 = sbr.rel (%p10) target = $region8
  $region5: #{classical_lifting_forward.1} parent=0 // loop_body
    %s14 = ssub.s32 %s9, 1
    %s15 = ssub.s32 %s9, 2
    %s16 = sadd.s32 %s9, 1
    %s17 = ssub.s32 %s9, %s16
    %p18 = scmp.eq.s32.totalorder %s17, 0
    %s20 = sadd.s32 %s19, 1
    %s21 = scalar_select %p18, %s19, %s20
    %p24 = pneg %p18
    %p25 = scmp.eq.s32.totalorder %s9, 1
    %p26 = por %p24, %p25
    %p27 = scmp.ne.s32.totalorder %s19, %s22
    %p28 = scmp.eq.s32.totalorder %s9, 0
    %p29 = por %p27, %p28
    %p30 = scmp.ne.s32.totalorder %s19, %s22
    %p31 = scmp.eq.s32.totalorder %s14, 1
    %p32 = por %p30, %p31
    %p33 = scmp.ne.s32.totalorder %s22, %s23
    %p34 = scmp.eq.s32.totalorder %s14, 0
    %p35 = por %p33, %p34
    %p36 = scmp.ne.s32.totalorder %s22, %s23
    %p37 = scmp.eq.s32.totalorder %s15, 1
    %p38 = por %p36, %p37
    %p40 = scmp.ne.s32.totalorder %s23, %s39
    %p41 = scmp.eq.s32.totalorder %s15, 0
    %p42 = por %p40, %p41
    %s44 = sadd.s32 %s43, 1
    %p47 = scmp.eq.s32.totalorder %s9, 1
    %p48 = scmp.ne.s32.totalorder %s43, %s45
    %p49 = scmp.eq.s32.totalorder %s9, 0
    %p50 = por %p48, %p49
    %p51 = scmp.ne.s32.totalorder %s43, %s45
    %p52 = scmp.eq.s32.totalorder %s14, 1
    %p53 = por %p51, %p52
    %p54 = scmp.ne.s32.totalorder %s45, %s46
    %p55 = scmp.eq.s32.totalorder %s14, 0
    %p56 = por %p54, %p55
    %p57 = scmp.ne.s32.totalorder %s45, %s46
    %p58 = scmp.eq.s32.totalorder %s15, 1
    %p59 = por %p57, %p58
    %p61 = scmp.ne.s32.totalorder %s46, %s60
    %p62 = scmp.eq.s32.totalorder %s15, 0
    %p63 = por %p61, %p62
    %s65 = sadd.s32 %s64, 1
    %p68 = scmp.eq.s32.totalorder %s9, 1
    %p69 = scmp.ne.s32.totalorder %s64, %s66
    %p70 = scmp.eq.s32.totalorder %s9, 0
    %p71 = por %p69, %p70
    %p72 = scmp.ne.s32.totalorder %s64, %s66
    %p73 = scmp.eq.s32.totalorder %s14, 1
    %p74 = por %p72, %p73
    %p75 = scmp.ne.s32.totalorder %s66, %s67
    %p76 = scmp.eq.s32.totalorder %s14, 0
    %p77 = por %p75, %p76
    %p78 = scmp.ne.s32.totalorder %s66, %s67
    %p79 = scmp.eq.s32.totalorder %s15, 1
    %p80 = por %p78, %p79
    %p82 = scmp.ne.s32.totalorder %s67, %s81
    %p83 = scmp.eq.s32.totalorder %s15, 0
    %p84 = por %p82, %p83
    %s85 = ssub.s32 %s9, %s16
    %p86 = scmp.eq.s32.totalorder %s85, 0
    %s88 = sadd.s32 %s87, 1
    %s89 = scalar_select %p86, %s87, %s88
    %p92 = pneg %p86
    %p93 = scmp.eq.s32.totalorder %s9, 1
    %p94 = por %p92, %p93
    %p95 = scmp.ne.s32.totalorder %s87, %s90
    %p96 = scmp.eq.s32.totalorder %s9, 0
    %p97 = por %p95, %p96
    %p98 = scmp.ne.s32.totalorder %s87, %s90
    %p99 = scmp.eq.s32.totalorder %s14, 1
    %p100 = por %p98, %p99
    %p101 = scmp.ne.s32.totalorder %s90, %s91
    %p102 = scmp.eq.s32.totalorder %s14, 0
    %p103 = por %p101, %p102
    %p104 = scmp.ne.s32.totalorder %s90, %s91
    %p105 = scmp.eq.s32.totalorder %s15, 1
    %p106 = por %p104, %p105
    %p108 = scmp.ne.s32.totalorder %s91, %s107
    %p109 = scmp.eq.s32.totalorder %s15, 0
    %p110 = por %p108, %p109
    %p111 = scmp.le.s32.totalorder 1, %s9
    %p112 = scmp.lt.s32.totalorder %s9, 3
    %p113 = pnand %p111, %p112
    %p114 = pneg %p113
    // Predicated region
    $region9: #{classical_lifting_forward.1} parent=5 // pred_check
      _
    $region10: #{classical_lifting_forward.1} parent=5 // pred_check_branch
      %116 = sbr.rel (%p113) target = $region12
    $region11: #{classical_lifting_forward.1} parent=5 // pred_region
      %s117 = ssub.s32 %s9, 1
      // Predicated region
      $region13: #{classical_lifting_forward.1} parent=11 // pred_check
        %p118 = pneg %p56
      $region14: #{classical_lifting_forward.1} parent=11 // pred_check_branch
        %120 = sbr.rel (%p118) target = $region16
      $region15: #{classical_lifting_forward.1} parent=11 // pred_region
        _
      $region16: #{classical_lifting_forward.1} parent=11 // pred_fallthru
        _
      // Predicated region
      $region17: #{classical_lifting_forward.1} parent=11 // pred_check
        %p121 = pneg %p77
      $region18: #{classical_lifting_forward.1} parent=11 // pred_check_branch
        %123 = sbr.rel (%p121) target = $region20
      $region19: #{classical_lifting_forward.1} parent=11 // pred_region
        _
      $region20: #{classical_lifting_forward.1} parent=11 // pred_fallthru
        _
    $region12: #{classical_lifting_forward.1} parent=5 // pred_fallthru
      _
    %p124 = scmp.lt.s32.totalorder %s9, 2
    // Predicated region
    $region21: #{classical_lifting_forward.1} parent=5 // pred_check
      %p125 = pneg %p124
    $region22: #{classical_lifting_forward.1} parent=5 // pred_check_branch
      %127 = sbr.rel (%p125) target = $region24
    $region23: #{classical_lifting_forward.1} parent=5 // pred_region
      // Predicated region
      $region25: #{classical_lifting_forward.1} parent=23 // pred_check
        %p128 = pneg %p29
      $region26: #{classical_lifting_forward.1} parent=23 // pred_check_branch
        %130 = sbr.rel (%p128) target = $region28
      $region27: #{classical_lifting_forward.1} parent=23 // pred_region
        %p131 = scmp.lt.s32.totalorder %s9, 1
        %s132 = scalar_select %p131, %s9, 1
        %s133 = smul.addr %s132, 58
        %s134 = smul.addr %s133, 8
        %s135 = scalar_lea.vmem %s0, %s134
      $region28: #{classical_lifting_forward.1} parent=23 // pred_fallthru
        _
    $region24: #{classical_lifting_forward.1} parent=5 // pred_fallthru
      _
    %p136 = scmp.le.s32.totalorder 1, %s9
    %p137 = scmp.lt.s32.totalorder %s9, 3
    %p138 = pnand %p136, %p137
    %p139 = pneg %p138
    // Predicated region
    $region29: #{classical_lifting_forward.1} parent=5 // pred_check
      _
    $region30: #{classical_lifting_forward.1} parent=5 // pred_check_branch
      %141 = sbr.rel (%p138) target = $region32
    $region31: #{classical_lifting_forward.1} parent=5 // pred_region
      %s142 = ssub.s32 %s9, 1
      %p143 = scmp.lt.s32.totalorder %s14, 1
      %s144 = scalar_select %p143, %s14, 1
      %s145 = smul.addr %s144, 58
      %s146 = smul.addr %s145, 8
      %s147 = scalar_lea.vmem %s0, %s146
      %p148 = pneg %p35
      %p149 = pneg %p32
      %p150 = pneg %p56
      %p151 = pneg %p53
      %p152 = pneg %p77
      %p153 = pneg %p74
      %p154 = pneg %p103
      %p155 = pneg %p100
      %p156 = scmp.lt.s32.totalorder %s14, 1
      %s157 = scalar_select %p156, %s14, 1
      %s158 = smul.addr %s157, 43
      %s159 = smul.addr %s158, 8
      %s160 = scalar_lea.vmem %s3, %s159
      %p161 = scmp.lt.s32.totalorder %s14, 1
      %s162 = scalar_select %p161, %s14, 1
      %s163 = smul.addr %s162, 58
      %s164 = smul.addr %s163, 8
      %s165 = scalar_lea.vmem %s0, %s164
      %p166 = scmp.lt.s32.totalorder %s14, 1
      %s167 = scalar_select %p166, %s14, 1
      %s168 = smul.addr %s167, 43
      %s169 = smul.addr %s168, 8
      %s170 = scalar_lea.vmem %s3, %s169
      %v171 = vld [vmem:[%s2] sm:$0x1]
      %v173 = vperm.slane %v171, 0
      %v175 = vld [vmem:[%s165] sm:$0xff]
      %v176 = vld [vmem:[%s165 + $0x8] sm:$0xff]
      %v177 = vld [vmem:[%s165 + $0x10] sm:$0xff]
      %v178 = vld [vmem:[%s165 + $0x18] sm:$0xff]
      %v179 = vld [vmem:[%s165 + $0x20] sm:$0xff]
      %v180 = vld [vmem:[%s165 + $0x28] sm:$0xff]
      %v181 = vld [vmem:[%s165 + $0x30] sm:$0xff]
      %v182 = vld [vmem:[%s165 + $0x38] sm:$0xff]
      %v183 = vld [vmem:[%s165 + $0x40] sm:$0xff]
      %v184 = vld [vmem:[%s165 + $0x48] sm:$0xff]
      %v185 = vld [vmem:[%s165 + $0x50] sm:$0xff]
      %v186 = vld [vmem:[%s165 + $0x58] sm:$0xff]
      %v187 = vld [vmem:[%s165 + $0x60] sm:$0xff]
      %v188 = vld [vmem:[%s165 + $0x68] sm:$0xff]
      %v189 = vld [vmem:[%s165 + $0x70] sm:$0xff]
      %v190 = vld [vmem:[%s165 + $0x78] sm:$0xff]
      %v191 = vld [vmem:[%s165 + $0x80] sm:$0xff]
      %v192 = vld [vmem:[%s165 + $0x88] sm:$0xff]
      %v193 = vld [vmem:[%s165 + $0x90] sm:$0xff]
      %v194 = vld [vmem:[%s165 + $0x98] sm:$0xff]
      %v195 = vld [vmem:[%s165 + $0xa0] sm:$0xff]
      %v196 = vld [vmem:[%s165 + $0xa8] sm:$0xff]
      %v197 = vld [vmem:[%s165 + $0xb0] sm:$0xff]
      %v198 = vld [vmem:[%s165 + $0xb8] sm:$0xff]
      %v199 = vld [vmem:[%s165 + $0xc0] sm:$0xff]
      %v200 = vld [vmem:[%s165 + $0xc8] sm:$0xff]
      %v201 = vld [vmem:[%s165 + $0xd0] sm:$0xff]
      %v202 = vld [vmem:[%s165 + $0xd8] sm:$0xff]
      %v203 = vld [vmem:[%s165 + $0xe0] sm:$0xff]
      %v204 = vld [vmem:[%s165 + $0xe8] sm:$0xff]
      %v205 = vld [vmem:[%s165 + $0xf0] sm:$0xff]
      %v206 = vld [vmem:[%s165 + $0xf8] sm:$0xff]
      %v207 = vld [vmem:[%s165 + $0x100] sm:$0xff]
      %v208 = vld [vmem:[%s165 + $0x108] sm:$0xff]
      %v209 = vld [vmem:[%s165 + $0x110] sm:$0xff]
      %v210 = vld [vmem:[%s165 + $0x118] sm:$0xff]
      %v211 = vld [vmem:[%s165 + $0x120] sm:$0xff]
      %v212 = vld [vmem:[%s165 + $0x128] sm:$0xff]
      %v213 = vld [vmem:[%s165 + $0x130] sm:$0xff]
      %v214 = vld [vmem:[%s165 + $0x138] sm:$0xff]
      %v215 = vld [vmem:[%s165 + $0x140] sm:$0xff]
      %v216 = vld [vmem:[%s165 + $0x148] sm:$0xff]
      %v217 = vld [vmem:[%s165 + $0x150] sm:$0xff]
      %v218 = vld [vmem:[%s1] sm:$0xff]
      %v219 = vld [vmem:[%s1 + $0x8] sm:$0xff]
      %v220 = vld [vmem:[%s1 + $0x10] sm:$0xff]
      %v221 = vld [vmem:[%s1 + $0x18] sm:$0xff]
      %v222 = vld [vmem:[%s1 + $0x20] sm:$0xff]
      %v223 = vld [vmem:[%s1 + $0x28] sm:$0xff]
      %v224 = vld [vmem:[%s1 + $0x30] sm:$0xff]
      %v225 = vld [vmem:[%s1 + $0x38] sm:$0xff]
      %v226 = vld [vmem:[%s1 + $0x40] sm:$0xff]
      %v227 = vld [vmem:[%s1 + $0x48] sm:$0xff]
      %v228 = vld [vmem:[%s1 + $0x50] sm:$0xff]
      %v229 = vld [vmem:[%s1 + $0x58] sm:$0x3]
      %vm230 = vcmask 736256
      %v232 = vsel %vm230, %v175, 0
      %v235 = vsel %vm230, %v176, 0
      %v238 = vsel %vm230, %v177, 0
      %v241 = vsel %vm230, %v178, 0
      %v244 = vsel %vm230, %v179, 0
      %v247 = vsel %vm230, %v180, 0
      %v250 = vsel %vm230, %v181, 0
      %v253 = vsel %vm230, %v182, 0
      %v256 = vsel %vm230, %v183, 0
      %v259 = vsel %vm230, %v184, 0
      %v262 = vsel %vm230, %v185, 0
      %v265 = vsel %vm230, %v186, 0
      %v268 = vsel %vm230, %v187, 0
      %v271 = vsel %vm230, %v188, 0
      %v274 = vsel %vm230, %v189, 0
      %v277 = vsel %vm230, %v190, 0
      %v280 = vsel %vm230, %v191, 0
      %v283 = vsel %vm230, %v192, 0
      %v286 = vsel %vm230, %v193, 0
      %v289 = vsel %vm230, %v194, 0
      %v292 = vsel %vm230, %v195, 0
      %v295 = vsel %vm230, %v196, 0
      %v298 = vsel %vm230, %v197, 0
      %v301 = vsel %vm230, %v198, 0
      %v304 = vsel %vm230, %v199, 0
      %v307 = vsel %vm230, %v200, 0
      %v310 = vsel %vm230, %v201, 0
      %v313 = vsel %vm230, %v202, 0
      %v316 = vsel %vm230, %v203, 0
      %v319 = vsel %vm230, %v204, 0
      %v322 = vsel %vm230, %v205, 0
      %v325 = vsel %vm230, %v206, 0
      %v328 = vsel %vm230, %v207, 0
      %v331 = vsel %vm230, %v208, 0
      %v334 = vsel %vm230, %v209, 0
      %v337 = vsel %vm230, %v210, 0
      %v340 = vsel %vm230, %v211, 0
      %v343 = vsel %vm230, %v212, 0
      %v346 = vsel %vm230, %v213, 0
      %v349 = vsel %vm230, %v214, 0
      %v352 = vsel %vm230, %v215, 0
      %v355 = vsel %vm230, %v216, 0
      %v358 = vsel %vm230, %v217, 0
      %vm360 = vcmask 1041408
      %v362 = vsel %vm360, %v229, 0
      %364 = vmatpush.msra.mxu0 0.0
      %365 = vmatpush.msra.mxu0 0.0
      %366 = vmatpush.msra.mxu0 0.0
      %367 = vmatpush.msra.mxu0 0.0
      %368 = vmatpush.msra.mxu0 %v362
      %369 = vmatpush.msra.mxu0 %v228
      %370 = vmatpush.msra.mxu0 %v227
      %371 = vmatpush.msra.mxu0 %v226
      %372 = vmatpush.msra.mxu0 %v225
      %373 = vmatpush.msra.mxu0 %v224
      %374 = vmatpush.msra.mxu0 %v223
      %375 = vmatpush.msra.mxu0 %v222
      %376 = vmatpush.msra.mxu0 %v221
      %377 = vmatpush.msra.mxu0 %v220
      %378 = vmatpush.msra.mxu0 %v219
      %379 = vmatpush.msra.mxu0 %v218
      %380 = vmatmul.f32.gmra.mxu0 %v232
      %v381 = vpop.f32.mrf.mxu0
      %v382 = vadd.f32 0.0, %v381
      %383 = vmatmul.f32.gmra.mxu0 %v235
      %v384 = vpop.f32.mrf.mxu0
      %v385 = vadd.f32 0.0, %v384
      %386 = vmatmul.f32.gmra.mxu0 %v238
      %v387 = vpop.f32.mrf.mxu0
      %v388 = vadd.f32 0.0, %v387
      %389 = vmatmul.f32.gmra.mxu0 %v241
      %v390 = vpop.f32.mrf.mxu0
      %v391 = vadd.f32 0.0, %v390
      %392 = vmatmul.f32.gmra.mxu0 %v244
      %v393 = vpop.f32.mrf.mxu0
      %v394 = vadd.f32 0.0, %v393
      %395 = vmatmul.f32.gmra.mxu0 %v247
      %v396 = vpop.f32.mrf.mxu0
      %v397 = vadd.f32 0.0, %v396
      %398 = vmatmul.f32.gmra.mxu0 %v250
      %v399 = vpop.f32.mrf.mxu0
      %v400 = vadd.f32 0.0, %v399
      %401 = vmatmul.f32.gmra.mxu0 %v253
      %v402 = vpop.f32.mrf.mxu0
      %v403 = vadd.f32 0.0, %v402
      %404 = vmatmul.f32.gmra.mxu0 %v256
      %v405 = vpop.f32.mrf.mxu0
      %v406 = vadd.f32 0.0, %v405
      %407 = vmatmul.f32.gmra.mxu0 %v259
      %v408 = vpop.f32.mrf.mxu0
      %v409 = vadd.f32 0.0, %v408
      %410 = vmatmul.f32.gmra.mxu0 %v262
      %v411 = vpop.f32.mrf.mxu0
      %v412 = vadd.f32 0.0, %v411
      %413 = vmatmul.f32.gmra.mxu0 %v265
      %v414 = vpop.f32.mrf.mxu0
      %v415 = vadd.f32 0.0, %v414
      %416 = vmatmul.f32.gmra.mxu0 %v268
      %v417 = vpop.f32.mrf.mxu0
      %v418 = vadd.f32 0.0, %v417
      %419 = vmatmul.f32.gmra.mxu0 %v271
      %v420 = vpop.f32.mrf.mxu0
      %v421 = vadd.f32 0.0, %v420
      %422 = vmatmul.f32.gmra.mxu0 %v274
      %v423 = vpop.f32.mrf.mxu0
      %v424 = vadd.f32 0.0, %v423
      %425 = vmatmul.f32.gmra.mxu0 %v277
      %v426 = vpop.f32.mrf.mxu0
      %v427 = vadd.f32 0.0, %v426
      %428 = vmatmul.f32.gmra.mxu0 %v280
      %v429 = vpop.f32.mrf.mxu0
      %v430 = vadd.f32 0.0, %v429
      %431 = vmatmul.f32.gmra.mxu0 %v283
      %v432 = vpop.f32.mrf.mxu0
      %v433 = vadd.f32 0.0, %v432
      %434 = vmatmul.f32.gmra.mxu0 %v286
      %v435 = vpop.f32.mrf.mxu0
      %v436 = vadd.f32 0.0, %v435
      %437 = vmatmul.f32.gmra.mxu0 %v289
      %v438 = vpop.f32.mrf.mxu0
      %v439 = vadd.f32 0.0, %v438
      %440 = vmatmul.f32.gmra.mxu0 %v292
      %v441 = vpop.f32.mrf.mxu0
      %v442 = vadd.f32 0.0, %v441
      %443 = vmatmul.f32.gmra.mxu0 %v295
      %v444 = vpop.f32.mrf.mxu0
      %v445 = vadd.f32 0.0, %v444
      %446 = vmatmul.f32.gmra.mxu0 %v298
      %v447 = vpop.f32.mrf.mxu0
      %v448 = vadd.f32 0.0, %v447
      %449 = vmatmul.f32.gmra.mxu0 %v301
      %v450 = vpop.f32.mrf.mxu0
      %v451 = vadd.f32 0.0, %v450
      %452 = vmatmul.f32.gmra.mxu0 %v304
      %v453 = vpop.f32.mrf.mxu0
      %v454 = vadd.f32 0.0, %v453
      %455 = vmatmul.f32.gmra.mxu0 %v307
      %v456 = vpop.f32.mrf.mxu0
      %v457 = vadd.f32 0.0, %v456
      %458 = vmatmul.f32.gmra.mxu0 %v310
      %v459 = vpop.f32.mrf.mxu0
      %v460 = vadd.f32 0.0, %v459
      %461 = vmatmul.f32.gmra.mxu0 %v313
      %v462 = vpop.f32.mrf.mxu0
      %v463 = vadd.f32 0.0, %v462
      %464 = vmatmul.f32.gmra.mxu0 %v316
      %v465 = vpop.f32.mrf.mxu0
      %v466 = vadd.f32 0.0, %v465
      %467 = vmatmul.f32.gmra.mxu0 %v319
      %v468 = vpop.f32.mrf.mxu0
      %v469 = vadd.f32 0.0, %v468
      %470 = vmatmul.f32.gmra.mxu0 %v322
      %v471 = vpop.f32.mrf.mxu0
      %v472 = vadd.f32 0.0, %v471
      %473 = vmatmul.f32.gmra.mxu0 %v325
      %v474 = vpop.f32.mrf.mxu0
      %v475 = vadd.f32 0.0, %v474
      %476 = vmatmul.f32.gmra.mxu0 %v328
      %v477 = vpop.f32.mrf.mxu0
      %v478 = vadd.f32 0.0, %v477
      %479 = vmatmul.f32.gmra.mxu0 %v331
      %v480 = vpop.f32.mrf.mxu0
      %v481 = vadd.f32 0.0, %v480
      %482 = vmatmul.f32.gmra.mxu0 %v334
      %v483 = vpop.f32.mrf.mxu0
      %v484 = vadd.f32 0.0, %v483
      %485 = vmatmul.f32.gmra.mxu0 %v337
      %v486 = vpop.f32.mrf.mxu0
      %v487 = vadd.f32 0.0, %v486
      %488 = vmatmul.f32.gmra.mxu0 %v340
      %v489 = vpop.f32.mrf.mxu0
      %v490 = vadd.f32 0.0, %v489
      %491 = vmatmul.f32.gmra.mxu0 %v343
      %v492 = vpop.f32.mrf.mxu0
      %v493 = vadd.f32 0.0, %v492
      %494 = vmatmul.f32.gmra.mxu0 %v346
      %v495 = vpop.f32.mrf.mxu0
      %v496 = vadd.f32 0.0, %v495
      %497 = vmatmul.f32.gmra.mxu0 %v349
      %v498 = vpop.f32.mrf.mxu0
      %v499 = vadd.f32 0.0, %v498
      %500 = vmatmul.f32.gmra.mxu0 %v352
      %v501 = vpop.f32.mrf.mxu0
      %v502 = vadd.f32 0.0, %v501
      %503 = vmatmul.f32.gmra.mxu0 %v355
      %v504 = vpop.f32.mrf.mxu0
      %v505 = vadd.f32 0.0, %v504
      %506 = vmatmul.f32.gmra.mxu0 %v358
      %v507 = vpop.f32.mrf.mxu0
      %v508 = vadd.f32 0.0, %v507
      %509 = vdwg.mxu0
      %v510 = vadd.f32 %v173, %v382
      %v511 = vadd.f32 %v173, %v385
      %v512 = vadd.f32 %v173, %v388
      %v513 = vadd.f32 %v173, %v391
      %v514 = vadd.f32 %v173, %v394
      %v515 = vadd.f32 %v173, %v397
      %v516 = vadd.f32 %v173, %v400
      %v517 = vadd.f32 %v173, %v403
      %v518 = vadd.f32 %v173, %v406
      %v519 = vadd.f32 %v173, %v409
      %v520 = vadd.f32 %v173, %v412
      %v521 = vadd.f32 %v173, %v415
      %v522 = vadd.f32 %v173, %v418
      %v523 = vadd.f32 %v173, %v421
      %v524 = vadd.f32 %v173, %v424
      %v525 = vadd.f32 %v173, %v427
      %v526 = vadd.f32 %v173, %v430
      %v527 = vadd.f32 %v173, %v433
      %v528 = vadd.f32 %v173, %v436
      %v529 = vadd.f32 %v173, %v439
      %v530 = vadd.f32 %v173, %v442
      %v531 = vadd.f32 %v173, %v445
      %v532 = vadd.f32 %v173, %v448
      %v533 = vadd.f32 %v173, %v451
      %v534 = vadd.f32 %v173, %v454
      %v535 = vadd.f32 %v173, %v457
      %v536 = vadd.f32 %v173, %v460
      %v537 = vadd.f32 %v173, %v463
      %v538 = vadd.f32 %v173, %v466
      %v539 = vadd.f32 %v173, %v469
      %v540 = vadd.f32 %v173, %v472
      %v541 = vadd.f32 %v173, %v475
      %v542 = vadd.f32 %v173, %v478
      %v543 = vadd.f32 %v173, %v481
      %v544 = vadd.f32 %v173, %v484
      %v545 = vadd.f32 %v173, %v487
      %v546 = vadd.f32 %v173, %v490
      %v547 = vadd.f32 %v173, %v493
      %v548 = vadd.f32 %v173, %v496
      %v549 = vadd.f32 %v173, %v499
      %v550 = vadd.f32 %v173, %v502
      %v551 = vadd.f32 %v173, %v505
      %v552 = vadd.f32 %v173, %v508
      %v553 = vld [vmem:[%s165 + $0x1] sm:$0xff]
      %v554 = vld [vmem:[%s165 + $0x9] sm:$0xff]
      %v555 = vld [vmem:[%s165 + $0x11] sm:$0xff]
      %v556 = vld [vmem:[%s165 + $0x19] sm:$0xff]
      %v557 = vld [vmem:[%s165 + $0x21] sm:$0xff]
      %v558 = vld [vmem:[%s165 + $0x29] sm:$0xff]
      %v559 = vld [vmem:[%s165 + $0x31] sm:$0xff]
      %v560 = vld [vmem:[%s165 + $0x39] sm:$0xff]
      %v561 = vld [vmem:[%s165 + $0x41] sm:$0xff]
      %v562 = vld [vmem:[%s165 + $0x49] sm:$0xff]
      %v563 = vld [vmem:[%s165 + $0x51] sm:$0xff]
      %v564 = vld [vmem:[%s165 + $0x59] sm:$0xff]
      %v565 = vld [vmem:[%s165 + $0x61] sm:$0xff]
      %v566 = vld [vmem:[%s165 + $0x69] sm:$0xff]
      %v567 = vld [vmem:[%s165 + $0x71] sm:$0xff]
      %v568 = vld [vmem:[%s165 + $0x79] sm:$0xff]
      %v569 = vld [vmem:[%s165 + $0x81] sm:$0xff]
      %v570 = vld [vmem:[%s165 + $0x89] sm:$0xff]
      %v571 = vld [vmem:[%s165 + $0x91] sm:$0xff]
      %v572 = vld [vmem:[%s165 + $0x99] sm:$0xff]
      %v573 = vld [vmem:[%s165 + $0xa1] sm:$0xff]
      %v574 = vld [vmem:[%s165 + $0xa9] sm:$0xff]
      %v575 = vld [vmem:[%s165 + $0xb1] sm:$0xff]
      %v576 = vld [vmem:[%s165 + $0xb9] sm:$0xff]
      %v577 = vld [vmem:[%s165 + $0xc1] sm:$0xff]
      %v578 = vld [vmem:[%s165 + $0xc9] sm:$0xff]
      %v579 = vld [vmem:[%s165 + $0xd1] sm:$0xff]
      %v580 = vld [vmem:[%s165 + $0xd9] sm:$0xff]
      %v581 = vld [vmem:[%s165 + $0xe1] sm:$0xff]
      %v582 = vld [vmem:[%s165 + $0xe9] sm:$0xff]
      %v583 = vld [vmem:[%s165 + $0xf1] sm:$0xff]
      %v584 = vld [vmem:[%s165 + $0xf9] sm:$0xff]
      %v585 = vld [vmem:[%s165 + $0x101] sm:$0xff]
      %v586 = vld [vmem:[%s165 + $0x109] sm:$0xff]
      %v587 = vld [vmem:[%s165 + $0x111] sm:$0xff]
      %v588 = vld [vmem:[%s165 + $0x119] sm:$0xff]
      %v589 = vld [vmem:[%s165 + $0x121] sm:$0xff]
      %v590 = vld [vmem:[%s165 + $0x129] sm:$0xff]
      %v591 = vld [vmem:[%s165 + $0x131] sm:$0xff]
      %v592 = vld [vmem:[%s165 + $0x139] sm:$0xff]
      %v593 = vld [vmem:[%s165 + $0x141] sm:$0xff]
      %v594 = vld [vmem:[%s165 + $0x149] sm:$0xff]
      %v595 = vld [vmem:[%s165 + $0x151] sm:$0xff]
      %s596 = scalar_lea.vmem %s1, 96
      %v597 = vld [vmem:[%s596] sm:$0xff]
      %v598 = vld [vmem:[%s596 + $0x8] sm:$0xff]
      %v599 = vld [vmem:[%s596 + $0x10] sm:$0xff]
      %v600 = vld [vmem:[%s596 + $0x18] sm:$0xff]
      %v601 = vld [vmem:[%s596 + $0x20] sm:$0xff]
      %v602 = vld [vmem:[%s596 + $0x28] sm:$0xff]
      %v603 = vld [vmem:[%s596 + $0x30] sm:$0xff]
      %v604 = vld [vmem:[%s596 + $0x38] sm:$0xff]
      %v605 = vld [vmem:[%s596 + $0x40] sm:$0xff]
      %v606 = vld [vmem:[%s596 + $0x48] sm:$0xff]
      %v607 = vld [vmem:[%s596 + $0x50] sm:$0xff]
      %v608 = vld [vmem:[%s596 + $0x58] sm:$0x3]
      %v610 = vsel %vm230, %v553, 0
      %v613 = vsel %vm230, %v554, 0
      %v616 = vsel %vm230, %v555, 0
      %v619 = vsel %vm230, %v556, 0
      %v622 = vsel %vm230, %v557, 0
      %v625 = vsel %vm230, %v558, 0
      %v628 = vsel %vm230, %v559, 0
      %v631 = vsel %vm230, %v560, 0
      %v634 = vsel %vm230, %v561, 0
      %v637 = vsel %vm230, %v562, 0
      %v640 = vsel %vm230, %v563, 0
      %v643 = vsel %vm230, %v564, 0
      %v646 = vsel %vm230, %v565, 0
      %v649 = vsel %vm230, %v566, 0
      %v652 = vsel %vm230, %v567, 0
      %v655 = vsel %vm230, %v568, 0
      %v658 = vsel %vm230, %v569, 0
      %v661 = vsel %vm230, %v570, 0
      %v664 = vsel %vm230, %v571, 0
      %v667 = vsel %vm230, %v572, 0
      %v670 = vsel %vm230, %v573, 0
      %v673 = vsel %vm230, %v574, 0
      %v676 = vsel %vm230, %v575, 0
      %v679 = vsel %vm230, %v576, 0
      %v682 = vsel %vm230, %v577, 0
      %v685 = vsel %vm230, %v578, 0
      %v688 = vsel %vm230, %v579, 0
      %v691 = vsel %vm230, %v580, 0
      %v694 = vsel %vm230, %v581, 0
      %v697 = vsel %vm230, %v582, 0
      %v700 = vsel %vm230, %v583, 0
      %v703 = vsel %vm230, %v584, 0
      %v706 = vsel %vm230, %v585, 0
      %v709 = vsel %vm230, %v586, 0
      %v712 = vsel %vm230, %v587, 0
      %v715 = vsel %vm230, %v588, 0
      %v718 = vsel %vm230, %v589, 0
      %v721 = vsel %vm230, %v590, 0
      %v724 = vsel %vm230, %v591, 0
      %v727 = vsel %vm230, %v592, 0
      %v730 = vsel %vm230, %v593, 0
      %v733 = vsel %vm230, %v594, 0
      %v736 = vsel %vm230, %v595, 0
      %v739 = vsel %vm360, %v608, 0
      %741 = vmatpush.msra.mxu0 0.0
      %742 = vmatpush.msra.mxu0 0.0
      %743 = vmatpush.msra.mxu0 0.0
      %744 = vmatpush.msra.mxu0 0.0
      %745 = vmatpush.msra.mxu0 %v739
      %746 = vmatpush.msra.mxu0 %v607
      %747 = vmatpush.msra.mxu0 %v606
      %748 = vmatpush.msra.mxu0 %v605
      %749 = vmatpush.msra.mxu0 %v604
      %750 = vmatpush.msra.mxu0 %v603
      %751 = vmatpush.msra.mxu0 %v602
      %752 = vmatpush.msra.mxu0 %v601
      %753 = vmatpush.msra.mxu0 %v600
      %754 = vmatpush.msra.mxu0 %v599
      %755 = vmatpush.msra.mxu0 %v598
      %756 = vmatpush.msra.mxu0 %v597
      %757 = vmatmul.f32.gmra.mxu0 %v610
      %v758 = vpop.f32.mrf.mxu0
      %v759 = vadd.f32 0.0, %v758
      %760 = vmatmul.f32.gmra.mxu0 %v613
      %v761 = vpop.f32.mrf.mxu0
      %v762 = vadd.f32 0.0, %v761
      %763 = vmatmul.f32.gmra.mxu0 %v616
      %v764 = vpop.f32.mrf.mxu0
      %v765 = vadd.f32 0.0, %v764
      %766 = vmatmul.f32.gmra.mxu0 %v619
      %v767 = vpop.f32.mrf.mxu0
      %v768 = vadd.f32 0.0, %v767
      %769 = vmatmul.f32.gmra.mxu0 %v622
      %v770 = vpop.f32.mrf.mxu0
      %v771 = vadd.f32 0.0, %v770
      %772 = vmatmul.f32.gmra.mxu0 %v625
      %v773 = vpop.f32.mrf.mxu0
      %v774 = vadd.f32 0.0, %v773
      %775 = vmatmul.f32.gmra.mxu0 %v628
      %v776 = vpop.f32.mrf.mxu0
      %v777 = vadd.f32 0.0, %v776
      %778 = vmatmul.f32.gmra.mxu0 %v631
      %v779 = vpop.f32.mrf.mxu0
      %v780 = vadd.f32 0.0, %v779
      %781 = vmatmul.f32.gmra.mxu0 %v634
      %v782 = vpop.f32.mrf.mxu0
      %v783 = vadd.f32 0.0, %v782
      %784 = vmatmul.f32.gmra.mxu0 %v637
      %v785 = vpop.f32.mrf.mxu0
      %v786 = vadd.f32 0.0, %v785
      %787 = vmatmul.f32.gmra.mxu0 %v640
      %v788 = vpop.f32.mrf.mxu0
      %v789 = vadd.f32 0.0, %v788
      %790 = vmatmul.f32.gmra.mxu0 %v643
      %v791 = vpop.f32.mrf.mxu0
      %v792 = vadd.f32 0.0, %v791
      %793 = vmatmul.f32.gmra.mxu0 %v646
      %v794 = vpop.f32.mrf.mxu0
      %v795 = vadd.f32 0.0, %v794
      %796 = vmatmul.f32.gmra.mxu0 %v649
      %v797 = vpop.f32.mrf.mxu0
      %v798 = vadd.f32 0.0, %v797
      %799 = vmatmul.f32.gmra.mxu0 %v652
      %v800 = vpop.f32.mrf.mxu0
      %v801 = vadd.f32 0.0, %v800
      %802 = vmatmul.f32.gmra.mxu0 %v655
      %v803 = vpop.f32.mrf.mxu0
      %v804 = vadd.f32 0.0, %v803
      %805 = vmatmul.f32.gmra.mxu0 %v658
      %v806 = vpop.f32.mrf.mxu0
      %v807 = vadd.f32 0.0, %v806
      %808 = vmatmul.f32.gmra.mxu0 %v661
      %v809 = vpop.f32.mrf.mxu0
      %v810 = vadd.f32 0.0, %v809
      %811 = vmatmul.f32.gmra.mxu0 %v664
      %v812 = vpop.f32.mrf.mxu0
      %v813 = vadd.f32 0.0, %v812
      %814 = vmatmul.f32.gmra.mxu0 %v667
      %v815 = vpop.f32.mrf.mxu0
      %v816 = vadd.f32 0.0, %v815
      %817 = vmatmul.f32.gmra.mxu0 %v670
      %v818 = vpop.f32.mrf.mxu0
      %v819 = vadd.f32 0.0, %v818
      %820 = vmatmul.f32.gmra.mxu0 %v673
      %v821 = vpop.f32.mrf.mxu0
      %v822 = vadd.f32 0.0, %v821
      %823 = vmatmul.f32.gmra.mxu0 %v676
      %v824 = vpop.f32.mrf.mxu0
      %v825 = vadd.f32 0.0, %v824
      %826 = vmatmul.f32.gmra.mxu0 %v679
      %v827 = vpop.f32.mrf.mxu0
      %v828 = vadd.f32 0.0, %v827
      %829 = vmatmul.f32.gmra.mxu0 %v682
      %v830 = vpop.f32.mrf.mxu0
      %v831 = vadd.f32 0.0, %v830
      %832 = vmatmul.f32.gmra.mxu0 %v685
      %v833 = vpop.f32.mrf.mxu0
      %v834 = vadd.f32 0.0, %v833
      %835 = vmatmul.f32.gmra.mxu0 %v688
      %v836 = vpop.f32.mrf.mxu0
      %v837 = vadd.f32 0.0, %v836
      %838 = vmatmul.f32.gmra.mxu0 %v691
      %v839 = vpop.f32.mrf.mxu0
      %v840 = vadd.f32 0.0, %v839
      %841 = vmatmul.f32.gmra.mxu0 %v694
      %v842 = vpop.f32.mrf.mxu0
      %v843 = vadd.f32 0.0, %v842
      %844 = vmatmul.f32.gmra.mxu0 %v697
      %v845 = vpop.f32.mrf.mxu0
      %v846 = vadd.f32 0.0, %v845
      %847 = vmatmul.f32.gmra.mxu0 %v700
      %v848 = vpop.f32.mrf.mxu0
      %v849 = vadd.f32 0.0, %v848
      %850 = vmatmul.f32.gmra.mxu0 %v703
      %v851 = vpop.f32.mrf.mxu0
      %v852 = vadd.f32 0.0, %v851
      %853 = vmatmul.f32.gmra.mxu0 %v706
      %v854 = vpop.f32.mrf.mxu0
      %v855 = vadd.f32 0.0, %v854
      %856 = vmatmul.f32.gmra.mxu0 %v709
      %v857 = vpop.f32.mrf.mxu0
      %v858 = vadd.f32 0.0, %v857
      %859 = vmatmul.f32.gmra.mxu0 %v712
      %v860 = vpop.f32.mrf.mxu0
      %v861 = vadd.f32 0.0, %v860
      %862 = vmatmul.f32.gmra.mxu0 %v715
      %v863 = vpop.f32.mrf.mxu0
      %v864 = vadd.f32 0.0, %v863
      %865 = vmatmul.f32.gmra.mxu0 %v718
      %v866 = vpop.f32.mrf.mxu0
      %v867 = vadd.f32 0.0, %v866
      %868 = vmatmul.f32.gmra.mxu0 %v721
      %v869 = vpop.f32.mrf.mxu0
      %v870 = vadd.f32 0.0, %v869
      %871 = vmatmul.f32.gmra.mxu0 %v724
      %v872 = vpop.f32.mrf.mxu0
      %v873 = vadd.f32 0.0, %v872
      %874 = vmatmul.f32.gmra.mxu0 %v727
      %v875 = vpop.f32.mrf.mxu0
      %v876 = vadd.f32 0.0, %v875
      %877 = vmatmul.f32.gmra.mxu0 %v730
      %v878 = vpop.f32.mrf.mxu0
      %v879 = vadd.f32 0.0, %v878
      %880 = vmatmul.f32.gmra.mxu0 %v733
      %v881 = vpop.f32.mrf.mxu0
      %v882 = vadd.f32 0.0, %v881
      %883 = vmatmul.f32.gmra.mxu0 %v736
      %v884 = vpop.f32.mrf.mxu0
      %v885 = vadd.f32 0.0, %v884
      %886 = vdwg.mxu0
      %v887 = vadd.f32 %v510, %v759
      %v888 = vadd.f32 %v511, %v762
      %v889 = vadd.f32 %v512, %v765
      %v890 = vadd.f32 %v513, %v768
      %v891 = vadd.f32 %v514, %v771
      %v892 = vadd.f32 %v515, %v774
      %v893 = vadd.f32 %v516, %v777
      %v894 = vadd.f32 %v517, %v780
      %v895 = vadd.f32 %v518, %v783
      %v896 = vadd.f32 %v519, %v786
      %v897 = vadd.f32 %v520, %v789
      %v898 = vadd.f32 %v521, %v792
      %v899 = vadd.f32 %v522, %v795
      %v900 = vadd.f32 %v523, %v798
      %v901 = vadd.f32 %v524, %v801
      %v902 = vadd.f32 %v525, %v804
      %v903 = vadd.f32 %v526, %v807
      %v904 = vadd.f32 %v527, %v810
      %v905 = vadd.f32 %v528, %v813
      %v906 = vadd.f32 %v529, %v816
      %v907 = vadd.f32 %v530, %v819
      %v908 = vadd.f32 %v531, %v822
      %v909 = vadd.f32 %v532, %v825
      %v910 = vadd.f32 %v533, %v828
      %v911 = vadd.f32 %v534, %v831
      %v912 = vadd.f32 %v535, %v834
      %v913 = vadd.f32 %v536, %v837
      %v914 = vadd.f32 %v537, %v840
      %v915 = vadd.f32 %v538, %v843
      %v916 = vadd.f32 %v539, %v846
      %v917 = vadd.f32 %v540, %v849
      %v918 = vadd.f32 %v541, %v852
      %v919 = vadd.f32 %v542, %v855
      %v920 = vadd.f32 %v543, %v858
      %v921 = vadd.f32 %v544, %v861
      %v922 = vadd.f32 %v545, %v864
      %v923 = vadd.f32 %v546, %v867
      %v924 = vadd.f32 %v547, %v870
      %v925 = vadd.f32 %v548, %v873
      %v926 = vadd.f32 %v549, %v876
      %v927 = vadd.f32 %v550, %v879
      %v928 = vadd.f32 %v551, %v882
      %v929 = vadd.f32 %v552, %v885
      %v930 = vld [vmem:[%s165 + $0x2] sm:$0xff]
      %v931 = vld [vmem:[%s165 + $0xa] sm:$0xff]
      %v932 = vld [vmem:[%s165 + $0x12] sm:$0xff]
      %v933 = vld [vmem:[%s165 + $0x1a] sm:$0xff]
      %v934 = vld [vmem:[%s165 + $0x22] sm:$0xff]
      %v935 = vld [vmem:[%s165 + $0x2a] sm:$0xff]
      %v936 = vld [vmem:[%s165 + $0x32] sm:$0xff]
      %v937 = vld [vmem:[%s165 + $0x3a] sm:$0xff]
      %v938 = vld [vmem:[%s165 + $0x42] sm:$0xff]
      %v939 = vld [vmem:[%s165 + $0x4a] sm:$0xff]
      %v940 = vld [vmem:[%s165 + $0x52] sm:$0xff]
      %v941 = vld [vmem:[%s165 + $0x5a] sm:$0xff]
      %v942 = vld [vmem:[%s165 + $0x62] sm:$0xff]
      %v943 = vld [vmem:[%s165 + $0x6a] sm:$0xff]
      %v944 = vld [vmem:[%s165 + $0x72] sm:$0xff]
      %v945 = vld [vmem:[%s165 + $0x7a] sm:$0xff]
      %v946 = vld [vmem:[%s165 + $0x82] sm:$0xff]
      %v947 = vld [vmem:[%s165 + $0x8a] sm:$0xff]
      %v948 = vld [vmem:[%s165 + $0x92] sm:$0xff]
      %v949 = vld [vmem:[%s165 + $0x9a] sm:$0xff]
      %v950 = vld [vmem:[%s165 + $0xa2] sm:$0xff]
      %v951 = vld [vmem:[%s165 + $0xaa] sm:$0xff]
      %v952 = vld [vmem:[%s165 + $0xb2] sm:$0xff]
      %v953 = vld [vmem:[%s165 + $0xba] sm:$0xff]
      %v954 = vld [vmem:[%s165 + $0xc2] sm:$0xff]
      %v955 = vld [vmem:[%s165 + $0xca] sm:$0xff]
      %v956 = vld [vmem:[%s165 + $0xd2] sm:$0xff]
      %v957 = vld [vmem:[%s165 + $0xda] sm:$0xff]
      %v958 = vld [vmem:[%s165 + $0xe2] sm:$0xff]
      %v959 = vld [vmem:[%s165 + $0xea] sm:$0xff]
      %v960 = vld [vmem:[%s165 + $0xf2] sm:$0xff]
      %v961 = vld [vmem:[%s165 + $0xfa] sm:$0xff]
      %v962 = vld [vmem:[%s165 + $0x102] sm:$0xff]
      %v963 = vld [vmem:[%s165 + $0x10a] sm:$0xff]
      %v964 = vld [vmem:[%s165 + $0x112] sm:$0xff]
      %v965 = vld [vmem:[%s165 + $0x11a] sm:$0xff]
      %v966 = vld [vmem:[%s165 + $0x122] sm:$0xff]
      %v967 = vld [vmem:[%s165 + $0x12a] sm:$0xff]
      %v968 = vld [vmem:[%s165 + $0x132] sm:$0xff]
      %v969 = vld [vmem:[%s165 + $0x13a] sm:$0xff]
      %v970 = vld [vmem:[%s165 + $0x142] sm:$0xff]
      %v971 = vld [vmem:[%s165 + $0x14a] sm:$0xff]
      %v972 = vld [vmem:[%s165 + $0x152] sm:$0xff]
      %s973 = scalar_lea.vmem %s1, 192
      %v974 = vld [vmem:[%s973] sm:$0xff]
      %v975 = vld [vmem:[%s973 + $0x8] sm:$0xff]
      %v976 = vld [vmem:[%s973 + $0x10] sm:$0xff]
      %v977 = vld [vmem:[%s973 + $0x18] sm:$0xff]
      %v978 = vld [vmem:[%s973 + $0x20] sm:$0xff]
      %v979 = vld [vmem:[%s973 + $0x28] sm:$0xff]
      %v980 = vld [vmem:[%s973 + $0x30] sm:$0xff]
      %v981 = vld [vmem:[%s973 + $0x38] sm:$0xff]
      %v982 = vld [vmem:[%s973 + $0x40] sm:$0xff]
      %v983 = vld [vmem:[%s973 + $0x48] sm:$0xff]
      %v984 = vld [vmem:[%s973 + $0x50] sm:$0xff]
      %v985 = vld [vmem:[%s973 + $0x58] sm:$0x3]
      %v987 = vsel %vm230, %v930, 0
      %v990 = vsel %vm230, %v931, 0
      %v993 = vsel %vm230, %v932, 0
      %v996 = vsel %vm230, %v933, 0
      %v999 = vsel %vm230, %v934, 0
      %v1002 = vsel %vm230, %v935, 0
      %v1005 = vsel %vm230, %v936, 0
      %v1008 = vsel %vm230, %v937, 0
      %v1011 = vsel %vm230, %v938, 0
      %v1014 = vsel %vm230, %v939, 0
      %v1017 = vsel %vm230, %v940, 0
      %v1020 = vsel %vm230, %v941, 0
      %v1023 = vsel %vm230, %v942, 0
      %v1026 = vsel %vm230, %v943, 0
      %v1029 = vsel %vm230, %v944, 0
      %v1032 = vsel %vm230, %v945, 0
      %v1035 = vsel %vm230, %v946, 0
      %v1038 = vsel %vm230, %v947, 0
      %v1041 = vsel %vm230, %v948, 0
      %v1044 = vsel %vm230, %v949, 0
      %v1047 = vsel %vm230, %v950, 0
      %v1050 = vsel %vm230, %v951, 0
      %v1053 = vsel %vm230, %v952, 0
      %v1056 = vsel %vm230, %v953, 0
      %v1059 = vsel %vm230, %v954, 0
      %v1062 = vsel %vm230, %v955, 0
      %v1065 = vsel %vm230, %v956, 0
      %v1068 = vsel %vm230, %v957, 0
      %v1071 = vsel %vm230, %v958, 0
      %v1074 = vsel %vm230, %v959, 0
      %v1077 = vsel %vm230, %v960, 0
      %v1080 = vsel %vm230, %v961, 0
      %v1083 = vsel %vm230, %v962, 0
      %v1086 = vsel %vm230, %v963, 0
      %v1089 = vsel %vm230, %v964, 0
      %v1092 = vsel %vm230, %v965, 0
      %v1095 = vsel %vm230, %v966, 0
      %v1098 = vsel %vm230, %v967, 0
      %v1101 = vsel %vm230, %v968, 0
      %v1104 = vsel %vm230, %v969, 0
      %v1107 = vsel %vm230, %v970, 0
      %v1110 = vsel %vm230, %v971, 0
      %v1113 = vsel %vm230, %v972, 0
      %v1116 = vsel %vm360, %v985, 0
      %1118 = vmatpush.msra.mxu0 0.0
      %1119 = vmatpush.msra.mxu0 0.0
      %1120 = vmatpush.msra.mxu0 0.0
      %1121 = vmatpush.msra.mxu0 0.0
      %1122 = vmatpush.msra.mxu0 %v1116
      %1123 = vmatpush.msra.mxu0 %v984
      %1124 = vmatpush.msra.mxu0 %v983
      %1125 = vmatpush.msra.mxu0 %v982
      %1126 = vmatpush.msra.mxu0 %v981
      %1127 = vmatpush.msra.mxu0 %v980
      %1128 = vmatpush.msra.mxu0 %v979
      %1129 = vmatpush.msra.mxu0 %v978
      %1130 = vmatpush.msra.mxu0 %v977
      %1131 = vmatpush.msra.mxu0 %v976
      %1132 = vmatpush.msra.mxu0 %v975
      %1133 = vmatpush.msra.mxu0 %v974
      %1134 = vmatmul.f32.gmra.mxu0 %v987
      %v1135 = vpop.f32.mrf.mxu0
      %v1136 = vadd.f32 0.0, %v1135
      %1137 = vmatmul.f32.gmra.mxu0 %v990
      %v1138 = vpop.f32.mrf.mxu0
      %v1139 = vadd.f32 0.0, %v1138
      %1140 = vmatmul.f32.gmra.mxu0 %v993
      %v1141 = vpop.f32.mrf.mxu0
      %v1142 = vadd.f32 0.0, %v1141
      %1143 = vmatmul.f32.gmra.mxu0 %v996
      %v1144 = vpop.f32.mrf.mxu0
      %v1145 = vadd.f32 0.0, %v1144
      %1146 = vmatmul.f32.gmra.mxu0 %v999
      %v1147 = vpop.f32.mrf.mxu0
      %v1148 = vadd.f32 0.0, %v1147
      %1149 = vmatmul.f32.gmra.mxu0 %v1002
      %v1150 = vpop.f32.mrf.mxu0
      %v1151 = vadd.f32 0.0, %v1150
      %1152 = vmatmul.f32.gmra.mxu0 %v1005
      %v1153 = vpop.f32.mrf.mxu0
      %v1154 = vadd.f32 0.0, %v1153
      %1155 = vmatmul.f32.gmra.mxu0 %v1008
      %v1156 = vpop.f32.mrf.mxu0
      %v1157 = vadd.f32 0.0, %v1156
      %1158 = vmatmul.f32.gmra.mxu0 %v1011
      %v1159 = vpop.f32.mrf.mxu0
      %v1160 = vadd.f32 0.0, %v1159
      %1161 = vmatmul.f32.gmra.mxu0 %v1014
      %v1162 = vpop.f32.mrf.mxu0
      %v1163 = vadd.f32 0.0, %v1162
      %1164 = vmatmul.f32.gmra.mxu0 %v1017
      %v1165 = vpop.f32.mrf.mxu0
      %v1166 = vadd.f32 0.0, %v1165
      %1167 = vmatmul.f32.gmra.mxu0 %v1020
      %v1168 = vpop.f32.mrf.mxu0
      %v1169 = vadd.f32 0.0, %v1168
      %1170 = vmatmul.f32.gmra.mxu0 %v1023
      %v1171 = vpop.f32.mrf.mxu0
      %v1172 = vadd.f32 0.0, %v1171
      %1173 = vmatmul.f32.gmra.mxu0 %v1026
      %v1174 = vpop.f32.mrf.mxu0
      %v1175 = vadd.f32 0.0, %v1174
      %1176 = vmatmul.f32.gmra.mxu0 %v1029
      %v1177 = vpop.f32.mrf.mxu0
      %v1178 = vadd.f32 0.0, %v1177
      %1179 = vmatmul.f32.gmra.mxu0 %v1032
      %v1180 = vpop.f32.mrf.mxu0
      %v1181 = vadd.f32 0.0, %v1180
      %1182 = vmatmul.f32.gmra.mxu0 %v1035
      %v1183 = vpop.f32.mrf.mxu0
      %v1184 = vadd.f32 0.0, %v1183
      %1185 = vmatmul.f32.gmra.mxu0 %v1038
      %v1186 = vpop.f32.mrf.mxu0
      %v1187 = vadd.f32 0.0, %v1186
      %1188 = vmatmul.f32.gmra.mxu0 %v1041
      %v1189 = vpop.f32.mrf.mxu0
      %v1190 = vadd.f32 0.0, %v1189
      %1191 = vmatmul.f32.gmra.mxu0 %v1044
      %v1192 = vpop.f32.mrf.mxu0
      %v1193 = vadd.f32 0.0, %v1192
      %1194 = vmatmul.f32.gmra.mxu0 %v1047
      %v1195 = vpop.f32.mrf.mxu0
      %v1196 = vadd.f32 0.0, %v1195
      %1197 = vmatmul.f32.gmra.mxu0 %v1050
      %v1198 = vpop.f32.mrf.mxu0
      %v1199 = vadd.f32 0.0, %v1198
      %1200 = vmatmul.f32.gmra.mxu0 %v1053
      %v1201 = vpop.f32.mrf.mxu0
      %v1202 = vadd.f32 0.0, %v1201
      %1203 = vmatmul.f32.gmra.mxu0 %v1056
      %v1204 = vpop.f32.mrf.mxu0
      %v1205 = vadd.f32 0.0, %v1204
      %1206 = vmatmul.f32.gmra.mxu0 %v1059
      %v1207 = vpop.f32.mrf.mxu0
      %v1208 = vadd.f32 0.0, %v1207
      %1209 = vmatmul.f32.gmra.mxu0 %v1062
      %v1210 = vpop.f32.mrf.mxu0
      %v1211 = vadd.f32 0.0, %v1210
      %1212 = vmatmul.f32.gmra.mxu0 %v1065
      %v1213 = vpop.f32.mrf.mxu0
      %v1214 = vadd.f32 0.0, %v1213
      %1215 = vmatmul.f32.gmra.mxu0 %v1068
      %v1216 = vpop.f32.mrf.mxu0
      %v1217 = vadd.f32 0.0, %v1216
      %1218 = vmatmul.f32.gmra.mxu0 %v1071
      %v1219 = vpop.f32.mrf.mxu0
      %v1220 = vadd.f32 0.0, %v1219
      %1221 = vmatmul.f32.gmra.mxu0 %v1074
      %v1222 = vpop.f32.mrf.mxu0
      %v1223 = vadd.f32 0.0, %v1222
      %1224 = vmatmul.f32.gmra.mxu0 %v1077
      %v1225 = vpop.f32.mrf.mxu0
      %v1226 = vadd.f32 0.0, %v1225
      %1227 = vmatmul.f32.gmra.mxu0 %v1080
      %v1228 = vpop.f32.mrf.mxu0
      %v1229 = vadd.f32 0.0, %v1228
      %1230 = vmatmul.f32.gmra.mxu0 %v1083
      %v1231 = vpop.f32.mrf.mxu0
      %v1232 = vadd.f32 0.0, %v1231
      %1233 = vmatmul.f32.gmra.mxu0 %v1086
      %v1234 = vpop.f32.mrf.mxu0
      %v1235 = vadd.f32 0.0, %v1234
      %1236 = vmatmul.f32.gmra.mxu0 %v1089
      %v1237 = vpop.f32.mrf.mxu0
      %v1238 = vadd.f32 0.0, %v1237
      %1239 = vmatmul.f32.gmra.mxu0 %v1092
      %v1240 = vpop.f32.mrf.mxu0
      %v1241 = vadd.f32 0.0, %v1240
      %1242 = vmatmul.f32.gmra.mxu0 %v1095
      %v1243 = vpop.f32.mrf.mxu0
      %v1244 = vadd.f32 0.0, %v1243
      %1245 = vmatmul.f32.gmra.mxu0 %v1098
      %v1246 = vpop.f32.mrf.mxu0
      %v1247 = vadd.f32 0.0, %v1246
      %1248 = vmatmul.f32.gmra.mxu0 %v1101
      %v1249 = vpop.f32.mrf.mxu0
      %v1250 = vadd.f32 0.0, %v1249
      %1251 = vmatmul.f32.gmra.mxu0 %v1104
      %v1252 = vpop.f32.mrf.mxu0
      %v1253 = vadd.f32 0.0, %v1252
      %1254 = vmatmul.f32.gmra.mxu0 %v1107
      %v1255 = vpop.f32.mrf.mxu0
      %v1256 = vadd.f32 0.0, %v1255
      %1257 = vmatmul.f32.gmra.mxu0 %v1110
      %v1258 = vpop.f32.mrf.mxu0
      %v1259 = vadd.f32 0.0, %v1258
      %1260 = vmatmul.f32.gmra.mxu0 %v1113
      %v1261 = vpop.f32.mrf.mxu0
      %v1262 = vadd.f32 0.0, %v1261
      %1263 = vdwg.mxu0
      %v1264 = vadd.f32 %v887, %v1136
      %v1265 = vadd.f32 %v888, %v1139
      %v1266 = vadd.f32 %v889, %v1142
      %v1267 = vadd.f32 %v890, %v1145
      %v1268 = vadd.f32 %v891, %v1148
      %v1269 = vadd.f32 %v892, %v1151
      %v1270 = vadd.f32 %v893, %v1154
      %v1271 = vadd.f32 %v894, %v1157
      %v1272 = vadd.f32 %v895, %v1160
      %v1273 = vadd.f32 %v896, %v1163
      %v1274 = vadd.f32 %v897, %v1166
      %v1275 = vadd.f32 %v898, %v1169
      %v1276 = vadd.f32 %v899, %v1172
      %v1277 = vadd.f32 %v900, %v1175
      %v1278 = vadd.f32 %v901, %v1178
      %v1279 = vadd.f32 %v902, %v1181
      %v1280 = vadd.f32 %v903, %v1184
      %v1281 = vadd.f32 %v904, %v1187
      %v1282 = vadd.f32 %v905, %v1190
      %v1283 = vadd.f32 %v906, %v1193
      %v1284 = vadd.f32 %v907, %v1196
      %v1285 = vadd.f32 %v908, %v1199
      %v1286 = vadd.f32 %v909, %v1202
      %v1287 = vadd.f32 %v910, %v1205
      %v1288 = vadd.f32 %v911, %v1208
      %v1289 = vadd.f32 %v912, %v1211
      %v1290 = vadd.f32 %v913, %v1214
      %v1291 = vadd.f32 %v914, %v1217
      %v1292 = vadd.f32 %v915, %v1220
      %v1293 = vadd.f32 %v916, %v1223
      %v1294 = vadd.f32 %v917, %v1226
      %v1295 = vadd.f32 %v918, %v1229
      %v1296 = vadd.f32 %v919, %v1232
      %v1297 = vadd.f32 %v920, %v1235
      %v1298 = vadd.f32 %v921, %v1238
      %v1299 = vadd.f32 %v922, %v1241
      %v1300 = vadd.f32 %v923, %v1244
      %v1301 = vadd.f32 %v924, %v1247
      %v1302 = vadd.f32 %v925, %v1250
      %v1303 = vadd.f32 %v926, %v1253
      %v1304 = vadd.f32 %v927, %v1256
      %v1305 = vadd.f32 %v928, %v1259
      %v1306 = vadd.f32 %v929, %v1262
      %v1307 = vld [vmem:[%s165 + $0x7] sm:$0xff]
      %v1308 = vld [vmem:[%s165 + $0xf] sm:$0xff]
      %v1309 = vld [vmem:[%s165 + $0x17] sm:$0xff]
      %v1310 = vld [vmem:[%s165 + $0x1f] sm:$0xff]
      %v1311 = vld [vmem:[%s165 + $0x27] sm:$0xff]
      %v1312 = vld [vmem:[%s165 + $0x2f] sm:$0xff]
      %v1313 = vld [vmem:[%s165 + $0x37] sm:$0xff]
      %v1314 = vld [vmem:[%s165 + $0x3f] sm:$0xff]
      %v1315 = vld [vmem:[%s165 + $0x47] sm:$0xff]
      %v1316 = vld [vmem:[%s165 + $0x4f] sm:$0xff]
      %v1317 = vld [vmem:[%s165 + $0x57] sm:$0xff]
      %v1318 = vld [vmem:[%s165 + $0x5f] sm:$0xff]
      %v1319 = vld [vmem:[%s165 + $0x67] sm:$0xff]
      %v1320 = vld [vmem:[%s165 + $0x6f] sm:$0xff]
      %v1321 = vld [vmem:[%s165 + $0x77] sm:$0xff]
      %v1322 = vld [vmem:[%s165 + $0x7f] sm:$0xff]
      %v1323 = vld [vmem:[%s165 + $0x87] sm:$0xff]
      %v1324 = vld [vmem:[%s165 + $0x8f] sm:$0xff]
      %v1325 = vld [vmem:[%s165 + $0x97] sm:$0xff]
      %v1326 = vld [vmem:[%s165 + $0x9f] sm:$0xff]
      %v1327 = vld [vmem:[%s165 + $0xa7] sm:$0xff]
      %v1328 = vld [vmem:[%s165 + $0xaf] sm:$0xff]
      %v1329 = vld [vmem:[%s165 + $0xb7] sm:$0xff]
      %v1330 = vld [vmem:[%s165 + $0xbf] sm:$0xff]
      %v1331 = vld [vmem:[%s165 + $0xc7] sm:$0xff]
      %v1332 = vld [vmem:[%s165 + $0xcf] sm:$0xff]
      %v1333 = vld [vmem:[%s165 + $0xd7] sm:$0xff]
      %v1334 = vld [vmem:[%s165 + $0xdf] sm:$0xff]
      %v1335 = vld [vmem:[%s165 + $0xe7] sm:$0xff]
      %v1336 = vld [vmem:[%s165 + $0xef] sm:$0xff]
      %v1337 = vld [vmem:[%s165 + $0xf7] sm:$0xff]
      %v1338 = vld [vmem:[%s165 + $0xff] sm:$0xff]
      %v1339 = vld [vmem:[%s165 + $0x107] sm:$0xff]
      %v1340 = vld [vmem:[%s165 + $0x10f] sm:$0xff]
      %v1341 = vld [vmem:[%s165 + $0x117] sm:$0xff]
      %v1342 = vld [vmem:[%s165 + $0x11f] sm:$0xff]
      %v1343 = vld [vmem:[%s165 + $0x127] sm:$0xff]
      %v1344 = vld [vmem:[%s165 + $0x12f] sm:$0xff]
      %v1345 = vld [vmem:[%s165 + $0x137] sm:$0xff]
      %v1346 = vld [vmem:[%s165 + $0x13f] sm:$0xff]
      %v1347 = vld [vmem:[%s165 + $0x147] sm:$0xff]
      %v1348 = vld [vmem:[%s165 + $0x14f] sm:$0xff]
      %v1349 = vld [vmem:[%s165 + $0x157] sm:$0xff]
      %s1350 = scalar_lea.vmem %s1, 288
      %v1351 = vld [vmem:[%s1350] sm:$0xff]
      %v1352 = vld [vmem:[%s1350 + $0x8] sm:$0xff]
      %v1353 = vld [vmem:[%s1350 + $0x10] sm:$0xff]
      %v1354 = vld [vmem:[%s1350 + $0x18] sm:$0xff]
      %v1355 = vld [vmem:[%s1350 + $0x20] sm:$0xff]
      %v1356 = vld [vmem:[%s1350 + $0x28] sm:$0xff]
      %v1357 = vld [vmem:[%s1350 + $0x30] sm:$0xff]
      %v1358 = vld [vmem:[%s1350 + $0x38] sm:$0xff]
      %v1359 = vld [vmem:[%s1350 + $0x40] sm:$0xff]
      %v1360 = vld [vmem:[%s1350 + $0x48] sm:$0xff]
      %v1361 = vld [vmem:[%s1350 + $0x50] sm:$0xff]
      %v1362 = vld [vmem:[%s1350 + $0x58] sm:$0x3]
      %v1364 = vsel %vm230, %v1307, 0
      %v1367 = vsel %vm230, %v1308, 0
      %v1370 = vsel %vm230, %v1309, 0
      %v1373 = vsel %vm230, %v1310, 0
      %v1376 = vsel %vm230, %v1311, 0
      %v1379 = vsel %vm230, %v1312, 0
      %v1382 = vsel %vm230, %v1313, 0
      %v1385 = vsel %vm230, %v1314, 0
      %v1388 = vsel %vm230, %v1315, 0
      %v1391 = vsel %vm230, %v1316, 0
      %v1394 = vsel %vm230, %v1317, 0
      %v1397 = vsel %vm230, %v1318, 0
      %v1400 = vsel %vm230, %v1319, 0
      %v1403 = vsel %vm230, %v1320, 0
      %v1406 = vsel %vm230, %v1321, 0
      %v1409 = vsel %vm230, %v1322, 0
      %v1412 = vsel %vm230, %v1323, 0
      %v1415 = vsel %vm230, %v1324, 0
      %v1418 = vsel %vm230, %v1325, 0
      %v1421 = vsel %vm230, %v1326, 0
      %v1424 = vsel %vm230, %v1327, 0
      %v1427 = vsel %vm230, %v1328, 0
      %v1430 = vsel %vm230, %v1329, 0
      %v1433 = vsel %vm230, %v1330, 0
      %v1436 = vsel %vm230, %v1331, 0
      %v1439 = vsel %vm230, %v1332, 0
      %v1442 = vsel %vm230, %v1333, 0
      %v1445 = vsel %vm230, %v1334, 0
      %v1448 = vsel %vm230, %v1335, 0
      %v1451 = vsel %vm230, %v1336, 0
      %v1454 = vsel %vm230, %v1337, 0
      %v1457 = vsel %vm230, %v1338, 0
      %v1460 = vsel %vm230, %v1339, 0
      %v1463 = vsel %vm230, %v1340, 0
      %v1466 = vsel %vm230, %v1341, 0
      %v1469 = vsel %vm230, %v1342, 0
      %v1472 = vsel %vm230, %v1343, 0
      %v1475 = vsel %vm230, %v1344, 0
      %v1478 = vsel %vm230, %v1345, 0
      %v1481 = vsel %vm230, %v1346, 0
      %v1484 = vsel %vm230, %v1347, 0
      %v1487 = vsel %vm230, %v1348, 0
      %v1490 = vsel %vm230, %v1349, 0
      %v1493 = vsel %vm360, %v1362, 0
      %1495 = vmatpush.msra.mxu0 0.0
      %1496 = vmatpush.msra.mxu0 0.0
      %1497 = vmatpush.msra.mxu0 0.0
      %1498 = vmatpush.msra.mxu0 0.0
      %1499 = vmatpush.msra.mxu0 %v1493
      %1500 = vmatpush.msra.mxu0 %v1361
      %1501 = vmatpush.msra.mxu0 %v1360
      %1502 = vmatpush.msra.mxu0 %v1359
      %1503 = vmatpush.msra.mxu0 %v1358
      %1504 = vmatpush.msra.mxu0 %v1357
      %1505 = vmatpush.msra.mxu0 %v1356
      %1506 = vmatpush.msra.mxu0 %v1355
      %1507 = vmatpush.msra.mxu0 %v1354
      %1508 = vmatpush.msra.mxu0 %v1353
      %1509 = vmatpush.msra.mxu0 %v1352
      %1510 = vmatpush.msra.mxu0 %v1351
      %1511 = vmatmul.f32.gmra.mxu0 %v1364
      %v1512 = vpop.f32.mrf.mxu0
      %v1513 = vadd.f32 0.0, %v1512
      %1514 = vmatmul.f32.gmra.mxu0 %v1367
      %v1515 = vpop.f32.mrf.mxu0
      %v1516 = vadd.f32 0.0, %v1515
      %1517 = vmatmul.f32.gmra.mxu0 %v1370
      %v1518 = vpop.f32.mrf.mxu0
      %v1519 = vadd.f32 0.0, %v1518
      %1520 = vmatmul.f32.gmra.mxu0 %v1373
      %v1521 = vpop.f32.mrf.mxu0
      %v1522 = vadd.f32 0.0, %v1521
      %1523 = vmatmul.f32.gmra.mxu0 %v1376
      %v1524 = vpop.f32.mrf.mxu0
      %v1525 = vadd.f32 0.0, %v1524
      %1526 = vmatmul.f32.gmra.mxu0 %v1379
      %v1527 = vpop.f32.mrf.mxu0
      %v1528 = vadd.f32 0.0, %v1527
      %1529 = vmatmul.f32.gmra.mxu0 %v1382
      %v1530 = vpop.f32.mrf.mxu0
      %v1531 = vadd.f32 0.0, %v1530
      %1532 = vmatmul.f32.gmra.mxu0 %v1385
      %v1533 = vpop.f32.mrf.mxu0
      %v1534 = vadd.f32 0.0, %v1533
      %1535 = vmatmul.f32.gmra.mxu0 %v1388
      %v1536 = vpop.f32.mrf.mxu0
      %v1537 = vadd.f32 0.0, %v1536
      %1538 = vmatmul.f32.gmra.mxu0 %v1391
      %v1539 = vpop.f32.mrf.mxu0
      %v1540 = vadd.f32 0.0, %v1539
      %1541 = vmatmul.f32.gmra.mxu0 %v1394
      %v1542 = vpop.f32.mrf.mxu0
      %v1543 = vadd.f32 0.0, %v1542
      %1544 = vmatmul.f32.gmra.mxu0 %v1397
      %v1545 = vpop.f32.mrf.mxu0
      %v1546 = vadd.f32 0.0, %v1545
      %1547 = vmatmul.f32.gmra.mxu0 %v1400
      %v1548 = vpop.f32.mrf.mxu0
      %v1549 = vadd.f32 0.0, %v1548
      %1550 = vmatmul.f32.gmra.mxu0 %v1403
      %v1551 = vpop.f32.mrf.mxu0
      %v1552 = vadd.f32 0.0, %v1551
      %1553 = vmatmul.f32.gmra.mxu0 %v1406
      %v1554 = vpop.f32.mrf.mxu0
      %v1555 = vadd.f32 0.0, %v1554
      %1556 = vmatmul.f32.gmra.mxu0 %v1409
      %v1557 = vpop.f32.mrf.mxu0
      %v1558 = vadd.f32 0.0, %v1557
      %1559 = vmatmul.f32.gmra.mxu0 %v1412
      %v1560 = vpop.f32.mrf.mxu0
      %v1561 = vadd.f32 0.0, %v1560
      %1562 = vmatmul.f32.gmra.mxu0 %v1415
      %v1563 = vpop.f32.mrf.mxu0
      %v1564 = vadd.f32 0.0, %v1563
      %1565 = vmatmul.f32.gmra.mxu0 %v1418
      %v1566 = vpop.f32.mrf.mxu0
      %v1567 = vadd.f32 0.0, %v1566
      %1568 = vmatmul.f32.gmra.mxu0 %v1421
      %v1569 = vpop.f32.mrf.mxu0
      %v1570 = vadd.f32 0.0, %v1569
      %1571 = vmatmul.f32.gmra.mxu0 %v1424
      %v1572 = vpop.f32.mrf.mxu0
      %v1573 = vadd.f32 0.0, %v1572
      %1574 = vmatmul.f32.gmra.mxu0 %v1427
      %v1575 = vpop.f32.mrf.mxu0
      %v1576 = vadd.f32 0.0, %v1575
      %1577 = vmatmul.f32.gmra.mxu0 %v1430
      %v1578 = vpop.f32.mrf.mxu0
      %v1579 = vadd.f32 0.0, %v1578
      %1580 = vmatmul.f32.gmra.mxu0 %v1433
      %v1581 = vpop.f32.mrf.mxu0
      %v1582 = vadd.f32 0.0, %v1581
      %1583 = vmatmul.f32.gmra.mxu0 %v1436
      %v1584 = vpop.f32.mrf.mxu0
      %v1585 = vadd.f32 0.0, %v1584
      %1586 = vmatmul.f32.gmra.mxu0 %v1439
      %v1587 = vpop.f32.mrf.mxu0
      %v1588 = vadd.f32 0.0, %v1587
      %1589 = vmatmul.f32.gmra.mxu0 %v1442
      %v1590 = vpop.f32.mrf.mxu0
      %v1591 = vadd.f32 0.0, %v1590
      %1592 = vmatmul.f32.gmra.mxu0 %v1445
      %v1593 = vpop.f32.mrf.mxu0
      %v1594 = vadd.f32 0.0, %v1593
      %1595 = vmatmul.f32.gmra.mxu0 %v1448
      %v1596 = vpop.f32.mrf.mxu0
      %v1597 = vadd.f32 0.0, %v1596
      %1598 = vmatmul.f32.gmra.mxu0 %v1451
      %v1599 = vpop.f32.mrf.mxu0
      %v1600 = vadd.f32 0.0, %v1599
      %1601 = vmatmul.f32.gmra.mxu0 %v1454
      %v1602 = vpop.f32.mrf.mxu0
      %v1603 = vadd.f32 0.0, %v1602
      %1604 = vmatmul.f32.gmra.mxu0 %v1457
      %v1605 = vpop.f32.mrf.mxu0
      %v1606 = vadd.f32 0.0, %v1605
      %1607 = vmatmul.f32.gmra.mxu0 %v1460
      %v1608 = vpop.f32.mrf.mxu0
      %v1609 = vadd.f32 0.0, %v1608
      %1610 = vmatmul.f32.gmra.mxu0 %v1463
      %v1611 = vpop.f32.mrf.mxu0
      %v1612 = vadd.f32 0.0, %v1611
      %1613 = vmatmul.f32.gmra.mxu0 %v1466
      %v1614 = vpop.f32.mrf.mxu0
      %v1615 = vadd.f32 0.0, %v1614
      %1616 = vmatmul.f32.gmra.mxu0 %v1469
      %v1617 = vpop.f32.mrf.mxu0
      %v1618 = vadd.f32 0.0, %v1617
      %1619 = vmatmul.f32.gmra.mxu0 %v1472
      %v1620 = vpop.f32.mrf.mxu0
      %v1621 = vadd.f32 0.0, %v1620
      %1622 = vmatmul.f32.gmra.mxu0 %v1475
      %v1623 = vpop.f32.mrf.mxu0
      %v1624 = vadd.f32 0.0, %v1623
      %1625 = vmatmul.f32.gmra.mxu0 %v1478
      %v1626 = vpop.f32.mrf.mxu0
      %v1627 = vadd.f32 0.0, %v1626
      %1628 = vmatmul.f32.gmra.mxu0 %v1481
      %v1629 = vpop.f32.mrf.mxu0
      %v1630 = vadd.f32 0.0, %v1629
      %1631 = vmatmul.f32.gmra.mxu0 %v1484
      %v1632 = vpop.f32.mrf.mxu0
      %v1633 = vadd.f32 0.0, %v1632
      %1634 = vmatmul.f32.gmra.mxu0 %v1487
      %v1635 = vpop.f32.mrf.mxu0
      %v1636 = vadd.f32 0.0, %v1635
      %1637 = vmatmul.f32.gmra.mxu0 %v1490
      %v1638 = vpop.f32.mrf.mxu0
      %v1639 = vadd.f32 0.0, %v1638
      %1640 = vdwg.mxu0
      %v1641 = vadd.f32 %v1264, %v1513
      %v1642 = vadd.f32 %v1265, %v1516
      %v1643 = vadd.f32 %v1266, %v1519
      %v1644 = vadd.f32 %v1267, %v1522
      %v1645 = vadd.f32 %v1268, %v1525
      %v1646 = vadd.f32 %v1269, %v1528
      %v1647 = vadd.f32 %v1270, %v1531
      %v1648 = vadd.f32 %v1271, %v1534
      %v1649 = vadd.f32 %v1272, %v1537
      %v1650 = vadd.f32 %v1273, %v1540
      %v1651 = vadd.f32 %v1274, %v1543
      %v1652 = vadd.f32 %v1275, %v1546
      %v1653 = vadd.f32 %v1276, %v1549
      %v1654 = vadd.f32 %v1277, %v1552
      %v1655 = vadd.f32 %v1278, %v1555
      %v1656 = vadd.f32 %v1279, %v1558
      %v1657 = vadd.f32 %v1280, %v1561
      %v1658 = vadd.f32 %v1281, %v1564
      %v1659 = vadd.f32 %v1282, %v1567
      %v1660 = vadd.f32 %v1283, %v1570
      %v1661 = vadd.f32 %v1284, %v1573
      %v1662 = vadd.f32 %v1285, %v1576
      %v1663 = vadd.f32 %v1286, %v1579
      %v1664 = vadd.f32 %v1287, %v1582
      %v1665 = vadd.f32 %v1288, %v1585
      %v1666 = vadd.f32 %v1289, %v1588
      %v1667 = vadd.f32 %v1290, %v1591
      %v1668 = vadd.f32 %v1291, %v1594
      %v1669 = vadd.f32 %v1292, %v1597
      %v1670 = vadd.f32 %v1293, %v1600
      %v1671 = vadd.f32 %v1294, %v1603
      %v1672 = vadd.f32 %v1295, %v1606
      %v1673 = vadd.f32 %v1296, %v1609
      %v1674 = vadd.f32 %v1297, %v1612
      %v1675 = vadd.f32 %v1298, %v1615
      %v1676 = vadd.f32 %v1299, %v1618
      %v1677 = vadd.f32 %v1300, %v1621
      %v1678 = vadd.f32 %v1301, %v1624
      %v1679 = vadd.f32 %v1302, %v1627
      %v1680 = vadd.f32 %v1303, %v1630
      %v1681 = vadd.f32 %v1304, %v1633
      %v1682 = vadd.f32 %v1305, %v1636
      %v1683 = vadd.f32 %v1306, %v1639
      %v1684 = vld [vmem:[%s165 + $0x8] sm:$0xff]
      %v1685 = vld [vmem:[%s165 + $0x10] sm:$0xff]
      %v1686 = vld [vmem:[%s165 + $0x18] sm:$0xff]
      %v1687 = vld [vmem:[%s165 + $0x20] sm:$0xff]
      %v1688 = vld [vmem:[%s165 + $0x28] sm:$0xff]
      %v1689 = vld [vmem:[%s165 + $0x30] sm:$0xff]
      %v1690 = vld [vmem:[%s165 + $0x38] sm:$0xff]
      %v1691 = vld [vmem:[%s165 + $0x40] sm:$0xff]
      %v1692 = vld [vmem:[%s165 + $0x48] sm:$0xff]
      %v1693 = vld [vmem:[%s165 + $0x50] sm:$0xff]
      %v1694 = vld [vmem:[%s165 + $0x58] sm:$0xff]
      %v1695 = vld [vmem:[%s165 + $0x60] sm:$0xff]
      %v1696 = vld [vmem:[%s165 + $0x68] sm:$0xff]
      %v1697 = vld [vmem:[%s165 + $0x70] sm:$0xff]
      %v1698 = vld [vmem:[%s165 + $0x78] sm:$0xff]
      %v1699 = vld [vmem:[%s165 + $0x80] sm:$0xff]
      %v1700 = vld [vmem:[%s165 + $0x88] sm:$0xff]
      %v1701 = vld [vmem:[%s165 + $0x90] sm:$0xff]
      %v1702 = vld [vmem:[%s165 + $0x98] sm:$0xff]
      %v1703 = vld [vmem:[%s165 + $0xa0] sm:$0xff]
      %v1704 = vld [vmem:[%s165 + $0xa8] sm:$0xff]
      %v1705 = vld [vmem:[%s165 + $0xb0] sm:$0xff]
      %v1706 = vld [vmem:[%s165 + $0xb8] sm:$0xff]
      %v1707 = vld [vmem:[%s165 + $0xc0] sm:$0xff]
      %v1708 = vld [vmem:[%s165 + $0xc8] sm:$0xff]
      %v1709 = vld [vmem:[%s165 + $0xd0] sm:$0xff]
      %v1710 = vld [vmem:[%s165 + $0xd8] sm:$0xff]
      %v1711 = vld [vmem:[%s165 + $0xe0] sm:$0xff]
      %v1712 = vld [vmem:[%s165 + $0xe8] sm:$0xff]
      %v1713 = vld [vmem:[%s165 + $0xf0] sm:$0xff]
      %v1714 = vld [vmem:[%s165 + $0xf8] sm:$0xff]
      %v1715 = vld [vmem:[%s165 + $0x100] sm:$0xff]
      %v1716 = vld [vmem:[%s165 + $0x108] sm:$0xff]
      %v1717 = vld [vmem:[%s165 + $0x110] sm:$0xff]
      %v1718 = vld [vmem:[%s165 + $0x118] sm:$0xff]
      %v1719 = vld [vmem:[%s165 + $0x120] sm:$0xff]
      %v1720 = vld [vmem:[%s165 + $0x128] sm:$0xff]
      %v1721 = vld [vmem:[%s165 + $0x130] sm:$0xff]
      %v1722 = vld [vmem:[%s165 + $0x138] sm:$0xff]
      %v1723 = vld [vmem:[%s165 + $0x140] sm:$0xff]
      %v1724 = vld [vmem:[%s165 + $0x148] sm:$0xff]
      %v1725 = vld [vmem:[%s165 + $0x150] sm:$0xff]
      %v1726 = vld [vmem:[%s165 + $0x158] sm:$0xff]
      %s1727 = scalar_lea.vmem %s1, 384
      %v1728 = vld [vmem:[%s1727] sm:$0xff]
      %v1729 = vld [vmem:[%s1727 + $0x8] sm:$0xff]
      %v1730 = vld [vmem:[%s1727 + $0x10] sm:$0xff]
      %v1731 = vld [vmem:[%s1727 + $0x18] sm:$0xff]
      %v1732 = vld [vmem:[%s1727 + $0x20] sm:$0xff]
      %v1733 = vld [vmem:[%s1727 + $0x28] sm:$0xff]
      %v1734 = vld [vmem:[%s1727 + $0x30] sm:$0xff]
      %v1735 = vld [vmem:[%s1727 + $0x38] sm:$0xff]
      %v1736 = vld [vmem:[%s1727 + $0x40] sm:$0xff]
      %v1737 = vld [vmem:[%s1727 + $0x48] sm:$0xff]
      %v1738 = vld [vmem:[%s1727 + $0x50] sm:$0xff]
      %v1739 = vld [vmem:[%s1727 + $0x58] sm:$0x3]
      %v1741 = vsel %vm230, %v1684, 0
      %v1744 = vsel %vm230, %v1685, 0
      %v1747 = vsel %vm230, %v1686, 0
      %v1750 = vsel %vm230, %v1687, 0
      %v1753 = vsel %vm230, %v1688, 0
      %v1756 = vsel %vm230, %v1689, 0
      %v1759 = vsel %vm230, %v1690, 0
      %v1762 = vsel %vm230, %v1691, 0
      %v1765 = vsel %vm230, %v1692, 0
      %v1768 = vsel %vm230, %v1693, 0
      %v1771 = vsel %vm230, %v1694, 0
      %v1774 = vsel %vm230, %v1695, 0
      %v1777 = vsel %vm230, %v1696, 0
      %v1780 = vsel %vm230, %v1697, 0
      %v1783 = vsel %vm230, %v1698, 0
      %v1786 = vsel %vm230, %v1699, 0
      %v1789 = vsel %vm230, %v1700, 0
      %v1792 = vsel %vm230, %v1701, 0
      %v1795 = vsel %vm230, %v1702, 0
      %v1798 = vsel %vm230, %v1703, 0
      %v1801 = vsel %vm230, %v1704, 0
      %v1804 = vsel %vm230, %v1705, 0
      %v1807 = vsel %vm230, %v1706, 0
      %v1810 = vsel %vm230, %v1707, 0
      %v1813 = vsel %vm230, %v1708, 0
      %v1816 = vsel %vm230, %v1709, 0
      %v1819 = vsel %vm230, %v1710, 0
      %v1822 = vsel %vm230, %v1711, 0
      %v1825 = vsel %vm230, %v1712, 0
      %v1828 = vsel %vm230, %v1713, 0
      %v1831 = vsel %vm230, %v1714, 0
      %v1834 = vsel %vm230, %v1715, 0
      %v1837 = vsel %vm230, %v1716, 0
      %v1840 = vsel %vm230, %v1717, 0
      %v1843 = vsel %vm230, %v1718, 0
      %v1846 = vsel %vm230, %v1719, 0
      %v1849 = vsel %vm230, %v1720, 0
      %v1852 = vsel %vm230, %v1721, 0
      %v1855 = vsel %vm230, %v1722, 0
      %v1858 = vsel %vm230, %v1723, 0
      %v1861 = vsel %vm230, %v1724, 0
      %v1864 = vsel %vm230, %v1725, 0
      %v1867 = vsel %vm230, %v1726, 0
      %v1870 = vsel %vm360, %v1739, 0
      %1872 = vmatpush.msra.mxu0 0.0
      %1873 = vmatpush.msra.mxu0 0.0
      %1874 = vmatpush.msra.mxu0 0.0
      %1875 = vmatpush.msra.mxu0 0.0
      %1876 = vmatpush.msra.mxu0 %v1870
      %1877 = vmatpush.msra.mxu0 %v1738
      %1878 = vmatpush.msra.mxu0 %v1737
      %1879 = vmatpush.msra.mxu0 %v1736
      %1880 = vmatpush.msra.mxu0 %v1735
      %1881 = vmatpush.msra.mxu0 %v1734
      %1882 = vmatpush.msra.mxu0 %v1733
      %1883 = vmatpush.msra.mxu0 %v1732
      %1884 = vmatpush.msra.mxu0 %v1731
      %1885 = vmatpush.msra.mxu0 %v1730
      %1886 = vmatpush.msra.mxu0 %v1729
      %1887 = vmatpush.msra.mxu0 %v1728
      %1888 = vmatmul.f32.gmra.mxu0 %v1741
      %v1889 = vpop.f32.mrf.mxu0
      %v1890 = vadd.f32 0.0, %v1889
      %1891 = vmatmul.f32.gmra.mxu0 %v1744
      %v1892 = vpop.f32.mrf.mxu0
      %v1893 = vadd.f32 0.0, %v1892
      %1894 = vmatmul.f32.gmra.mxu0 %v1747
      %v1895 = vpop.f32.mrf.mxu0
      %v1896 = vadd.f32 0.0, %v1895
      %1897 = vmatmul.f32.gmra.mxu0 %v1750
      %v1898 = vpop.f32.mrf.mxu0
      %v1899 = vadd.f32 0.0, %v1898
      %1900 = vmatmul.f32.gmra.mxu0 %v1753
      %v1901 = vpop.f32.mrf.mxu0
      %v1902 = vadd.f32 0.0, %v1901
      %1903 = vmatmul.f32.gmra.mxu0 %v1756
      %v1904 = vpop.f32.mrf.mxu0
      %v1905 = vadd.f32 0.0, %v1904
      %1906 = vmatmul.f32.gmra.mxu0 %v1759
      %v1907 = vpop.f32.mrf.mxu0
      %v1908 = vadd.f32 0.0, %v1907
      %1909 = vmatmul.f32.gmra.mxu0 %v1762
      %v1910 = vpop.f32.mrf.mxu0
      %v1911 = vadd.f32 0.0, %v1910
      %1912 = vmatmul.f32.gmra.mxu0 %v1765
      %v1913 = vpop.f32.mrf.mxu0
      %v1914 = vadd.f32 0.0, %v1913
      %1915 = vmatmul.f32.gmra.mxu0 %v1768
      %v1916 = vpop.f32.mrf.mxu0
      %v1917 = vadd.f32 0.0, %v1916
      %1918 = vmatmul.f32.gmra.mxu0 %v1771
      %v1919 = vpop.f32.mrf.mxu0
      %v1920 = vadd.f32 0.0, %v1919
      %1921 = vmatmul.f32.gmra.mxu0 %v1774
      %v1922 = vpop.f32.mrf.mxu0
      %v1923 = vadd.f32 0.0, %v1922
      %1924 = vmatmul.f32.gmra.mxu0 %v1777
      %v1925 = vpop.f32.mrf.mxu0
      %v1926 = vadd.f32 0.0, %v1925
      %1927 = vmatmul.f32.gmra.mxu0 %v1780
      %v1928 = vpop.f32.mrf.mxu0
      %v1929 = vadd.f32 0.0, %v1928
      %1930 = vmatmul.f32.gmra.mxu0 %v1783
      %v1931 = vpop.f32.mrf.mxu0
      %v1932 = vadd.f32 0.0, %v1931
      %1933 = vmatmul.f32.gmra.mxu0 %v1786
      %v1934 = vpop.f32.mrf.mxu0
      %v1935 = vadd.f32 0.0, %v1934
      %1936 = vmatmul.f32.gmra.mxu0 %v1789
      %v1937 = vpop.f32.mrf.mxu0
      %v1938 = vadd.f32 0.0, %v1937
      %1939 = vmatmul.f32.gmra.mxu0 %v1792
      %v1940 = vpop.f32.mrf.mxu0
      %v1941 = vadd.f32 0.0, %v1940
      %1942 = vmatmul.f32.gmra.mxu0 %v1795
      %v1943 = vpop.f32.mrf.mxu0
      %v1944 = vadd.f32 0.0, %v1943
      %1945 = vmatmul.f32.gmra.mxu0 %v1798
      %v1946 = vpop.f32.mrf.mxu0
      %v1947 = vadd.f32 0.0, %v1946
      %1948 = vmatmul.f32.gmra.mxu0 %v1801
      %v1949 = vpop.f32.mrf.mxu0
      %v1950 = vadd.f32 0.0, %v1949
      %1951 = vmatmul.f32.gmra.mxu0 %v1804
      %v1952 = vpop.f32.mrf.mxu0
      %v1953 = vadd.f32 0.0, %v1952
      %1954 = vmatmul.f32.gmra.mxu0 %v1807
      %v1955 = vpop.f32.mrf.mxu0
      %v1956 = vadd.f32 0.0, %v1955
      %1957 = vmatmul.f32.gmra.mxu0 %v1810
      %v1958 = vpop.f32.mrf.mxu0
      %v1959 = vadd.f32 0.0, %v1958
      %1960 = vmatmul.f32.gmra.mxu0 %v1813
      %v1961 = vpop.f32.mrf.mxu0
      %v1962 = vadd.f32 0.0, %v1961
      %1963 = vmatmul.f32.gmra.mxu0 %v1816
      %v1964 = vpop.f32.mrf.mxu0
      %v1965 = vadd.f32 0.0, %v1964
      %1966 = vmatmul.f32.gmra.mxu0 %v1819
      %v1967 = vpop.f32.mrf.mxu0
      %v1968 = vadd.f32 0.0, %v1967
      %1969 = vmatmul.f32.gmra.mxu0 %v1822
      %v1970 = vpop.f32.mrf.mxu0
      %v1971 = vadd.f32 0.0, %v1970
      %1972 = vmatmul.f32.gmra.mxu0 %v1825
      %v1973 = vpop.f32.mrf.mxu0
      %v1974 = vadd.f32 0.0, %v1973
      %1975 = vmatmul.f32.gmra.mxu0 %v1828
      %v1976 = vpop.f32.mrf.mxu0
      %v1977 = vadd.f32 0.0, %v1976
      %1978 = vmatmul.f32.gmra.mxu0 %v1831
      %v1979 = vpop.f32.mrf.mxu0
      %v1980 = vadd.f32 0.0, %v1979
      %1981 = vmatmul.f32.gmra.mxu0 %v1834
      %v1982 = vpop.f32.mrf.mxu0
      %v1983 = vadd.f32 0.0, %v1982
      %1984 = vmatmul.f32.gmra.mxu0 %v1837
      %v1985 = vpop.f32.mrf.mxu0
      %v1986 = vadd.f32 0.0, %v1985
      %1987 = vmatmul.f32.gmra.mxu0 %v1840
      %v1988 = vpop.f32.mrf.mxu0
      %v1989 = vadd.f32 0.0, %v1988
      %1990 = vmatmul.f32.gmra.mxu0 %v1843
      %v1991 = vpop.f32.mrf.mxu0
      %v1992 = vadd.f32 0.0, %v1991
      %1993 = vmatmul.f32.gmra.mxu0 %v1846
      %v1994 = vpop.f32.mrf.mxu0
      %v1995 = vadd.f32 0.0, %v1994
      %1996 = vmatmul.f32.gmra.mxu0 %v1849
      %v1997 = vpop.f32.mrf.mxu0
      %v1998 = vadd.f32 0.0, %v1997
      %1999 = vmatmul.f32.gmra.mxu0 %v1852
      %v2000 = vpop.f32.mrf.mxu0
      %v2001 = vadd.f32 0.0, %v2000
      %2002 = vmatmul.f32.gmra.mxu0 %v1855
      %v2003 = vpop.f32.mrf.mxu0
      %v2004 = vadd.f32 0.0, %v2003
      %2005 = vmatmul.f32.gmra.mxu0 %v1858
      %v2006 = vpop.f32.mrf.mxu0
      %v2007 = vadd.f32 0.0, %v2006
      %2008 = vmatmul.f32.gmra.mxu0 %v1861
      %v2009 = vpop.f32.mrf.mxu0
      %v2010 = vadd.f32 0.0, %v2009
      %2011 = vmatmul.f32.gmra.mxu0 %v1864
      %v2012 = vpop.f32.mrf.mxu0
      %v2013 = vadd.f32 0.0, %v2012
      %2014 = vmatmul.f32.gmra.mxu0 %v1867
      %v2015 = vpop.f32.mrf.mxu0
      %v2016 = vadd.f32 0.0, %v2015
      %2017 = vdwg.mxu0
      %v2018 = vadd.f32 %v1641, %v1890
      %v2019 = vadd.f32 %v1642, %v1893
      %v2020 = vadd.f32 %v1643, %v1896
      %v2021 = vadd.f32 %v1644, %v1899
      %v2022 = vadd.f32 %v1645, %v1902
      %v2023 = vadd.f32 %v1646, %v1905
      %v2024 = vadd.f32 %v1647, %v1908
      %v2025 = vadd.f32 %v1648, %v1911
      %v2026 = vadd.f32 %v1649, %v1914
      %v2027 = vadd.f32 %v1650, %v1917
      %v2028 = vadd.f32 %v1651, %v1920
      %v2029 = vadd.f32 %v1652, %v1923
      %v2030 = vadd.f32 %v1653, %v1926
      %v2031 = vadd.f32 %v1654, %v1929
      %v2032 = vadd.f32 %v1655, %v1932
      %v2033 = vadd.f32 %v1656, %v1935
      %v2034 = vadd.f32 %v1657, %v1938
      %v2035 = vadd.f32 %v1658, %v1941
      %v2036 = vadd.f32 %v1659, %v1944
      %v2037 = vadd.f32 %v1660, %v1947
      %v2038 = vadd.f32 %v1661, %v1950
      %v2039 = vadd.f32 %v1662, %v1953
      %v2040 = vadd.f32 %v1663, %v1956
      %v2041 = vadd.f32 %v1664, %v1959
      %v2042 = vadd.f32 %v1665, %v1962
      %v2043 = vadd.f32 %v1666, %v1965
      %v2044 = vadd.f32 %v1667, %v1968
      %v2045 = vadd.f32 %v1668, %v1971
      %v2046 = vadd.f32 %v1669, %v1974
      %v2047 = vadd.f32 %v1670, %v1977
      %v2048 = vadd.f32 %v1671, %v1980
      %v2049 = vadd.f32 %v1672, %v1983
      %v2050 = vadd.f32 %v1673, %v1986
      %v2051 = vadd.f32 %v1674, %v1989
      %v2052 = vadd.f32 %v1675, %v1992
      %v2053 = vadd.f32 %v1676, %v1995
      %v2054 = vadd.f32 %v1677, %v1998
      %v2055 = vadd.f32 %v1678, %v2001
      %v2056 = vadd.f32 %v1679, %v2004
      %v2057 = vadd.f32 %v1680, %v2007
      %v2058 = vadd.f32 %v1681, %v2010
      %v2059 = vadd.f32 %v1682, %v2013
      %v2060 = vadd.f32 %v1683, %v2016
      %v2061 = vld [vmem:[%s165 + $0x9] sm:$0xff]
      %v2062 = vld [vmem:[%s165 + $0x11] sm:$0xff]
      %v2063 = vld [vmem:[%s165 + $0x19] sm:$0xff]
      %v2064 = vld [vmem:[%s165 + $0x21] sm:$0xff]
      %v2065 = vld [vmem:[%s165 + $0x29] sm:$0xff]
      %v2066 = vld [vmem:[%s165 + $0x31] sm:$0xff]
      %v2067 = vld [vmem:[%s165 + $0x39] sm:$0xff]
      %v2068 = vld [vmem:[%s165 + $0x41] sm:$0xff]
      %v2069 = vld [vmem:[%s165 + $0x49] sm:$0xff]
      %v2070 = vld [vmem:[%s165 + $0x51] sm:$0xff]
      %v2071 = vld [vmem:[%s165 + $0x59] sm:$0xff]
      %v2072 = vld [vmem:[%s165 + $0x61] sm:$0xff]
      %v2073 = vld [vmem:[%s165 + $0x69] sm:$0xff]
      %v2074 = vld [vmem:[%s165 + $0x71] sm:$0xff]
      %v2075 = vld [vmem:[%s165 + $0x79] sm:$0xff]
      %v2076 = vld [vmem:[%s165 + $0x81] sm:$0xff]
      %v2077 = vld [vmem:[%s165 + $0x89] sm:$0xff]
      %v2078 = vld [vmem:[%s165 + $0x91] sm:$0xff]
      %v2079 = vld [vmem:[%s165 + $0x99] sm:$0xff]
      %v2080 = vld [vmem:[%s165 + $0xa1] sm:$0xff]
      %v2081 = vld [vmem:[%s165 + $0xa9] sm:$0xff]
      %v2082 = vld [vmem:[%s165 + $0xb1] sm:$0xff]
      %v2083 = vld [vmem:[%s165 + $0xb9] sm:$0xff]
      %v2084 = vld [vmem:[%s165 + $0xc1] sm:$0xff]
      %v2085 = vld [vmem:[%s165 + $0xc9] sm:$0xff]
      %v2086 = vld [vmem:[%s165 + $0xd1] sm:$0xff]
      %v2087 = vld [vmem:[%s165 + $0xd9] sm:$0xff]
      %v2088 = vld [vmem:[%s165 + $0xe1] sm:$0xff]
      %v2089 = vld [vmem:[%s165 + $0xe9] sm:$0xff]
      %v2090 = vld [vmem:[%s165 + $0xf1] sm:$0xff]
      %v2091 = vld [vmem:[%s165 + $0xf9] sm:$0xff]
      %v2092 = vld [vmem:[%s165 + $0x101] sm:$0xff]
      %v2093 = vld [vmem:[%s165 + $0x109] sm:$0xff]
      %v2094 = vld [vmem:[%s165 + $0x111] sm:$0xff]
      %v2095 = vld [vmem:[%s165 + $0x119] sm:$0xff]
      %v2096 = vld [vmem:[%s165 + $0x121] sm:$0xff]
      %v2097 = vld [vmem:[%s165 + $0x129] sm:$0xff]
      %v2098 = vld [vmem:[%s165 + $0x131] sm:$0xff]
      %v2099 = vld [vmem:[%s165 + $0x139] sm:$0xff]
      %v2100 = vld [vmem:[%s165 + $0x141] sm:$0xff]
      %v2101 = vld [vmem:[%s165 + $0x149] sm:$0xff]
      %v2102 = vld [vmem:[%s165 + $0x151] sm:$0xff]
      %v2103 = vld [vmem:[%s165 + $0x159] sm:$0xff]
      %s2104 = scalar_lea.vmem %s1, 480
      %v2105 = vld [vmem:[%s2104] sm:$0xff]
      %v2106 = vld [vmem:[%s2104 + $0x8] sm:$0xff]
      %v2107 = vld [vmem:[%s2104 + $0x10] sm:$0xff]
      %v2108 = vld [vmem:[%s2104 + $0x18] sm:$0xff]
      %v2109 = vld [vmem:[%s2104 + $0x20] sm:$0xff]
      %v2110 = vld [vmem:[%s2104 + $0x28] sm:$0xff]
      %v2111 = vld [vmem:[%s2104 + $0x30] sm:$0xff]
      %v2112 = vld [vmem:[%s2104 + $0x38] sm:$0xff]
      %v2113 = vld [vmem:[%s2104 + $0x40] sm:$0xff]
      %v2114 = vld [vmem:[%s2104 + $0x48] sm:$0xff]
      %v2115 = vld [vmem:[%s2104 + $0x50] sm:$0xff]
      %v2116 = vld [vmem:[%s2104 + $0x58] sm:$0x3]
      %v2118 = vsel %vm230, %v2061, 0
      %v2121 = vsel %vm230, %v2062, 0
      %v2124 = vsel %vm230, %v2063, 0
      %v2127 = vsel %vm230, %v2064, 0
      %v2130 = vsel %vm230, %v2065, 0
      %v2133 = vsel %vm230, %v2066, 0
      %v2136 = vsel %vm230, %v2067, 0
      %v2139 = vsel %vm230, %v2068, 0
      %v2142 = vsel %vm230, %v2069, 0
      %v2145 = vsel %vm230, %v2070, 0
      %v2148 = vsel %vm230, %v2071, 0
      %v2151 = vsel %vm230, %v2072, 0
      %v2154 = vsel %vm230, %v2073, 0
      %v2157 = vsel %vm230, %v2074, 0
      %v2160 = vsel %vm230, %v2075, 0
      %v2163 = vsel %vm230, %v2076, 0
      %v2166 = vsel %vm230, %v2077, 0
      %v2169 = vsel %vm230, %v2078, 0
      %v2172 = vsel %vm230, %v2079, 0
      %v2175 = vsel %vm230, %v2080, 0
      %v2178 = vsel %vm230, %v2081, 0
      %v2181 = vsel %vm230, %v2082, 0
      %v2184 = vsel %vm230, %v2083, 0
      %v2187 = vsel %vm230, %v2084, 0
      %v2190 = vsel %vm230, %v2085, 0
      %v2193 = vsel %vm230, %v2086, 0
      %v2196 = vsel %vm230, %v2087, 0
      %v2199 = vsel %vm230, %v2088, 0
      %v2202 = vsel %vm230, %v2089, 0
      %v2205 = vsel %vm230, %v2090, 0
      %v2208 = vsel %vm230, %v2091, 0
      %v2211 = vsel %vm230, %v2092, 0
      %v2214 = vsel %vm230, %v2093, 0
      %v2217 = vsel %vm230, %v2094, 0
      %v2220 = vsel %vm230, %v2095, 0
      %v2223 = vsel %vm230, %v2096, 0
      %v2226 = vsel %vm230, %v2097, 0
      %v2229 = vsel %vm230, %v2098, 0
      %v2232 = vsel %vm230, %v2099, 0
      %v2235 = vsel %vm230, %v2100, 0
      %v2238 = vsel %vm230, %v2101, 0
      %v2241 = vsel %vm230, %v2102, 0
      %v2244 = vsel %vm230, %v2103, 0
      %v2247 = vsel %vm360, %v2116, 0
      %2249 = vmatpush.msra.mxu0 0.0
      %2250 = vmatpush.msra.mxu0 0.0
      %2251 = vmatpush.msra.mxu0 0.0
      %2252 = vmatpush.msra.mxu0 0.0
      %2253 = vmatpush.msra.mxu0 %v2247
      %2254 = vmatpush.msra.mxu0 %v2115
      %2255 = vmatpush.msra.mxu0 %v2114
      %2256 = vmatpush.msra.mxu0 %v2113
      %2257 = vmatpush.msra.mxu0 %v2112
      %2258 = vmatpush.msra.mxu0 %v2111
      %2259 = vmatpush.msra.mxu0 %v2110
      %2260 = vmatpush.msra.mxu0 %v2109
      %2261 = vmatpush.msra.mxu0 %v2108
      %2262 = vmatpush.msra.mxu0 %v2107
      %2263 = vmatpush.msra.mxu0 %v2106
      %2264 = vmatpush.msra.mxu0 %v2105
      %2265 = vmatmul.f32.gmra.mxu0 %v2118
      %v2266 = vpop.f32.mrf.mxu0
      %v2267 = vadd.f32 0.0, %v2266
      %2268 = vmatmul.f32.gmra.mxu0 %v2121
      %v2269 = vpop.f32.mrf.mxu0
      %v2270 = vadd.f32 0.0, %v2269
      %2271 = vmatmul.f32.gmra.mxu0 %v2124
      %v2272 = vpop.f32.mrf.mxu0
      %v2273 = vadd.f32 0.0, %v2272
      %2274 = vmatmul.f32.gmra.mxu0 %v2127
      %v2275 = vpop.f32.mrf.mxu0
      %v2276 = vadd.f32 0.0, %v2275
      %2277 = vmatmul.f32.gmra.mxu0 %v2130
      %v2278 = vpop.f32.mrf.mxu0
      %v2279 = vadd.f32 0.0, %v2278
      %2280 = vmatmul.f32.gmra.mxu0 %v2133
      %v2281 = vpop.f32.mrf.mxu0
      %v2282 = vadd.f32 0.0, %v2281
      %2283 = vmatmul.f32.gmra.mxu0 %v2136
      %v2284 = vpop.f32.mrf.mxu0
      %v2285 = vadd.f32 0.0, %v2284
      %2286 = vmatmul.f32.gmra.mxu0 %v2139
      %v2287 = vpop.f32.mrf.mxu0
      %v2288 = vadd.f32 0.0, %v2287
      %2289 = vmatmul.f32.gmra.mxu0 %v2142
      %v2290 = vpop.f32.mrf.mxu0
      %v2291 = vadd.f32 0.0, %v2290
      %2292 = vmatmul.f32.gmra.mxu0 %v2145
      %v2293 = vpop.f32.mrf.mxu0
      %v2294 = vadd.f32 0.0, %v2293
      %2295 = vmatmul.f32.gmra.mxu0 %v2148
      %v2296 = vpop.f32.mrf.mxu0
      %v2297 = vadd.f32 0.0, %v2296
      %2298 = vmatmul.f32.gmra.mxu0 %v2151
      %v2299 = vpop.f32.mrf.mxu0
      %v2300 = vadd.f32 0.0, %v2299
      %2301 = vmatmul.f32.gmra.mxu0 %v2154
      %v2302 = vpop.f32.mrf.mxu0
      %v2303 = vadd.f32 0.0, %v2302
      %2304 = vmatmul.f32.gmra.mxu0 %v2157
      %v2305 = vpop.f32.mrf.mxu0
      %v2306 = vadd.f32 0.0, %v2305
      %2307 = vmatmul.f32.gmra.mxu0 %v2160
      %v2308 = vpop.f32.mrf.mxu0
      %v2309 = vadd.f32 0.0, %v2308
      %2310 = vmatmul.f32.gmra.mxu0 %v2163
      %v2311 = vpop.f32.mrf.mxu0
      %v2312 = vadd.f32 0.0, %v2311
      %2313 = vmatmul.f32.gmra.mxu0 %v2166
      %v2314 = vpop.f32.mrf.mxu0
      %v2315 = vadd.f32 0.0, %v2314
      %2316 = vmatmul.f32.gmra.mxu0 %v2169
      %v2317 = vpop.f32.mrf.mxu0
      %v2318 = vadd.f32 0.0, %v2317
      %2319 = vmatmul.f32.gmra.mxu0 %v2172
      %v2320 = vpop.f32.mrf.mxu0
      %v2321 = vadd.f32 0.0, %v2320
      %2322 = vmatmul.f32.gmra.mxu0 %v2175
      %v2323 = vpop.f32.mrf.mxu0
      %v2324 = vadd.f32 0.0, %v2323
      %2325 = vmatmul.f32.gmra.mxu0 %v2178
      %v2326 = vpop.f32.mrf.mxu0
      %v2327 = vadd.f32 0.0, %v2326
      %2328 = vmatmul.f32.gmra.mxu0 %v2181
      %v2329 = vpop.f32.mrf.mxu0
      %v2330 = vadd.f32 0.0, %v2329
      %2331 = vmatmul.f32.gmra.mxu0 %v2184
      %v2332 = vpop.f32.mrf.mxu0
      %v2333 = vadd.f32 0.0, %v2332
      %2334 = vmatmul.f32.gmra.mxu0 %v2187
      %v2335 = vpop.f32.mrf.mxu0
      %v2336 = vadd.f32 0.0, %v2335
      %2337 = vmatmul.f32.gmra.mxu0 %v2190
      %v2338 = vpop.f32.mrf.mxu0
      %v2339 = vadd.f32 0.0, %v2338
      %2340 = vmatmul.f32.gmra.mxu0 %v2193
      %v2341 = vpop.f32.mrf.mxu0
      %v2342 = vadd.f32 0.0, %v2341
      %2343 = vmatmul.f32.gmra.mxu0 %v2196
      %v2344 = vpop.f32.mrf.mxu0
      %v2345 = vadd.f32 0.0, %v2344
      %2346 = vmatmul.f32.gmra.mxu0 %v2199
      %v2347 = vpop.f32.mrf.mxu0
      %v2348 = vadd.f32 0.0, %v2347
      %2349 = vmatmul.f32.gmra.mxu0 %v2202
      %v2350 = vpop.f32.mrf.mxu0
      %v2351 = vadd.f32 0.0, %v2350
      %2352 = vmatmul.f32.gmra.mxu0 %v2205
      %v2353 = vpop.f32.mrf.mxu0
      %v2354 = vadd.f32 0.0, %v2353
      %2355 = vmatmul.f32.gmra.mxu0 %v2208
      %v2356 = vpop.f32.mrf.mxu0
      %v2357 = vadd.f32 0.0, %v2356
      %2358 = vmatmul.f32.gmra.mxu0 %v2211
      %v2359 = vpop.f32.mrf.mxu0
      %v2360 = vadd.f32 0.0, %v2359
      %2361 = vmatmul.f32.gmra.mxu0 %v2214
      %v2362 = vpop.f32.mrf.mxu0
      %v2363 = vadd.f32 0.0, %v2362
      %2364 = vmatmul.f32.gmra.mxu0 %v2217
      %v2365 = vpop.f32.mrf.mxu0
      %v2366 = vadd.f32 0.0, %v2365
      %2367 = vmatmul.f32.gmra.mxu0 %v2220
      %v2368 = vpop.f32.mrf.mxu0
      %v2369 = vadd.f32 0.0, %v2368
      %2370 = vmatmul.f32.gmra.mxu0 %v2223
      %v2371 = vpop.f32.mrf.mxu0
      %v2372 = vadd.f32 0.0, %v2371
      %2373 = vmatmul.f32.gmra.mxu0 %v2226
      %v2374 = vpop.f32.mrf.mxu0
      %v2375 = vadd.f32 0.0, %v2374
      %2376 = vmatmul.f32.gmra.mxu0 %v2229
      %v2377 = vpop.f32.mrf.mxu0
      %v2378 = vadd.f32 0.0, %v2377
      %2379 = vmatmul.f32.gmra.mxu0 %v2232
      %v2380 = vpop.f32.mrf.mxu0
      %v2381 = vadd.f32 0.0, %v2380
      %2382 = vmatmul.f32.gmra.mxu0 %v2235
      %v2383 = vpop.f32.mrf.mxu0
      %v2384 = vadd.f32 0.0, %v2383
      %2385 = vmatmul.f32.gmra.mxu0 %v2238
      %v2386 = vpop.f32.mrf.mxu0
      %v2387 = vadd.f32 0.0, %v2386
      %2388 = vmatmul.f32.gmra.mxu0 %v2241
      %v2389 = vpop.f32.mrf.mxu0
      %v2390 = vadd.f32 0.0, %v2389
      %2391 = vmatmul.f32.gmra.mxu0 %v2244
      %v2392 = vpop.f32.mrf.mxu0
      %v2393 = vadd.f32 0.0, %v2392
      %2394 = vdwg.mxu0
      %v2395 = vadd.f32 %v2018, %v2267
      %v2396 = vadd.f32 %v2019, %v2270
      %v2397 = vadd.f32 %v2020, %v2273
      %v2398 = vadd.f32 %v2021, %v2276
      %v2399 = vadd.f32 %v2022, %v2279
      %v2400 = vadd.f32 %v2023, %v2282
      %v2401 = vadd.f32 %v2024, %v2285
      %v2402 = vadd.f32 %v2025, %v2288
      %v2403 = vadd.f32 %v2026, %v2291
      %v2404 = vadd.f32 %v2027, %v2294
      %v2405 = vadd.f32 %v2028, %v2297
      %v2406 = vadd.f32 %v2029, %v2300
      %v2407 = vadd.f32 %v2030, %v2303
      %v2408 = vadd.f32 %v2031, %v2306
      %v2409 = vadd.f32 %v2032, %v2309
      %v2410 = vadd.f32 %v2033, %v2312
      %v2411 = vadd.f32 %v2034, %v2315
      %v2412 = vadd.f32 %v2035, %v2318
      %v2413 = vadd.f32 %v2036, %v2321
      %v2414 = vadd.f32 %v2037, %v2324
      %v2415 = vadd.f32 %v2038, %v2327
      %v2416 = vadd.f32 %v2039, %v2330
      %v2417 = vadd.f32 %v2040, %v2333
      %v2418 = vadd.f32 %v2041, %v2336
      %v2419 = vadd.f32 %v2042, %v2339
      %v2420 = vadd.f32 %v2043, %v2342
      %v2421 = vadd.f32 %v2044, %v2345
      %v2422 = vadd.f32 %v2045, %v2348
      %v2423 = vadd.f32 %v2046, %v2351
      %v2424 = vadd.f32 %v2047, %v2354
      %v2425 = vadd.f32 %v2048, %v2357
      %v2426 = vadd.f32 %v2049, %v2360
      %v2427 = vadd.f32 %v2050, %v2363
      %v2428 = vadd.f32 %v2051, %v2366
      %v2429 = vadd.f32 %v2052, %v2369
      %v2430 = vadd.f32 %v2053, %v2372
      %v2431 = vadd.f32 %v2054, %v2375
      %v2432 = vadd.f32 %v2055, %v2378
      %v2433 = vadd.f32 %v2056, %v2381
      %v2434 = vadd.f32 %v2057, %v2384
      %v2435 = vadd.f32 %v2058, %v2387
      %v2436 = vadd.f32 %v2059, %v2390
      %v2437 = vadd.f32 %v2060, %v2393
      %v2438 = vld [vmem:[%s165 + $0xe] sm:$0xff]
      %v2439 = vld [vmem:[%s165 + $0x16] sm:$0xff]
      %v2440 = vld [vmem:[%s165 + $0x1e] sm:$0xff]
      %v2441 = vld [vmem:[%s165 + $0x26] sm:$0xff]
      %v2442 = vld [vmem:[%s165 + $0x2e] sm:$0xff]
      %v2443 = vld [vmem:[%s165 + $0x36] sm:$0xff]
      %v2444 = vld [vmem:[%s165 + $0x3e] sm:$0xff]
      %v2445 = vld [vmem:[%s165 + $0x46] sm:$0xff]
      %v2446 = vld [vmem:[%s165 + $0x4e] sm:$0xff]
      %v2447 = vld [vmem:[%s165 + $0x56] sm:$0xff]
      %v2448 = vld [vmem:[%s165 + $0x5e] sm:$0xff]
      %v2449 = vld [vmem:[%s165 + $0x66] sm:$0xff]
      %v2450 = vld [vmem:[%s165 + $0x6e] sm:$0xff]
      %v2451 = vld [vmem:[%s165 + $0x76] sm:$0xff]
      %v2452 = vld [vmem:[%s165 + $0x7e] sm:$0xff]
      %v2453 = vld [vmem:[%s165 + $0x86] sm:$0xff]
      %v2454 = vld [vmem:[%s165 + $0x8e] sm:$0xff]
      %v2455 = vld [vmem:[%s165 + $0x96] sm:$0xff]
      %v2456 = vld [vmem:[%s165 + $0x9e] sm:$0xff]
      %v2457 = vld [vmem:[%s165 + $0xa6] sm:$0xff]
      %v2458 = vld [vmem:[%s165 + $0xae] sm:$0xff]
      %v2459 = vld [vmem:[%s165 + $0xb6] sm:$0xff]
      %v2460 = vld [vmem:[%s165 + $0xbe] sm:$0xff]
      %v2461 = vld [vmem:[%s165 + $0xc6] sm:$0xff]
      %v2462 = vld [vmem:[%s165 + $0xce] sm:$0xff]
      %v2463 = vld [vmem:[%s165 + $0xd6] sm:$0xff]
      %v2464 = vld [vmem:[%s165 + $0xde] sm:$0xff]
      %v2465 = vld [vmem:[%s165 + $0xe6] sm:$0xff]
      %v2466 = vld [vmem:[%s165 + $0xee] sm:$0xff]
      %v2467 = vld [vmem:[%s165 + $0xf6] sm:$0xff]
      %v2468 = vld [vmem:[%s165 + $0xfe] sm:$0xff]
      %v2469 = vld [vmem:[%s165 + $0x106] sm:$0xff]
      %v2470 = vld [vmem:[%s165 + $0x10e] sm:$0xff]
      %v2471 = vld [vmem:[%s165 + $0x116] sm:$0xff]
      %v2472 = vld [vmem:[%s165 + $0x11e] sm:$0xff]
      %v2473 = vld [vmem:[%s165 + $0x126] sm:$0xff]
      %v2474 = vld [vmem:[%s165 + $0x12e] sm:$0xff]
      %v2475 = vld [vmem:[%s165 + $0x136] sm:$0xff]
      %v2476 = vld [vmem:[%s165 + $0x13e] sm:$0xff]
      %v2477 = vld [vmem:[%s165 + $0x146] sm:$0xff]
      %v2478 = vld [vmem:[%s165 + $0x14e] sm:$0xff]
      %v2479 = vld [vmem:[%s165 + $0x156] sm:$0xff]
      %v2480 = vld [vmem:[%s165 + $0x15e] sm:$0xff]
      %s2481 = scalar_lea.vmem %s1, 576
      %v2482 = vld [vmem:[%s2481] sm:$0xff]
      %v2483 = vld [vmem:[%s2481 + $0x8] sm:$0xff]
      %v2484 = vld [vmem:[%s2481 + $0x10] sm:$0xff]
      %v2485 = vld [vmem:[%s2481 + $0x18] sm:$0xff]
      %v2486 = vld [vmem:[%s2481 + $0x20] sm:$0xff]
      %v2487 = vld [vmem:[%s2481 + $0x28] sm:$0xff]
      %v2488 = vld [vmem:[%s2481 + $0x30] sm:$0xff]
      %v2489 = vld [vmem:[%s2481 + $0x38] sm:$0xff]
      %v2490 = vld [vmem:[%s2481 + $0x40] sm:$0xff]
      %v2491 = vld [vmem:[%s2481 + $0x48] sm:$0xff]
      %v2492 = vld [vmem:[%s2481 + $0x50] sm:$0xff]
      %v2493 = vld [vmem:[%s2481 + $0x58] sm:$0x3]
      %v2495 = vsel %vm230, %v2438, 0
      %v2498 = vsel %vm230, %v2439, 0
      %v2501 = vsel %vm230, %v2440, 0
      %v2504 = vsel %vm230, %v2441, 0
      %v2507 = vsel %vm230, %v2442, 0
      %v2510 = vsel %vm230, %v2443, 0
      %v2513 = vsel %vm230, %v2444, 0
      %v2516 = vsel %vm230, %v2445, 0
      %v2519 = vsel %vm230, %v2446, 0
      %v2522 = vsel %vm230, %v2447, 0
      %v2525 = vsel %vm230, %v2448, 0
      %v2528 = vsel %vm230, %v2449, 0
      %v2531 = vsel %vm230, %v2450, 0
      %v2534 = vsel %vm230, %v2451, 0
      %v2537 = vsel %vm230, %v2452, 0
      %v2540 = vsel %vm230, %v2453, 0
      %v2543 = vsel %vm230, %v2454, 0
      %v2546 = vsel %vm230, %v2455, 0
      %v2549 = vsel %vm230, %v2456, 0
      %v2552 = vsel %vm230, %v2457, 0
      %v2555 = vsel %vm230, %v2458, 0
      %v2558 = vsel %vm230, %v2459, 0
      %v2561 = vsel %vm230, %v2460, 0
      %v2564 = vsel %vm230, %v2461, 0
      %v2567 = vsel %vm230, %v2462, 0
      %v2570 = vsel %vm230, %v2463, 0
      %v2573 = vsel %vm230, %v2464, 0
      %v2576 = vsel %vm230, %v2465, 0
      %v2579 = vsel %vm230, %v2466, 0
      %v2582 = vsel %vm230, %v2467, 0
      %v2585 = vsel %vm230, %v2468, 0
      %v2588 = vsel %vm230, %v2469, 0
      %v2591 = vsel %vm230, %v2470, 0
      %v2594 = vsel %vm230, %v2471, 0
      %v2597 = vsel %vm230, %v2472, 0
      %v2600 = vsel %vm230, %v2473, 0
      %v2603 = vsel %vm230, %v2474, 0
      %v2606 = vsel %vm230, %v2475, 0
      %v2609 = vsel %vm230, %v2476, 0
      %v2612 = vsel %vm230, %v2477, 0
      %v2615 = vsel %vm230, %v2478, 0
      %v2618 = vsel %vm230, %v2479, 0
      %v2621 = vsel %vm230, %v2480, 0
      %v2624 = vsel %vm360, %v2493, 0
      %2626 = vmatpush.msra.mxu0 0.0
      %2627 = vmatpush.msra.mxu0 0.0
      %2628 = vmatpush.msra.mxu0 0.0
      %2629 = vmatpush.msra.mxu0 0.0
      %2630 = vmatpush.msra.mxu0 %v2624
      %2631 = vmatpush.msra.mxu0 %v2492
      %2632 = vmatpush.msra.mxu0 %v2491
      %2633 = vmatpush.msra.mxu0 %v2490
      %2634 = vmatpush.msra.mxu0 %v2489
      %2635 = vmatpush.msra.mxu0 %v2488
      %2636 = vmatpush.msra.mxu0 %v2487
      %2637 = vmatpush.msra.mxu0 %v2486
      %2638 = vmatpush.msra.mxu0 %v2485
      %2639 = vmatpush.msra.mxu0 %v2484
      %2640 = vmatpush.msra.mxu0 %v2483
      %2641 = vmatpush.msra.mxu0 %v2482
      %2642 = vmatmul.f32.gmra.mxu0 %v2495
      %v2643 = vpop.f32.mrf.mxu0
      %v2644 = vadd.f32 0.0, %v2643
      %2645 = vmatmul.f32.gmra.mxu0 %v2498
      %v2646 = vpop.f32.mrf.mxu0
      %v2647 = vadd.f32 0.0, %v2646
      %2648 = vmatmul.f32.gmra.mxu0 %v2501
      %v2649 = vpop.f32.mrf.mxu0
      %v2650 = vadd.f32 0.0, %v2649
      %2651 = vmatmul.f32.gmra.mxu0 %v2504
      %v2652 = vpop.f32.mrf.mxu0
      %v2653 = vadd.f32 0.0, %v2652
      %2654 = vmatmul.f32.gmra.mxu0 %v2507
      %v2655 = vpop.f32.mrf.mxu0
      %v2656 = vadd.f32 0.0, %v2655
      %2657 = vmatmul.f32.gmra.mxu0 %v2510
      %v2658 = vpop.f32.mrf.mxu0
      %v2659 = vadd.f32 0.0, %v2658
      %2660 = vmatmul.f32.gmra.mxu0 %v2513
      %v2661 = vpop.f32.mrf.mxu0
      %v2662 = vadd.f32 0.0, %v2661
      %2663 = vmatmul.f32.gmra.mxu0 %v2516
      %v2664 = vpop.f32.mrf.mxu0
      %v2665 = vadd.f32 0.0, %v2664
      %2666 = vmatmul.f32.gmra.mxu0 %v2519
      %v2667 = vpop.f32.mrf.mxu0
      %v2668 = vadd.f32 0.0, %v2667
      %2669 = vmatmul.f32.gmra.mxu0 %v2522
      %v2670 = vpop.f32.mrf.mxu0
      %v2671 = vadd.f32 0.0, %v2670
      %2672 = vmatmul.f32.gmra.mxu0 %v2525
      %v2673 = vpop.f32.mrf.mxu0
      %v2674 = vadd.f32 0.0, %v2673
      %2675 = vmatmul.f32.gmra.mxu0 %v2528
      %v2676 = vpop.f32.mrf.mxu0
      %v2677 = vadd.f32 0.0, %v2676
      %2678 = vmatmul.f32.gmra.mxu0 %v2531
      %v2679 = vpop.f32.mrf.mxu0
      %v2680 = vadd.f32 0.0, %v2679
      %2681 = vmatmul.f32.gmra.mxu0 %v2534
      %v2682 = vpop.f32.mrf.mxu0
      %v2683 = vadd.f32 0.0, %v2682
      %2684 = vmatmul.f32.gmra.mxu0 %v2537
      %v2685 = vpop.f32.mrf.mxu0
      %v2686 = vadd.f32 0.0, %v2685
      %2687 = vmatmul.f32.gmra.mxu0 %v2540
      %v2688 = vpop.f32.mrf.mxu0
      %v2689 = vadd.f32 0.0, %v2688
      %2690 = vmatmul.f32.gmra.mxu0 %v2543
      %v2691 = vpop.f32.mrf.mxu0
      %v2692 = vadd.f32 0.0, %v2691
      %2693 = vmatmul.f32.gmra.mxu0 %v2546
      %v2694 = vpop.f32.mrf.mxu0
      %v2695 = vadd.f32 0.0, %v2694
      %2696 = vmatmul.f32.gmra.mxu0 %v2549
      %v2697 = vpop.f32.mrf.mxu0
      %v2698 = vadd.f32 0.0, %v2697
      %2699 = vmatmul.f32.gmra.mxu0 %v2552
      %v2700 = vpop.f32.mrf.mxu0
      %v2701 = vadd.f32 0.0, %v2700
      %2702 = vmatmul.f32.gmra.mxu0 %v2555
      %v2703 = vpop.f32.mrf.mxu0
      %v2704 = vadd.f32 0.0, %v2703
      %2705 = vmatmul.f32.gmra.mxu0 %v2558
      %v2706 = vpop.f32.mrf.mxu0
      %v2707 = vadd.f32 0.0, %v2706
      %2708 = vmatmul.f32.gmra.mxu0 %v2561
      %v2709 = vpop.f32.mrf.mxu0
      %v2710 = vadd.f32 0.0, %v2709
      %2711 = vmatmul.f32.gmra.mxu0 %v2564
      %v2712 = vpop.f32.mrf.mxu0
      %v2713 = vadd.f32 0.0, %v2712
      %2714 = vmatmul.f32.gmra.mxu0 %v2567
      %v2715 = vpop.f32.mrf.mxu0
      %v2716 = vadd.f32 0.0, %v2715
      %2717 = vmatmul.f32.gmra.mxu0 %v2570
      %v2718 = vpop.f32.mrf.mxu0
      %v2719 = vadd.f32 0.0, %v2718
      %2720 = vmatmul.f32.gmra.mxu0 %v2573
      %v2721 = vpop.f32.mrf.mxu0
      %v2722 = vadd.f32 0.0, %v2721
      %2723 = vmatmul.f32.gmra.mxu0 %v2576
      %v2724 = vpop.f32.mrf.mxu0
      %v2725 = vadd.f32 0.0, %v2724
      %2726 = vmatmul.f32.gmra.mxu0 %v2579
      %v2727 = vpop.f32.mrf.mxu0
      %v2728 = vadd.f32 0.0, %v2727
      %2729 = vmatmul.f32.gmra.mxu0 %v2582
      %v2730 = vpop.f32.mrf.mxu0
      %v2731 = vadd.f32 0.0, %v2730
      %2732 = vmatmul.f32.gmra.mxu0 %v2585
      %v2733 = vpop.f32.mrf.mxu0
      %v2734 = vadd.f32 0.0, %v2733
      %2735 = vmatmul.f32.gmra.mxu0 %v2588
      %v2736 = vpop.f32.mrf.mxu0
      %v2737 = vadd.f32 0.0, %v2736
      %2738 = vmatmul.f32.gmra.mxu0 %v2591
      %v2739 = vpop.f32.mrf.mxu0
      %v2740 = vadd.f32 0.0, %v2739
      %2741 = vmatmul.f32.gmra.mxu0 %v2594
      %v2742 = vpop.f32.mrf.mxu0
      %v2743 = vadd.f32 0.0, %v2742
      %2744 = vmatmul.f32.gmra.mxu0 %v2597
      %v2745 = vpop.f32.mrf.mxu0
      %v2746 = vadd.f32 0.0, %v2745
      %2747 = vmatmul.f32.gmra.mxu0 %v2600
      %v2748 = vpop.f32.mrf.mxu0
      %v2749 = vadd.f32 0.0, %v2748
      %2750 = vmatmul.f32.gmra.mxu0 %v2603
      %v2751 = vpop.f32.mrf.mxu0
      %v2752 = vadd.f32 0.0, %v2751
      %2753 = vmatmul.f32.gmra.mxu0 %v2606
      %v2754 = vpop.f32.mrf.mxu0
      %v2755 = vadd.f32 0.0, %v2754
      %2756 = vmatmul.f32.gmra.mxu0 %v2609
      %v2757 = vpop.f32.mrf.mxu0
      %v2758 = vadd.f32 0.0, %v2757
      %2759 = vmatmul.f32.gmra.mxu0 %v2612
      %v2760 = vpop.f32.mrf.mxu0
      %v2761 = vadd.f32 0.0, %v2760
      %2762 = vmatmul.f32.gmra.mxu0 %v2615
      %v2763 = vpop.f32.mrf.mxu0
      %v2764 = vadd.f32 0.0, %v2763
      %2765 = vmatmul.f32.gmra.mxu0 %v2618
      %v2766 = vpop.f32.mrf.mxu0
      %v2767 = vadd.f32 0.0, %v2766
      %2768 = vmatmul.f32.gmra.mxu0 %v2621
      %v2769 = vpop.f32.mrf.mxu0
      %v2770 = vadd.f32 0.0, %v2769
      %2771 = vdwg.mxu0
      %v2772 = vadd.f32 %v2395, %v2644
      %v2773 = vadd.f32 %v2396, %v2647
      %v2774 = vadd.f32 %v2397, %v2650
      %v2775 = vadd.f32 %v2398, %v2653
      %v2776 = vadd.f32 %v2399, %v2656
      %v2777 = vadd.f32 %v2400, %v2659
      %v2778 = vadd.f32 %v2401, %v2662
      %v2779 = vadd.f32 %v2402, %v2665
      %v2780 = vadd.f32 %v2403, %v2668
      %v2781 = vadd.f32 %v2404, %v2671
      %v2782 = vadd.f32 %v2405, %v2674
      %v2783 = vadd.f32 %v2406, %v2677
      %v2784 = vadd.f32 %v2407, %v2680
      %v2785 = vadd.f32 %v2408, %v2683
      %v2786 = vadd.f32 %v2409, %v2686
      %v2787 = vadd.f32 %v2410, %v2689
      %v2788 = vadd.f32 %v2411, %v2692
      %v2789 = vadd.f32 %v2412, %v2695
      %v2790 = vadd.f32 %v2413, %v2698
      %v2791 = vadd.f32 %v2414, %v2701
      %v2792 = vadd.f32 %v2415, %v2704
      %v2793 = vadd.f32 %v2416, %v2707
      %v2794 = vadd.f32 %v2417, %v2710
      %v2795 = vadd.f32 %v2418, %v2713
      %v2796 = vadd.f32 %v2419, %v2716
      %v2797 = vadd.f32 %v2420, %v2719
      %v2798 = vadd.f32 %v2421, %v2722
      %v2799 = vadd.f32 %v2422, %v2725
      %v2800 = vadd.f32 %v2423, %v2728
      %v2801 = vadd.f32 %v2424, %v2731
      %v2802 = vadd.f32 %v2425, %v2734
      %v2803 = vadd.f32 %v2426, %v2737
      %v2804 = vadd.f32 %v2427, %v2740
      %v2805 = vadd.f32 %v2428, %v2743
      %v2806 = vadd.f32 %v2429, %v2746
      %v2807 = vadd.f32 %v2430, %v2749
      %v2808 = vadd.f32 %v2431, %v2752
      %v2809 = vadd.f32 %v2432, %v2755
      %v2810 = vadd.f32 %v2433, %v2758
      %v2811 = vadd.f32 %v2434, %v2761
      %v2812 = vadd.f32 %v2435, %v2764
      %v2813 = vadd.f32 %v2436, %v2767
      %v2814 = vadd.f32 %v2437, %v2770
      %v2815 = vld [vmem:[%s165 + $0xf] sm:$0xff]
      %v2816 = vld [vmem:[%s165 + $0x17] sm:$0xff]
      %v2817 = vld [vmem:[%s165 + $0x1f] sm:$0xff]
      %v2818 = vld [vmem:[%s165 + $0x27] sm:$0xff]
      %v2819 = vld [vmem:[%s165 + $0x2f] sm:$0xff]
      %v2820 = vld [vmem:[%s165 + $0x37] sm:$0xff]
      %v2821 = vld [vmem:[%s165 + $0x3f] sm:$0xff]
      %v2822 = vld [vmem:[%s165 + $0x47] sm:$0xff]
      %v2823 = vld [vmem:[%s165 + $0x4f] sm:$0xff]
      %v2824 = vld [vmem:[%s165 + $0x57] sm:$0xff]
      %v2825 = vld [vmem:[%s165 + $0x5f] sm:$0xff]
      %v2826 = vld [vmem:[%s165 + $0x67] sm:$0xff]
      %v2827 = vld [vmem:[%s165 + $0x6f] sm:$0xff]
      %v2828 = vld [vmem:[%s165 + $0x77] sm:$0xff]
      %v2829 = vld [vmem:[%s165 + $0x7f] sm:$0xff]
      %v2830 = vld [vmem:[%s165 + $0x87] sm:$0xff]
      %v2831 = vld [vmem:[%s165 + $0x8f] sm:$0xff]
      %v2832 = vld [vmem:[%s165 + $0x97] sm:$0xff]
      %v2833 = vld [vmem:[%s165 + $0x9f] sm:$0xff]
      %v2834 = vld [vmem:[%s165 + $0xa7] sm:$0xff]
      %v2835 = vld [vmem:[%s165 + $0xaf] sm:$0xff]
      %v2836 = vld [vmem:[%s165 + $0xb7] sm:$0xff]
      %v2837 = vld [vmem:[%s165 + $0xbf] sm:$0xff]
      %v2838 = vld [vmem:[%s165 + $0xc7] sm:$0xff]
      %v2839 = vld [vmem:[%s165 + $0xcf] sm:$0xff]
      %v2840 = vld [vmem:[%s165 + $0xd7] sm:$0xff]
      %v2841 = vld [vmem:[%s165 + $0xdf] sm:$0xff]
      %v2842 = vld [vmem:[%s165 + $0xe7] sm:$0xff]
      %v2843 = vld [vmem:[%s165 + $0xef] sm:$0xff]
      %v2844 = vld [vmem:[%s165 + $0xf7] sm:$0xff]
      %v2845 = vld [vmem:[%s165 + $0xff] sm:$0xff]
      %v2846 = vld [vmem:[%s165 + $0x107] sm:$0xff]
      %v2847 = vld [vmem:[%s165 + $0x10f] sm:$0xff]
      %v2848 = vld [vmem:[%s165 + $0x117] sm:$0xff]
      %v2849 = vld [vmem:[%s165 + $0x11f] sm:$0xff]
      %v2850 = vld [vmem:[%s165 + $0x127] sm:$0xff]
      %v2851 = vld [vmem:[%s165 + $0x12f] sm:$0xff]
      %v2852 = vld [vmem:[%s165 + $0x137] sm:$0xff]
      %v2853 = vld [vmem:[%s165 + $0x13f] sm:$0xff]
      %v2854 = vld [vmem:[%s165 + $0x147] sm:$0xff]
      %v2855 = vld [vmem:[%s165 + $0x14f] sm:$0xff]
      %v2856 = vld [vmem:[%s165 + $0x157] sm:$0xff]
      %v2857 = vld [vmem:[%s165 + $0x15f] sm:$0xff]
      %s2858 = scalar_lea.vmem %s1, 672
      %v2859 = vld [vmem:[%s2858] sm:$0xff]
      %v2860 = vld [vmem:[%s2858 + $0x8] sm:$0xff]
      %v2861 = vld [vmem:[%s2858 + $0x10] sm:$0xff]
      %v2862 = vld [vmem:[%s2858 + $0x18] sm:$0xff]
      %v2863 = vld [vmem:[%s2858 + $0x20] sm:$0xff]
      %v2864 = vld [vmem:[%s2858 + $0x28] sm:$0xff]
      %v2865 = vld [vmem:[%s2858 + $0x30] sm:$0xff]
      %v2866 = vld [vmem:[%s2858 + $0x38] sm:$0xff]
      %v2867 = vld [vmem:[%s2858 + $0x40] sm:$0xff]
      %v2868 = vld [vmem:[%s2858 + $0x48] sm:$0xff]
      %v2869 = vld [vmem:[%s2858 + $0x50] sm:$0xff]
      %v2870 = vld [vmem:[%s2858 + $0x58] sm:$0x3]
      %v2872 = vsel %vm230, %v2815, 0
      %v2875 = vsel %vm230, %v2816, 0
      %v2878 = vsel %vm230, %v2817, 0
      %v2881 = vsel %vm230, %v2818, 0
      %v2884 = vsel %vm230, %v2819, 0
      %v2887 = vsel %vm230, %v2820, 0
      %v2890 = vsel %vm230, %v2821, 0
      %v2893 = vsel %vm230, %v2822, 0
      %v2896 = vsel %vm230, %v2823, 0
      %v2899 = vsel %vm230, %v2824, 0
      %v2902 = vsel %vm230, %v2825, 0
      %v2905 = vsel %vm230, %v2826, 0
      %v2908 = vsel %vm230, %v2827, 0
      %v2911 = vsel %vm230, %v2828, 0
      %v2914 = vsel %vm230, %v2829, 0
      %v2917 = vsel %vm230, %v2830, 0
      %v2920 = vsel %vm230, %v2831, 0
      %v2923 = vsel %vm230, %v2832, 0
      %v2926 = vsel %vm230, %v2833, 0
      %v2929 = vsel %vm230, %v2834, 0
      %v2932 = vsel %vm230, %v2835, 0
      %v2935 = vsel %vm230, %v2836, 0
      %v2938 = vsel %vm230, %v2837, 0
      %v2941 = vsel %vm230, %v2838, 0
      %v2944 = vsel %vm230, %v2839, 0
      %v2947 = vsel %vm230, %v2840, 0
      %v2950 = vsel %vm230, %v2841, 0
      %v2953 = vsel %vm230, %v2842, 0
      %v2956 = vsel %vm230, %v2843, 0
      %v2959 = vsel %vm230, %v2844, 0
      %v2962 = vsel %vm230, %v2845, 0
      %v2965 = vsel %vm230, %v2846, 0
      %v2968 = vsel %vm230, %v2847, 0
      %v2971 = vsel %vm230, %v2848, 0
      %v2974 = vsel %vm230, %v2849, 0
      %v2977 = vsel %vm230, %v2850, 0
      %v2980 = vsel %vm230, %v2851, 0
      %v2983 = vsel %vm230, %v2852, 0
      %v2986 = vsel %vm230, %v2853, 0
      %v2989 = vsel %vm230, %v2854, 0
      %v2992 = vsel %vm230, %v2855, 0
      %v2995 = vsel %vm230, %v2856, 0
      %v2998 = vsel %vm230, %v2857, 0
      %v3001 = vsel %vm360, %v2870, 0
      %3003 = vmatpush.msra.mxu0 0.0
      %3004 = vmatpush.msra.mxu0 0.0
      %3005 = vmatpush.msra.mxu0 0.0
      %3006 = vmatpush.msra.mxu0 0.0
      %3007 = vmatpush.msra.mxu0 %v3001
      %3008 = vmatpush.msra.mxu0 %v2869
      %3009 = vmatpush.msra.mxu0 %v2868
      %3010 = vmatpush.msra.mxu0 %v2867
      %3011 = vmatpush.msra.mxu0 %v2866
      %3012 = vmatpush.msra.mxu0 %v2865
      %3013 = vmatpush.msra.mxu0 %v2864
      %3014 = vmatpush.msra.mxu0 %v2863
      %3015 = vmatpush.msra.mxu0 %v2862
      %3016 = vmatpush.msra.mxu0 %v2861
      %3017 = vmatpush.msra.mxu0 %v2860
      %3018 = vmatpush.msra.mxu0 %v2859
      %3019 = vmatmul.f32.gmra.mxu0 %v2872
      %v3020 = vpop.f32.mrf.mxu0
      %v3021 = vadd.f32 0.0, %v3020
      %3022 = vmatmul.f32.gmra.mxu0 %v2875
      %v3023 = vpop.f32.mrf.mxu0
      %v3024 = vadd.f32 0.0, %v3023
      %3025 = vmatmul.f32.gmra.mxu0 %v2878
      %v3026 = vpop.f32.mrf.mxu0
      %v3027 = vadd.f32 0.0, %v3026
      %3028 = vmatmul.f32.gmra.mxu0 %v2881
      %v3029 = vpop.f32.mrf.mxu0
      %v3030 = vadd.f32 0.0, %v3029
      %3031 = vmatmul.f32.gmra.mxu0 %v2884
      %v3032 = vpop.f32.mrf.mxu0
      %v3033 = vadd.f32 0.0, %v3032
      %3034 = vmatmul.f32.gmra.mxu0 %v2887
      %v3035 = vpop.f32.mrf.mxu0
      %v3036 = vadd.f32 0.0, %v3035
      %3037 = vmatmul.f32.gmra.mxu0 %v2890
      %v3038 = vpop.f32.mrf.mxu0
      %v3039 = vadd.f32 0.0, %v3038
      %3040 = vmatmul.f32.gmra.mxu0 %v2893
      %v3041 = vpop.f32.mrf.mxu0
      %v3042 = vadd.f32 0.0, %v3041
      %3043 = vmatmul.f32.gmra.mxu0 %v2896
      %v3044 = vpop.f32.mrf.mxu0
      %v3045 = vadd.f32 0.0, %v3044
      %3046 = vmatmul.f32.gmra.mxu0 %v2899
      %v3047 = vpop.f32.mrf.mxu0
      %v3048 = vadd.f32 0.0, %v3047
      %3049 = vmatmul.f32.gmra.mxu0 %v2902
      %v3050 = vpop.f32.mrf.mxu0
      %v3051 = vadd.f32 0.0, %v3050
      %3052 = vmatmul.f32.gmra.mxu0 %v2905
      %v3053 = vpop.f32.mrf.mxu0
      %v3054 = vadd.f32 0.0, %v3053
      %3055 = vmatmul.f32.gmra.mxu0 %v2908
      %v3056 = vpop.f32.mrf.mxu0
      %v3057 = vadd.f32 0.0, %v3056
      %3058 = vmatmul.f32.gmra.mxu0 %v2911
      %v3059 = vpop.f32.mrf.mxu0
      %v3060 = vadd.f32 0.0, %v3059
      %3061 = vmatmul.f32.gmra.mxu0 %v2914
      %v3062 = vpop.f32.mrf.mxu0
      %v3063 = vadd.f32 0.0, %v3062
      %3064 = vmatmul.f32.gmra.mxu0 %v2917
      %v3065 = vpop.f32.mrf.mxu0
      %v3066 = vadd.f32 0.0, %v3065
      %3067 = vmatmul.f32.gmra.mxu0 %v2920
      %v3068 = vpop.f32.mrf.mxu0
      %v3069 = vadd.f32 0.0, %v3068
      %3070 = vmatmul.f32.gmra.mxu0 %v2923
      %v3071 = vpop.f32.mrf.mxu0
      %v3072 = vadd.f32 0.0, %v3071
      %3073 = vmatmul.f32.gmra.mxu0 %v2926
      %v3074 = vpop.f32.mrf.mxu0
      %v3075 = vadd.f32 0.0, %v3074
      %3076 = vmatmul.f32.gmra.mxu0 %v2929
      %v3077 = vpop.f32.mrf.mxu0
      %v3078 = vadd.f32 0.0, %v3077
      %3079 = vmatmul.f32.gmra.mxu0 %v2932
      %v3080 = vpop.f32.mrf.mxu0
      %v3081 = vadd.f32 0.0, %v3080
      %3082 = vmatmul.f32.gmra.mxu0 %v2935
      %v3083 = vpop.f32.mrf.mxu0
      %v3084 = vadd.f32 0.0, %v3083
      %3085 = vmatmul.f32.gmra.mxu0 %v2938
      %v3086 = vpop.f32.mrf.mxu0
      %v3087 = vadd.f32 0.0, %v3086
      %3088 = vmatmul.f32.gmra.mxu0 %v2941
      %v3089 = vpop.f32.mrf.mxu0
      %v3090 = vadd.f32 0.0, %v3089
      %3091 = vmatmul.f32.gmra.mxu0 %v2944
      %v3092 = vpop.f32.mrf.mxu0
      %v3093 = vadd.f32 0.0, %v3092
      %3094 = vmatmul.f32.gmra.mxu0 %v2947
      %v3095 = vpop.f32.mrf.mxu0
      %v3096 = vadd.f32 0.0, %v3095
      %3097 = vmatmul.f32.gmra.mxu0 %v2950
      %v3098 = vpop.f32.mrf.mxu0
      %v3099 = vadd.f32 0.0, %v3098
      %3100 = vmatmul.f32.gmra.mxu0 %v2953
      %v3101 = vpop.f32.mrf.mxu0
      %v3102 = vadd.f32 0.0, %v3101
      %3103 = vmatmul.f32.gmra.mxu0 %v2956
      %v3104 = vpop.f32.mrf.mxu0
      %v3105 = vadd.f32 0.0, %v3104
      %3106 = vmatmul.f32.gmra.mxu0 %v2959
      %v3107 = vpop.f32.mrf.mxu0
      %v3108 = vadd.f32 0.0, %v3107
      %3109 = vmatmul.f32.gmra.mxu0 %v2962
      %v3110 = vpop.f32.mrf.mxu0
      %v3111 = vadd.f32 0.0, %v3110
      %3112 = vmatmul.f32.gmra.mxu0 %v2965
      %v3113 = vpop.f32.mrf.mxu0
      %v3114 = vadd.f32 0.0, %v3113
      %3115 = vmatmul.f32.gmra.mxu0 %v2968
      %v3116 = vpop.f32.mrf.mxu0
      %v3117 = vadd.f32 0.0, %v3116
      %3118 = vmatmul.f32.gmra.mxu0 %v2971
      %v3119 = vpop.f32.mrf.mxu0
      %v3120 = vadd.f32 0.0, %v3119
      %3121 = vmatmul.f32.gmra.mxu0 %v2974
      %v3122 = vpop.f32.mrf.mxu0
      %v3123 = vadd.f32 0.0, %v3122
      %3124 = vmatmul.f32.gmra.mxu0 %v2977
      %v3125 = vpop.f32.mrf.mxu0
      %v3126 = vadd.f32 0.0, %v3125
      %3127 = vmatmul.f32.gmra.mxu0 %v2980
      %v3128 = vpop.f32.mrf.mxu0
      %v3129 = vadd.f32 0.0, %v3128
      %3130 = vmatmul.f32.gmra.mxu0 %v2983
      %v3131 = vpop.f32.mrf.mxu0
      %v3132 = vadd.f32 0.0, %v3131
      %3133 = vmatmul.f32.gmra.mxu0 %v2986
      %v3134 = vpop.f32.mrf.mxu0
      %v3135 = vadd.f32 0.0, %v3134
      %3136 = vmatmul.f32.gmra.mxu0 %v2989
      %v3137 = vpop.f32.mrf.mxu0
      %v3138 = vadd.f32 0.0, %v3137
      %3139 = vmatmul.f32.gmra.mxu0 %v2992
      %v3140 = vpop.f32.mrf.mxu0
      %v3141 = vadd.f32 0.0, %v3140
      %3142 = vmatmul.f32.gmra.mxu0 %v2995
      %v3143 = vpop.f32.mrf.mxu0
      %v3144 = vadd.f32 0.0, %v3143
      %3145 = vmatmul.f32.gmra.mxu0 %v2998
      %v3146 = vpop.f32.mrf.mxu0
      %v3147 = vadd.f32 0.0, %v3146
      %3148 = vdwg.mxu0
      %v3149 = vadd.f32 %v2772, %v3021
      %v3150 = vadd.f32 %v2773, %v3024
      %v3151 = vadd.f32 %v2774, %v3027
      %v3152 = vadd.f32 %v2775, %v3030
      %v3153 = vadd.f32 %v2776, %v3033
      %v3154 = vadd.f32 %v2777, %v3036
      %v3155 = vadd.f32 %v2778, %v3039
      %v3156 = vadd.f32 %v2779, %v3042
      %v3157 = vadd.f32 %v2780, %v3045
      %v3158 = vadd.f32 %v2781, %v3048
      %v3159 = vadd.f32 %v2782, %v3051
      %v3160 = vadd.f32 %v2783, %v3054
      %v3161 = vadd.f32 %v2784, %v3057
      %v3162 = vadd.f32 %v2785, %v3060
      %v3163 = vadd.f32 %v2786, %v3063
      %v3164 = vadd.f32 %v2787, %v3066
      %v3165 = vadd.f32 %v2788, %v3069
      %v3166 = vadd.f32 %v2789, %v3072
      %v3167 = vadd.f32 %v2790, %v3075
      %v3168 = vadd.f32 %v2791, %v3078
      %v3169 = vadd.f32 %v2792, %v3081
      %v3170 = vadd.f32 %v2793, %v3084
      %v3171 = vadd.f32 %v2794, %v3087
      %v3172 = vadd.f32 %v2795, %v3090
      %v3173 = vadd.f32 %v2796, %v3093
      %v3174 = vadd.f32 %v2797, %v3096
      %v3175 = vadd.f32 %v2798, %v3099
      %v3176 = vadd.f32 %v2799, %v3102
      %v3177 = vadd.f32 %v2800, %v3105
      %v3178 = vadd.f32 %v2801, %v3108
      %v3179 = vadd.f32 %v2802, %v3111
      %v3180 = vadd.f32 %v2803, %v3114
      %v3181 = vadd.f32 %v2804, %v3117
      %v3182 = vadd.f32 %v2805, %v3120
      %v3183 = vadd.f32 %v2806, %v3123
      %v3184 = vadd.f32 %v2807, %v3126
      %v3185 = vadd.f32 %v2808, %v3129
      %v3186 = vadd.f32 %v2809, %v3132
      %v3187 = vadd.f32 %v2810, %v3135
      %v3188 = vadd.f32 %v2811, %v3138
      %v3189 = vadd.f32 %v2812, %v3141
      %v3190 = vadd.f32 %v2813, %v3144
      %v3191 = vadd.f32 %v2814, %v3147
      %v3192 = vld [vmem:[%s165 + $0x10] sm:$0xff]
      %v3193 = vld [vmem:[%s165 + $0x18] sm:$0xff]
      %v3194 = vld [vmem:[%s165 + $0x20] sm:$0xff]
      %v3195 = vld [vmem:[%s165 + $0x28] sm:$0xff]
      %v3196 = vld [vmem:[%s165 + $0x30] sm:$0xff]
      %v3197 = vld [vmem:[%s165 + $0x38] sm:$0xff]
      %v3198 = vld [vmem:[%s165 + $0x40] sm:$0xff]
      %v3199 = vld [vmem:[%s165 + $0x48] sm:$0xff]
      %v3200 = vld [vmem:[%s165 + $0x50] sm:$0xff]
      %v3201 = vld [vmem:[%s165 + $0x58] sm:$0xff]
      %v3202 = vld [vmem:[%s165 + $0x60] sm:$0xff]
      %v3203 = vld [vmem:[%s165 + $0x68] sm:$0xff]
      %v3204 = vld [vmem:[%s165 + $0x70] sm:$0xff]
      %v3205 = vld [vmem:[%s165 + $0x78] sm:$0xff]
      %v3206 = vld [vmem:[%s165 + $0x80] sm:$0xff]
      %v3207 = vld [vmem:[%s165 + $0x88] sm:$0xff]
      %v3208 = vld [vmem:[%s165 + $0x90] sm:$0xff]
      %v3209 = vld [vmem:[%s165 + $0x98] sm:$0xff]
      %v3210 = vld [vmem:[%s165 + $0xa0] sm:$0xff]
      %v3211 = vld [vmem:[%s165 + $0xa8] sm:$0xff]
      %v3212 = vld [vmem:[%s165 + $0xb0] sm:$0xff]
      %v3213 = vld [vmem:[%s165 + $0xb8] sm:$0xff]
      %v3214 = vld [vmem:[%s165 + $0xc0] sm:$0xff]
      %v3215 = vld [vmem:[%s165 + $0xc8] sm:$0xff]
      %v3216 = vld [vmem:[%s165 + $0xd0] sm:$0xff]
      %v3217 = vld [vmem:[%s165 + $0xd8] sm:$0xff]
      %v3218 = vld [vmem:[%s165 + $0xe0] sm:$0xff]
      %v3219 = vld [vmem:[%s165 + $0xe8] sm:$0xff]
      %v3220 = vld [vmem:[%s165 + $0xf0] sm:$0xff]
      %v3221 = vld [vmem:[%s165 + $0xf8] sm:$0xff]
      %v3222 = vld [vmem:[%s165 + $0x100] sm:$0xff]
      %v3223 = vld [vmem:[%s165 + $0x108] sm:$0xff]
      %v3224 = vld [vmem:[%s165 + $0x110] sm:$0xff]
      %v3225 = vld [vmem:[%s165 + $0x118] sm:$0xff]
      %v3226 = vld [vmem:[%s165 + $0x120] sm:$0xff]
      %v3227 = vld [vmem:[%s165 + $0x128] sm:$0xff]
      %v3228 = vld [vmem:[%s165 + $0x130] sm:$0xff]
      %v3229 = vld [vmem:[%s165 + $0x138] sm:$0xff]
      %v3230 = vld [vmem:[%s165 + $0x140] sm:$0xff]
      %v3231 = vld [vmem:[%s165 + $0x148] sm:$0xff]
      %v3232 = vld [vmem:[%s165 + $0x150] sm:$0xff]
      %v3233 = vld [vmem:[%s165 + $0x158] sm:$0xff]
      %v3234 = vld [vmem:[%s165 + $0x160] sm:$0xff]
      %s3235 = scalar_lea.vmem %s1, 768
      %v3236 = vld [vmem:[%s3235] sm:$0xff]
      %v3237 = vld [vmem:[%s3235 + $0x8] sm:$0xff]
      %v3238 = vld [vmem:[%s3235 + $0x10] sm:$0xff]
      %v3239 = vld [vmem:[%s3235 + $0x18] sm:$0xff]
      %v3240 = vld [vmem:[%s3235 + $0x20] sm:$0xff]
      %v3241 = vld [vmem:[%s3235 + $0x28] sm:$0xff]
      %v3242 = vld [vmem:[%s3235 + $0x30] sm:$0xff]
      %v3243 = vld [vmem:[%s3235 + $0x38] sm:$0xff]
      %v3244 = vld [vmem:[%s3235 + $0x40] sm:$0xff]
      %v3245 = vld [vmem:[%s3235 + $0x48] sm:$0xff]
      %v3246 = vld [vmem:[%s3235 + $0x50] sm:$0xff]
      %v3247 = vld [vmem:[%s3235 + $0x58] sm:$0x3]
      %v3249 = vsel %vm230, %v3192, 0
      %v3252 = vsel %vm230, %v3193, 0
      %v3255 = vsel %vm230, %v3194, 0
      %v3258 = vsel %vm230, %v3195, 0
      %v3261 = vsel %vm230, %v3196, 0
      %v3264 = vsel %vm230, %v3197, 0
      %v3267 = vsel %vm230, %v3198, 0
      %v3270 = vsel %vm230, %v3199, 0
      %v3273 = vsel %vm230, %v3200, 0
      %v3276 = vsel %vm230, %v3201, 0
      %v3279 = vsel %vm230, %v3202, 0
      %v3282 = vsel %vm230, %v3203, 0
      %v3285 = vsel %vm230, %v3204, 0
      %v3288 = vsel %vm230, %v3205, 0
      %v3291 = vsel %vm230, %v3206, 0
      %v3294 = vsel %vm230, %v3207, 0
      %v3297 = vsel %vm230, %v3208, 0
      %v3300 = vsel %vm230, %v3209, 0
      %v3303 = vsel %vm230, %v3210, 0
      %v3306 = vsel %vm230, %v3211, 0
      %v3309 = vsel %vm230, %v3212, 0
      %v3312 = vsel %vm230, %v3213, 0
      %v3315 = vsel %vm230, %v3214, 0
      %v3318 = vsel %vm230, %v3215, 0
      %v3321 = vsel %vm230, %v3216, 0
      %v3324 = vsel %vm230, %v3217, 0
      %v3327 = vsel %vm230, %v3218, 0
      %v3330 = vsel %vm230, %v3219, 0
      %v3333 = vsel %vm230, %v3220, 0
      %v3336 = vsel %vm230, %v3221, 0
      %v3339 = vsel %vm230, %v3222, 0
      %v3342 = vsel %vm230, %v3223, 0
      %v3345 = vsel %vm230, %v3224, 0
      %v3348 = vsel %vm230, %v3225, 0
      %v3351 = vsel %vm230, %v3226, 0
      %v3354 = vsel %vm230, %v3227, 0
      %v3357 = vsel %vm230, %v3228, 0
      %v3360 = vsel %vm230, %v3229, 0
      %v3363 = vsel %vm230, %v3230, 0
      %v3366 = vsel %vm230, %v3231, 0
      %v3369 = vsel %vm230, %v3232, 0
      %v3372 = vsel %vm230, %v3233, 0
      %v3375 = vsel %vm230, %v3234, 0
      %v3378 = vsel %vm360, %v3247, 0
      %3380 = vmatpush.msra.mxu0 0.0
      %3381 = vmatpush.msra.mxu0 0.0
      %3382 = vmatpush.msra.mxu0 0.0
      %3383 = vmatpush.msra.mxu0 0.0
      %3384 = vmatpush.msra.mxu0 %v3378
      %3385 = vmatpush.msra.mxu0 %v3246
      %3386 = vmatpush.msra.mxu0 %v3245
      %3387 = vmatpush.msra.mxu0 %v3244
      %3388 = vmatpush.msra.mxu0 %v3243
      %3389 = vmatpush.msra.mxu0 %v3242
      %3390 = vmatpush.msra.mxu0 %v3241
      %3391 = vmatpush.msra.mxu0 %v3240
      %3392 = vmatpush.msra.mxu0 %v3239
      %3393 = vmatpush.msra.mxu0 %v3238
      %3394 = vmatpush.msra.mxu0 %v3237
      %3395 = vmatpush.msra.mxu0 %v3236
      %3396 = vmatmul.f32.gmra.mxu0 %v3249
      %v3397 = vpop.f32.mrf.mxu0
      %v3398 = vadd.f32 0.0, %v3397
      %3399 = vmatmul.f32.gmra.mxu0 %v3252
      %v3400 = vpop.f32.mrf.mxu0
      %v3401 = vadd.f32 0.0, %v3400
      %3402 = vmatmul.f32.gmra.mxu0 %v3255
      %v3403 = vpop.f32.mrf.mxu0
      %v3404 = vadd.f32 0.0, %v3403
      %3405 = vmatmul.f32.gmra.mxu0 %v3258
      %v3406 = vpop.f32.mrf.mxu0
      %v3407 = vadd.f32 0.0, %v3406
      %3408 = vmatmul.f32.gmra.mxu0 %v3261
      %v3409 = vpop.f32.mrf.mxu0
      %v3410 = vadd.f32 0.0, %v3409
      %3411 = vmatmul.f32.gmra.mxu0 %v3264
      %v3412 = vpop.f32.mrf.mxu0
      %v3413 = vadd.f32 0.0, %v3412
      %3414 = vmatmul.f32.gmra.mxu0 %v3267
      %v3415 = vpop.f32.mrf.mxu0
      %v3416 = vadd.f32 0.0, %v3415
      %3417 = vmatmul.f32.gmra.mxu0 %v3270
      %v3418 = vpop.f32.mrf.mxu0
      %v3419 = vadd.f32 0.0, %v3418
      %3420 = vmatmul.f32.gmra.mxu0 %v3273
      %v3421 = vpop.f32.mrf.mxu0
      %v3422 = vadd.f32 0.0, %v3421
      %3423 = vmatmul.f32.gmra.mxu0 %v3276
      %v3424 = vpop.f32.mrf.mxu0
      %v3425 = vadd.f32 0.0, %v3424
      %3426 = vmatmul.f32.gmra.mxu0 %v3279
      %v3427 = vpop.f32.mrf.mxu0
      %v3428 = vadd.f32 0.0, %v3427
      %3429 = vmatmul.f32.gmra.mxu0 %v3282
      %v3430 = vpop.f32.mrf.mxu0
      %v3431 = vadd.f32 0.0, %v3430
      %3432 = vmatmul.f32.gmra.mxu0 %v3285
      %v3433 = vpop.f32.mrf.mxu0
      %v3434 = vadd.f32 0.0, %v3433
      %3435 = vmatmul.f32.gmra.mxu0 %v3288
      %v3436 = vpop.f32.mrf.mxu0
      %v3437 = vadd.f32 0.0, %v3436
      %3438 = vmatmul.f32.gmra.mxu0 %v3291
      %v3439 = vpop.f32.mrf.mxu0
      %v3440 = vadd.f32 0.0, %v3439
      %3441 = vmatmul.f32.gmra.mxu0 %v3294
      %v3442 = vpop.f32.mrf.mxu0
      %v3443 = vadd.f32 0.0, %v3442
      %3444 = vmatmul.f32.gmra.mxu0 %v3297
      %v3445 = vpop.f32.mrf.mxu0
      %v3446 = vadd.f32 0.0, %v3445
      %3447 = vmatmul.f32.gmra.mxu0 %v3300
      %v3448 = vpop.f32.mrf.mxu0
      %v3449 = vadd.f32 0.0, %v3448
      %3450 = vmatmul.f32.gmra.mxu0 %v3303
      %v3451 = vpop.f32.mrf.mxu0
      %v3452 = vadd.f32 0.0, %v3451
      %3453 = vmatmul.f32.gmra.mxu0 %v3306
      %v3454 = vpop.f32.mrf.mxu0
      %v3455 = vadd.f32 0.0, %v3454
      %3456 = vmatmul.f32.gmra.mxu0 %v3309
      %v3457 = vpop.f32.mrf.mxu0
      %v3458 = vadd.f32 0.0, %v3457
      %3459 = vmatmul.f32.gmra.mxu0 %v3312
      %v3460 = vpop.f32.mrf.mxu0
      %v3461 = vadd.f32 0.0, %v3460
      %3462 = vmatmul.f32.gmra.mxu0 %v3315
      %v3463 = vpop.f32.mrf.mxu0
      %v3464 = vadd.f32 0.0, %v3463
      %3465 = vmatmul.f32.gmra.mxu0 %v3318
      %v3466 = vpop.f32.mrf.mxu0
      %v3467 = vadd.f32 0.0, %v3466
      %3468 = vmatmul.f32.gmra.mxu0 %v3321
      %v3469 = vpop.f32.mrf.mxu0
      %v3470 = vadd.f32 0.0, %v3469
      %3471 = vmatmul.f32.gmra.mxu0 %v3324
      %v3472 = vpop.f32.mrf.mxu0
      %v3473 = vadd.f32 0.0, %v3472
      %3474 = vmatmul.f32.gmra.mxu0 %v3327
      %v3475 = vpop.f32.mrf.mxu0
      %v3476 = vadd.f32 0.0, %v3475
      %3477 = vmatmul.f32.gmra.mxu0 %v3330
      %v3478 = vpop.f32.mrf.mxu0
      %v3479 = vadd.f32 0.0, %v3478
      %3480 = vmatmul.f32.gmra.mxu0 %v3333
      %v3481 = vpop.f32.mrf.mxu0
      %v3482 = vadd.f32 0.0, %v3481
      %3483 = vmatmul.f32.gmra.mxu0 %v3336
      %v3484 = vpop.f32.mrf.mxu0
      %v3485 = vadd.f32 0.0, %v3484
      %3486 = vmatmul.f32.gmra.mxu0 %v3339
      %v3487 = vpop.f32.mrf.mxu0
      %v3488 = vadd.f32 0.0, %v3487
      %3489 = vmatmul.f32.gmra.mxu0 %v3342
      %v3490 = vpop.f32.mrf.mxu0
      %v3491 = vadd.f32 0.0, %v3490
      %3492 = vmatmul.f32.gmra.mxu0 %v3345
      %v3493 = vpop.f32.mrf.mxu0
      %v3494 = vadd.f32 0.0, %v3493
      %3495 = vmatmul.f32.gmra.mxu0 %v3348
      %v3496 = vpop.f32.mrf.mxu0
      %v3497 = vadd.f32 0.0, %v3496
      %3498 = vmatmul.f32.gmra.mxu0 %v3351
      %v3499 = vpop.f32.mrf.mxu0
      %v3500 = vadd.f32 0.0, %v3499
      %3501 = vmatmul.f32.gmra.mxu0 %v3354
      %v3502 = vpop.f32.mrf.mxu0
      %v3503 = vadd.f32 0.0, %v3502
      %3504 = vmatmul.f32.gmra.mxu0 %v3357
      %v3505 = vpop.f32.mrf.mxu0
      %v3506 = vadd.f32 0.0, %v3505
      %3507 = vmatmul.f32.gmra.mxu0 %v3360
      %v3508 = vpop.f32.mrf.mxu0
      %v3509 = vadd.f32 0.0, %v3508
      %3510 = vmatmul.f32.gmra.mxu0 %v3363
      %v3511 = vpop.f32.mrf.mxu0
      %v3512 = vadd.f32 0.0, %v3511
      %3513 = vmatmul.f32.gmra.mxu0 %v3366
      %v3514 = vpop.f32.mrf.mxu0
      %v3515 = vadd.f32 0.0, %v3514
      %3516 = vmatmul.f32.gmra.mxu0 %v3369
      %v3517 = vpop.f32.mrf.mxu0
      %v3518 = vadd.f32 0.0, %v3517
      %3519 = vmatmul.f32.gmra.mxu0 %v3372
      %v3520 = vpop.f32.mrf.mxu0
      %v3521 = vadd.f32 0.0, %v3520
      %3522 = vmatmul.f32.gmra.mxu0 %v3375
      %v3523 = vpop.f32.mrf.mxu0
      %v3524 = vadd.f32 0.0, %v3523
      %3525 = vdwg.mxu0
      %v3526 = vadd.f32 %v3149, %v3398
      %v3527 = vadd.f32 %v3150, %v3401
      %v3528 = vadd.f32 %v3151, %v3404
      %v3529 = vadd.f32 %v3152, %v3407
      %v3530 = vadd.f32 %v3153, %v3410
      %v3531 = vadd.f32 %v3154, %v3413
      %v3532 = vadd.f32 %v3155, %v3416
      %v3533 = vadd.f32 %v3156, %v3419
      %v3534 = vadd.f32 %v3157, %v3422
      %v3535 = vadd.f32 %v3158, %v3425
      %v3536 = vadd.f32 %v3159, %v3428
      %v3537 = vadd.f32 %v3160, %v3431
      %v3538 = vadd.f32 %v3161, %v3434
      %v3539 = vadd.f32 %v3162, %v3437
      %v3540 = vadd.f32 %v3163, %v3440
      %v3541 = vadd.f32 %v3164, %v3443
      %v3542 = vadd.f32 %v3165, %v3446
      %v3543 = vadd.f32 %v3166, %v3449
      %v3544 = vadd.f32 %v3167, %v3452
      %v3545 = vadd.f32 %v3168, %v3455
      %v3546 = vadd.f32 %v3169, %v3458
      %v3547 = vadd.f32 %v3170, %v3461
      %v3548 = vadd.f32 %v3171, %v3464
      %v3549 = vadd.f32 %v3172, %v3467
      %v3550 = vadd.f32 %v3173, %v3470
      %v3551 = vadd.f32 %v3174, %v3473
      %v3552 = vadd.f32 %v3175, %v3476
      %v3553 = vadd.f32 %v3176, %v3479
      %v3554 = vadd.f32 %v3177, %v3482
      %v3555 = vadd.f32 %v3178, %v3485
      %v3556 = vadd.f32 %v3179, %v3488
      %v3557 = vadd.f32 %v3180, %v3491
      %v3558 = vadd.f32 %v3181, %v3494
      %v3559 = vadd.f32 %v3182, %v3497
      %v3560 = vadd.f32 %v3183, %v3500
      %v3561 = vadd.f32 %v3184, %v3503
      %v3562 = vadd.f32 %v3185, %v3506
      %v3563 = vadd.f32 %v3186, %v3509
      %v3564 = vadd.f32 %v3187, %v3512
      %v3565 = vadd.f32 %v3188, %v3515
      %v3566 = vadd.f32 %v3189, %v3518
      %v3567 = vadd.f32 %v3190, %v3521
      %v3568 = vadd.f32 %v3191, %v3524
      %v3569 = vld [vmem:[%s165 + $0x31] sm:$0xff]
      %v3570 = vld [vmem:[%s165 + $0x39] sm:$0xff]
      %v3571 = vld [vmem:[%s165 + $0x41] sm:$0xff]
      %v3572 = vld [vmem:[%s165 + $0x49] sm:$0xff]
      %v3573 = vld [vmem:[%s165 + $0x51] sm:$0xff]
      %v3574 = vld [vmem:[%s165 + $0x59] sm:$0xff]
      %v3575 = vld [vmem:[%s165 + $0x61] sm:$0xff]
      %v3576 = vld [vmem:[%s165 + $0x69] sm:$0xff]
      %v3577 = vld [vmem:[%s165 + $0x71] sm:$0xff]
      %v3578 = vld [vmem:[%s165 + $0x79] sm:$0xff]
      %v3579 = vld [vmem:[%s165 + $0x81] sm:$0xff]
      %v3580 = vld [vmem:[%s165 + $0x89] sm:$0xff]
      %v3581 = vld [vmem:[%s165 + $0x91] sm:$0xff]
      %v3582 = vld [vmem:[%s165 + $0x99] sm:$0xff]
      %v3583 = vld [vmem:[%s165 + $0xa1] sm:$0xff]
      %v3584 = vld [vmem:[%s165 + $0xa9] sm:$0xff]
      %v3585 = vld [vmem:[%s165 + $0xb1] sm:$0xff]
      %v3586 = vld [vmem:[%s165 + $0xb9] sm:$0xff]
      %v3587 = vld [vmem:[%s165 + $0xc1] sm:$0xff]
      %v3588 = vld [vmem:[%s165 + $0xc9] sm:$0xff]
      %v3589 = vld [vmem:[%s165 + $0xd1] sm:$0xff]
      %v3590 = vld [vmem:[%s165 + $0xd9] sm:$0xff]
      %v3591 = vld [vmem:[%s165 + $0xe1] sm:$0xff]
      %v3592 = vld [vmem:[%s165 + $0xe9] sm:$0xff]
      %v3593 = vld [vmem:[%s165 + $0xf1] sm:$0xff]
      %v3594 = vld [vmem:[%s165 + $0xf9] sm:$0xff]
      %v3595 = vld [vmem:[%s165 + $0x101] sm:$0xff]
      %v3596 = vld [vmem:[%s165 + $0x109] sm:$0xff]
      %v3597 = vld [vmem:[%s165 + $0x111] sm:$0xff]
      %v3598 = vld [vmem:[%s165 + $0x119] sm:$0xff]
      %v3599 = vld [vmem:[%s165 + $0x121] sm:$0xff]
      %v3600 = vld [vmem:[%s165 + $0x129] sm:$0xff]
      %v3601 = vld [vmem:[%s165 + $0x131] sm:$0xff]
      %v3602 = vld [vmem:[%s165 + $0x139] sm:$0xff]
      %v3603 = vld [vmem:[%s165 + $0x141] sm:$0xff]
      %v3604 = vld [vmem:[%s165 + $0x149] sm:$0xff]
      %v3605 = vld [vmem:[%s165 + $0x151] sm:$0xff]
      %v3606 = vld [vmem:[%s165 + $0x159] sm:$0xff]
      %v3607 = vld [vmem:[%s165 + $0x161] sm:$0xff]
      %v3608 = vld [vmem:[%s165 + $0x169] sm:$0xff]
      %v3609 = vld [vmem:[%s165 + $0x171] sm:$0xff]
      %v3610 = vld [vmem:[%s165 + $0x179] sm:$0xff]
      %v3611 = vld [vmem:[%s165 + $0x181] sm:$0xff]
      %s3612 = scalar_lea.vmem %s1, 864
      %v3613 = vld [vmem:[%s3612] sm:$0xff]
      %v3614 = vld [vmem:[%s3612 + $0x8] sm:$0xff]
      %v3615 = vld [vmem:[%s3612 + $0x10] sm:$0xff]
      %v3616 = vld [vmem:[%s3612 + $0x18] sm:$0xff]
      %v3617 = vld [vmem:[%s3612 + $0x20] sm:$0xff]
      %v3618 = vld [vmem:[%s3612 + $0x28] sm:$0xff]
      %v3619 = vld [vmem:[%s3612 + $0x30] sm:$0xff]
      %v3620 = vld [vmem:[%s3612 + $0x38] sm:$0xff]
      %v3621 = vld [vmem:[%s3612 + $0x40] sm:$0xff]
      %v3622 = vld [vmem:[%s3612 + $0x48] sm:$0xff]
      %v3623 = vld [vmem:[%s3612 + $0x50] sm:$0xff]
      %v3624 = vld [vmem:[%s3612 + $0x58] sm:$0x3]
      %v3626 = vsel %vm230, %v3569, 0
      %v3629 = vsel %vm230, %v3570, 0
      %v3632 = vsel %vm230, %v3571, 0
      %v3635 = vsel %vm230, %v3572, 0
      %v3638 = vsel %vm230, %v3573, 0
      %v3641 = vsel %vm230, %v3574, 0
      %v3644 = vsel %vm230, %v3575, 0
      %v3647 = vsel %vm230, %v3576, 0
      %v3650 = vsel %vm230, %v3577, 0
      %v3653 = vsel %vm230, %v3578, 0
      %v3656 = vsel %vm230, %v3579, 0
      %v3659 = vsel %vm230, %v3580, 0
      %v3662 = vsel %vm230, %v3581, 0
      %v3665 = vsel %vm230, %v3582, 0
      %v3668 = vsel %vm230, %v3583, 0
      %v3671 = vsel %vm230, %v3584, 0
      %v3674 = vsel %vm230, %v3585, 0
      %v3677 = vsel %vm230, %v3586, 0
      %v3680 = vsel %vm230, %v3587, 0
      %v3683 = vsel %vm230, %v3588, 0
      %v3686 = vsel %vm230, %v3589, 0
      %v3689 = vsel %vm230, %v3590, 0
      %v3692 = vsel %vm230, %v3591, 0
      %v3695 = vsel %vm230, %v3592, 0
      %v3698 = vsel %vm230, %v3593, 0
      %v3701 = vsel %vm230, %v3594, 0
      %v3704 = vsel %vm230, %v3595, 0
      %v3707 = vsel %vm230, %v3596, 0
      %v3710 = vsel %vm230, %v3597, 0
      %v3713 = vsel %vm230, %v3598, 0
      %v3716 = vsel %vm230, %v3599, 0
      %v3719 = vsel %vm230, %v3600, 0
      %v3722 = vsel %vm230, %v3601, 0
      %v3725 = vsel %vm230, %v3602, 0
      %v3728 = vsel %vm230, %v3603, 0
      %v3731 = vsel %vm230, %v3604, 0
      %v3734 = vsel %vm230, %v3605, 0
      %v3737 = vsel %vm230, %v3606, 0
      %v3740 = vsel %vm230, %v3607, 0
      %v3743 = vsel %vm230, %v3608, 0
      %v3746 = vsel %vm230, %v3609, 0
      %v3749 = vsel %vm230, %v3610, 0
      %v3752 = vsel %vm230, %v3611, 0
      %v3755 = vsel %vm360, %v3624, 0
      %3757 = vmatpush.msra.mxu0 0.0
      %3758 = vmatpush.msra.mxu0 0.0
      %3759 = vmatpush.msra.mxu0 0.0
      %3760 = vmatpush.msra.mxu0 0.0
      %3761 = vmatpush.msra.mxu0 %v3755
      %3762 = vmatpush.msra.mxu0 %v3623
      %3763 = vmatpush.msra.mxu0 %v3622
      %3764 = vmatpush.msra.mxu0 %v3621
      %3765 = vmatpush.msra.mxu0 %v3620
      %3766 = vmatpush.msra.mxu0 %v3619
      %3767 = vmatpush.msra.mxu0 %v3618
      %3768 = vmatpush.msra.mxu0 %v3617
      %3769 = vmatpush.msra.mxu0 %v3616
      %3770 = vmatpush.msra.mxu0 %v3615
      %3771 = vmatpush.msra.mxu0 %v3614
      %3772 = vmatpush.msra.mxu0 %v3613
      %3773 = vmatmul.f32.gmra.mxu0 %v3626
      %v3774 = vpop.f32.mrf.mxu0
      %v3775 = vadd.f32 0.0, %v3774
      %3776 = vmatmul.f32.gmra.mxu0 %v3629
      %v3777 = vpop.f32.mrf.mxu0
      %v3778 = vadd.f32 0.0, %v3777
      %3779 = vmatmul.f32.gmra.mxu0 %v3632
      %v3780 = vpop.f32.mrf.mxu0
      %v3781 = vadd.f32 0.0, %v3780
      %3782 = vmatmul.f32.gmra.mxu0 %v3635
      %v3783 = vpop.f32.mrf.mxu0
      %v3784 = vadd.f32 0.0, %v3783
      %3785 = vmatmul.f32.gmra.mxu0 %v3638
      %v3786 = vpop.f32.mrf.mxu0
      %v3787 = vadd.f32 0.0, %v3786
      %3788 = vmatmul.f32.gmra.mxu0 %v3641
      %v3789 = vpop.f32.mrf.mxu0
      %v3790 = vadd.f32 0.0, %v3789
      %3791 = vmatmul.f32.gmra.mxu0 %v3644
      %v3792 = vpop.f32.mrf.mxu0
      %v3793 = vadd.f32 0.0, %v3792
      %3794 = vmatmul.f32.gmra.mxu0 %v3647
      %v3795 = vpop.f32.mrf.mxu0
      %v3796 = vadd.f32 0.0, %v3795
      %3797 = vmatmul.f32.gmra.mxu0 %v3650
      %v3798 = vpop.f32.mrf.mxu0
      %v3799 = vadd.f32 0.0, %v3798
      %3800 = vmatmul.f32.gmra.mxu0 %v3653
      %v3801 = vpop.f32.mrf.mxu0
      %v3802 = vadd.f32 0.0, %v3801
      %3803 = vmatmul.f32.gmra.mxu0 %v3656
      %v3804 = vpop.f32.mrf.mxu0
      %v3805 = vadd.f32 0.0, %v3804
      %3806 = vmatmul.f32.gmra.mxu0 %v3659
      %v3807 = vpop.f32.mrf.mxu0
      %v3808 = vadd.f32 0.0, %v3807
      %3809 = vmatmul.f32.gmra.mxu0 %v3662
      %v3810 = vpop.f32.mrf.mxu0
      %v3811 = vadd.f32 0.0, %v3810
      %3812 = vmatmul.f32.gmra.mxu0 %v3665
      %v3813 = vpop.f32.mrf.mxu0
      %v3814 = vadd.f32 0.0, %v3813
      %3815 = vmatmul.f32.gmra.mxu0 %v3668
      %v3816 = vpop.f32.mrf.mxu0
      %v3817 = vadd.f32 0.0, %v3816
      %3818 = vmatmul.f32.gmra.mxu0 %v3671
      %v3819 = vpop.f32.mrf.mxu0
      %v3820 = vadd.f32 0.0, %v3819
      %3821 = vmatmul.f32.gmra.mxu0 %v3674
      %v3822 = vpop.f32.mrf.mxu0
      %v3823 = vadd.f32 0.0, %v3822
      %3824 = vmatmul.f32.gmra.mxu0 %v3677
      %v3825 = vpop.f32.mrf.mxu0
      %v3826 = vadd.f32 0.0, %v3825
      %3827 = vmatmul.f32.gmra.mxu0 %v3680
      %v3828 = vpop.f32.mrf.mxu0
      %v3829 = vadd.f32 0.0, %v3828
      %3830 = vmatmul.f32.gmra.mxu0 %v3683
      %v3831 = vpop.f32.mrf.mxu0
      %v3832 = vadd.f32 0.0, %v3831
      %3833 = vmatmul.f32.gmra.mxu0 %v3686
      %v3834 = vpop.f32.mrf.mxu0
      %v3835 = vadd.f32 0.0, %v3834
      %3836 = vmatmul.f32.gmra.mxu0 %v3689
      %v3837 = vpop.f32.mrf.mxu0
      %v3838 = vadd.f32 0.0, %v3837
      %3839 = vmatmul.f32.gmra.mxu0 %v3692
      %v3840 = vpop.f32.mrf.mxu0
      %v3841 = vadd.f32 0.0, %v3840
      %3842 = vmatmul.f32.gmra.mxu0 %v3695
      %v3843 = vpop.f32.mrf.mxu0
      %v3844 = vadd.f32 0.0, %v3843
      %3845 = vmatmul.f32.gmra.mxu0 %v3698
      %v3846 = vpop.f32.mrf.mxu0
      %v3847 = vadd.f32 0.0, %v3846
      %3848 = vmatmul.f32.gmra.mxu0 %v3701
      %v3849 = vpop.f32.mrf.mxu0
      %v3850 = vadd.f32 0.0, %v3849
      %3851 = vmatmul.f32.gmra.mxu0 %v3704
      %v3852 = vpop.f32.mrf.mxu0
      %v3853 = vadd.f32 0.0, %v3852
      %3854 = vmatmul.f32.gmra.mxu0 %v3707
      %v3855 = vpop.f32.mrf.mxu0
      %v3856 = vadd.f32 0.0, %v3855
      %3857 = vmatmul.f32.gmra.mxu0 %v3710
      %v3858 = vpop.f32.mrf.mxu0
      %v3859 = vadd.f32 0.0, %v3858
      %3860 = vmatmul.f32.gmra.mxu0 %v3713
      %v3861 = vpop.f32.mrf.mxu0
      %v3862 = vadd.f32 0.0, %v3861
      %3863 = vmatmul.f32.gmra.mxu0 %v3716
      %v3864 = vpop.f32.mrf.mxu0
      %v3865 = vadd.f32 0.0, %v3864
      %3866 = vmatmul.f32.gmra.mxu0 %v3719
      %v3867 = vpop.f32.mrf.mxu0
      %v3868 = vadd.f32 0.0, %v3867
      %3869 = vmatmul.f32.gmra.mxu0 %v3722
      %v3870 = vpop.f32.mrf.mxu0
      %v3871 = vadd.f32 0.0, %v3870
      %3872 = vmatmul.f32.gmra.mxu0 %v3725
      %v3873 = vpop.f32.mrf.mxu0
      %v3874 = vadd.f32 0.0, %v3873
      %3875 = vmatmul.f32.gmra.mxu0 %v3728
      %v3876 = vpop.f32.mrf.mxu0
      %v3877 = vadd.f32 0.0, %v3876
      %3878 = vmatmul.f32.gmra.mxu0 %v3731
      %v3879 = vpop.f32.mrf.mxu0
      %v3880 = vadd.f32 0.0, %v3879
      %3881 = vmatmul.f32.gmra.mxu0 %v3734
      %v3882 = vpop.f32.mrf.mxu0
      %v3883 = vadd.f32 0.0, %v3882
      %3884 = vmatmul.f32.gmra.mxu0 %v3737
      %v3885 = vpop.f32.mrf.mxu0
      %v3886 = vadd.f32 0.0, %v3885
      %3887 = vmatmul.f32.gmra.mxu0 %v3740
      %v3888 = vpop.f32.mrf.mxu0
      %v3889 = vadd.f32 0.0, %v3888
      %3890 = vmatmul.f32.gmra.mxu0 %v3743
      %v3891 = vpop.f32.mrf.mxu0
      %v3892 = vadd.f32 0.0, %v3891
      %3893 = vmatmul.f32.gmra.mxu0 %v3746
      %v3894 = vpop.f32.mrf.mxu0
      %v3895 = vadd.f32 0.0, %v3894
      %3896 = vmatmul.f32.gmra.mxu0 %v3749
      %v3897 = vpop.f32.mrf.mxu0
      %v3898 = vadd.f32 0.0, %v3897
      %3899 = vmatmul.f32.gmra.mxu0 %v3752
      %v3900 = vpop.f32.mrf.mxu0
      %v3901 = vadd.f32 0.0, %v3900
      %3902 = vdwg.mxu0
      %v3903 = vadd.f32 %v3526, %v3775
      %v3904 = vadd.f32 %v3527, %v3778
      %v3905 = vadd.f32 %v3528, %v3781
      %v3906 = vadd.f32 %v3529, %v3784
      %v3907 = vadd.f32 %v3530, %v3787
      %v3908 = vadd.f32 %v3531, %v3790
      %v3909 = vadd.f32 %v3532, %v3793
      %v3910 = vadd.f32 %v3533, %v3796
      %v3911 = vadd.f32 %v3534, %v3799
      %v3912 = vadd.f32 %v3535, %v3802
      %v3913 = vadd.f32 %v3536, %v3805
      %v3914 = vadd.f32 %v3537, %v3808
      %v3915 = vadd.f32 %v3538, %v3811
      %v3916 = vadd.f32 %v3539, %v3814
      %v3917 = vadd.f32 %v3540, %v3817
      %v3918 = vadd.f32 %v3541, %v3820
      %v3919 = vadd.f32 %v3542, %v3823
      %v3920 = vadd.f32 %v3543, %v3826
      %v3921 = vadd.f32 %v3544, %v3829
      %v3922 = vadd.f32 %v3545, %v3832
      %v3923 = vadd.f32 %v3546, %v3835
      %v3924 = vadd.f32 %v3547, %v3838
      %v3925 = vadd.f32 %v3548, %v3841
      %v3926 = vadd.f32 %v3549, %v3844
      %v3927 = vadd.f32 %v3550, %v3847
      %v3928 = vadd.f32 %v3551, %v3850
      %v3929 = vadd.f32 %v3552, %v3853
      %v3930 = vadd.f32 %v3553, %v3856
      %v3931 = vadd.f32 %v3554, %v3859
      %v3932 = vadd.f32 %v3555, %v3862
      %v3933 = vadd.f32 %v3556, %v3865
      %v3934 = vadd.f32 %v3557, %v3868
      %v3935 = vadd.f32 %v3558, %v3871
      %v3936 = vadd.f32 %v3559, %v3874
      %v3937 = vadd.f32 %v3560, %v3877
      %v3938 = vadd.f32 %v3561, %v3880
      %v3939 = vadd.f32 %v3562, %v3883
      %v3940 = vadd.f32 %v3563, %v3886
      %v3941 = vadd.f32 %v3564, %v3889
      %v3942 = vadd.f32 %v3565, %v3892
      %v3943 = vadd.f32 %v3566, %v3895
      %v3944 = vadd.f32 %v3567, %v3898
      %v3945 = vadd.f32 %v3568, %v3901
      %v3946 = vld [vmem:[%s165 + $0x32] sm:$0xff]
      %v3947 = vld [vmem:[%s165 + $0x3a] sm:$0xff]
      %v3948 = vld [vmem:[%s165 + $0x42] sm:$0xff]
      %v3949 = vld [vmem:[%s165 + $0x4a] sm:$0xff]
      %v3950 = vld [vmem:[%s165 + $0x52] sm:$0xff]
      %v3951 = vld [vmem:[%s165 + $0x5a] sm:$0xff]
      %v3952 = vld [vmem:[%s165 + $0x62] sm:$0xff]
      %v3953 = vld [vmem:[%s165 + $0x6a] sm:$0xff]
      %v3954 = vld [vmem:[%s165 + $0x72] sm:$0xff]
      %v3955 = vld [vmem:[%s165 + $0x7a] sm:$0xff]
      %v3956 = vld [vmem:[%s165 + $0x82] sm:$0xff]
      %v3957 = vld [vmem:[%s165 + $0x8a] sm:$0xff]
      %v3958 = vld [vmem:[%s165 + $0x92] sm:$0xff]
      %v3959 = vld [vmem:[%s165 + $0x9a] sm:$0xff]
      %v3960 = vld [vmem:[%s165 + $0xa2] sm:$0xff]
      %v3961 = vld [vmem:[%s165 + $0xaa] sm:$0xff]
      %v3962 = vld [vmem:[%s165 + $0xb2] sm:$0xff]
      %v3963 = vld [vmem:[%s165 + $0xba] sm:$0xff]
      %v3964 = vld [vmem:[%s165 + $0xc2] sm:$0xff]
      %v3965 = vld [vmem:[%s165 + $0xca] sm:$0xff]
      %v3966 = vld [vmem:[%s165 + $0xd2] sm:$0xff]
      %v3967 = vld [vmem:[%s165 + $0xda] sm:$0xff]
      %v3968 = vld [vmem:[%s165 + $0xe2] sm:$0xff]
      %v3969 = vld [vmem:[%s165 + $0xea] sm:$0xff]
      %v3970 = vld [vmem:[%s165 + $0xf2] sm:$0xff]
      %v3971 = vld [vmem:[%s165 + $0xfa] sm:$0xff]
      %v3972 = vld [vmem:[%s165 + $0x102] sm:$0xff]
      %v3973 = vld [vmem:[%s165 + $0x10a] sm:$0xff]
      %v3974 = vld [vmem:[%s165 + $0x112] sm:$0xff]
      %v3975 = vld [vmem:[%s165 + $0x11a] sm:$0xff]
      %v3976 = vld [vmem:[%s165 + $0x122] sm:$0xff]
      %v3977 = vld [vmem:[%s165 + $0x12a] sm:$0xff]
      %v3978 = vld [vmem:[%s165 + $0x132] sm:$0xff]
      %v3979 = vld [vmem:[%s165 + $0x13a] sm:$0xff]
      %v3980 = vld [vmem:[%s165 + $0x142] sm:$0xff]
      %v3981 = vld [vmem:[%s165 + $0x14a] sm:$0xff]
      %v3982 = vld [vmem:[%s165 + $0x152] sm:$0xff]
      %v3983 = vld [vmem:[%s165 + $0x15a] sm:$0xff]
      %v3984 = vld [vmem:[%s165 + $0x162] sm:$0xff]
      %v3985 = vld [vmem:[%s165 + $0x16a] sm:$0xff]
      %v3986 = vld [vmem:[%s165 + $0x172] sm:$0xff]
      %v3987 = vld [vmem:[%s165 + $0x17a] sm:$0xff]
      %v3988 = vld [vmem:[%s165 + $0x182] sm:$0xff]
      %s3989 = scalar_lea.vmem %s1, 960
      %v3990 = vld [vmem:[%s3989] sm:$0xff]
      %v3991 = vld [vmem:[%s3989 + $0x8] sm:$0xff]
      %v3992 = vld [vmem:[%s3989 + $0x10] sm:$0xff]
      %v3993 = vld [vmem:[%s3989 + $0x18] sm:$0xff]
      %v3994 = vld [vmem:[%s3989 + $0x20] sm:$0xff]
      %v3995 = vld [vmem:[%s3989 + $0x28] sm:$0xff]
      %v3996 = vld [vmem:[%s3989 + $0x30] sm:$0xff]
      %v3997 = vld [vmem:[%s3989 + $0x38] sm:$0xff]
      %v3998 = vld [vmem:[%s3989 + $0x40] sm:$0xff]
      %v3999 = vld [vmem:[%s3989 + $0x48] sm:$0xff]
      %v4000 = vld [vmem:[%s3989 + $0x50] sm:$0xff]
      %v4001 = vld [vmem:[%s3989 + $0x58] sm:$0x3]
      %v4003 = vsel %vm230, %v3946, 0
      %v4006 = vsel %vm230, %v3947, 0
      %v4009 = vsel %vm230, %v3948, 0
      %v4012 = vsel %vm230, %v3949, 0
      %v4015 = vsel %vm230, %v3950, 0
      %v4018 = vsel %vm230, %v3951, 0
      %v4021 = vsel %vm230, %v3952, 0
      %v4024 = vsel %vm230, %v3953, 0
      %v4027 = vsel %vm230, %v3954, 0
      %v4030 = vsel %vm230, %v3955, 0
      %v4033 = vsel %vm230, %v3956, 0
      %v4036 = vsel %vm230, %v3957, 0
      %v4039 = vsel %vm230, %v3958, 0
      %v4042 = vsel %vm230, %v3959, 0
      %v4045 = vsel %vm230, %v3960, 0
      %v4048 = vsel %vm230, %v3961, 0
      %v4051 = vsel %vm230, %v3962, 0
      %v4054 = vsel %vm230, %v3963, 0
      %v4057 = vsel %vm230, %v3964, 0
      %v4060 = vsel %vm230, %v3965, 0
      %v4063 = vsel %vm230, %v3966, 0
      %v4066 = vsel %vm230, %v3967, 0
      %v4069 = vsel %vm230, %v3968, 0
      %v4072 = vsel %vm230, %v3969, 0
      %v4075 = vsel %vm230, %v3970, 0
      %v4078 = vsel %vm230, %v3971, 0
      %v4081 = vsel %vm230, %v3972, 0
      %v4084 = vsel %vm230, %v3973, 0
      %v4087 = vsel %vm230, %v3974, 0
      %v4090 = vsel %vm230, %v3975, 0
      %v4093 = vsel %vm230, %v3976, 0
      %v4096 = vsel %vm230, %v3977, 0
      %v4099 = vsel %vm230, %v3978, 0
      %v4102 = vsel %vm230, %v3979, 0
      %v4105 = vsel %vm230, %v3980, 0
      %v4108 = vsel %vm230, %v3981, 0
      %v4111 = vsel %vm230, %v3982, 0
      %v4114 = vsel %vm230, %v3983, 0
      %v4117 = vsel %vm230, %v3984, 0
      %v4120 = vsel %vm230, %v3985, 0
      %v4123 = vsel %vm230, %v3986, 0
      %v4126 = vsel %vm230, %v3987, 0
      %v4129 = vsel %vm230, %v3988, 0
      %v4132 = vsel %vm360, %v4001, 0
      %4134 = vmatpush.msra.mxu0 0.0
      %4135 = vmatpush.msra.mxu0 0.0
      %4136 = vmatpush.msra.mxu0 0.0
      %4137 = vmatpush.msra.mxu0 0.0
      %4138 = vmatpush.msra.mxu0 %v4132
      %4139 = vmatpush.msra.mxu0 %v4000
      %4140 = vmatpush.msra.mxu0 %v3999
      %4141 = vmatpush.msra.mxu0 %v3998
      %4142 = vmatpush.msra.mxu0 %v3997
      %4143 = vmatpush.msra.mxu0 %v3996
      %4144 = vmatpush.msra.mxu0 %v3995
      %4145 = vmatpush.msra.mxu0 %v3994
      %4146 = vmatpush.msra.mxu0 %v3993
      %4147 = vmatpush.msra.mxu0 %v3992
      %4148 = vmatpush.msra.mxu0 %v3991
      %4149 = vmatpush.msra.mxu0 %v3990
      %4150 = vmatmul.f32.gmra.mxu0 %v4003
      %v4151 = vpop.f32.mrf.mxu0
      %v4152 = vadd.f32 0.0, %v4151
      %4153 = vmatmul.f32.gmra.mxu0 %v4006
      %v4154 = vpop.f32.mrf.mxu0
      %v4155 = vadd.f32 0.0, %v4154
      %4156 = vmatmul.f32.gmra.mxu0 %v4009
      %v4157 = vpop.f32.mrf.mxu0
      %v4158 = vadd.f32 0.0, %v4157
      %4159 = vmatmul.f32.gmra.mxu0 %v4012
      %v4160 = vpop.f32.mrf.mxu0
      %v4161 = vadd.f32 0.0, %v4160
      %4162 = vmatmul.f32.gmra.mxu0 %v4015
      %v4163 = vpop.f32.mrf.mxu0
      %v4164 = vadd.f32 0.0, %v4163
      %4165 = vmatmul.f32.gmra.mxu0 %v4018
      %v4166 = vpop.f32.mrf.mxu0
      %v4167 = vadd.f32 0.0, %v4166
      %4168 = vmatmul.f32.gmra.mxu0 %v4021
      %v4169 = vpop.f32.mrf.mxu0
      %v4170 = vadd.f32 0.0, %v4169
      %4171 = vmatmul.f32.gmra.mxu0 %v4024
      %v4172 = vpop.f32.mrf.mxu0
      %v4173 = vadd.f32 0.0, %v4172
      %4174 = vmatmul.f32.gmra.mxu0 %v4027
      %v4175 = vpop.f32.mrf.mxu0
      %v4176 = vadd.f32 0.0, %v4175
      %4177 = vmatmul.f32.gmra.mxu0 %v4030
      %v4178 = vpop.f32.mrf.mxu0
      %v4179 = vadd.f32 0.0, %v4178
      %4180 = vmatmul.f32.gmra.mxu0 %v4033
      %v4181 = vpop.f32.mrf.mxu0
      %v4182 = vadd.f32 0.0, %v4181
      %4183 = vmatmul.f32.gmra.mxu0 %v4036
      %v4184 = vpop.f32.mrf.mxu0
      %v4185 = vadd.f32 0.0, %v4184
      %4186 = vmatmul.f32.gmra.mxu0 %v4039
      %v4187 = vpop.f32.mrf.mxu0
      %v4188 = vadd.f32 0.0, %v4187
      %4189 = vmatmul.f32.gmra.mxu0 %v4042
      %v4190 = vpop.f32.mrf.mxu0
      %v4191 = vadd.f32 0.0, %v4190
      %4192 = vmatmul.f32.gmra.mxu0 %v4045
      %v4193 = vpop.f32.mrf.mxu0
      %v4194 = vadd.f32 0.0, %v4193
      %4195 = vmatmul.f32.gmra.mxu0 %v4048
      %v4196 = vpop.f32.mrf.mxu0
      %v4197 = vadd.f32 0.0, %v4196
      %4198 = vmatmul.f32.gmra.mxu0 %v4051
      %v4199 = vpop.f32.mrf.mxu0
      %v4200 = vadd.f32 0.0, %v4199
      %4201 = vmatmul.f32.gmra.mxu0 %v4054
      %v4202 = vpop.f32.mrf.mxu0
      %v4203 = vadd.f32 0.0, %v4202
      %4204 = vmatmul.f32.gmra.mxu0 %v4057
      %v4205 = vpop.f32.mrf.mxu0
      %v4206 = vadd.f32 0.0, %v4205
      %4207 = vmatmul.f32.gmra.mxu0 %v4060
      %v4208 = vpop.f32.mrf.mxu0
      %v4209 = vadd.f32 0.0, %v4208
      %4210 = vmatmul.f32.gmra.mxu0 %v4063
      %v4211 = vpop.f32.mrf.mxu0
      %v4212 = vadd.f32 0.0, %v4211
      %4213 = vmatmul.f32.gmra.mxu0 %v4066
      %v4214 = vpop.f32.mrf.mxu0
      %v4215 = vadd.f32 0.0, %v4214
      %4216 = vmatmul.f32.gmra.mxu0 %v4069
      %v4217 = vpop.f32.mrf.mxu0
      %v4218 = vadd.f32 0.0, %v4217
      %4219 = vmatmul.f32.gmra.mxu0 %v4072
      %v4220 = vpop.f32.mrf.mxu0
      %v4221 = vadd.f32 0.0, %v4220
      %4222 = vmatmul.f32.gmra.mxu0 %v4075
      %v4223 = vpop.f32.mrf.mxu0
      %v4224 = vadd.f32 0.0, %v4223
      %4225 = vmatmul.f32.gmra.mxu0 %v4078
      %v4226 = vpop.f32.mrf.mxu0
      %v4227 = vadd.f32 0.0, %v4226
      %4228 = vmatmul.f32.gmra.mxu0 %v4081
      %v4229 = vpop.f32.mrf.mxu0
      %v4230 = vadd.f32 0.0, %v4229
      %4231 = vmatmul.f32.gmra.mxu0 %v4084
      %v4232 = vpop.f32.mrf.mxu0
      %v4233 = vadd.f32 0.0, %v4232
      %4234 = vmatmul.f32.gmra.mxu0 %v4087
      %v4235 = vpop.f32.mrf.mxu0
      %v4236 = vadd.f32 0.0, %v4235
      %4237 = vmatmul.f32.gmra.mxu0 %v4090
      %v4238 = vpop.f32.mrf.mxu0
      %v4239 = vadd.f32 0.0, %v4238
      %4240 = vmatmul.f32.gmra.mxu0 %v4093
      %v4241 = vpop.f32.mrf.mxu0
      %v4242 = vadd.f32 0.0, %v4241
      %4243 = vmatmul.f32.gmra.mxu0 %v4096
      %v4244 = vpop.f32.mrf.mxu0
      %v4245 = vadd.f32 0.0, %v4244
      %4246 = vmatmul.f32.gmra.mxu0 %v4099
      %v4247 = vpop.f32.mrf.mxu0
      %v4248 = vadd.f32 0.0, %v4247
      %4249 = vmatmul.f32.gmra.mxu0 %v4102
      %v4250 = vpop.f32.mrf.mxu0
      %v4251 = vadd.f32 0.0, %v4250
      %4252 = vmatmul.f32.gmra.mxu0 %v4105
      %v4253 = vpop.f32.mrf.mxu0
      %v4254 = vadd.f32 0.0, %v4253
      %4255 = vmatmul.f32.gmra.mxu0 %v4108
      %v4256 = vpop.f32.mrf.mxu0
      %v4257 = vadd.f32 0.0, %v4256
      %4258 = vmatmul.f32.gmra.mxu0 %v4111
      %v4259 = vpop.f32.mrf.mxu0
      %v4260 = vadd.f32 0.0, %v4259
      %4261 = vmatmul.f32.gmra.mxu0 %v4114
      %v4262 = vpop.f32.mrf.mxu0
      %v4263 = vadd.f32 0.0, %v4262
      %4264 = vmatmul.f32.gmra.mxu0 %v4117
      %v4265 = vpop.f32.mrf.mxu0
      %v4266 = vadd.f32 0.0, %v4265
      %4267 = vmatmul.f32.gmra.mxu0 %v4120
      %v4268 = vpop.f32.mrf.mxu0
      %v4269 = vadd.f32 0.0, %v4268
      %4270 = vmatmul.f32.gmra.mxu0 %v4123
      %v4271 = vpop.f32.mrf.mxu0
      %v4272 = vadd.f32 0.0, %v4271
      %4273 = vmatmul.f32.gmra.mxu0 %v4126
      %v4274 = vpop.f32.mrf.mxu0
      %v4275 = vadd.f32 0.0, %v4274
      %4276 = vmatmul.f32.gmra.mxu0 %v4129
      %v4277 = vpop.f32.mrf.mxu0
      %v4278 = vadd.f32 0.0, %v4277
      %4279 = vdwg.mxu0
      %v4280 = vadd.f32 %v3903, %v4152
      %v4281 = vadd.f32 %v3904, %v4155
      %v4282 = vadd.f32 %v3905, %v4158
      %v4283 = vadd.f32 %v3906, %v4161
      %v4284 = vadd.f32 %v3907, %v4164
      %v4285 = vadd.f32 %v3908, %v4167
      %v4286 = vadd.f32 %v3909, %v4170
      %v4287 = vadd.f32 %v3910, %v4173
      %v4288 = vadd.f32 %v3911, %v4176
      %v4289 = vadd.f32 %v3912, %v4179
      %v4290 = vadd.f32 %v3913, %v4182
      %v4291 = vadd.f32 %v3914, %v4185
      %v4292 = vadd.f32 %v3915, %v4188
      %v4293 = vadd.f32 %v3916, %v4191
      %v4294 = vadd.f32 %v3917, %v4194
      %v4295 = vadd.f32 %v3918, %v4197
      %v4296 = vadd.f32 %v3919, %v4200
      %v4297 = vadd.f32 %v3920, %v4203
      %v4298 = vadd.f32 %v3921, %v4206
      %v4299 = vadd.f32 %v3922, %v4209
      %v4300 = vadd.f32 %v3923, %v4212
      %v4301 = vadd.f32 %v3924, %v4215
      %v4302 = vadd.f32 %v3925, %v4218
      %v4303 = vadd.f32 %v3926, %v4221
      %v4304 = vadd.f32 %v3927, %v4224
      %v4305 = vadd.f32 %v3928, %v4227
      %v4306 = vadd.f32 %v3929, %v4230
      %v4307 = vadd.f32 %v3930, %v4233
      %v4308 = vadd.f32 %v3931, %v4236
      %v4309 = vadd.f32 %v3932, %v4239
      %v4310 = vadd.f32 %v3933, %v4242
      %v4311 = vadd.f32 %v3934, %v4245
      %v4312 = vadd.f32 %v3935, %v4248
      %v4313 = vadd.f32 %v3936, %v4251
      %v4314 = vadd.f32 %v3937, %v4254
      %v4315 = vadd.f32 %v3938, %v4257
      %v4316 = vadd.f32 %v3939, %v4260
      %v4317 = vadd.f32 %v3940, %v4263
      %v4318 = vadd.f32 %v3941, %v4266
      %v4319 = vadd.f32 %v3942, %v4269
      %v4320 = vadd.f32 %v3943, %v4272
      %v4321 = vadd.f32 %v3944, %v4275
      %v4322 = vadd.f32 %v3945, %v4278
      %v4323 = vld [vmem:[%s165 + $0x33] sm:$0xff]
      %v4324 = vld [vmem:[%s165 + $0x3b] sm:$0xff]
      %v4325 = vld [vmem:[%s165 + $0x43] sm:$0xff]
      %v4326 = vld [vmem:[%s165 + $0x4b] sm:$0xff]
      %v4327 = vld [vmem:[%s165 + $0x53] sm:$0xff]
      %v4328 = vld [vmem:[%s165 + $0x5b] sm:$0xff]
      %v4329 = vld [vmem:[%s165 + $0x63] sm:$0xff]
      %v4330 = vld [vmem:[%s165 + $0x6b] sm:$0xff]
      %v4331 = vld [vmem:[%s165 + $0x73] sm:$0xff]
      %v4332 = vld [vmem:[%s165 + $0x7b] sm:$0xff]
      %v4333 = vld [vmem:[%s165 + $0x83] sm:$0xff]
      %v4334 = vld [vmem:[%s165 + $0x8b] sm:$0xff]
      %v4335 = vld [vmem:[%s165 + $0x93] sm:$0xff]
      %v4336 = vld [vmem:[%s165 + $0x9b] sm:$0xff]
      %v4337 = vld [vmem:[%s165 + $0xa3] sm:$0xff]
      %v4338 = vld [vmem:[%s165 + $0xab] sm:$0xff]
      %v4339 = vld [vmem:[%s165 + $0xb3] sm:$0xff]
      %v4340 = vld [vmem:[%s165 + $0xbb] sm:$0xff]
      %v4341 = vld [vmem:[%s165 + $0xc3] sm:$0xff]
      %v4342 = vld [vmem:[%s165 + $0xcb] sm:$0xff]
      %v4343 = vld [vmem:[%s165 + $0xd3] sm:$0xff]
      %v4344 = vld [vmem:[%s165 + $0xdb] sm:$0xff]
      %v4345 = vld [vmem:[%s165 + $0xe3] sm:$0xff]
      %v4346 = vld [vmem:[%s165 + $0xeb] sm:$0xff]
      %v4347 = vld [vmem:[%s165 + $0xf3] sm:$0xff]
      %v4348 = vld [vmem:[%s165 + $0xfb] sm:$0xff]
      %v4349 = vld [vmem:[%s165 + $0x103] sm:$0xff]
      %v4350 = vld [vmem:[%s165 + $0x10b] sm:$0xff]
      %v4351 = vld [vmem:[%s165 + $0x113] sm:$0xff]
      %v4352 = vld [vmem:[%s165 + $0x11b] sm:$0xff]
      %v4353 = vld [vmem:[%s165 + $0x123] sm:$0xff]
      %v4354 = vld [vmem:[%s165 + $0x12b] sm:$0xff]
      %v4355 = vld [vmem:[%s165 + $0x133] sm:$0xff]
      %v4356 = vld [vmem:[%s165 + $0x13b] sm:$0xff]
      %v4357 = vld [vmem:[%s165 + $0x143] sm:$0xff]
      %v4358 = vld [vmem:[%s165 + $0x14b] sm:$0xff]
      %v4359 = vld [vmem:[%s165 + $0x153] sm:$0xff]
      %v4360 = vld [vmem:[%s165 + $0x15b] sm:$0xff]
      %v4361 = vld [vmem:[%s165 + $0x163] sm:$0xff]
      %v4362 = vld [vmem:[%s165 + $0x16b] sm:$0xff]
      %v4363 = vld [vmem:[%s165 + $0x173] sm:$0xff]
      %v4364 = vld [vmem:[%s165 + $0x17b] sm:$0xff]
      %v4365 = vld [vmem:[%s165 + $0x183] sm:$0xff]
      %s4366 = scalar_lea.vmem %s1, 1056
      %v4367 = vld [vmem:[%s4366] sm:$0xff]
      %v4368 = vld [vmem:[%s4366 + $0x8] sm:$0xff]
      %v4369 = vld [vmem:[%s4366 + $0x10] sm:$0xff]
      %v4370 = vld [vmem:[%s4366 + $0x18] sm:$0xff]
      %v4371 = vld [vmem:[%s4366 + $0x20] sm:$0xff]
      %v4372 = vld [vmem:[%s4366 + $0x28] sm:$0xff]
      %v4373 = vld [vmem:[%s4366 + $0x30] sm:$0xff]
      %v4374 = vld [vmem:[%s4366 + $0x38] sm:$0xff]
      %v4375 = vld [vmem:[%s4366 + $0x40] sm:$0xff]
      %v4376 = vld [vmem:[%s4366 + $0x48] sm:$0xff]
      %v4377 = vld [vmem:[%s4366 + $0x50] sm:$0xff]
      %v4378 = vld [vmem:[%s4366 + $0x58] sm:$0x3]
      %v4380 = vsel %vm230, %v4323, 0
      %v4383 = vsel %vm230, %v4324, 0
      %v4386 = vsel %vm230, %v4325, 0
      %v4389 = vsel %vm230, %v4326, 0
      %v4392 = vsel %vm230, %v4327, 0
      %v4395 = vsel %vm230, %v4328, 0
      %v4398 = vsel %vm230, %v4329, 0
      %v4401 = vsel %vm230, %v4330, 0
      %v4404 = vsel %vm230, %v4331, 0
      %v4407 = vsel %vm230, %v4332, 0
      %v4410 = vsel %vm230, %v4333, 0
      %v4413 = vsel %vm230, %v4334, 0
      %v4416 = vsel %vm230, %v4335, 0
      %v4419 = vsel %vm230, %v4336, 0
      %v4422 = vsel %vm230, %v4337, 0
      %v4425 = vsel %vm230, %v4338, 0
      %v4428 = vsel %vm230, %v4339, 0
      %v4431 = vsel %vm230, %v4340, 0
      %v4434 = vsel %vm230, %v4341, 0
      %v4437 = vsel %vm230, %v4342, 0
      %v4440 = vsel %vm230, %v4343, 0
      %v4443 = vsel %vm230, %v4344, 0
      %v4446 = vsel %vm230, %v4345, 0
      %v4449 = vsel %vm230, %v4346, 0
      %v4452 = vsel %vm230, %v4347, 0
      %v4455 = vsel %vm230, %v4348, 0
      %v4458 = vsel %vm230, %v4349, 0
      %v4461 = vsel %vm230, %v4350, 0
      %v4464 = vsel %vm230, %v4351, 0
      %v4467 = vsel %vm230, %v4352, 0
      %v4470 = vsel %vm230, %v4353, 0
      %v4473 = vsel %vm230, %v4354, 0
      %v4476 = vsel %vm230, %v4355, 0
      %v4479 = vsel %vm230, %v4356, 0
      %v4482 = vsel %vm230, %v4357, 0
      %v4485 = vsel %vm230, %v4358, 0
      %v4488 = vsel %vm230, %v4359, 0
      %v4491 = vsel %vm230, %v4360, 0
      %v4494 = vsel %vm230, %v4361, 0
      %v4497 = vsel %vm230, %v4362, 0
      %v4500 = vsel %vm230, %v4363, 0
      %v4503 = vsel %vm230, %v4364, 0
      %v4506 = vsel %vm230, %v4365, 0
      %v4509 = vsel %vm360, %v4378, 0
      %4511 = vmatpush.msra.mxu0 0.0
      %4512 = vmatpush.msra.mxu0 0.0
      %4513 = vmatpush.msra.mxu0 0.0
      %4514 = vmatpush.msra.mxu0 0.0
      %4515 = vmatpush.msra.mxu0 %v4509
      %4516 = vmatpush.msra.mxu0 %v4377
      %4517 = vmatpush.msra.mxu0 %v4376
      %4518 = vmatpush.msra.mxu0 %v4375
      %4519 = vmatpush.msra.mxu0 %v4374
      %4520 = vmatpush.msra.mxu0 %v4373
      %4521 = vmatpush.msra.mxu0 %v4372
      %4522 = vmatpush.msra.mxu0 %v4371
      %4523 = vmatpush.msra.mxu0 %v4370
      %4524 = vmatpush.msra.mxu0 %v4369
      %4525 = vmatpush.msra.mxu0 %v4368
      %4526 = vmatpush.msra.mxu0 %v4367
      %4527 = vmatmul.f32.gmra.mxu0 %v4380
      %v4528 = vpop.f32.mrf.mxu0
      %v4529 = vadd.f32 0.0, %v4528
      %4530 = vmatmul.f32.gmra.mxu0 %v4383
      %v4531 = vpop.f32.mrf.mxu0
      %v4532 = vadd.f32 0.0, %v4531
      %4533 = vmatmul.f32.gmra.mxu0 %v4386
      %v4534 = vpop.f32.mrf.mxu0
      %v4535 = vadd.f32 0.0, %v4534
      %4536 = vmatmul.f32.gmra.mxu0 %v4389
      %v4537 = vpop.f32.mrf.mxu0
      %v4538 = vadd.f32 0.0, %v4537
      %4539 = vmatmul.f32.gmra.mxu0 %v4392
      %v4540 = vpop.f32.mrf.mxu0
      %v4541 = vadd.f32 0.0, %v4540
      %4542 = vmatmul.f32.gmra.mxu0 %v4395
      %v4543 = vpop.f32.mrf.mxu0
      %v4544 = vadd.f32 0.0, %v4543
      %4545 = vmatmul.f32.gmra.mxu0 %v4398
      %v4546 = vpop.f32.mrf.mxu0
      %v4547 = vadd.f32 0.0, %v4546
      %4548 = vmatmul.f32.gmra.mxu0 %v4401
      %v4549 = vpop.f32.mrf.mxu0
      %v4550 = vadd.f32 0.0, %v4549
      %4551 = vmatmul.f32.gmra.mxu0 %v4404
      %v4552 = vpop.f32.mrf.mxu0
      %v4553 = vadd.f32 0.0, %v4552
      %4554 = vmatmul.f32.gmra.mxu0 %v4407
      %v4555 = vpop.f32.mrf.mxu0
      %v4556 = vadd.f32 0.0, %v4555
      %4557 = vmatmul.f32.gmra.mxu0 %v4410
      %v4558 = vpop.f32.mrf.mxu0
      %v4559 = vadd.f32 0.0, %v4558
      %4560 = vmatmul.f32.gmra.mxu0 %v4413
      %v4561 = vpop.f32.mrf.mxu0
      %v4562 = vadd.f32 0.0, %v4561
      %4563 = vmatmul.f32.gmra.mxu0 %v4416
      %v4564 = vpop.f32.mrf.mxu0
      %v4565 = vadd.f32 0.0, %v4564
      %4566 = vmatmul.f32.gmra.mxu0 %v4419
      %v4567 = vpop.f32.mrf.mxu0
      %v4568 = vadd.f32 0.0, %v4567
      %4569 = vmatmul.f32.gmra.mxu0 %v4422
      %v4570 = vpop.f32.mrf.mxu0
      %v4571 = vadd.f32 0.0, %v4570
      %4572 = vmatmul.f32.gmra.mxu0 %v4425
      %v4573 = vpop.f32.mrf.mxu0
      %v4574 = vadd.f32 0.0, %v4573
      %4575 = vmatmul.f32.gmra.mxu0 %v4428
      %v4576 = vpop.f32.mrf.mxu0
      %v4577 = vadd.f32 0.0, %v4576
      %4578 = vmatmul.f32.gmra.mxu0 %v4431
      %v4579 = vpop.f32.mrf.mxu0
      %v4580 = vadd.f32 0.0, %v4579
      %4581 = vmatmul.f32.gmra.mxu0 %v4434
      %v4582 = vpop.f32.mrf.mxu0
      %v4583 = vadd.f32 0.0, %v4582
      %4584 = vmatmul.f32.gmra.mxu0 %v4437
      %v4585 = vpop.f32.mrf.mxu0
      %v4586 = vadd.f32 0.0, %v4585
      %4587 = vmatmul.f32.gmra.mxu0 %v4440
      %v4588 = vpop.f32.mrf.mxu0
      %v4589 = vadd.f32 0.0, %v4588
      %4590 = vmatmul.f32.gmra.mxu0 %v4443
      %v4591 = vpop.f32.mrf.mxu0
      %v4592 = vadd.f32 0.0, %v4591
      %4593 = vmatmul.f32.gmra.mxu0 %v4446
      %v4594 = vpop.f32.mrf.mxu0
      %v4595 = vadd.f32 0.0, %v4594
      %4596 = vmatmul.f32.gmra.mxu0 %v4449
      %v4597 = vpop.f32.mrf.mxu0
      %v4598 = vadd.f32 0.0, %v4597
      %4599 = vmatmul.f32.gmra.mxu0 %v4452
      %v4600 = vpop.f32.mrf.mxu0
      %v4601 = vadd.f32 0.0, %v4600
      %4602 = vmatmul.f32.gmra.mxu0 %v4455
      %v4603 = vpop.f32.mrf.mxu0
      %v4604 = vadd.f32 0.0, %v4603
      %4605 = vmatmul.f32.gmra.mxu0 %v4458
      %v4606 = vpop.f32.mrf.mxu0
      %v4607 = vadd.f32 0.0, %v4606
      %4608 = vmatmul.f32.gmra.mxu0 %v4461
      %v4609 = vpop.f32.mrf.mxu0
      %v4610 = vadd.f32 0.0, %v4609
      %4611 = vmatmul.f32.gmra.mxu0 %v4464
      %v4612 = vpop.f32.mrf.mxu0
      %v4613 = vadd.f32 0.0, %v4612
      %4614 = vmatmul.f32.gmra.mxu0 %v4467
      %v4615 = vpop.f32.mrf.mxu0
      %v4616 = vadd.f32 0.0, %v4615
      %4617 = vmatmul.f32.gmra.mxu0 %v4470
      %v4618 = vpop.f32.mrf.mxu0
      %v4619 = vadd.f32 0.0, %v4618
      %4620 = vmatmul.f32.gmra.mxu0 %v4473
      %v4621 = vpop.f32.mrf.mxu0
      %v4622 = vadd.f32 0.0, %v4621
      %4623 = vmatmul.f32.gmra.mxu0 %v4476
      %v4624 = vpop.f32.mrf.mxu0
      %v4625 = vadd.f32 0.0, %v4624
      %4626 = vmatmul.f32.gmra.mxu0 %v4479
      %v4627 = vpop.f32.mrf.mxu0
      %v4628 = vadd.f32 0.0, %v4627
      %4629 = vmatmul.f32.gmra.mxu0 %v4482
      %v4630 = vpop.f32.mrf.mxu0
      %v4631 = vadd.f32 0.0, %v4630
      %4632 = vmatmul.f32.gmra.mxu0 %v4485
      %v4633 = vpop.f32.mrf.mxu0
      %v4634 = vadd.f32 0.0, %v4633
      %4635 = vmatmul.f32.gmra.mxu0 %v4488
      %v4636 = vpop.f32.mrf.mxu0
      %v4637 = vadd.f32 0.0, %v4636
      %4638 = vmatmul.f32.gmra.mxu0 %v4491
      %v4639 = vpop.f32.mrf.mxu0
      %v4640 = vadd.f32 0.0, %v4639
      %4641 = vmatmul.f32.gmra.mxu0 %v4494
      %v4642 = vpop.f32.mrf.mxu0
      %v4643 = vadd.f32 0.0, %v4642
      %4644 = vmatmul.f32.gmra.mxu0 %v4497
      %v4645 = vpop.f32.mrf.mxu0
      %v4646 = vadd.f32 0.0, %v4645
      %4647 = vmatmul.f32.gmra.mxu0 %v4500
      %v4648 = vpop.f32.mrf.mxu0
      %v4649 = vadd.f32 0.0, %v4648
      %4650 = vmatmul.f32.gmra.mxu0 %v4503
      %v4651 = vpop.f32.mrf.mxu0
      %v4652 = vadd.f32 0.0, %v4651
      %4653 = vmatmul.f32.gmra.mxu0 %v4506
      %v4654 = vpop.f32.mrf.mxu0
      %v4655 = vadd.f32 0.0, %v4654
      %4656 = vdwg.mxu0
      %v4657 = vadd.f32 %v4280, %v4529
      %v4658 = vadd.f32 %v4281, %v4532
      %v4659 = vadd.f32 %v4282, %v4535
      %v4660 = vadd.f32 %v4283, %v4538
      %v4661 = vadd.f32 %v4284, %v4541
      %v4662 = vadd.f32 %v4285, %v4544
      %v4663 = vadd.f32 %v4286, %v4547
      %v4664 = vadd.f32 %v4287, %v4550
      %v4665 = vadd.f32 %v4288, %v4553
      %v4666 = vadd.f32 %v4289, %v4556
      %v4667 = vadd.f32 %v4290, %v4559
      %v4668 = vadd.f32 %v4291, %v4562
      %v4669 = vadd.f32 %v4292, %v4565
      %v4670 = vadd.f32 %v4293, %v4568
      %v4671 = vadd.f32 %v4294, %v4571
      %v4672 = vadd.f32 %v4295, %v4574
      %v4673 = vadd.f32 %v4296, %v4577
      %v4674 = vadd.f32 %v4297, %v4580
      %v4675 = vadd.f32 %v4298, %v4583
      %v4676 = vadd.f32 %v4299, %v4586
      %v4677 = vadd.f32 %v4300, %v4589
      %v4678 = vadd.f32 %v4301, %v4592
      %v4679 = vadd.f32 %v4302, %v4595
      %v4680 = vadd.f32 %v4303, %v4598
      %v4681 = vadd.f32 %v4304, %v4601
      %v4682 = vadd.f32 %v4305, %v4604
      %v4683 = vadd.f32 %v4306, %v4607
      %v4684 = vadd.f32 %v4307, %v4610
      %v4685 = vadd.f32 %v4308, %v4613
      %v4686 = vadd.f32 %v4309, %v4616
      %v4687 = vadd.f32 %v4310, %v4619
      %v4688 = vadd.f32 %v4311, %v4622
      %v4689 = vadd.f32 %v4312, %v4625
      %v4690 = vadd.f32 %v4313, %v4628
      %v4691 = vadd.f32 %v4314, %v4631
      %v4692 = vadd.f32 %v4315, %v4634
      %v4693 = vadd.f32 %v4316, %v4637
      %v4694 = vadd.f32 %v4317, %v4640
      %v4695 = vadd.f32 %v4318, %v4643
      %v4696 = vadd.f32 %v4319, %v4646
      %v4697 = vadd.f32 %v4320, %v4649
      %v4698 = vadd.f32 %v4321, %v4652
      %v4699 = vadd.f32 %v4322, %v4655
      %v4700 = vld [vmem:[%s165 + $0x38] sm:$0xff]
      %v4701 = vld [vmem:[%s165 + $0x40] sm:$0xff]
      %v4702 = vld [vmem:[%s165 + $0x48] sm:$0xff]
      %v4703 = vld [vmem:[%s165 + $0x50] sm:$0xff]
      %v4704 = vld [vmem:[%s165 + $0x58] sm:$0xff]
      %v4705 = vld [vmem:[%s165 + $0x60] sm:$0xff]
      %v4706 = vld [vmem:[%s165 + $0x68] sm:$0xff]
      %v4707 = vld [vmem:[%s165 + $0x70] sm:$0xff]
      %v4708 = vld [vmem:[%s165 + $0x78] sm:$0xff]
      %v4709 = vld [vmem:[%s165 + $0x80] sm:$0xff]
      %v4710 = vld [vmem:[%s165 + $0x88] sm:$0xff]
      %v4711 = vld [vmem:[%s165 + $0x90] sm:$0xff]
      %v4712 = vld [vmem:[%s165 + $0x98] sm:$0xff]
      %v4713 = vld [vmem:[%s165 + $0xa0] sm:$0xff]
      %v4714 = vld [vmem:[%s165 + $0xa8] sm:$0xff]
      %v4715 = vld [vmem:[%s165 + $0xb0] sm:$0xff]
      %v4716 = vld [vmem:[%s165 + $0xb8] sm:$0xff]
      %v4717 = vld [vmem:[%s165 + $0xc0] sm:$0xff]
      %v4718 = vld [vmem:[%s165 + $0xc8] sm:$0xff]
      %v4719 = vld [vmem:[%s165 + $0xd0] sm:$0xff]
      %v4720 = vld [vmem:[%s165 + $0xd8] sm:$0xff]
      %v4721 = vld [vmem:[%s165 + $0xe0] sm:$0xff]
      %v4722 = vld [vmem:[%s165 + $0xe8] sm:$0xff]
      %v4723 = vld [vmem:[%s165 + $0xf0] sm:$0xff]
      %v4724 = vld [vmem:[%s165 + $0xf8] sm:$0xff]
      %v4725 = vld [vmem:[%s165 + $0x100] sm:$0xff]
      %v4726 = vld [vmem:[%s165 + $0x108] sm:$0xff]
      %v4727 = vld [vmem:[%s165 + $0x110] sm:$0xff]
      %v4728 = vld [vmem:[%s165 + $0x118] sm:$0xff]
      %v4729 = vld [vmem:[%s165 + $0x120] sm:$0xff]
      %v4730 = vld [vmem:[%s165 + $0x128] sm:$0xff]
      %v4731 = vld [vmem:[%s165 + $0x130] sm:$0xff]
      %v4732 = vld [vmem:[%s165 + $0x138] sm:$0xff]
      %v4733 = vld [vmem:[%s165 + $0x140] sm:$0xff]
      %v4734 = vld [vmem:[%s165 + $0x148] sm:$0xff]
      %v4735 = vld [vmem:[%s165 + $0x150] sm:$0xff]
      %v4736 = vld [vmem:[%s165 + $0x158] sm:$0xff]
      %v4737 = vld [vmem:[%s165 + $0x160] sm:$0xff]
      %v4738 = vld [vmem:[%s165 + $0x168] sm:$0xff]
      %v4739 = vld [vmem:[%s165 + $0x170] sm:$0xff]
      %v4740 = vld [vmem:[%s165 + $0x178] sm:$0xff]
      %v4741 = vld [vmem:[%s165 + $0x180] sm:$0xff]
      %v4742 = vld [vmem:[%s165 + $0x188] sm:$0xff]
      %s4743 = scalar_lea.vmem %s1, 1152
      %v4744 = vld [vmem:[%s4743] sm:$0xff]
      %v4745 = vld [vmem:[%s4743 + $0x8] sm:$0xff]
      %v4746 = vld [vmem:[%s4743 + $0x10] sm:$0xff]
      %v4747 = vld [vmem:[%s4743 + $0x18] sm:$0xff]
      %v4748 = vld [vmem:[%s4743 + $0x20] sm:$0xff]
      %v4749 = vld [vmem:[%s4743 + $0x28] sm:$0xff]
      %v4750 = vld [vmem:[%s4743 + $0x30] sm:$0xff]
      %v4751 = vld [vmem:[%s4743 + $0x38] sm:$0xff]
      %v4752 = vld [vmem:[%s4743 + $0x40] sm:$0xff]
      %v4753 = vld [vmem:[%s4743 + $0x48] sm:$0xff]
      %v4754 = vld [vmem:[%s4743 + $0x50] sm:$0xff]
      %v4755 = vld [vmem:[%s4743 + $0x58] sm:$0x3]
      %v4757 = vsel %vm230, %v4700, 0
      %v4760 = vsel %vm230, %v4701, 0
      %v4763 = vsel %vm230, %v4702, 0
      %v4766 = vsel %vm230, %v4703, 0
      %v4769 = vsel %vm230, %v4704, 0
      %v4772 = vsel %vm230, %v4705, 0
      %v4775 = vsel %vm230, %v4706, 0
      %v4778 = vsel %vm230, %v4707, 0
      %v4781 = vsel %vm230, %v4708, 0
      %v4784 = vsel %vm230, %v4709, 0
      %v4787 = vsel %vm230, %v4710, 0
      %v4790 = vsel %vm230, %v4711, 0
      %v4793 = vsel %vm230, %v4712, 0
      %v4796 = vsel %vm230, %v4713, 0
      %v4799 = vsel %vm230, %v4714, 0
      %v4802 = vsel %vm230, %v4715, 0
      %v4805 = vsel %vm230, %v4716, 0
      %v4808 = vsel %vm230, %v4717, 0
      %v4811 = vsel %vm230, %v4718, 0
      %v4814 = vsel %vm230, %v4719, 0
      %v4817 = vsel %vm230, %v4720, 0
      %v4820 = vsel %vm230, %v4721, 0
      %v4823 = vsel %vm230, %v4722, 0
      %v4826 = vsel %vm230, %v4723, 0
      %v4829 = vsel %vm230, %v4724, 0
      %v4832 = vsel %vm230, %v4725, 0
      %v4835 = vsel %vm230, %v4726, 0
      %v4838 = vsel %vm230, %v4727, 0
      %v4841 = vsel %vm230, %v4728, 0
      %v4844 = vsel %vm230, %v4729, 0
      %v4847 = vsel %vm230, %v4730, 0
      %v4850 = vsel %vm230, %v4731, 0
      %v4853 = vsel %vm230, %v4732, 0
      %v4856 = vsel %vm230, %v4733, 0
      %v4859 = vsel %vm230, %v4734, 0
      %v4862 = vsel %vm230, %v4735, 0
      %v4865 = vsel %vm230, %v4736, 0
      %v4868 = vsel %vm230, %v4737, 0
      %v4871 = vsel %vm230, %v4738, 0
      %v4874 = vsel %vm230, %v4739, 0
      %v4877 = vsel %vm230, %v4740, 0
      %v4880 = vsel %vm230, %v4741, 0
      %v4883 = vsel %vm230, %v4742, 0
      %v4886 = vsel %vm360, %v4755, 0
      %4888 = vmatpush.msra.mxu0 0.0
      %4889 = vmatpush.msra.mxu0 0.0
      %4890 = vmatpush.msra.mxu0 0.0
      %4891 = vmatpush.msra.mxu0 0.0
      %4892 = vmatpush.msra.mxu0 %v4886
      %4893 = vmatpush.msra.mxu0 %v4754
      %4894 = vmatpush.msra.mxu0 %v4753
      %4895 = vmatpush.msra.mxu0 %v4752
      %4896 = vmatpush.msra.mxu0 %v4751
      %4897 = vmatpush.msra.mxu0 %v4750
      %4898 = vmatpush.msra.mxu0 %v4749
      %4899 = vmatpush.msra.mxu0 %v4748
      %4900 = vmatpush.msra.mxu0 %v4747
      %4901 = vmatpush.msra.mxu0 %v4746
      %4902 = vmatpush.msra.mxu0 %v4745
      %4903 = vmatpush.msra.mxu0 %v4744
      %4904 = vmatmul.f32.gmra.mxu0 %v4757
      %v4905 = vpop.f32.mrf.mxu0
      %v4906 = vadd.f32 0.0, %v4905
      %4907 = vmatmul.f32.gmra.mxu0 %v4760
      %v4908 = vpop.f32.mrf.mxu0
      %v4909 = vadd.f32 0.0, %v4908
      %4910 = vmatmul.f32.gmra.mxu0 %v4763
      %v4911 = vpop.f32.mrf.mxu0
      %v4912 = vadd.f32 0.0, %v4911
      %4913 = vmatmul.f32.gmra.mxu0 %v4766
      %v4914 = vpop.f32.mrf.mxu0
      %v4915 = vadd.f32 0.0, %v4914
      %4916 = vmatmul.f32.gmra.mxu0 %v4769
      %v4917 = vpop.f32.mrf.mxu0
      %v4918 = vadd.f32 0.0, %v4917
      %4919 = vmatmul.f32.gmra.mxu0 %v4772
      %v4920 = vpop.f32.mrf.mxu0
      %v4921 = vadd.f32 0.0, %v4920
      %4922 = vmatmul.f32.gmra.mxu0 %v4775
      %v4923 = vpop.f32.mrf.mxu0
      %v4924 = vadd.f32 0.0, %v4923
      %4925 = vmatmul.f32.gmra.mxu0 %v4778
      %v4926 = vpop.f32.mrf.mxu0
      %v4927 = vadd.f32 0.0, %v4926
      %4928 = vmatmul.f32.gmra.mxu0 %v4781
      %v4929 = vpop.f32.mrf.mxu0
      %v4930 = vadd.f32 0.0, %v4929
      %4931 = vmatmul.f32.gmra.mxu0 %v4784
      %v4932 = vpop.f32.mrf.mxu0
      %v4933 = vadd.f32 0.0, %v4932
      %4934 = vmatmul.f32.gmra.mxu0 %v4787
      %v4935 = vpop.f32.mrf.mxu0
      %v4936 = vadd.f32 0.0, %v4935
      %4937 = vmatmul.f32.gmra.mxu0 %v4790
      %v4938 = vpop.f32.mrf.mxu0
      %v4939 = vadd.f32 0.0, %v4938
      %4940 = vmatmul.f32.gmra.mxu0 %v4793
      %v4941 = vpop.f32.mrf.mxu0
      %v4942 = vadd.f32 0.0, %v4941
      %4943 = vmatmul.f32.gmra.mxu0 %v4796
      %v4944 = vpop.f32.mrf.mxu0
      %v4945 = vadd.f32 0.0, %v4944
      %4946 = vmatmul.f32.gmra.mxu0 %v4799
      %v4947 = vpop.f32.mrf.mxu0
      %v4948 = vadd.f32 0.0, %v4947
      %4949 = vmatmul.f32.gmra.mxu0 %v4802
      %v4950 = vpop.f32.mrf.mxu0
      %v4951 = vadd.f32 0.0, %v4950
      %4952 = vmatmul.f32.gmra.mxu0 %v4805
      %v4953 = vpop.f32.mrf.mxu0
      %v4954 = vadd.f32 0.0, %v4953
      %4955 = vmatmul.f32.gmra.mxu0 %v4808
      %v4956 = vpop.f32.mrf.mxu0
      %v4957 = vadd.f32 0.0, %v4956
      %4958 = vmatmul.f32.gmra.mxu0 %v4811
      %v4959 = vpop.f32.mrf.mxu0
      %v4960 = vadd.f32 0.0, %v4959
      %4961 = vmatmul.f32.gmra.mxu0 %v4814
      %v4962 = vpop.f32.mrf.mxu0
      %v4963 = vadd.f32 0.0, %v4962
      %4964 = vmatmul.f32.gmra.mxu0 %v4817
      %v4965 = vpop.f32.mrf.mxu0
      %v4966 = vadd.f32 0.0, %v4965
      %4967 = vmatmul.f32.gmra.mxu0 %v4820
      %v4968 = vpop.f32.mrf.mxu0
      %v4969 = vadd.f32 0.0, %v4968
      %4970 = vmatmul.f32.gmra.mxu0 %v4823
      %v4971 = vpop.f32.mrf.mxu0
      %v4972 = vadd.f32 0.0, %v4971
      %4973 = vmatmul.f32.gmra.mxu0 %v4826
      %v4974 = vpop.f32.mrf.mxu0
      %v4975 = vadd.f32 0.0, %v4974
      %4976 = vmatmul.f32.gmra.mxu0 %v4829
      %v4977 = vpop.f32.mrf.mxu0
      %v4978 = vadd.f32 0.0, %v4977
      %4979 = vmatmul.f32.gmra.mxu0 %v4832
      %v4980 = vpop.f32.mrf.mxu0
      %v4981 = vadd.f32 0.0, %v4980
      %4982 = vmatmul.f32.gmra.mxu0 %v4835
      %v4983 = vpop.f32.mrf.mxu0
      %v4984 = vadd.f32 0.0, %v4983
      %4985 = vmatmul.f32.gmra.mxu0 %v4838
      %v4986 = vpop.f32.mrf.mxu0
      %v4987 = vadd.f32 0.0, %v4986
      %4988 = vmatmul.f32.gmra.mxu0 %v4841
      %v4989 = vpop.f32.mrf.mxu0
      %v4990 = vadd.f32 0.0, %v4989
      %4991 = vmatmul.f32.gmra.mxu0 %v4844
      %v4992 = vpop.f32.mrf.mxu0
      %v4993 = vadd.f32 0.0, %v4992
      %4994 = vmatmul.f32.gmra.mxu0 %v4847
      %v4995 = vpop.f32.mrf.mxu0
      %v4996 = vadd.f32 0.0, %v4995
      %4997 = vmatmul.f32.gmra.mxu0 %v4850
      %v4998 = vpop.f32.mrf.mxu0
      %v4999 = vadd.f32 0.0, %v4998
      %5000 = vmatmul.f32.gmra.mxu0 %v4853
      %v5001 = vpop.f32.mrf.mxu0
      %v5002 = vadd.f32 0.0, %v5001
      %5003 = vmatmul.f32.gmra.mxu0 %v4856
      %v5004 = vpop.f32.mrf.mxu0
      %v5005 = vadd.f32 0.0, %v5004
      %5006 = vmatmul.f32.gmra.mxu0 %v4859
      %v5007 = vpop.f32.mrf.mxu0
      %v5008 = vadd.f32 0.0, %v5007
      %5009 = vmatmul.f32.gmra.mxu0 %v4862
      %v5010 = vpop.f32.mrf.mxu0
      %v5011 = vadd.f32 0.0, %v5010
      %5012 = vmatmul.f32.gmra.mxu0 %v4865
      %v5013 = vpop.f32.mrf.mxu0
      %v5014 = vadd.f32 0.0, %v5013
      %5015 = vmatmul.f32.gmra.mxu0 %v4868
      %v5016 = vpop.f32.mrf.mxu0
      %v5017 = vadd.f32 0.0, %v5016
      %5018 = vmatmul.f32.gmra.mxu0 %v4871
      %v5019 = vpop.f32.mrf.mxu0
      %v5020 = vadd.f32 0.0, %v5019
      %5021 = vmatmul.f32.gmra.mxu0 %v4874
      %v5022 = vpop.f32.mrf.mxu0
      %v5023 = vadd.f32 0.0, %v5022
      %5024 = vmatmul.f32.gmra.mxu0 %v4877
      %v5025 = vpop.f32.mrf.mxu0
      %v5026 = vadd.f32 0.0, %v5025
      %5027 = vmatmul.f32.gmra.mxu0 %v4880
      %v5028 = vpop.f32.mrf.mxu0
      %v5029 = vadd.f32 0.0, %v5028
      %5030 = vmatmul.f32.gmra.mxu0 %v4883
      %v5031 = vpop.f32.mrf.mxu0
      %v5032 = vadd.f32 0.0, %v5031
      %5033 = vdwg.mxu0
      %v5034 = vadd.f32 %v4657, %v4906
      %v5035 = vadd.f32 %v4658, %v4909
      %v5036 = vadd.f32 %v4659, %v4912
      %v5037 = vadd.f32 %v4660, %v4915
      %v5038 = vadd.f32 %v4661, %v4918
      %v5039 = vadd.f32 %v4662, %v4921
      %v5040 = vadd.f32 %v4663, %v4924
      %v5041 = vadd.f32 %v4664, %v4927
      %v5042 = vadd.f32 %v4665, %v4930
      %v5043 = vadd.f32 %v4666, %v4933
      %v5044 = vadd.f32 %v4667, %v4936
      %v5045 = vadd.f32 %v4668, %v4939
      %v5046 = vadd.f32 %v4669, %v4942
      %v5047 = vadd.f32 %v4670, %v4945
      %v5048 = vadd.f32 %v4671, %v4948
      %v5049 = vadd.f32 %v4672, %v4951
      %v5050 = vadd.f32 %v4673, %v4954
      %v5051 = vadd.f32 %v4674, %v4957
      %v5052 = vadd.f32 %v4675, %v4960
      %v5053 = vadd.f32 %v4676, %v4963
      %v5054 = vadd.f32 %v4677, %v4966
      %v5055 = vadd.f32 %v4678, %v4969
      %v5056 = vadd.f32 %v4679, %v4972
      %v5057 = vadd.f32 %v4680, %v4975
      %v5058 = vadd.f32 %v4681, %v4978
      %v5059 = vadd.f32 %v4682, %v4981
      %v5060 = vadd.f32 %v4683, %v4984
      %v5061 = vadd.f32 %v4684, %v4987
      %v5062 = vadd.f32 %v4685, %v4990
      %v5063 = vadd.f32 %v4686, %v4993
      %v5064 = vadd.f32 %v4687, %v4996
      %v5065 = vadd.f32 %v4688, %v4999
      %v5066 = vadd.f32 %v4689, %v5002
      %v5067 = vadd.f32 %v4690, %v5005
      %v5068 = vadd.f32 %v4691, %v5008
      %v5069 = vadd.f32 %v4692, %v5011
      %v5070 = vadd.f32 %v4693, %v5014
      %v5071 = vadd.f32 %v4694, %v5017
      %v5072 = vadd.f32 %v4695, %v5020
      %v5073 = vadd.f32 %v4696, %v5023
      %v5074 = vadd.f32 %v4697, %v5026
      %v5075 = vadd.f32 %v4698, %v5029
      %v5076 = vadd.f32 %v4699, %v5032
      %v5077 = vld [vmem:[%s165 + $0x39] sm:$0xff]
      %v5078 = vld [vmem:[%s165 + $0x41] sm:$0xff]
      %v5079 = vld [vmem:[%s165 + $0x49] sm:$0xff]
      %v5080 = vld [vmem:[%s165 + $0x51] sm:$0xff]
      %v5081 = vld [vmem:[%s165 + $0x59] sm:$0xff]
      %v5082 = vld [vmem:[%s165 + $0x61] sm:$0xff]
      %v5083 = vld [vmem:[%s165 + $0x69] sm:$0xff]
      %v5084 = vld [vmem:[%s165 + $0x71] sm:$0xff]
      %v5085 = vld [vmem:[%s165 + $0x79] sm:$0xff]
      %v5086 = vld [vmem:[%s165 + $0x81] sm:$0xff]
      %v5087 = vld [vmem:[%s165 + $0x89] sm:$0xff]
      %v5088 = vld [vmem:[%s165 + $0x91] sm:$0xff]
      %v5089 = vld [vmem:[%s165 + $0x99] sm:$0xff]
      %v5090 = vld [vmem:[%s165 + $0xa1] sm:$0xff]
      %v5091 = vld [vmem:[%s165 + $0xa9] sm:$0xff]
      %v5092 = vld [vmem:[%s165 + $0xb1] sm:$0xff]
      %v5093 = vld [vmem:[%s165 + $0xb9] sm:$0xff]
      %v5094 = vld [vmem:[%s165 + $0xc1] sm:$0xff]
      %v5095 = vld [vmem:[%s165 + $0xc9] sm:$0xff]
      %v5096 = vld [vmem:[%s165 + $0xd1] sm:$0xff]
      %v5097 = vld [vmem:[%s165 + $0xd9] sm:$0xff]
      %v5098 = vld [vmem:[%s165 + $0xe1] sm:$0xff]
      %v5099 = vld [vmem:[%s165 + $0xe9] sm:$0xff]
      %v5100 = vld [vmem:[%s165 + $0xf1] sm:$0xff]
      %v5101 = vld [vmem:[%s165 + $0xf9] sm:$0xff]
      %v5102 = vld [vmem:[%s165 + $0x101] sm:$0xff]
      %v5103 = vld [vmem:[%s165 + $0x109] sm:$0xff]
      %v5104 = vld [vmem:[%s165 + $0x111] sm:$0xff]
      %v5105 = vld [vmem:[%s165 + $0x119] sm:$0xff]
      %v5106 = vld [vmem:[%s165 + $0x121] sm:$0xff]
      %v5107 = vld [vmem:[%s165 + $0x129] sm:$0xff]
      %v5108 = vld [vmem:[%s165 + $0x131] sm:$0xff]
      %v5109 = vld [vmem:[%s165 + $0x139] sm:$0xff]
      %v5110 = vld [vmem:[%s165 + $0x141] sm:$0xff]
      %v5111 = vld [vmem:[%s165 + $0x149] sm:$0xff]
      %v5112 = vld [vmem:[%s165 + $0x151] sm:$0xff]
      %v5113 = vld [vmem:[%s165 + $0x159] sm:$0xff]
      %v5114 = vld [vmem:[%s165 + $0x161] sm:$0xff]
      %v5115 = vld [vmem:[%s165 + $0x169] sm:$0xff]
      %v5116 = vld [vmem:[%s165 + $0x171] sm:$0xff]
      %v5117 = vld [vmem:[%s165 + $0x179] sm:$0xff]
      %v5118 = vld [vmem:[%s165 + $0x181] sm:$0xff]
      %v5119 = vld [vmem:[%s165 + $0x189] sm:$0xff]
      %s5120 = scalar_lea.vmem %s1, 1248
      %v5121 = vld [vmem:[%s5120] sm:$0xff]
      %v5122 = vld [vmem:[%s5120 + $0x8] sm:$0xff]
      %v5123 = vld [vmem:[%s5120 + $0x10] sm:$0xff]
      %v5124 = vld [vmem:[%s5120 + $0x18] sm:$0xff]
      %v5125 = vld [vmem:[%s5120 + $0x20] sm:$0xff]
      %v5126 = vld [vmem:[%s5120 + $0x28] sm:$0xff]
      %v5127 = vld [vmem:[%s5120 + $0x30] sm:$0xff]
      %v5128 = vld [vmem:[%s5120 + $0x38] sm:$0xff]
      %v5129 = vld [vmem:[%s5120 + $0x40] sm:$0xff]
      %v5130 = vld [vmem:[%s5120 + $0x48] sm:$0xff]
      %v5131 = vld [vmem:[%s5120 + $0x50] sm:$0xff]
      %v5132 = vld [vmem:[%s5120 + $0x58] sm:$0x3]
      %v5134 = vsel %vm230, %v5077, 0
      %v5137 = vsel %vm230, %v5078, 0
      %v5140 = vsel %vm230, %v5079, 0
      %v5143 = vsel %vm230, %v5080, 0
      %v5146 = vsel %vm230, %v5081, 0
      %v5149 = vsel %vm230, %v5082, 0
      %v5152 = vsel %vm230, %v5083, 0
      %v5155 = vsel %vm230, %v5084, 0
      %v5158 = vsel %vm230, %v5085, 0
      %v5161 = vsel %vm230, %v5086, 0
      %v5164 = vsel %vm230, %v5087, 0
      %v5167 = vsel %vm230, %v5088, 0
      %v5170 = vsel %vm230, %v5089, 0
      %v5173 = vsel %vm230, %v5090, 0
      %v5176 = vsel %vm230, %v5091, 0
      %v5179 = vsel %vm230, %v5092, 0
      %v5182 = vsel %vm230, %v5093, 0
      %v5185 = vsel %vm230, %v5094, 0
      %v5188 = vsel %vm230, %v5095, 0
      %v5191 = vsel %vm230, %v5096, 0
      %v5194 = vsel %vm230, %v5097, 0
      %v5197 = vsel %vm230, %v5098, 0
      %v5200 = vsel %vm230, %v5099, 0
      %v5203 = vsel %vm230, %v5100, 0
      %v5206 = vsel %vm230, %v5101, 0
      %v5209 = vsel %vm230, %v5102, 0
      %v5212 = vsel %vm230, %v5103, 0
      %v5215 = vsel %vm230, %v5104, 0
      %v5218 = vsel %vm230, %v5105, 0
      %v5221 = vsel %vm230, %v5106, 0
      %v5224 = vsel %vm230, %v5107, 0
      %v5227 = vsel %vm230, %v5108, 0
      %v5230 = vsel %vm230, %v5109, 0
      %v5233 = vsel %vm230, %v5110, 0
      %v5236 = vsel %vm230, %v5111, 0
      %v5239 = vsel %vm230, %v5112, 0
      %v5242 = vsel %vm230, %v5113, 0
      %v5245 = vsel %vm230, %v5114, 0
      %v5248 = vsel %vm230, %v5115, 0
      %v5251 = vsel %vm230, %v5116, 0
      %v5254 = vsel %vm230, %v5117, 0
      %v5257 = vsel %vm230, %v5118, 0
      %v5260 = vsel %vm230, %v5119, 0
      %v5263 = vsel %vm360, %v5132, 0
      %5265 = vmatpush.msra.mxu0 0.0
      %5266 = vmatpush.msra.mxu0 0.0
      %5267 = vmatpush.msra.mxu0 0.0
      %5268 = vmatpush.msra.mxu0 0.0
      %5269 = vmatpush.msra.mxu0 %v5263
      %5270 = vmatpush.msra.mxu0 %v5131
      %5271 = vmatpush.msra.mxu0 %v5130
      %5272 = vmatpush.msra.mxu0 %v5129
      %5273 = vmatpush.msra.mxu0 %v5128
      %5274 = vmatpush.msra.mxu0 %v5127
      %5275 = vmatpush.msra.mxu0 %v5126
      %5276 = vmatpush.msra.mxu0 %v5125
      %5277 = vmatpush.msra.mxu0 %v5124
      %5278 = vmatpush.msra.mxu0 %v5123
      %5279 = vmatpush.msra.mxu0 %v5122
      %5280 = vmatpush.msra.mxu0 %v5121
      %5281 = vmatmul.f32.gmra.mxu0 %v5134
      %v5282 = vpop.f32.mrf.mxu0
      %v5283 = vadd.f32 0.0, %v5282
      %5284 = vmatmul.f32.gmra.mxu0 %v5137
      %v5285 = vpop.f32.mrf.mxu0
      %v5286 = vadd.f32 0.0, %v5285
      %5287 = vmatmul.f32.gmra.mxu0 %v5140
      %v5288 = vpop.f32.mrf.mxu0
      %v5289 = vadd.f32 0.0, %v5288
      %5290 = vmatmul.f32.gmra.mxu0 %v5143
      %v5291 = vpop.f32.mrf.mxu0
      %v5292 = vadd.f32 0.0, %v5291
      %5293 = vmatmul.f32.gmra.mxu0 %v5146
      %v5294 = vpop.f32.mrf.mxu0
      %v5295 = vadd.f32 0.0, %v5294
      %5296 = vmatmul.f32.gmra.mxu0 %v5149
      %v5297 = vpop.f32.mrf.mxu0
      %v5298 = vadd.f32 0.0, %v5297
      %5299 = vmatmul.f32.gmra.mxu0 %v5152
      %v5300 = vpop.f32.mrf.mxu0
      %v5301 = vadd.f32 0.0, %v5300
      %5302 = vmatmul.f32.gmra.mxu0 %v5155
      %v5303 = vpop.f32.mrf.mxu0
      %v5304 = vadd.f32 0.0, %v5303
      %5305 = vmatmul.f32.gmra.mxu0 %v5158
      %v5306 = vpop.f32.mrf.mxu0
      %v5307 = vadd.f32 0.0, %v5306
      %5308 = vmatmul.f32.gmra.mxu0 %v5161
      %v5309 = vpop.f32.mrf.mxu0
      %v5310 = vadd.f32 0.0, %v5309
      %5311 = vmatmul.f32.gmra.mxu0 %v5164
      %v5312 = vpop.f32.mrf.mxu0
      %v5313 = vadd.f32 0.0, %v5312
      %5314 = vmatmul.f32.gmra.mxu0 %v5167
      %v5315 = vpop.f32.mrf.mxu0
      %v5316 = vadd.f32 0.0, %v5315
      %5317 = vmatmul.f32.gmra.mxu0 %v5170
      %v5318 = vpop.f32.mrf.mxu0
      %v5319 = vadd.f32 0.0, %v5318
      %5320 = vmatmul.f32.gmra.mxu0 %v5173
      %v5321 = vpop.f32.mrf.mxu0
      %v5322 = vadd.f32 0.0, %v5321
      %5323 = vmatmul.f32.gmra.mxu0 %v5176
      %v5324 = vpop.f32.mrf.mxu0
      %v5325 = vadd.f32 0.0, %v5324
      %5326 = vmatmul.f32.gmra.mxu0 %v5179
      %v5327 = vpop.f32.mrf.mxu0
      %v5328 = vadd.f32 0.0, %v5327
      %5329 = vmatmul.f32.gmra.mxu0 %v5182
      %v5330 = vpop.f32.mrf.mxu0
      %v5331 = vadd.f32 0.0, %v5330
      %5332 = vmatmul.f32.gmra.mxu0 %v5185
      %v5333 = vpop.f32.mrf.mxu0
      %v5334 = vadd.f32 0.0, %v5333
      %5335 = vmatmul.f32.gmra.mxu0 %v5188
      %v5336 = vpop.f32.mrf.mxu0
      %v5337 = vadd.f32 0.0, %v5336
      %5338 = vmatmul.f32.gmra.mxu0 %v5191
      %v5339 = vpop.f32.mrf.mxu0
      %v5340 = vadd.f32 0.0, %v5339
      %5341 = vmatmul.f32.gmra.mxu0 %v5194
      %v5342 = vpop.f32.mrf.mxu0
      %v5343 = vadd.f32 0.0, %v5342
      %5344 = vmatmul.f32.gmra.mxu0 %v5197
      %v5345 = vpop.f32.mrf.mxu0
      %v5346 = vadd.f32 0.0, %v5345
      %5347 = vmatmul.f32.gmra.mxu0 %v5200
      %v5348 = vpop.f32.mrf.mxu0
      %v5349 = vadd.f32 0.0, %v5348
      %5350 = vmatmul.f32.gmra.mxu0 %v5203
      %v5351 = vpop.f32.mrf.mxu0
      %v5352 = vadd.f32 0.0, %v5351
      %5353 = vmatmul.f32.gmra.mxu0 %v5206
      %v5354 = vpop.f32.mrf.mxu0
      %v5355 = vadd.f32 0.0, %v5354
      %5356 = vmatmul.f32.gmra.mxu0 %v5209
      %v5357 = vpop.f32.mrf.mxu0
      %v5358 = vadd.f32 0.0, %v5357
      %5359 = vmatmul.f32.gmra.mxu0 %v5212
      %v5360 = vpop.f32.mrf.mxu0
      %v5361 = vadd.f32 0.0, %v5360
      %5362 = vmatmul.f32.gmra.mxu0 %v5215
      %v5363 = vpop.f32.mrf.mxu0
      %v5364 = vadd.f32 0.0, %v5363
      %5365 = vmatmul.f32.gmra.mxu0 %v5218
      %v5366 = vpop.f32.mrf.mxu0
      %v5367 = vadd.f32 0.0, %v5366
      %5368 = vmatmul.f32.gmra.mxu0 %v5221
      %v5369 = vpop.f32.mrf.mxu0
      %v5370 = vadd.f32 0.0, %v5369
      %5371 = vmatmul.f32.gmra.mxu0 %v5224
      %v5372 = vpop.f32.mrf.mxu0
      %v5373 = vadd.f32 0.0, %v5372
      %5374 = vmatmul.f32.gmra.mxu0 %v5227
      %v5375 = vpop.f32.mrf.mxu0
      %v5376 = vadd.f32 0.0, %v5375
      %5377 = vmatmul.f32.gmra.mxu0 %v5230
      %v5378 = vpop.f32.mrf.mxu0
      %v5379 = vadd.f32 0.0, %v5378
      %5380 = vmatmul.f32.gmra.mxu0 %v5233
      %v5381 = vpop.f32.mrf.mxu0
      %v5382 = vadd.f32 0.0, %v5381
      %5383 = vmatmul.f32.gmra.mxu0 %v5236
      %v5384 = vpop.f32.mrf.mxu0
      %v5385 = vadd.f32 0.0, %v5384
      %5386 = vmatmul.f32.gmra.mxu0 %v5239
      %v5387 = vpop.f32.mrf.mxu0
      %v5388 = vadd.f32 0.0, %v5387
      %5389 = vmatmul.f32.gmra.mxu0 %v5242
      %v5390 = vpop.f32.mrf.mxu0
      %v5391 = vadd.f32 0.0, %v5390
      %5392 = vmatmul.f32.gmra.mxu0 %v5245
      %v5393 = vpop.f32.mrf.mxu0
      %v5394 = vadd.f32 0.0, %v5393
      %5395 = vmatmul.f32.gmra.mxu0 %v5248
      %v5396 = vpop.f32.mrf.mxu0
      %v5397 = vadd.f32 0.0, %v5396
      %5398 = vmatmul.f32.gmra.mxu0 %v5251
      %v5399 = vpop.f32.mrf.mxu0
      %v5400 = vadd.f32 0.0, %v5399
      %5401 = vmatmul.f32.gmra.mxu0 %v5254
      %v5402 = vpop.f32.mrf.mxu0
      %v5403 = vadd.f32 0.0, %v5402
      %5404 = vmatmul.f32.gmra.mxu0 %v5257
      %v5405 = vpop.f32.mrf.mxu0
      %v5406 = vadd.f32 0.0, %v5405
      %5407 = vmatmul.f32.gmra.mxu0 %v5260
      %v5408 = vpop.f32.mrf.mxu0
      %v5409 = vadd.f32 0.0, %v5408
      %5410 = vdwg.mxu0
      %v5411 = vadd.f32 %v5034, %v5283
      %v5412 = vadd.f32 %v5035, %v5286
      %v5413 = vadd.f32 %v5036, %v5289
      %v5414 = vadd.f32 %v5037, %v5292
      %v5415 = vadd.f32 %v5038, %v5295
      %v5416 = vadd.f32 %v5039, %v5298
      %v5417 = vadd.f32 %v5040, %v5301
      %v5418 = vadd.f32 %v5041, %v5304
      %v5419 = vadd.f32 %v5042, %v5307
      %v5420 = vadd.f32 %v5043, %v5310
      %v5421 = vadd.f32 %v5044, %v5313
      %v5422 = vadd.f32 %v5045, %v5316
      %v5423 = vadd.f32 %v5046, %v5319
      %v5424 = vadd.f32 %v5047, %v5322
      %v5425 = vadd.f32 %v5048, %v5325
      %v5426 = vadd.f32 %v5049, %v5328
      %v5427 = vadd.f32 %v5050, %v5331
      %v5428 = vadd.f32 %v5051, %v5334
      %v5429 = vadd.f32 %v5052, %v5337
      %v5430 = vadd.f32 %v5053, %v5340
      %v5431 = vadd.f32 %v5054, %v5343
      %v5432 = vadd.f32 %v5055, %v5346
      %v5433 = vadd.f32 %v5056, %v5349
      %v5434 = vadd.f32 %v5057, %v5352
      %v5435 = vadd.f32 %v5058, %v5355
      %v5436 = vadd.f32 %v5059, %v5358
      %v5437 = vadd.f32 %v5060, %v5361
      %v5438 = vadd.f32 %v5061, %v5364
      %v5439 = vadd.f32 %v5062, %v5367
      %v5440 = vadd.f32 %v5063, %v5370
      %v5441 = vadd.f32 %v5064, %v5373
      %v5442 = vadd.f32 %v5065, %v5376
      %v5443 = vadd.f32 %v5066, %v5379
      %v5444 = vadd.f32 %v5067, %v5382
      %v5445 = vadd.f32 %v5068, %v5385
      %v5446 = vadd.f32 %v5069, %v5388
      %v5447 = vadd.f32 %v5070, %v5391
      %v5448 = vadd.f32 %v5071, %v5394
      %v5449 = vadd.f32 %v5072, %v5397
      %v5450 = vadd.f32 %v5073, %v5400
      %v5451 = vadd.f32 %v5074, %v5403
      %v5452 = vadd.f32 %v5075, %v5406
      %v5453 = vadd.f32 %v5076, %v5409
      %v5454 = vld [vmem:[%s165 + $0x3a] sm:$0xff]
      %v5455 = vld [vmem:[%s165 + $0x42] sm:$0xff]
      %v5456 = vld [vmem:[%s165 + $0x4a] sm:$0xff]
      %v5457 = vld [vmem:[%s165 + $0x52] sm:$0xff]
      %v5458 = vld [vmem:[%s165 + $0x5a] sm:$0xff]
      %v5459 = vld [vmem:[%s165 + $0x62] sm:$0xff]
      %v5460 = vld [vmem:[%s165 + $0x6a] sm:$0xff]
      %v5461 = vld [vmem:[%s165 + $0x72] sm:$0xff]
      %v5462 = vld [vmem:[%s165 + $0x7a] sm:$0xff]
      %v5463 = vld [vmem:[%s165 + $0x82] sm:$0xff]
      %v5464 = vld [vmem:[%s165 + $0x8a] sm:$0xff]
      %v5465 = vld [vmem:[%s165 + $0x92] sm:$0xff]
      %v5466 = vld [vmem:[%s165 + $0x9a] sm:$0xff]
      %v5467 = vld [vmem:[%s165 + $0xa2] sm:$0xff]
      %v5468 = vld [vmem:[%s165 + $0xaa] sm:$0xff]
      %v5469 = vld [vmem:[%s165 + $0xb2] sm:$0xff]
      %v5470 = vld [vmem:[%s165 + $0xba] sm:$0xff]
      %v5471 = vld [vmem:[%s165 + $0xc2] sm:$0xff]
      %v5472 = vld [vmem:[%s165 + $0xca] sm:$0xff]
      %v5473 = vld [vmem:[%s165 + $0xd2] sm:$0xff]
      %v5474 = vld [vmem:[%s165 + $0xda] sm:$0xff]
      %v5475 = vld [vmem:[%s165 + $0xe2] sm:$0xff]
      %v5476 = vld [vmem:[%s165 + $0xea] sm:$0xff]
      %v5477 = vld [vmem:[%s165 + $0xf2] sm:$0xff]
      %v5478 = vld [vmem:[%s165 + $0xfa] sm:$0xff]
      %v5479 = vld [vmem:[%s165 + $0x102] sm:$0xff]
      %v5480 = vld [vmem:[%s165 + $0x10a] sm:$0xff]
      %v5481 = vld [vmem:[%s165 + $0x112] sm:$0xff]
      %v5482 = vld [vmem:[%s165 + $0x11a] sm:$0xff]
      %v5483 = vld [vmem:[%s165 + $0x122] sm:$0xff]
      %v5484 = vld [vmem:[%s165 + $0x12a] sm:$0xff]
      %v5485 = vld [vmem:[%s165 + $0x132] sm:$0xff]
      %v5486 = vld [vmem:[%s165 + $0x13a] sm:$0xff]
      %v5487 = vld [vmem:[%s165 + $0x142] sm:$0xff]
      %v5488 = vld [vmem:[%s165 + $0x14a] sm:$0xff]
      %v5489 = vld [vmem:[%s165 + $0x152] sm:$0xff]
      %v5490 = vld [vmem:[%s165 + $0x15a] sm:$0xff]
      %v5491 = vld [vmem:[%s165 + $0x162] sm:$0xff]
      %v5492 = vld [vmem:[%s165 + $0x16a] sm:$0xff]
      %v5493 = vld [vmem:[%s165 + $0x172] sm:$0xff]
      %v5494 = vld [vmem:[%s165 + $0x17a] sm:$0xff]
      %v5495 = vld [vmem:[%s165 + $0x182] sm:$0xff]
      %v5496 = vld [vmem:[%s165 + $0x18a] sm:$0xff]
      %s5497 = scalar_lea.vmem %s1, 1344
      %v5498 = vld [vmem:[%s5497] sm:$0xff]
      %v5499 = vld [vmem:[%s5497 + $0x8] sm:$0xff]
      %v5500 = vld [vmem:[%s5497 + $0x10] sm:$0xff]
      %v5501 = vld [vmem:[%s5497 + $0x18] sm:$0xff]
      %v5502 = vld [vmem:[%s5497 + $0x20] sm:$0xff]
      %v5503 = vld [vmem:[%s5497 + $0x28] sm:$0xff]
      %v5504 = vld [vmem:[%s5497 + $0x30] sm:$0xff]
      %v5505 = vld [vmem:[%s5497 + $0x38] sm:$0xff]
      %v5506 = vld [vmem:[%s5497 + $0x40] sm:$0xff]
      %v5507 = vld [vmem:[%s5497 + $0x48] sm:$0xff]
      %v5508 = vld [vmem:[%s5497 + $0x50] sm:$0xff]
      %v5509 = vld [vmem:[%s5497 + $0x58] sm:$0x3]
      %v5511 = vsel %vm230, %v5454, 0
      %v5514 = vsel %vm230, %v5455, 0
      %v5517 = vsel %vm230, %v5456, 0
      %v5520 = vsel %vm230, %v5457, 0
      %v5523 = vsel %vm230, %v5458, 0
      %v5526 = vsel %vm230, %v5459, 0
      %v5529 = vsel %vm230, %v5460, 0
      %v5532 = vsel %vm230, %v5461, 0
      %v5535 = vsel %vm230, %v5462, 0
      %v5538 = vsel %vm230, %v5463, 0
      %v5541 = vsel %vm230, %v5464, 0
      %v5544 = vsel %vm230, %v5465, 0
      %v5547 = vsel %vm230, %v5466, 0
      %v5550 = vsel %vm230, %v5467, 0
      %v5553 = vsel %vm230, %v5468, 0
      %v5556 = vsel %vm230, %v5469, 0
      %v5559 = vsel %vm230, %v5470, 0
      %v5562 = vsel %vm230, %v5471, 0
      %v5565 = vsel %vm230, %v5472, 0
      %v5568 = vsel %vm230, %v5473, 0
      %v5571 = vsel %vm230, %v5474, 0
      %v5574 = vsel %vm230, %v5475, 0
      %v5577 = vsel %vm230, %v5476, 0
      %v5580 = vsel %vm230, %v5477, 0
      %v5583 = vsel %vm230, %v5478, 0
      %v5586 = vsel %vm230, %v5479, 0
      %v5589 = vsel %vm230, %v5480, 0
      %v5592 = vsel %vm230, %v5481, 0
      %v5595 = vsel %vm230, %v5482, 0
      %v5598 = vsel %vm230, %v5483, 0
      %v5601 = vsel %vm230, %v5484, 0
      %v5604 = vsel %vm230, %v5485, 0
      %v5607 = vsel %vm230, %v5486, 0
      %v5610 = vsel %vm230, %v5487, 0
      %v5613 = vsel %vm230, %v5488, 0
      %v5616 = vsel %vm230, %v5489, 0
      %v5619 = vsel %vm230, %v5490, 0
      %v5622 = vsel %vm230, %v5491, 0
      %v5625 = vsel %vm230, %v5492, 0
      %v5628 = vsel %vm230, %v5493, 0
      %v5631 = vsel %vm230, %v5494, 0
      %v5634 = vsel %vm230, %v5495, 0
      %v5637 = vsel %vm230, %v5496, 0
      %v5640 = vsel %vm360, %v5509, 0
      %5642 = vmatpush.msra.mxu0 0.0
      %5643 = vmatpush.msra.mxu0 0.0
      %5644 = vmatpush.msra.mxu0 0.0
      %5645 = vmatpush.msra.mxu0 0.0
      %5646 = vmatpush.msra.mxu0 %v5640
      %5647 = vmatpush.msra.mxu0 %v5508
      %5648 = vmatpush.msra.mxu0 %v5507
      %5649 = vmatpush.msra.mxu0 %v5506
      %5650 = vmatpush.msra.mxu0 %v5505
      %5651 = vmatpush.msra.mxu0 %v5504
      %5652 = vmatpush.msra.mxu0 %v5503
      %5653 = vmatpush.msra.mxu0 %v5502
      %5654 = vmatpush.msra.mxu0 %v5501
      %5655 = vmatpush.msra.mxu0 %v5500
      %5656 = vmatpush.msra.mxu0 %v5499
      %5657 = vmatpush.msra.mxu0 %v5498
      %5658 = vmatmul.f32.gmra.mxu0 %v5511
      %v5659 = vpop.f32.mrf.mxu0
      %v5660 = vadd.f32 0.0, %v5659
      %5661 = vmatmul.f32.gmra.mxu0 %v5514
      %v5662 = vpop.f32.mrf.mxu0
      %v5663 = vadd.f32 0.0, %v5662
      %5664 = vmatmul.f32.gmra.mxu0 %v5517
      %v5665 = vpop.f32.mrf.mxu0
      %v5666 = vadd.f32 0.0, %v5665
      %5667 = vmatmul.f32.gmra.mxu0 %v5520
      %v5668 = vpop.f32.mrf.mxu0
      %v5669 = vadd.f32 0.0, %v5668
      %5670 = vmatmul.f32.gmra.mxu0 %v5523
      %v5671 = vpop.f32.mrf.mxu0
      %v5672 = vadd.f32 0.0, %v5671
      %5673 = vmatmul.f32.gmra.mxu0 %v5526
      %v5674 = vpop.f32.mrf.mxu0
      %v5675 = vadd.f32 0.0, %v5674
      %5676 = vmatmul.f32.gmra.mxu0 %v5529
      %v5677 = vpop.f32.mrf.mxu0
      %v5678 = vadd.f32 0.0, %v5677
      %5679 = vmatmul.f32.gmra.mxu0 %v5532
      %v5680 = vpop.f32.mrf.mxu0
      %v5681 = vadd.f32 0.0, %v5680
      %5682 = vmatmul.f32.gmra.mxu0 %v5535
      %v5683 = vpop.f32.mrf.mxu0
      %v5684 = vadd.f32 0.0, %v5683
      %5685 = vmatmul.f32.gmra.mxu0 %v5538
      %v5686 = vpop.f32.mrf.mxu0
      %v5687 = vadd.f32 0.0, %v5686
      %5688 = vmatmul.f32.gmra.mxu0 %v5541
      %v5689 = vpop.f32.mrf.mxu0
      %v5690 = vadd.f32 0.0, %v5689
      %5691 = vmatmul.f32.gmra.mxu0 %v5544
      %v5692 = vpop.f32.mrf.mxu0
      %v5693 = vadd.f32 0.0, %v5692
      %5694 = vmatmul.f32.gmra.mxu0 %v5547
      %v5695 = vpop.f32.mrf.mxu0
      %v5696 = vadd.f32 0.0, %v5695
      %5697 = vmatmul.f32.gmra.mxu0 %v5550
      %v5698 = vpop.f32.mrf.mxu0
      %v5699 = vadd.f32 0.0, %v5698
      %5700 = vmatmul.f32.gmra.mxu0 %v5553
      %v5701 = vpop.f32.mrf.mxu0
      %v5702 = vadd.f32 0.0, %v5701
      %5703 = vmatmul.f32.gmra.mxu0 %v5556
      %v5704 = vpop.f32.mrf.mxu0
      %v5705 = vadd.f32 0.0, %v5704
      %5706 = vmatmul.f32.gmra.mxu0 %v5559
      %v5707 = vpop.f32.mrf.mxu0
      %v5708 = vadd.f32 0.0, %v5707
      %5709 = vmatmul.f32.gmra.mxu0 %v5562
      %v5710 = vpop.f32.mrf.mxu0
      %v5711 = vadd.f32 0.0, %v5710
      %5712 = vmatmul.f32.gmra.mxu0 %v5565
      %v5713 = vpop.f32.mrf.mxu0
      %v5714 = vadd.f32 0.0, %v5713
      %5715 = vmatmul.f32.gmra.mxu0 %v5568
      %v5716 = vpop.f32.mrf.mxu0
      %v5717 = vadd.f32 0.0, %v5716
      %5718 = vmatmul.f32.gmra.mxu0 %v5571
      %v5719 = vpop.f32.mrf.mxu0
      %v5720 = vadd.f32 0.0, %v5719
      %5721 = vmatmul.f32.gmra.mxu0 %v5574
      %v5722 = vpop.f32.mrf.mxu0
      %v5723 = vadd.f32 0.0, %v5722
      %5724 = vmatmul.f32.gmra.mxu0 %v5577
      %v5725 = vpop.f32.mrf.mxu0
      %v5726 = vadd.f32 0.0, %v5725
      %5727 = vmatmul.f32.gmra.mxu0 %v5580
      %v5728 = vpop.f32.mrf.mxu0
      %v5729 = vadd.f32 0.0, %v5728
      %5730 = vmatmul.f32.gmra.mxu0 %v5583
      %v5731 = vpop.f32.mrf.mxu0
      %v5732 = vadd.f32 0.0, %v5731
      %5733 = vmatmul.f32.gmra.mxu0 %v5586
      %v5734 = vpop.f32.mrf.mxu0
      %v5735 = vadd.f32 0.0, %v5734
      %5736 = vmatmul.f32.gmra.mxu0 %v5589
      %v5737 = vpop.f32.mrf.mxu0
      %v5738 = vadd.f32 0.0, %v5737
      %5739 = vmatmul.f32.gmra.mxu0 %v5592
      %v5740 = vpop.f32.mrf.mxu0
      %v5741 = vadd.f32 0.0, %v5740
      %5742 = vmatmul.f32.gmra.mxu0 %v5595
      %v5743 = vpop.f32.mrf.mxu0
      %v5744 = vadd.f32 0.0, %v5743
      %5745 = vmatmul.f32.gmra.mxu0 %v5598
      %v5746 = vpop.f32.mrf.mxu0
      %v5747 = vadd.f32 0.0, %v5746
      %5748 = vmatmul.f32.gmra.mxu0 %v5601
      %v5749 = vpop.f32.mrf.mxu0
      %v5750 = vadd.f32 0.0, %v5749
      %5751 = vmatmul.f32.gmra.mxu0 %v5604
      %v5752 = vpop.f32.mrf.mxu0
      %v5753 = vadd.f32 0.0, %v5752
      %5754 = vmatmul.f32.gmra.mxu0 %v5607
      %v5755 = vpop.f32.mrf.mxu0
      %v5756 = vadd.f32 0.0, %v5755
      %5757 = vmatmul.f32.gmra.mxu0 %v5610
      %v5758 = vpop.f32.mrf.mxu0
      %v5759 = vadd.f32 0.0, %v5758
      %5760 = vmatmul.f32.gmra.mxu0 %v5613
      %v5761 = vpop.f32.mrf.mxu0
      %v5762 = vadd.f32 0.0, %v5761
      %5763 = vmatmul.f32.gmra.mxu0 %v5616
      %v5764 = vpop.f32.mrf.mxu0
      %v5765 = vadd.f32 0.0, %v5764
      %5766 = vmatmul.f32.gmra.mxu0 %v5619
      %v5767 = vpop.f32.mrf.mxu0
      %v5768 = vadd.f32 0.0, %v5767
      %5769 = vmatmul.f32.gmra.mxu0 %v5622
      %v5770 = vpop.f32.mrf.mxu0
      %v5771 = vadd.f32 0.0, %v5770
      %5772 = vmatmul.f32.gmra.mxu0 %v5625
      %v5773 = vpop.f32.mrf.mxu0
      %v5774 = vadd.f32 0.0, %v5773
      %5775 = vmatmul.f32.gmra.mxu0 %v5628
      %v5776 = vpop.f32.mrf.mxu0
      %v5777 = vadd.f32 0.0, %v5776
      %5778 = vmatmul.f32.gmra.mxu0 %v5631
      %v5779 = vpop.f32.mrf.mxu0
      %v5780 = vadd.f32 0.0, %v5779
      %5781 = vmatmul.f32.gmra.mxu0 %v5634
      %v5782 = vpop.f32.mrf.mxu0
      %v5783 = vadd.f32 0.0, %v5782
      %5784 = vmatmul.f32.gmra.mxu0 %v5637
      %v5785 = vpop.f32.mrf.mxu0
      %v5786 = vadd.f32 0.0, %v5785
      %5787 = vdwg.mxu0
      %v5788 = vadd.f32 %v5411, %v5660
      %v5789 = vadd.f32 %v5412, %v5663
      %v5790 = vadd.f32 %v5413, %v5666
      %v5791 = vadd.f32 %v5414, %v5669
      %v5792 = vadd.f32 %v5415, %v5672
      %v5793 = vadd.f32 %v5416, %v5675
      %v5794 = vadd.f32 %v5417, %v5678
      %v5795 = vadd.f32 %v5418, %v5681
      %v5796 = vadd.f32 %v5419, %v5684
      %v5797 = vadd.f32 %v5420, %v5687
      %v5798 = vadd.f32 %v5421, %v5690
      %v5799 = vadd.f32 %v5422, %v5693
      %v5800 = vadd.f32 %v5423, %v5696
      %v5801 = vadd.f32 %v5424, %v5699
      %v5802 = vadd.f32 %v5425, %v5702
      %v5803 = vadd.f32 %v5426, %v5705
      %v5804 = vadd.f32 %v5427, %v5708
      %v5805 = vadd.f32 %v5428, %v5711
      %v5806 = vadd.f32 %v5429, %v5714
      %v5807 = vadd.f32 %v5430, %v5717
      %v5808 = vadd.f32 %v5431, %v5720
      %v5809 = vadd.f32 %v5432, %v5723
      %v5810 = vadd.f32 %v5433, %v5726
      %v5811 = vadd.f32 %v5434, %v5729
      %v5812 = vadd.f32 %v5435, %v5732
      %v5813 = vadd.f32 %v5436, %v5735
      %v5814 = vadd.f32 %v5437, %v5738
      %v5815 = vadd.f32 %v5438, %v5741
      %v5816 = vadd.f32 %v5439, %v5744
      %v5817 = vadd.f32 %v5440, %v5747
      %v5818 = vadd.f32 %v5441, %v5750
      %v5819 = vadd.f32 %v5442, %v5753
      %v5820 = vadd.f32 %v5443, %v5756
      %v5821 = vadd.f32 %v5444, %v5759
      %v5822 = vadd.f32 %v5445, %v5762
      %v5823 = vadd.f32 %v5446, %v5765
      %v5824 = vadd.f32 %v5447, %v5768
      %v5825 = vadd.f32 %v5448, %v5771
      %v5826 = vadd.f32 %v5449, %v5774
      %v5827 = vadd.f32 %v5450, %v5777
      %v5828 = vadd.f32 %v5451, %v5780
      %v5829 = vadd.f32 %v5452, %v5783
      %v5830 = vadd.f32 %v5453, %v5786
      %v5831 = vld [vmem:[%s165 + $0x3f] sm:$0xff]
      %v5832 = vld [vmem:[%s165 + $0x47] sm:$0xff]
      %v5833 = vld [vmem:[%s165 + $0x4f] sm:$0xff]
      %v5834 = vld [vmem:[%s165 + $0x57] sm:$0xff]
      %v5835 = vld [vmem:[%s165 + $0x5f] sm:$0xff]
      %v5836 = vld [vmem:[%s165 + $0x67] sm:$0xff]
      %v5837 = vld [vmem:[%s165 + $0x6f] sm:$0xff]
      %v5838 = vld [vmem:[%s165 + $0x77] sm:$0xff]
      %v5839 = vld [vmem:[%s165 + $0x7f] sm:$0xff]
      %v5840 = vld [vmem:[%s165 + $0x87] sm:$0xff]
      %v5841 = vld [vmem:[%s165 + $0x8f] sm:$0xff]
      %v5842 = vld [vmem:[%s165 + $0x97] sm:$0xff]
      %v5843 = vld [vmem:[%s165 + $0x9f] sm:$0xff]
      %v5844 = vld [vmem:[%s165 + $0xa7] sm:$0xff]
      %v5845 = vld [vmem:[%s165 + $0xaf] sm:$0xff]
      %v5846 = vld [vmem:[%s165 + $0xb7] sm:$0xff]
      %v5847 = vld [vmem:[%s165 + $0xbf] sm:$0xff]
      %v5848 = vld [vmem:[%s165 + $0xc7] sm:$0xff]
      %v5849 = vld [vmem:[%s165 + $0xcf] sm:$0xff]
      %v5850 = vld [vmem:[%s165 + $0xd7] sm:$0xff]
      %v5851 = vld [vmem:[%s165 + $0xdf] sm:$0xff]
      %v5852 = vld [vmem:[%s165 + $0xe7] sm:$0xff]
      %v5853 = vld [vmem:[%s165 + $0xef] sm:$0xff]
      %v5854 = vld [vmem:[%s165 + $0xf7] sm:$0xff]
      %v5855 = vld [vmem:[%s165 + $0xff] sm:$0xff]
      %v5856 = vld [vmem:[%s165 + $0x107] sm:$0xff]
      %v5857 = vld [vmem:[%s165 + $0x10f] sm:$0xff]
      %v5858 = vld [vmem:[%s165 + $0x117] sm:$0xff]
      %v5859 = vld [vmem:[%s165 + $0x11f] sm:$0xff]
      %v5860 = vld [vmem:[%s165 + $0x127] sm:$0xff]
      %v5861 = vld [vmem:[%s165 + $0x12f] sm:$0xff]
      %v5862 = vld [vmem:[%s165 + $0x137] sm:$0xff]
      %v5863 = vld [vmem:[%s165 + $0x13f] sm:$0xff]
      %v5864 = vld [vmem:[%s165 + $0x147] sm:$0xff]
      %v5865 = vld [vmem:[%s165 + $0x14f] sm:$0xff]
      %v5866 = vld [vmem:[%s165 + $0x157] sm:$0xff]
      %v5867 = vld [vmem:[%s165 + $0x15f] sm:$0xff]
      %v5868 = vld [vmem:[%s165 + $0x167] sm:$0xff]
      %v5869 = vld [vmem:[%s165 + $0x16f] sm:$0xff]
      %v5870 = vld [vmem:[%s165 + $0x177] sm:$0xff]
      %v5871 = vld [vmem:[%s165 + $0x17f] sm:$0xff]
      %v5872 = vld [vmem:[%s165 + $0x187] sm:$0xff]
      %v5873 = vld [vmem:[%s165 + $0x18f] sm:$0xff]
      %s5874 = scalar_lea.vmem %s1, 1440
      %v5875 = vld [vmem:[%s5874] sm:$0xff]
      %v5876 = vld [vmem:[%s5874 + $0x8] sm:$0xff]
      %v5877 = vld [vmem:[%s5874 + $0x10] sm:$0xff]
      %v5878 = vld [vmem:[%s5874 + $0x18] sm:$0xff]
      %v5879 = vld [vmem:[%s5874 + $0x20] sm:$0xff]
      %v5880 = vld [vmem:[%s5874 + $0x28] sm:$0xff]
      %v5881 = vld [vmem:[%s5874 + $0x30] sm:$0xff]
      %v5882 = vld [vmem:[%s5874 + $0x38] sm:$0xff]
      %v5883 = vld [vmem:[%s5874 + $0x40] sm:$0xff]
      %v5884 = vld [vmem:[%s5874 + $0x48] sm:$0xff]
      %v5885 = vld [vmem:[%s5874 + $0x50] sm:$0xff]
      %v5886 = vld [vmem:[%s5874 + $0x58] sm:$0x3]
      %v5888 = vsel %vm230, %v5831, 0
      %v5891 = vsel %vm230, %v5832, 0
      %v5894 = vsel %vm230, %v5833, 0
      %v5897 = vsel %vm230, %v5834, 0
      %v5900 = vsel %vm230, %v5835, 0
      %v5903 = vsel %vm230, %v5836, 0
      %v5906 = vsel %vm230, %v5837, 0
      %v5909 = vsel %vm230, %v5838, 0
      %v5912 = vsel %vm230, %v5839, 0
      %v5915 = vsel %vm230, %v5840, 0
      %v5918 = vsel %vm230, %v5841, 0
      %v5921 = vsel %vm230, %v5842, 0
      %v5924 = vsel %vm230, %v5843, 0
      %v5927 = vsel %vm230, %v5844, 0
      %v5930 = vsel %vm230, %v5845, 0
      %v5933 = vsel %vm230, %v5846, 0
      %v5936 = vsel %vm230, %v5847, 0
      %v5939 = vsel %vm230, %v5848, 0
      %v5942 = vsel %vm230, %v5849, 0
      %v5945 = vsel %vm230, %v5850, 0
      %v5948 = vsel %vm230, %v5851, 0
      %v5951 = vsel %vm230, %v5852, 0
      %v5954 = vsel %vm230, %v5853, 0
      %v5957 = vsel %vm230, %v5854, 0
      %v5960 = vsel %vm230, %v5855, 0
      %v5963 = vsel %vm230, %v5856, 0
      %v5966 = vsel %vm230, %v5857, 0
      %v5969 = vsel %vm230, %v5858, 0
      %v5972 = vsel %vm230, %v5859, 0
      %v5975 = vsel %vm230, %v5860, 0
      %v5978 = vsel %vm230, %v5861, 0
      %v5981 = vsel %vm230, %v5862, 0
      %v5984 = vsel %vm230, %v5863, 0
      %v5987 = vsel %vm230, %v5864, 0
      %v5990 = vsel %vm230, %v5865, 0
      %v5993 = vsel %vm230, %v5866, 0
      %v5996 = vsel %vm230, %v5867, 0
      %v5999 = vsel %vm230, %v5868, 0
      %v6002 = vsel %vm230, %v5869, 0
      %v6005 = vsel %vm230, %v5870, 0
      %v6008 = vsel %vm230, %v5871, 0
      %v6011 = vsel %vm230, %v5872, 0
      %v6014 = vsel %vm230, %v5873, 0
      %v6017 = vsel %vm360, %v5886, 0
      %6019 = vmatpush.msra.mxu0 0.0
      %6020 = vmatpush.msra.mxu0 0.0
      %6021 = vmatpush.msra.mxu0 0.0
      %6022 = vmatpush.msra.mxu0 0.0
      %6023 = vmatpush.msra.mxu0 %v6017
      %6024 = vmatpush.msra.mxu0 %v5885
      %6025 = vmatpush.msra.mxu0 %v5884
      %6026 = vmatpush.msra.mxu0 %v5883
      %6027 = vmatpush.msra.mxu0 %v5882
      %6028 = vmatpush.msra.mxu0 %v5881
      %6029 = vmatpush.msra.mxu0 %v5880
      %6030 = vmatpush.msra.mxu0 %v5879
      %6031 = vmatpush.msra.mxu0 %v5878
      %6032 = vmatpush.msra.mxu0 %v5877
      %6033 = vmatpush.msra.mxu0 %v5876
      %6034 = vmatpush.msra.mxu0 %v5875
      %6035 = vmatmul.f32.gmra.mxu0 %v5888
      %v6036 = vpop.f32.mrf.mxu0
      %v6037 = vadd.f32 0.0, %v6036
      %6038 = vmatmul.f32.gmra.mxu0 %v5891
      %v6039 = vpop.f32.mrf.mxu0
      %v6040 = vadd.f32 0.0, %v6039
      %6041 = vmatmul.f32.gmra.mxu0 %v5894
      %v6042 = vpop.f32.mrf.mxu0
      %v6043 = vadd.f32 0.0, %v6042
      %6044 = vmatmul.f32.gmra.mxu0 %v5897
      %v6045 = vpop.f32.mrf.mxu0
      %v6046 = vadd.f32 0.0, %v6045
      %6047 = vmatmul.f32.gmra.mxu0 %v5900
      %v6048 = vpop.f32.mrf.mxu0
      %v6049 = vadd.f32 0.0, %v6048
      %6050 = vmatmul.f32.gmra.mxu0 %v5903
      %v6051 = vpop.f32.mrf.mxu0
      %v6052 = vadd.f32 0.0, %v6051
      %6053 = vmatmul.f32.gmra.mxu0 %v5906
      %v6054 = vpop.f32.mrf.mxu0
      %v6055 = vadd.f32 0.0, %v6054
      %6056 = vmatmul.f32.gmra.mxu0 %v5909
      %v6057 = vpop.f32.mrf.mxu0
      %v6058 = vadd.f32 0.0, %v6057
      %6059 = vmatmul.f32.gmra.mxu0 %v5912
      %v6060 = vpop.f32.mrf.mxu0
      %v6061 = vadd.f32 0.0, %v6060
      %6062 = vmatmul.f32.gmra.mxu0 %v5915
      %v6063 = vpop.f32.mrf.mxu0
      %v6064 = vadd.f32 0.0, %v6063
      %6065 = vmatmul.f32.gmra.mxu0 %v5918
      %v6066 = vpop.f32.mrf.mxu0
      %v6067 = vadd.f32 0.0, %v6066
      %6068 = vmatmul.f32.gmra.mxu0 %v5921
      %v6069 = vpop.f32.mrf.mxu0
      %v6070 = vadd.f32 0.0, %v6069
      %6071 = vmatmul.f32.gmra.mxu0 %v5924
      %v6072 = vpop.f32.mrf.mxu0
      %v6073 = vadd.f32 0.0, %v6072
      %6074 = vmatmul.f32.gmra.mxu0 %v5927
      %v6075 = vpop.f32.mrf.mxu0
      %v6076 = vadd.f32 0.0, %v6075
      %6077 = vmatmul.f32.gmra.mxu0 %v5930
      %v6078 = vpop.f32.mrf.mxu0
      %v6079 = vadd.f32 0.0, %v6078
      %6080 = vmatmul.f32.gmra.mxu0 %v5933
      %v6081 = vpop.f32.mrf.mxu0
      %v6082 = vadd.f32 0.0, %v6081
      %6083 = vmatmul.f32.gmra.mxu0 %v5936
      %v6084 = vpop.f32.mrf.mxu0
      %v6085 = vadd.f32 0.0, %v6084
      %6086 = vmatmul.f32.gmra.mxu0 %v5939
      %v6087 = vpop.f32.mrf.mxu0
      %v6088 = vadd.f32 0.0, %v6087
      %6089 = vmatmul.f32.gmra.mxu0 %v5942
      %v6090 = vpop.f32.mrf.mxu0
      %v6091 = vadd.f32 0.0, %v6090
      %6092 = vmatmul.f32.gmra.mxu0 %v5945
      %v6093 = vpop.f32.mrf.mxu0
      %v6094 = vadd.f32 0.0, %v6093
      %6095 = vmatmul.f32.gmra.mxu0 %v5948
      %v6096 = vpop.f32.mrf.mxu0
      %v6097 = vadd.f32 0.0, %v6096
      %6098 = vmatmul.f32.gmra.mxu0 %v5951
      %v6099 = vpop.f32.mrf.mxu0
      %v6100 = vadd.f32 0.0, %v6099
      %6101 = vmatmul.f32.gmra.mxu0 %v5954
      %v6102 = vpop.f32.mrf.mxu0
      %v6103 = vadd.f32 0.0, %v6102
      %6104 = vmatmul.f32.gmra.mxu0 %v5957
      %v6105 = vpop.f32.mrf.mxu0
      %v6106 = vadd.f32 0.0, %v6105
      %6107 = vmatmul.f32.gmra.mxu0 %v5960
      %v6108 = vpop.f32.mrf.mxu0
      %v6109 = vadd.f32 0.0, %v6108
      %6110 = vmatmul.f32.gmra.mxu0 %v5963
      %v6111 = vpop.f32.mrf.mxu0
      %v6112 = vadd.f32 0.0, %v6111
      %6113 = vmatmul.f32.gmra.mxu0 %v5966
      %v6114 = vpop.f32.mrf.mxu0
      %v6115 = vadd.f32 0.0, %v6114
      %6116 = vmatmul.f32.gmra.mxu0 %v5969
      %v6117 = vpop.f32.mrf.mxu0
      %v6118 = vadd.f32 0.0, %v6117
      %6119 = vmatmul.f32.gmra.mxu0 %v5972
      %v6120 = vpop.f32.mrf.mxu0
      %v6121 = vadd.f32 0.0, %v6120
      %6122 = vmatmul.f32.gmra.mxu0 %v5975
      %v6123 = vpop.f32.mrf.mxu0
      %v6124 = vadd.f32 0.0, %v6123
      %6125 = vmatmul.f32.gmra.mxu0 %v5978
      %v6126 = vpop.f32.mrf.mxu0
      %v6127 = vadd.f32 0.0, %v6126
      %6128 = vmatmul.f32.gmra.mxu0 %v5981
      %v6129 = vpop.f32.mrf.mxu0
      %v6130 = vadd.f32 0.0, %v6129
      %6131 = vmatmul.f32.gmra.mxu0 %v5984
      %v6132 = vpop.f32.mrf.mxu0
      %v6133 = vadd.f32 0.0, %v6132
      %6134 = vmatmul.f32.gmra.mxu0 %v5987
      %v6135 = vpop.f32.mrf.mxu0
      %v6136 = vadd.f32 0.0, %v6135
      %6137 = vmatmul.f32.gmra.mxu0 %v5990
      %v6138 = vpop.f32.mrf.mxu0
      %v6139 = vadd.f32 0.0, %v6138
      %6140 = vmatmul.f32.gmra.mxu0 %v5993
      %v6141 = vpop.f32.mrf.mxu0
      %v6142 = vadd.f32 0.0, %v6141
      %6143 = vmatmul.f32.gmra.mxu0 %v5996
      %v6144 = vpop.f32.mrf.mxu0
      %v6145 = vadd.f32 0.0, %v6144
      %6146 = vmatmul.f32.gmra.mxu0 %v5999
      %v6147 = vpop.f32.mrf.mxu0
      %v6148 = vadd.f32 0.0, %v6147
      %6149 = vmatmul.f32.gmra.mxu0 %v6002
      %v6150 = vpop.f32.mrf.mxu0
      %v6151 = vadd.f32 0.0, %v6150
      %6152 = vmatmul.f32.gmra.mxu0 %v6005
      %v6153 = vpop.f32.mrf.mxu0
      %v6154 = vadd.f32 0.0, %v6153
      %6155 = vmatmul.f32.gmra.mxu0 %v6008
      %v6156 = vpop.f32.mrf.mxu0
      %v6157 = vadd.f32 0.0, %v6156
      %6158 = vmatmul.f32.gmra.mxu0 %v6011
      %v6159 = vpop.f32.mrf.mxu0
      %v6160 = vadd.f32 0.0, %v6159
      %6161 = vmatmul.f32.gmra.mxu0 %v6014
      %v6162 = vpop.f32.mrf.mxu0
      %v6163 = vadd.f32 0.0, %v6162
      %6164 = vdwg.mxu0
      %v6165 = vadd.f32 %v5788, %v6037
      %v6166 = vadd.f32 %v5789, %v6040
      %v6167 = vadd.f32 %v5790, %v6043
      %v6168 = vadd.f32 %v5791, %v6046
      %v6169 = vadd.f32 %v5792, %v6049
      %v6170 = vadd.f32 %v5793, %v6052
      %v6171 = vadd.f32 %v5794, %v6055
      %v6172 = vadd.f32 %v5795, %v6058
      %v6173 = vadd.f32 %v5796, %v6061
      %v6174 = vadd.f32 %v5797, %v6064
      %v6175 = vadd.f32 %v5798, %v6067
      %v6176 = vadd.f32 %v5799, %v6070
      %v6177 = vadd.f32 %v5800, %v6073
      %v6178 = vadd.f32 %v5801, %v6076
      %v6179 = vadd.f32 %v5802, %v6079
      %v6180 = vadd.f32 %v5803, %v6082
      %v6181 = vadd.f32 %v5804, %v6085
      %v6182 = vadd.f32 %v5805, %v6088
      %v6183 = vadd.f32 %v5806, %v6091
      %v6184 = vadd.f32 %v5807, %v6094
      %v6185 = vadd.f32 %v5808, %v6097
      %v6186 = vadd.f32 %v5809, %v6100
      %v6187 = vadd.f32 %v5810, %v6103
      %v6188 = vadd.f32 %v5811, %v6106
      %v6189 = vadd.f32 %v5812, %v6109
      %v6190 = vadd.f32 %v5813, %v6112
      %v6191 = vadd.f32 %v5814, %v6115
      %v6192 = vadd.f32 %v5815, %v6118
      %v6193 = vadd.f32 %v5816, %v6121
      %v6194 = vadd.f32 %v5817, %v6124
      %v6195 = vadd.f32 %v5818, %v6127
      %v6196 = vadd.f32 %v5819, %v6130
      %v6197 = vadd.f32 %v5820, %v6133
      %v6198 = vadd.f32 %v5821, %v6136
      %v6199 = vadd.f32 %v5822, %v6139
      %v6200 = vadd.f32 %v5823, %v6142
      %v6201 = vadd.f32 %v5824, %v6145
      %v6202 = vadd.f32 %v5825, %v6148
      %v6203 = vadd.f32 %v5826, %v6151
      %v6204 = vadd.f32 %v5827, %v6154
      %v6205 = vadd.f32 %v5828, %v6157
      %v6206 = vadd.f32 %v5829, %v6160
      %v6207 = vadd.f32 %v5830, %v6163
      %v6208 = vld [vmem:[%s165 + $0x40] sm:$0xff]
      %v6209 = vld [vmem:[%s165 + $0x48] sm:$0xff]
      %v6210 = vld [vmem:[%s165 + $0x50] sm:$0xff]
      %v6211 = vld [vmem:[%s165 + $0x58] sm:$0xff]
      %v6212 = vld [vmem:[%s165 + $0x60] sm:$0xff]
      %v6213 = vld [vmem:[%s165 + $0x68] sm:$0xff]
      %v6214 = vld [vmem:[%s165 + $0x70] sm:$0xff]
      %v6215 = vld [vmem:[%s165 + $0x78] sm:$0xff]
      %v6216 = vld [vmem:[%s165 + $0x80] sm:$0xff]
      %v6217 = vld [vmem:[%s165 + $0x88] sm:$0xff]
      %v6218 = vld [vmem:[%s165 + $0x90] sm:$0xff]
      %v6219 = vld [vmem:[%s165 + $0x98] sm:$0xff]
      %v6220 = vld [vmem:[%s165 + $0xa0] sm:$0xff]
      %v6221 = vld [vmem:[%s165 + $0xa8] sm:$0xff]
      %v6222 = vld [vmem:[%s165 + $0xb0] sm:$0xff]
      %v6223 = vld [vmem:[%s165 + $0xb8] sm:$0xff]
      %v6224 = vld [vmem:[%s165 + $0xc0] sm:$0xff]
      %v6225 = vld [vmem:[%s165 + $0xc8] sm:$0xff]
      %v6226 = vld [vmem:[%s165 + $0xd0] sm:$0xff]
      %v6227 = vld [vmem:[%s165 + $0xd8] sm:$0xff]
      %v6228 = vld [vmem:[%s165 + $0xe0] sm:$0xff]
      %v6229 = vld [vmem:[%s165 + $0xe8] sm:$0xff]
      %v6230 = vld [vmem:[%s165 + $0xf0] sm:$0xff]
      %v6231 = vld [vmem:[%s165 + $0xf8] sm:$0xff]
      %v6232 = vld [vmem:[%s165 + $0x100] sm:$0xff]
      %v6233 = vld [vmem:[%s165 + $0x108] sm:$0xff]
      %v6234 = vld [vmem:[%s165 + $0x110] sm:$0xff]
      %v6235 = vld [vmem:[%s165 + $0x118] sm:$0xff]
      %v6236 = vld [vmem:[%s165 + $0x120] sm:$0xff]
      %v6237 = vld [vmem:[%s165 + $0x128] sm:$0xff]
      %v6238 = vld [vmem:[%s165 + $0x130] sm:$0xff]
      %v6239 = vld [vmem:[%s165 + $0x138] sm:$0xff]
      %v6240 = vld [vmem:[%s165 + $0x140] sm:$0xff]
      %v6241 = vld [vmem:[%s165 + $0x148] sm:$0xff]
      %v6242 = vld [vmem:[%s165 + $0x150] sm:$0xff]
      %v6243 = vld [vmem:[%s165 + $0x158] sm:$0xff]
      %v6244 = vld [vmem:[%s165 + $0x160] sm:$0xff]
      %v6245 = vld [vmem:[%s165 + $0x168] sm:$0xff]
      %v6246 = vld [vmem:[%s165 + $0x170] sm:$0xff]
      %v6247 = vld [vmem:[%s165 + $0x178] sm:$0xff]
      %v6248 = vld [vmem:[%s165 + $0x180] sm:$0xff]
      %v6249 = vld [vmem:[%s165 + $0x188] sm:$0xff]
      %v6250 = vld [vmem:[%s165 + $0x190] sm:$0xff]
      %s6251 = scalar_lea.vmem %s1, 1536
      %v6252 = vld [vmem:[%s6251] sm:$0xff]
      %v6253 = vld [vmem:[%s6251 + $0x8] sm:$0xff]
      %v6254 = vld [vmem:[%s6251 + $0x10] sm:$0xff]
      %v6255 = vld [vmem:[%s6251 + $0x18] sm:$0xff]
      %v6256 = vld [vmem:[%s6251 + $0x20] sm:$0xff]
      %v6257 = vld [vmem:[%s6251 + $0x28] sm:$0xff]
      %v6258 = vld [vmem:[%s6251 + $0x30] sm:$0xff]
      %v6259 = vld [vmem:[%s6251 + $0x38] sm:$0xff]
      %v6260 = vld [vmem:[%s6251 + $0x40] sm:$0xff]
      %v6261 = vld [vmem:[%s6251 + $0x48] sm:$0xff]
      %v6262 = vld [vmem:[%s6251 + $0x50] sm:$0xff]
      %v6263 = vld [vmem:[%s6251 + $0x58] sm:$0x3]
      %v6265 = vsel %vm230, %v6208, 0
      %v6268 = vsel %vm230, %v6209, 0
      %v6271 = vsel %vm230, %v6210, 0
      %v6274 = vsel %vm230, %v6211, 0
      %v6277 = vsel %vm230, %v6212, 0
      %v6280 = vsel %vm230, %v6213, 0
      %v6283 = vsel %vm230, %v6214, 0
      %v6286 = vsel %vm230, %v6215, 0
      %v6289 = vsel %vm230, %v6216, 0
      %v6292 = vsel %vm230, %v6217, 0
      %v6295 = vsel %vm230, %v6218, 0
      %v6298 = vsel %vm230, %v6219, 0
      %v6301 = vsel %vm230, %v6220, 0
      %v6304 = vsel %vm230, %v6221, 0
      %v6307 = vsel %vm230, %v6222, 0
      %v6310 = vsel %vm230, %v6223, 0
      %v6313 = vsel %vm230, %v6224, 0
      %v6316 = vsel %vm230, %v6225, 0
      %v6319 = vsel %vm230, %v6226, 0
      %v6322 = vsel %vm230, %v6227, 0
      %v6325 = vsel %vm230, %v6228, 0
      %v6328 = vsel %vm230, %v6229, 0
      %v6331 = vsel %vm230, %v6230, 0
      %v6334 = vsel %vm230, %v6231, 0
      %v6337 = vsel %vm230, %v6232, 0
      %v6340 = vsel %vm230, %v6233, 0
      %v6343 = vsel %vm230, %v6234, 0
      %v6346 = vsel %vm230, %v6235, 0
      %v6349 = vsel %vm230, %v6236, 0
      %v6352 = vsel %vm230, %v6237, 0
      %v6355 = vsel %vm230, %v6238, 0
      %v6358 = vsel %vm230, %v6239, 0
      %v6361 = vsel %vm230, %v6240, 0
      %v6364 = vsel %vm230, %v6241, 0
      %v6367 = vsel %vm230, %v6242, 0
      %v6370 = vsel %vm230, %v6243, 0
      %v6373 = vsel %vm230, %v6244, 0
      %v6376 = vsel %vm230, %v6245, 0
      %v6379 = vsel %vm230, %v6246, 0
      %v6382 = vsel %vm230, %v6247, 0
      %v6385 = vsel %vm230, %v6248, 0
      %v6388 = vsel %vm230, %v6249, 0
      %v6391 = vsel %vm230, %v6250, 0
      %v6394 = vsel %vm360, %v6263, 0
      %6396 = vmatpush.msra.mxu0 0.0
      %6397 = vmatpush.msra.mxu0 0.0
      %6398 = vmatpush.msra.mxu0 0.0
      %6399 = vmatpush.msra.mxu0 0.0
      %6400 = vmatpush.msra.mxu0 %v6394
      %6401 = vmatpush.msra.mxu0 %v6262
      %6402 = vmatpush.msra.mxu0 %v6261
      %6403 = vmatpush.msra.mxu0 %v6260
      %6404 = vmatpush.msra.mxu0 %v6259
      %6405 = vmatpush.msra.mxu0 %v6258
      %6406 = vmatpush.msra.mxu0 %v6257
      %6407 = vmatpush.msra.mxu0 %v6256
      %6408 = vmatpush.msra.mxu0 %v6255
      %6409 = vmatpush.msra.mxu0 %v6254
      %6410 = vmatpush.msra.mxu0 %v6253
      %6411 = vmatpush.msra.mxu0 %v6252
      %6412 = vmatmul.f32.gmra.mxu0 %v6265
      %v6413 = vpop.f32.mrf.mxu0
      %v6414 = vadd.f32 0.0, %v6413
      %6415 = vmatmul.f32.gmra.mxu0 %v6268
      %v6416 = vpop.f32.mrf.mxu0
      %v6417 = vadd.f32 0.0, %v6416
      %6418 = vmatmul.f32.gmra.mxu0 %v6271
      %v6419 = vpop.f32.mrf.mxu0
      %v6420 = vadd.f32 0.0, %v6419
      %6421 = vmatmul.f32.gmra.mxu0 %v6274
      %v6422 = vpop.f32.mrf.mxu0
      %v6423 = vadd.f32 0.0, %v6422
      %6424 = vmatmul.f32.gmra.mxu0 %v6277
      %v6425 = vpop.f32.mrf.mxu0
      %v6426 = vadd.f32 0.0, %v6425
      %6427 = vmatmul.f32.gmra.mxu0 %v6280
      %v6428 = vpop.f32.mrf.mxu0
      %v6429 = vadd.f32 0.0, %v6428
      %6430 = vmatmul.f32.gmra.mxu0 %v6283
      %v6431 = vpop.f32.mrf.mxu0
      %v6432 = vadd.f32 0.0, %v6431
      %6433 = vmatmul.f32.gmra.mxu0 %v6286
      %v6434 = vpop.f32.mrf.mxu0
      %v6435 = vadd.f32 0.0, %v6434
      %6436 = vmatmul.f32.gmra.mxu0 %v6289
      %v6437 = vpop.f32.mrf.mxu0
      %v6438 = vadd.f32 0.0, %v6437
      %6439 = vmatmul.f32.gmra.mxu0 %v6292
      %v6440 = vpop.f32.mrf.mxu0
      %v6441 = vadd.f32 0.0, %v6440
      %6442 = vmatmul.f32.gmra.mxu0 %v6295
      %v6443 = vpop.f32.mrf.mxu0
      %v6444 = vadd.f32 0.0, %v6443
      %6445 = vmatmul.f32.gmra.mxu0 %v6298
      %v6446 = vpop.f32.mrf.mxu0
      %v6447 = vadd.f32 0.0, %v6446
      %6448 = vmatmul.f32.gmra.mxu0 %v6301
      %v6449 = vpop.f32.mrf.mxu0
      %v6450 = vadd.f32 0.0, %v6449
      %6451 = vmatmul.f32.gmra.mxu0 %v6304
      %v6452 = vpop.f32.mrf.mxu0
      %v6453 = vadd.f32 0.0, %v6452
      %6454 = vmatmul.f32.gmra.mxu0 %v6307
      %v6455 = vpop.f32.mrf.mxu0
      %v6456 = vadd.f32 0.0, %v6455
      %6457 = vmatmul.f32.gmra.mxu0 %v6310
      %v6458 = vpop.f32.mrf.mxu0
      %v6459 = vadd.f32 0.0, %v6458
      %6460 = vmatmul.f32.gmra.mxu0 %v6313
      %v6461 = vpop.f32.mrf.mxu0
      %v6462 = vadd.f32 0.0, %v6461
      %6463 = vmatmul.f32.gmra.mxu0 %v6316
      %v6464 = vpop.f32.mrf.mxu0
      %v6465 = vadd.f32 0.0, %v6464
      %6466 = vmatmul.f32.gmra.mxu0 %v6319
      %v6467 = vpop.f32.mrf.mxu0
      %v6468 = vadd.f32 0.0, %v6467
      %6469 = vmatmul.f32.gmra.mxu0 %v6322
      %v6470 = vpop.f32.mrf.mxu0
      %v6471 = vadd.f32 0.0, %v6470
      %6472 = vmatmul.f32.gmra.mxu0 %v6325
      %v6473 = vpop.f32.mrf.mxu0
      %v6474 = vadd.f32 0.0, %v6473
      %6475 = vmatmul.f32.gmra.mxu0 %v6328
      %v6476 = vpop.f32.mrf.mxu0
      %v6477 = vadd.f32 0.0, %v6476
      %6478 = vmatmul.f32.gmra.mxu0 %v6331
      %v6479 = vpop.f32.mrf.mxu0
      %v6480 = vadd.f32 0.0, %v6479
      %6481 = vmatmul.f32.gmra.mxu0 %v6334
      %v6482 = vpop.f32.mrf.mxu0
      %v6483 = vadd.f32 0.0, %v6482
      %6484 = vmatmul.f32.gmra.mxu0 %v6337
      %v6485 = vpop.f32.mrf.mxu0
      %v6486 = vadd.f32 0.0, %v6485
      %6487 = vmatmul.f32.gmra.mxu0 %v6340
      %v6488 = vpop.f32.mrf.mxu0
      %v6489 = vadd.f32 0.0, %v6488
      %6490 = vmatmul.f32.gmra.mxu0 %v6343
      %v6491 = vpop.f32.mrf.mxu0
      %v6492 = vadd.f32 0.0, %v6491
      %6493 = vmatmul.f32.gmra.mxu0 %v6346
      %v6494 = vpop.f32.mrf.mxu0
      %v6495 = vadd.f32 0.0, %v6494
      %6496 = vmatmul.f32.gmra.mxu0 %v6349
      %v6497 = vpop.f32.mrf.mxu0
      %v6498 = vadd.f32 0.0, %v6497
      %6499 = vmatmul.f32.gmra.mxu0 %v6352
      %v6500 = vpop.f32.mrf.mxu0
      %v6501 = vadd.f32 0.0, %v6500
      %6502 = vmatmul.f32.gmra.mxu0 %v6355
      %v6503 = vpop.f32.mrf.mxu0
      %v6504 = vadd.f32 0.0, %v6503
      %6505 = vmatmul.f32.gmra.mxu0 %v6358
      %v6506 = vpop.f32.mrf.mxu0
      %v6507 = vadd.f32 0.0, %v6506
      %6508 = vmatmul.f32.gmra.mxu0 %v6361
      %v6509 = vpop.f32.mrf.mxu0
      %v6510 = vadd.f32 0.0, %v6509
      %6511 = vmatmul.f32.gmra.mxu0 %v6364
      %v6512 = vpop.f32.mrf.mxu0
      %v6513 = vadd.f32 0.0, %v6512
      %6514 = vmatmul.f32.gmra.mxu0 %v6367
      %v6515 = vpop.f32.mrf.mxu0
      %v6516 = vadd.f32 0.0, %v6515
      %6517 = vmatmul.f32.gmra.mxu0 %v6370
      %v6518 = vpop.f32.mrf.mxu0
      %v6519 = vadd.f32 0.0, %v6518
      %6520 = vmatmul.f32.gmra.mxu0 %v6373
      %v6521 = vpop.f32.mrf.mxu0
      %v6522 = vadd.f32 0.0, %v6521
      %6523 = vmatmul.f32.gmra.mxu0 %v6376
      %v6524 = vpop.f32.mrf.mxu0
      %v6525 = vadd.f32 0.0, %v6524
      %6526 = vmatmul.f32.gmra.mxu0 %v6379
      %v6527 = vpop.f32.mrf.mxu0
      %v6528 = vadd.f32 0.0, %v6527
      %6529 = vmatmul.f32.gmra.mxu0 %v6382
      %v6530 = vpop.f32.mrf.mxu0
      %v6531 = vadd.f32 0.0, %v6530
      %6532 = vmatmul.f32.gmra.mxu0 %v6385
      %v6533 = vpop.f32.mrf.mxu0
      %v6534 = vadd.f32 0.0, %v6533
      %6535 = vmatmul.f32.gmra.mxu0 %v6388
      %v6536 = vpop.f32.mrf.mxu0
      %v6537 = vadd.f32 0.0, %v6536
      %6538 = vmatmul.f32.gmra.mxu0 %v6391
      %v6539 = vpop.f32.mrf.mxu0
      %v6540 = vadd.f32 0.0, %v6539
      %6541 = vdwg.mxu0
      %v6542 = vadd.f32 %v6165, %v6414
      %v6543 = vadd.f32 %v6166, %v6417
      %v6544 = vadd.f32 %v6167, %v6420
      %v6545 = vadd.f32 %v6168, %v6423
      %v6546 = vadd.f32 %v6169, %v6426
      %v6547 = vadd.f32 %v6170, %v6429
      %v6548 = vadd.f32 %v6171, %v6432
      %v6549 = vadd.f32 %v6172, %v6435
      %v6550 = vadd.f32 %v6173, %v6438
      %v6551 = vadd.f32 %v6174, %v6441
      %v6552 = vadd.f32 %v6175, %v6444
      %v6553 = vadd.f32 %v6176, %v6447
      %v6554 = vadd.f32 %v6177, %v6450
      %v6555 = vadd.f32 %v6178, %v6453
      %v6556 = vadd.f32 %v6179, %v6456
      %v6557 = vadd.f32 %v6180, %v6459
      %v6558 = vadd.f32 %v6181, %v6462
      %v6559 = vadd.f32 %v6182, %v6465
      %v6560 = vadd.f32 %v6183, %v6468
      %v6561 = vadd.f32 %v6184, %v6471
      %v6562 = vadd.f32 %v6185, %v6474
      %v6563 = vadd.f32 %v6186, %v6477
      %v6564 = vadd.f32 %v6187, %v6480
      %v6565 = vadd.f32 %v6188, %v6483
      %v6566 = vadd.f32 %v6189, %v6486
      %v6567 = vadd.f32 %v6190, %v6489
      %v6568 = vadd.f32 %v6191, %v6492
      %v6569 = vadd.f32 %v6192, %v6495
      %v6570 = vadd.f32 %v6193, %v6498
      %v6571 = vadd.f32 %v6194, %v6501
      %v6572 = vadd.f32 %v6195, %v6504
      %v6573 = vadd.f32 %v6196, %v6507
      %v6574 = vadd.f32 %v6197, %v6510
      %v6575 = vadd.f32 %v6198, %v6513
      %v6576 = vadd.f32 %v6199, %v6516
      %v6577 = vadd.f32 %v6200, %v6519
      %v6578 = vadd.f32 %v6201, %v6522
      %v6579 = vadd.f32 %v6202, %v6525
      %v6580 = vadd.f32 %v6203, %v6528
      %v6581 = vadd.f32 %v6204, %v6531
      %v6582 = vadd.f32 %v6205, %v6534
      %v6583 = vadd.f32 %v6206, %v6537
      %v6584 = vadd.f32 %v6207, %v6540
      %v6585 = vld [vmem:[%s165 + $0x41] sm:$0xff]
      %v6586 = vld [vmem:[%s165 + $0x49] sm:$0xff]
      %v6587 = vld [vmem:[%s165 + $0x51] sm:$0xff]
      %v6588 = vld [vmem:[%s165 + $0x59] sm:$0xff]
      %v6589 = vld [vmem:[%s165 + $0x61] sm:$0xff]
      %v6590 = vld [vmem:[%s165 + $0x69] sm:$0xff]
      %v6591 = vld [vmem:[%s165 + $0x71] sm:$0xff]
      %v6592 = vld [vmem:[%s165 + $0x79] sm:$0xff]
      %v6593 = vld [vmem:[%s165 + $0x81] sm:$0xff]
      %v6594 = vld [vmem:[%s165 + $0x89] sm:$0xff]
      %v6595 = vld [vmem:[%s165 + $0x91] sm:$0xff]
      %v6596 = vld [vmem:[%s165 + $0x99] sm:$0xff]
      %v6597 = vld [vmem:[%s165 + $0xa1] sm:$0xff]
      %v6598 = vld [vmem:[%s165 + $0xa9] sm:$0xff]
      %v6599 = vld [vmem:[%s165 + $0xb1] sm:$0xff]
      %v6600 = vld [vmem:[%s165 + $0xb9] sm:$0xff]
      %v6601 = vld [vmem:[%s165 + $0xc1] sm:$0xff]
      %v6602 = vld [vmem:[%s165 + $0xc9] sm:$0xff]
      %v6603 = vld [vmem:[%s165 + $0xd1] sm:$0xff]
      %v6604 = vld [vmem:[%s165 + $0xd9] sm:$0xff]
      %v6605 = vld [vmem:[%s165 + $0xe1] sm:$0xff]
      %v6606 = vld [vmem:[%s165 + $0xe9] sm:$0xff]
      %v6607 = vld [vmem:[%s165 + $0xf1] sm:$0xff]
      %v6608 = vld [vmem:[%s165 + $0xf9] sm:$0xff]
      %v6609 = vld [vmem:[%s165 + $0x101] sm:$0xff]
      %v6610 = vld [vmem:[%s165 + $0x109] sm:$0xff]
      %v6611 = vld [vmem:[%s165 + $0x111] sm:$0xff]
      %v6612 = vld [vmem:[%s165 + $0x119] sm:$0xff]
      %v6613 = vld [vmem:[%s165 + $0x121] sm:$0xff]
      %v6614 = vld [vmem:[%s165 + $0x129] sm:$0xff]
      %v6615 = vld [vmem:[%s165 + $0x131] sm:$0xff]
      %v6616 = vld [vmem:[%s165 + $0x139] sm:$0xff]
      %v6617 = vld [vmem:[%s165 + $0x141] sm:$0xff]
      %v6618 = vld [vmem:[%s165 + $0x149] sm:$0xff]
      %v6619 = vld [vmem:[%s165 + $0x151] sm:$0xff]
      %v6620 = vld [vmem:[%s165 + $0x159] sm:$0xff]
      %v6621 = vld [vmem:[%s165 + $0x161] sm:$0xff]
      %v6622 = vld [vmem:[%s165 + $0x169] sm:$0xff]
      %v6623 = vld [vmem:[%s165 + $0x171] sm:$0xff]
      %v6624 = vld [vmem:[%s165 + $0x179] sm:$0xff]
      %v6625 = vld [vmem:[%s165 + $0x181] sm:$0xff]
      %v6626 = vld [vmem:[%s165 + $0x189] sm:$0xff]
      %v6627 = vld [vmem:[%s165 + $0x191] sm:$0xff]
      %s6628 = scalar_lea.vmem %s1, 1632
      %v6629 = vld [vmem:[%s6628] sm:$0xff]
      %v6630 = vld [vmem:[%s6628 + $0x8] sm:$0xff]
      %v6631 = vld [vmem:[%s6628 + $0x10] sm:$0xff]
      %v6632 = vld [vmem:[%s6628 + $0x18] sm:$0xff]
      %v6633 = vld [vmem:[%s6628 + $0x20] sm:$0xff]
      %v6634 = vld [vmem:[%s6628 + $0x28] sm:$0xff]
      %v6635 = vld [vmem:[%s6628 + $0x30] sm:$0xff]
      %v6636 = vld [vmem:[%s6628 + $0x38] sm:$0xff]
      %v6637 = vld [vmem:[%s6628 + $0x40] sm:$0xff]
      %v6638 = vld [vmem:[%s6628 + $0x48] sm:$0xff]
      %v6639 = vld [vmem:[%s6628 + $0x50] sm:$0xff]
      %v6640 = vld [vmem:[%s6628 + $0x58] sm:$0x3]
      %v6642 = vsel %vm230, %v6585, 0
      %v6645 = vsel %vm230, %v6586, 0
      %v6648 = vsel %vm230, %v6587, 0
      %v6651 = vsel %vm230, %v6588, 0
      %v6654 = vsel %vm230, %v6589, 0
      %v6657 = vsel %vm230, %v6590, 0
      %v6660 = vsel %vm230, %v6591, 0
      %v6663 = vsel %vm230, %v6592, 0
      %v6666 = vsel %vm230, %v6593, 0
      %v6669 = vsel %vm230, %v6594, 0
      %v6672 = vsel %vm230, %v6595, 0
      %v6675 = vsel %vm230, %v6596, 0
      %v6678 = vsel %vm230, %v6597, 0
      %v6681 = vsel %vm230, %v6598, 0
      %v6684 = vsel %vm230, %v6599, 0
      %v6687 = vsel %vm230, %v6600, 0
      %v6690 = vsel %vm230, %v6601, 0
      %v6693 = vsel %vm230, %v6602, 0
      %v6696 = vsel %vm230, %v6603, 0
      %v6699 = vsel %vm230, %v6604, 0
      %v6702 = vsel %vm230, %v6605, 0
      %v6705 = vsel %vm230, %v6606, 0
      %v6708 = vsel %vm230, %v6607, 0
      %v6711 = vsel %vm230, %v6608, 0
      %v6714 = vsel %vm230, %v6609, 0
      %v6717 = vsel %vm230, %v6610, 0
      %v6720 = vsel %vm230, %v6611, 0
      %v6723 = vsel %vm230, %v6612, 0
      %v6726 = vsel %vm230, %v6613, 0
      %v6729 = vsel %vm230, %v6614, 0
      %v6732 = vsel %vm230, %v6615, 0
      %v6735 = vsel %vm230, %v6616, 0
      %v6738 = vsel %vm230, %v6617, 0
      %v6741 = vsel %vm230, %v6618, 0
      %v6744 = vsel %vm230, %v6619, 0
      %v6747 = vsel %vm230, %v6620, 0
      %v6750 = vsel %vm230, %v6621, 0
      %v6753 = vsel %vm230, %v6622, 0
      %v6756 = vsel %vm230, %v6623, 0
      %v6759 = vsel %vm230, %v6624, 0
      %v6762 = vsel %vm230, %v6625, 0
      %v6765 = vsel %vm230, %v6626, 0
      %v6768 = vsel %vm230, %v6627, 0
      %v6771 = vsel %vm360, %v6640, 0
      %6773 = vmatpush.msra.mxu0 0.0
      %6774 = vmatpush.msra.mxu0 0.0
      %6775 = vmatpush.msra.mxu0 0.0
      %6776 = vmatpush.msra.mxu0 0.0
      %6777 = vmatpush.msra.mxu0 %v6771
      %6778 = vmatpush.msra.mxu0 %v6639
      %6779 = vmatpush.msra.mxu0 %v6638
      %6780 = vmatpush.msra.mxu0 %v6637
      %6781 = vmatpush.msra.mxu0 %v6636
      %6782 = vmatpush.msra.mxu0 %v6635
      %6783 = vmatpush.msra.mxu0 %v6634
      %6784 = vmatpush.msra.mxu0 %v6633
      %6785 = vmatpush.msra.mxu0 %v6632
      %6786 = vmatpush.msra.mxu0 %v6631
      %6787 = vmatpush.msra.mxu0 %v6630
      %6788 = vmatpush.msra.mxu0 %v6629
      %6789 = vmatmul.f32.gmra.mxu0 %v6642
      %v6790 = vpop.f32.mrf.mxu0
      %v6791 = vadd.f32 0.0, %v6790
      %6792 = vmatmul.f32.gmra.mxu0 %v6645
      %v6793 = vpop.f32.mrf.mxu0
      %v6794 = vadd.f32 0.0, %v6793
      %6795 = vmatmul.f32.gmra.mxu0 %v6648
      %v6796 = vpop.f32.mrf.mxu0
      %v6797 = vadd.f32 0.0, %v6796
      %6798 = vmatmul.f32.gmra.mxu0 %v6651
      %v6799 = vpop.f32.mrf.mxu0
      %v6800 = vadd.f32 0.0, %v6799
      %6801 = vmatmul.f32.gmra.mxu0 %v6654
      %v6802 = vpop.f32.mrf.mxu0
      %v6803 = vadd.f32 0.0, %v6802
      %6804 = vmatmul.f32.gmra.mxu0 %v6657
      %v6805 = vpop.f32.mrf.mxu0
      %v6806 = vadd.f32 0.0, %v6805
      %6807 = vmatmul.f32.gmra.mxu0 %v6660
      %v6808 = vpop.f32.mrf.mxu0
      %v6809 = vadd.f32 0.0, %v6808
      %6810 = vmatmul.f32.gmra.mxu0 %v6663
      %v6811 = vpop.f32.mrf.mxu0
      %v6812 = vadd.f32 0.0, %v6811
      %6813 = vmatmul.f32.gmra.mxu0 %v6666
      %v6814 = vpop.f32.mrf.mxu0
      %v6815 = vadd.f32 0.0, %v6814
      %6816 = vmatmul.f32.gmra.mxu0 %v6669
      %v6817 = vpop.f32.mrf.mxu0
      %v6818 = vadd.f32 0.0, %v6817
      %6819 = vmatmul.f32.gmra.mxu0 %v6672
      %v6820 = vpop.f32.mrf.mxu0
      %v6821 = vadd.f32 0.0, %v6820
      %6822 = vmatmul.f32.gmra.mxu0 %v6675
      %v6823 = vpop.f32.mrf.mxu0
      %v6824 = vadd.f32 0.0, %v6823
      %6825 = vmatmul.f32.gmra.mxu0 %v6678
      %v6826 = vpop.f32.mrf.mxu0
      %v6827 = vadd.f32 0.0, %v6826
      %6828 = vmatmul.f32.gmra.mxu0 %v6681
      %v6829 = vpop.f32.mrf.mxu0
      %v6830 = vadd.f32 0.0, %v6829
      %6831 = vmatmul.f32.gmra.mxu0 %v6684
      %v6832 = vpop.f32.mrf.mxu0
      %v6833 = vadd.f32 0.0, %v6832
      %6834 = vmatmul.f32.gmra.mxu0 %v6687
      %v6835 = vpop.f32.mrf.mxu0
      %v6836 = vadd.f32 0.0, %v6835
      %6837 = vmatmul.f32.gmra.mxu0 %v6690
      %v6838 = vpop.f32.mrf.mxu0
      %v6839 = vadd.f32 0.0, %v6838
      %6840 = vmatmul.f32.gmra.mxu0 %v6693
      %v6841 = vpop.f32.mrf.mxu0
      %v6842 = vadd.f32 0.0, %v6841
      %6843 = vmatmul.f32.gmra.mxu0 %v6696
      %v6844 = vpop.f32.mrf.mxu0
      %v6845 = vadd.f32 0.0, %v6844
      %6846 = vmatmul.f32.gmra.mxu0 %v6699
      %v6847 = vpop.f32.mrf.mxu0
      %v6848 = vadd.f32 0.0, %v6847
      %6849 = vmatmul.f32.gmra.mxu0 %v6702
      %v6850 = vpop.f32.mrf.mxu0
      %v6851 = vadd.f32 0.0, %v6850
      %6852 = vmatmul.f32.gmra.mxu0 %v6705
      %v6853 = vpop.f32.mrf.mxu0
      %v6854 = vadd.f32 0.0, %v6853
      %6855 = vmatmul.f32.gmra.mxu0 %v6708
      %v6856 = vpop.f32.mrf.mxu0
      %v6857 = vadd.f32 0.0, %v6856
      %6858 = vmatmul.f32.gmra.mxu0 %v6711
      %v6859 = vpop.f32.mrf.mxu0
      %v6860 = vadd.f32 0.0, %v6859
      %6861 = vmatmul.f32.gmra.mxu0 %v6714
      %v6862 = vpop.f32.mrf.mxu0
      %v6863 = vadd.f32 0.0, %v6862
      %6864 = vmatmul.f32.gmra.mxu0 %v6717
      %v6865 = vpop.f32.mrf.mxu0
      %v6866 = vadd.f32 0.0, %v6865
      %6867 = vmatmul.f32.gmra.mxu0 %v6720
      %v6868 = vpop.f32.mrf.mxu0
      %v6869 = vadd.f32 0.0, %v6868
      %6870 = vmatmul.f32.gmra.mxu0 %v6723
      %v6871 = vpop.f32.mrf.mxu0
      %v6872 = vadd.f32 0.0, %v6871
      %6873 = vmatmul.f32.gmra.mxu0 %v6726
      %v6874 = vpop.f32.mrf.mxu0
      %v6875 = vadd.f32 0.0, %v6874
      %6876 = vmatmul.f32.gmra.mxu0 %v6729
      %v6877 = vpop.f32.mrf.mxu0
      %v6878 = vadd.f32 0.0, %v6877
      %6879 = vmatmul.f32.gmra.mxu0 %v6732
      %v6880 = vpop.f32.mrf.mxu0
      %v6881 = vadd.f32 0.0, %v6880
      %6882 = vmatmul.f32.gmra.mxu0 %v6735
      %v6883 = vpop.f32.mrf.mxu0
      %v6884 = vadd.f32 0.0, %v6883
      %6885 = vmatmul.f32.gmra.mxu0 %v6738
      %v6886 = vpop.f32.mrf.mxu0
      %v6887 = vadd.f32 0.0, %v6886
      %6888 = vmatmul.f32.gmra.mxu0 %v6741
      %v6889 = vpop.f32.mrf.mxu0
      %v6890 = vadd.f32 0.0, %v6889
      %6891 = vmatmul.f32.gmra.mxu0 %v6744
      %v6892 = vpop.f32.mrf.mxu0
      %v6893 = vadd.f32 0.0, %v6892
      %6894 = vmatmul.f32.gmra.mxu0 %v6747
      %v6895 = vpop.f32.mrf.mxu0
      %v6896 = vadd.f32 0.0, %v6895
      %6897 = vmatmul.f32.gmra.mxu0 %v6750
      %v6898 = vpop.f32.mrf.mxu0
      %v6899 = vadd.f32 0.0, %v6898
      %6900 = vmatmul.f32.gmra.mxu0 %v6753
      %v6901 = vpop.f32.mrf.mxu0
      %v6902 = vadd.f32 0.0, %v6901
      %6903 = vmatmul.f32.gmra.mxu0 %v6756
      %v6904 = vpop.f32.mrf.mxu0
      %v6905 = vadd.f32 0.0, %v6904
      %6906 = vmatmul.f32.gmra.mxu0 %v6759
      %v6907 = vpop.f32.mrf.mxu0
      %v6908 = vadd.f32 0.0, %v6907
      %6909 = vmatmul.f32.gmra.mxu0 %v6762
      %v6910 = vpop.f32.mrf.mxu0
      %v6911 = vadd.f32 0.0, %v6910
      %6912 = vmatmul.f32.gmra.mxu0 %v6765
      %v6913 = vpop.f32.mrf.mxu0
      %v6914 = vadd.f32 0.0, %v6913
      %6915 = vmatmul.f32.gmra.mxu0 %v6768
      %v6916 = vpop.f32.mrf.mxu0
      %v6917 = vadd.f32 0.0, %v6916
      %6918 = vdwg.mxu0
      %v6919 = vadd.f32 %v6542, %v6791
      %v6920 = vadd.f32 %v6543, %v6794
      %v6921 = vadd.f32 %v6544, %v6797
      %v6922 = vadd.f32 %v6545, %v6800
      %v6923 = vadd.f32 %v6546, %v6803
      %v6924 = vadd.f32 %v6547, %v6806
      %v6925 = vadd.f32 %v6548, %v6809
      %v6926 = vadd.f32 %v6549, %v6812
      %v6927 = vadd.f32 %v6550, %v6815
      %v6928 = vadd.f32 %v6551, %v6818
      %v6929 = vadd.f32 %v6552, %v6821
      %v6930 = vadd.f32 %v6553, %v6824
      %v6931 = vadd.f32 %v6554, %v6827
      %v6932 = vadd.f32 %v6555, %v6830
      %v6933 = vadd.f32 %v6556, %v6833
      %v6934 = vadd.f32 %v6557, %v6836
      %v6935 = vadd.f32 %v6558, %v6839
      %v6936 = vadd.f32 %v6559, %v6842
      %v6937 = vadd.f32 %v6560, %v6845
      %v6938 = vadd.f32 %v6561, %v6848
      %v6939 = vadd.f32 %v6562, %v6851
      %v6940 = vadd.f32 %v6563, %v6854
      %v6941 = vadd.f32 %v6564, %v6857
      %v6942 = vadd.f32 %v6565, %v6860
      %v6943 = vadd.f32 %v6566, %v6863
      %v6944 = vadd.f32 %v6567, %v6866
      %v6945 = vadd.f32 %v6568, %v6869
      %v6946 = vadd.f32 %v6569, %v6872
      %v6947 = vadd.f32 %v6570, %v6875
      %v6948 = vadd.f32 %v6571, %v6878
      %v6949 = vadd.f32 %v6572, %v6881
      %v6950 = vadd.f32 %v6573, %v6884
      %v6951 = vadd.f32 %v6574, %v6887
      %v6952 = vadd.f32 %v6575, %v6890
      %v6953 = vadd.f32 %v6576, %v6893
      %v6954 = vadd.f32 %v6577, %v6896
      %v6955 = vadd.f32 %v6578, %v6899
      %v6956 = vadd.f32 %v6579, %v6902
      %v6957 = vadd.f32 %v6580, %v6905
      %v6958 = vadd.f32 %v6581, %v6908
      %v6959 = vadd.f32 %v6582, %v6911
      %v6960 = vadd.f32 %v6583, %v6914
      %v6961 = vadd.f32 %v6584, %v6917
      %v6962 = vld [vmem:[%s165 + $0x62] sm:$0xff]
      %v6963 = vld [vmem:[%s165 + $0x6a] sm:$0xff]
      %v6964 = vld [vmem:[%s165 + $0x72] sm:$0xff]
      %v6965 = vld [vmem:[%s165 + $0x7a] sm:$0xff]
      %v6966 = vld [vmem:[%s165 + $0x82] sm:$0xff]
      %v6967 = vld [vmem:[%s165 + $0x8a] sm:$0xff]
      %v6968 = vld [vmem:[%s165 + $0x92] sm:$0xff]
      %v6969 = vld [vmem:[%s165 + $0x9a] sm:$0xff]
      %v6970 = vld [vmem:[%s165 + $0xa2] sm:$0xff]
      %v6971 = vld [vmem:[%s165 + $0xaa] sm:$0xff]
      %v6972 = vld [vmem:[%s165 + $0xb2] sm:$0xff]
      %v6973 = vld [vmem:[%s165 + $0xba] sm:$0xff]
      %v6974 = vld [vmem:[%s165 + $0xc2] sm:$0xff]
      %v6975 = vld [vmem:[%s165 + $0xca] sm:$0xff]
      %v6976 = vld [vmem:[%s165 + $0xd2] sm:$0xff]
      %v6977 = vld [vmem:[%s165 + $0xda] sm:$0xff]
      %v6978 = vld [vmem:[%s165 + $0xe2] sm:$0xff]
      %v6979 = vld [vmem:[%s165 + $0xea] sm:$0xff]
      %v6980 = vld [vmem:[%s165 + $0xf2] sm:$0xff]
      %v6981 = vld [vmem:[%s165 + $0xfa] sm:$0xff]
      %v6982 = vld [vmem:[%s165 + $0x102] sm:$0xff]
      %v6983 = vld [vmem:[%s165 + $0x10a] sm:$0xff]
      %v6984 = vld [vmem:[%s165 + $0x112] sm:$0xff]
      %v6985 = vld [vmem:[%s165 + $0x11a] sm:$0xff]
      %v6986 = vld [vmem:[%s165 + $0x122] sm:$0xff]
      %v6987 = vld [vmem:[%s165 + $0x12a] sm:$0xff]
      %v6988 = vld [vmem:[%s165 + $0x132] sm:$0xff]
      %v6989 = vld [vmem:[%s165 + $0x13a] sm:$0xff]
      %v6990 = vld [vmem:[%s165 + $0x142] sm:$0xff]
      %v6991 = vld [vmem:[%s165 + $0x14a] sm:$0xff]
      %v6992 = vld [vmem:[%s165 + $0x152] sm:$0xff]
      %v6993 = vld [vmem:[%s165 + $0x15a] sm:$0xff]
      %v6994 = vld [vmem:[%s165 + $0x162] sm:$0xff]
      %v6995 = vld [vmem:[%s165 + $0x16a] sm:$0xff]
      %v6996 = vld [vmem:[%s165 + $0x172] sm:$0xff]
      %v6997 = vld [vmem:[%s165 + $0x17a] sm:$0xff]
      %v6998 = vld [vmem:[%s165 + $0x182] sm:$0xff]
      %v6999 = vld [vmem:[%s165 + $0x18a] sm:$0xff]
      %v7000 = vld [vmem:[%s165 + $0x192] sm:$0xff]
      %v7001 = vld [vmem:[%s165 + $0x19a] sm:$0xff]
      %v7002 = vld [vmem:[%s165 + $0x1a2] sm:$0xff]
      %v7003 = vld [vmem:[%s165 + $0x1aa] sm:$0xff]
      %v7004 = vld [vmem:[%s165 + $0x1b2] sm:$0xff]
      %s7005 = scalar_lea.vmem %s1, 1728
      %v7006 = vld [vmem:[%s7005] sm:$0xff]
      %v7007 = vld [vmem:[%s7005 + $0x8] sm:$0xff]
      %v7008 = vld [vmem:[%s7005 + $0x10] sm:$0xff]
      %v7009 = vld [vmem:[%s7005 + $0x18] sm:$0xff]
      %v7010 = vld [vmem:[%s7005 + $0x20] sm:$0xff]
      %v7011 = vld [vmem:[%s7005 + $0x28] sm:$0xff]
      %v7012 = vld [vmem:[%s7005 + $0x30] sm:$0xff]
      %v7013 = vld [vmem:[%s7005 + $0x38] sm:$0xff]
      %v7014 = vld [vmem:[%s7005 + $0x40] sm:$0xff]
      %v7015 = vld [vmem:[%s7005 + $0x48] sm:$0xff]
      %v7016 = vld [vmem:[%s7005 + $0x50] sm:$0xff]
      %v7017 = vld [vmem:[%s7005 + $0x58] sm:$0x3]
      %v7019 = vsel %vm230, %v6962, 0
      %v7022 = vsel %vm230, %v6963, 0
      %v7025 = vsel %vm230, %v6964, 0
      %v7028 = vsel %vm230, %v6965, 0
      %v7031 = vsel %vm230, %v6966, 0
      %v7034 = vsel %vm230, %v6967, 0
      %v7037 = vsel %vm230, %v6968, 0
      %v7040 = vsel %vm230, %v6969, 0
      %v7043 = vsel %vm230, %v6970, 0
      %v7046 = vsel %vm230, %v6971, 0
      %v7049 = vsel %vm230, %v6972, 0
      %v7052 = vsel %vm230, %v6973, 0
      %v7055 = vsel %vm230, %v6974, 0
      %v7058 = vsel %vm230, %v6975, 0
      %v7061 = vsel %vm230, %v6976, 0
      %v7064 = vsel %vm230, %v6977, 0
      %v7067 = vsel %vm230, %v6978, 0
      %v7070 = vsel %vm230, %v6979, 0
      %v7073 = vsel %vm230, %v6980, 0
      %v7076 = vsel %vm230, %v6981, 0
      %v7079 = vsel %vm230, %v6982, 0
      %v7082 = vsel %vm230, %v6983, 0
      %v7085 = vsel %vm230, %v6984, 0
      %v7088 = vsel %vm230, %v6985, 0
      %v7091 = vsel %vm230, %v6986, 0
      %v7094 = vsel %vm230, %v6987, 0
      %v7097 = vsel %vm230, %v6988, 0
      %v7100 = vsel %vm230, %v6989, 0
      %v7103 = vsel %vm230, %v6990, 0
      %v7106 = vsel %vm230, %v6991, 0
      %v7109 = vsel %vm230, %v6992, 0
      %v7112 = vsel %vm230, %v6993, 0
      %v7115 = vsel %vm230, %v6994, 0
      %v7118 = vsel %vm230, %v6995, 0
      %v7121 = vsel %vm230, %v6996, 0
      %v7124 = vsel %vm230, %v6997, 0
      %v7127 = vsel %vm230, %v6998, 0
      %v7130 = vsel %vm230, %v6999, 0
      %v7133 = vsel %vm230, %v7000, 0
      %v7136 = vsel %vm230, %v7001, 0
      %v7139 = vsel %vm230, %v7002, 0
      %v7142 = vsel %vm230, %v7003, 0
      %v7145 = vsel %vm230, %v7004, 0
      %v7148 = vsel %vm360, %v7017, 0
      %7150 = vmatpush.msra.mxu0 0.0
      %7151 = vmatpush.msra.mxu0 0.0
      %7152 = vmatpush.msra.mxu0 0.0
      %7153 = vmatpush.msra.mxu0 0.0
      %7154 = vmatpush.msra.mxu0 %v7148
      %7155 = vmatpush.msra.mxu0 %v7016
      %7156 = vmatpush.msra.mxu0 %v7015
      %7157 = vmatpush.msra.mxu0 %v7014
      %7158 = vmatpush.msra.mxu0 %v7013
      %7159 = vmatpush.msra.mxu0 %v7012
      %7160 = vmatpush.msra.mxu0 %v7011
      %7161 = vmatpush.msra.mxu0 %v7010
      %7162 = vmatpush.msra.mxu0 %v7009
      %7163 = vmatpush.msra.mxu0 %v7008
      %7164 = vmatpush.msra.mxu0 %v7007
      %7165 = vmatpush.msra.mxu0 %v7006
      %7166 = vmatmul.f32.gmra.mxu0 %v7019
      %v7167 = vpop.f32.mrf.mxu0
      %v7168 = vadd.f32 0.0, %v7167
      %7169 = vmatmul.f32.gmra.mxu0 %v7022
      %v7170 = vpop.f32.mrf.mxu0
      %v7171 = vadd.f32 0.0, %v7170
      %7172 = vmatmul.f32.gmra.mxu0 %v7025
      %v7173 = vpop.f32.mrf.mxu0
      %v7174 = vadd.f32 0.0, %v7173
      %7175 = vmatmul.f32.gmra.mxu0 %v7028
      %v7176 = vpop.f32.mrf.mxu0
      %v7177 = vadd.f32 0.0, %v7176
      %7178 = vmatmul.f32.gmra.mxu0 %v7031
      %v7179 = vpop.f32.mrf.mxu0
      %v7180 = vadd.f32 0.0, %v7179
      %7181 = vmatmul.f32.gmra.mxu0 %v7034
      %v7182 = vpop.f32.mrf.mxu0
      %v7183 = vadd.f32 0.0, %v7182
      %7184 = vmatmul.f32.gmra.mxu0 %v7037
      %v7185 = vpop.f32.mrf.mxu0
      %v7186 = vadd.f32 0.0, %v7185
      %7187 = vmatmul.f32.gmra.mxu0 %v7040
      %v7188 = vpop.f32.mrf.mxu0
      %v7189 = vadd.f32 0.0, %v7188
      %7190 = vmatmul.f32.gmra.mxu0 %v7043
      %v7191 = vpop.f32.mrf.mxu0
      %v7192 = vadd.f32 0.0, %v7191
      %7193 = vmatmul.f32.gmra.mxu0 %v7046
      %v7194 = vpop.f32.mrf.mxu0
      %v7195 = vadd.f32 0.0, %v7194
      %7196 = vmatmul.f32.gmra.mxu0 %v7049
      %v7197 = vpop.f32.mrf.mxu0
      %v7198 = vadd.f32 0.0, %v7197
      %7199 = vmatmul.f32.gmra.mxu0 %v7052
      %v7200 = vpop.f32.mrf.mxu0
      %v7201 = vadd.f32 0.0, %v7200
      %7202 = vmatmul.f32.gmra.mxu0 %v7055
      %v7203 = vpop.f32.mrf.mxu0
      %v7204 = vadd.f32 0.0, %v7203
      %7205 = vmatmul.f32.gmra.mxu0 %v7058
      %v7206 = vpop.f32.mrf.mxu0
      %v7207 = vadd.f32 0.0, %v7206
      %7208 = vmatmul.f32.gmra.mxu0 %v7061
      %v7209 = vpop.f32.mrf.mxu0
      %v7210 = vadd.f32 0.0, %v7209
      %7211 = vmatmul.f32.gmra.mxu0 %v7064
      %v7212 = vpop.f32.mrf.mxu0
      %v7213 = vadd.f32 0.0, %v7212
      %7214 = vmatmul.f32.gmra.mxu0 %v7067
      %v7215 = vpop.f32.mrf.mxu0
      %v7216 = vadd.f32 0.0, %v7215
      %7217 = vmatmul.f32.gmra.mxu0 %v7070
      %v7218 = vpop.f32.mrf.mxu0
      %v7219 = vadd.f32 0.0, %v7218
      %7220 = vmatmul.f32.gmra.mxu0 %v7073
      %v7221 = vpop.f32.mrf.mxu0
      %v7222 = vadd.f32 0.0, %v7221
      %7223 = vmatmul.f32.gmra.mxu0 %v7076
      %v7224 = vpop.f32.mrf.mxu0
      %v7225 = vadd.f32 0.0, %v7224
      %7226 = vmatmul.f32.gmra.mxu0 %v7079
      %v7227 = vpop.f32.mrf.mxu0
      %v7228 = vadd.f32 0.0, %v7227
      %7229 = vmatmul.f32.gmra.mxu0 %v7082
      %v7230 = vpop.f32.mrf.mxu0
      %v7231 = vadd.f32 0.0, %v7230
      %7232 = vmatmul.f32.gmra.mxu0 %v7085
      %v7233 = vpop.f32.mrf.mxu0
      %v7234 = vadd.f32 0.0, %v7233
      %7235 = vmatmul.f32.gmra.mxu0 %v7088
      %v7236 = vpop.f32.mrf.mxu0
      %v7237 = vadd.f32 0.0, %v7236
      %7238 = vmatmul.f32.gmra.mxu0 %v7091
      %v7239 = vpop.f32.mrf.mxu0
      %v7240 = vadd.f32 0.0, %v7239
      %7241 = vmatmul.f32.gmra.mxu0 %v7094
      %v7242 = vpop.f32.mrf.mxu0
      %v7243 = vadd.f32 0.0, %v7242
      %7244 = vmatmul.f32.gmra.mxu0 %v7097
      %v7245 = vpop.f32.mrf.mxu0
      %v7246 = vadd.f32 0.0, %v7245
      %7247 = vmatmul.f32.gmra.mxu0 %v7100
      %v7248 = vpop.f32.mrf.mxu0
      %v7249 = vadd.f32 0.0, %v7248
      %7250 = vmatmul.f32.gmra.mxu0 %v7103
      %v7251 = vpop.f32.mrf.mxu0
      %v7252 = vadd.f32 0.0, %v7251
      %7253 = vmatmul.f32.gmra.mxu0 %v7106
      %v7254 = vpop.f32.mrf.mxu0
      %v7255 = vadd.f32 0.0, %v7254
      %7256 = vmatmul.f32.gmra.mxu0 %v7109
      %v7257 = vpop.f32.mrf.mxu0
      %v7258 = vadd.f32 0.0, %v7257
      %7259 = vmatmul.f32.gmra.mxu0 %v7112
      %v7260 = vpop.f32.mrf.mxu0
      %v7261 = vadd.f32 0.0, %v7260
      %7262 = vmatmul.f32.gmra.mxu0 %v7115
      %v7263 = vpop.f32.mrf.mxu0
      %v7264 = vadd.f32 0.0, %v7263
      %7265 = vmatmul.f32.gmra.mxu0 %v7118
      %v7266 = vpop.f32.mrf.mxu0
      %v7267 = vadd.f32 0.0, %v7266
      %7268 = vmatmul.f32.gmra.mxu0 %v7121
      %v7269 = vpop.f32.mrf.mxu0
      %v7270 = vadd.f32 0.0, %v7269
      %7271 = vmatmul.f32.gmra.mxu0 %v7124
      %v7272 = vpop.f32.mrf.mxu0
      %v7273 = vadd.f32 0.0, %v7272
      %7274 = vmatmul.f32.gmra.mxu0 %v7127
      %v7275 = vpop.f32.mrf.mxu0
      %v7276 = vadd.f32 0.0, %v7275
      %7277 = vmatmul.f32.gmra.mxu0 %v7130
      %v7278 = vpop.f32.mrf.mxu0
      %v7279 = vadd.f32 0.0, %v7278
      %7280 = vmatmul.f32.gmra.mxu0 %v7133
      %v7281 = vpop.f32.mrf.mxu0
      %v7282 = vadd.f32 0.0, %v7281
      %7283 = vmatmul.f32.gmra.mxu0 %v7136
      %v7284 = vpop.f32.mrf.mxu0
      %v7285 = vadd.f32 0.0, %v7284
      %7286 = vmatmul.f32.gmra.mxu0 %v7139
      %v7287 = vpop.f32.mrf.mxu0
      %v7288 = vadd.f32 0.0, %v7287
      %7289 = vmatmul.f32.gmra.mxu0 %v7142
      %v7290 = vpop.f32.mrf.mxu0
      %v7291 = vadd.f32 0.0, %v7290
      %7292 = vmatmul.f32.gmra.mxu0 %v7145
      %v7293 = vpop.f32.mrf.mxu0
      %v7294 = vadd.f32 0.0, %v7293
      %7295 = vdwg.mxu0
      %v7296 = vadd.f32 %v6919, %v7168
      %v7297 = vadd.f32 %v6920, %v7171
      %v7298 = vadd.f32 %v6921, %v7174
      %v7299 = vadd.f32 %v6922, %v7177
      %v7300 = vadd.f32 %v6923, %v7180
      %v7301 = vadd.f32 %v6924, %v7183
      %v7302 = vadd.f32 %v6925, %v7186
      %v7303 = vadd.f32 %v6926, %v7189
      %v7304 = vadd.f32 %v6927, %v7192
      %v7305 = vadd.f32 %v6928, %v7195
      %v7306 = vadd.f32 %v6929, %v7198
      %v7307 = vadd.f32 %v6930, %v7201
      %v7308 = vadd.f32 %v6931, %v7204
      %v7309 = vadd.f32 %v6932, %v7207
      %v7310 = vadd.f32 %v6933, %v7210
      %v7311 = vadd.f32 %v6934, %v7213
      %v7312 = vadd.f32 %v6935, %v7216
      %v7313 = vadd.f32 %v6936, %v7219
      %v7314 = vadd.f32 %v6937, %v7222
      %v7315 = vadd.f32 %v6938, %v7225
      %v7316 = vadd.f32 %v6939, %v7228
      %v7317 = vadd.f32 %v6940, %v7231
      %v7318 = vadd.f32 %v6941, %v7234
      %v7319 = vadd.f32 %v6942, %v7237
      %v7320 = vadd.f32 %v6943, %v7240
      %v7321 = vadd.f32 %v6944, %v7243
      %v7322 = vadd.f32 %v6945, %v7246
      %v7323 = vadd.f32 %v6946, %v7249
      %v7324 = vadd.f32 %v6947, %v7252
      %v7325 = vadd.f32 %v6948, %v7255
      %v7326 = vadd.f32 %v6949, %v7258
      %v7327 = vadd.f32 %v6950, %v7261
      %v7328 = vadd.f32 %v6951, %v7264
      %v7329 = vadd.f32 %v6952, %v7267
      %v7330 = vadd.f32 %v6953, %v7270
      %v7331 = vadd.f32 %v6954, %v7273
      %v7332 = vadd.f32 %v6955, %v7276
      %v7333 = vadd.f32 %v6956, %v7279
      %v7334 = vadd.f32 %v6957, %v7282
      %v7335 = vadd.f32 %v6958, %v7285
      %v7336 = vadd.f32 %v6959, %v7288
      %v7337 = vadd.f32 %v6960, %v7291
      %v7338 = vadd.f32 %v6961, %v7294
      %v7339 = vld [vmem:[%s165 + $0x63] sm:$0xff]
      %v7340 = vld [vmem:[%s165 + $0x6b] sm:$0xff]
      %v7341 = vld [vmem:[%s165 + $0x73] sm:$0xff]
      %v7342 = vld [vmem:[%s165 + $0x7b] sm:$0xff]
      %v7343 = vld [vmem:[%s165 + $0x83] sm:$0xff]
      %v7344 = vld [vmem:[%s165 + $0x8b] sm:$0xff]
      %v7345 = vld [vmem:[%s165 + $0x93] sm:$0xff]
      %v7346 = vld [vmem:[%s165 + $0x9b] sm:$0xff]
      %v7347 = vld [vmem:[%s165 + $0xa3] sm:$0xff]
      %v7348 = vld [vmem:[%s165 + $0xab] sm:$0xff]
      %v7349 = vld [vmem:[%s165 + $0xb3] sm:$0xff]
      %v7350 = vld [vmem:[%s165 + $0xbb] sm:$0xff]
      %v7351 = vld [vmem:[%s165 + $0xc3] sm:$0xff]
      %v7352 = vld [vmem:[%s165 + $0xcb] sm:$0xff]
      %v7353 = vld [vmem:[%s165 + $0xd3] sm:$0xff]
      %v7354 = vld [vmem:[%s165 + $0xdb] sm:$0xff]
      %v7355 = vld [vmem:[%s165 + $0xe3] sm:$0xff]
      %v7356 = vld [vmem:[%s165 + $0xeb] sm:$0xff]
      %v7357 = vld [vmem:[%s165 + $0xf3] sm:$0xff]
      %v7358 = vld [vmem:[%s165 + $0xfb] sm:$0xff]
      %v7359 = vld [vmem:[%s165 + $0x103] sm:$0xff]
      %v7360 = vld [vmem:[%s165 + $0x10b] sm:$0xff]
      %v7361 = vld [vmem:[%s165 + $0x113] sm:$0xff]
      %v7362 = vld [vmem:[%s165 + $0x11b] sm:$0xff]
      %v7363 = vld [vmem:[%s165 + $0x123] sm:$0xff]
      %v7364 = vld [vmem:[%s165 + $0x12b] sm:$0xff]
      %v7365 = vld [vmem:[%s165 + $0x133] sm:$0xff]
      %v7366 = vld [vmem:[%s165 + $0x13b] sm:$0xff]
      %v7367 = vld [vmem:[%s165 + $0x143] sm:$0xff]
      %v7368 = vld [vmem:[%s165 + $0x14b] sm:$0xff]
      %v7369 = vld [vmem:[%s165 + $0x153] sm:$0xff]
      %v7370 = vld [vmem:[%s165 + $0x15b] sm:$0xff]
      %v7371 = vld [vmem:[%s165 + $0x163] sm:$0xff]
      %v7372 = vld [vmem:[%s165 + $0x16b] sm:$0xff]
      %v7373 = vld [vmem:[%s165 + $0x173] sm:$0xff]
      %v7374 = vld [vmem:[%s165 + $0x17b] sm:$0xff]
      %v7375 = vld [vmem:[%s165 + $0x183] sm:$0xff]
      %v7376 = vld [vmem:[%s165 + $0x18b] sm:$0xff]
      %v7377 = vld [vmem:[%s165 + $0x193] sm:$0xff]
      %v7378 = vld [vmem:[%s165 + $0x19b] sm:$0xff]
      %v7379 = vld [vmem:[%s165 + $0x1a3] sm:$0xff]
      %v7380 = vld [vmem:[%s165 + $0x1ab] sm:$0xff]
      %v7381 = vld [vmem:[%s165 + $0x1b3] sm:$0xff]
      %s7382 = scalar_lea.vmem %s1, 1824
      %v7383 = vld [vmem:[%s7382] sm:$0xff]
      %v7384 = vld [vmem:[%s7382 + $0x8] sm:$0xff]
      %v7385 = vld [vmem:[%s7382 + $0x10] sm:$0xff]
      %v7386 = vld [vmem:[%s7382 + $0x18] sm:$0xff]
      %v7387 = vld [vmem:[%s7382 + $0x20] sm:$0xff]
      %v7388 = vld [vmem:[%s7382 + $0x28] sm:$0xff]
      %v7389 = vld [vmem:[%s7382 + $0x30] sm:$0xff]
      %v7390 = vld [vmem:[%s7382 + $0x38] sm:$0xff]
      %v7391 = vld [vmem:[%s7382 + $0x40] sm:$0xff]
      %v7392 = vld [vmem:[%s7382 + $0x48] sm:$0xff]
      %v7393 = vld [vmem:[%s7382 + $0x50] sm:$0xff]
      %v7394 = vld [vmem:[%s7382 + $0x58] sm:$0x3]
      %v7396 = vsel %vm230, %v7339, 0
      %v7399 = vsel %vm230, %v7340, 0
      %v7402 = vsel %vm230, %v7341, 0
      %v7405 = vsel %vm230, %v7342, 0
      %v7408 = vsel %vm230, %v7343, 0
      %v7411 = vsel %vm230, %v7344, 0
      %v7414 = vsel %vm230, %v7345, 0
      %v7417 = vsel %vm230, %v7346, 0
      %v7420 = vsel %vm230, %v7347, 0
      %v7423 = vsel %vm230, %v7348, 0
      %v7426 = vsel %vm230, %v7349, 0
      %v7429 = vsel %vm230, %v7350, 0
      %v7432 = vsel %vm230, %v7351, 0
      %v7435 = vsel %vm230, %v7352, 0
      %v7438 = vsel %vm230, %v7353, 0
      %v7441 = vsel %vm230, %v7354, 0
      %v7444 = vsel %vm230, %v7355, 0
      %v7447 = vsel %vm230, %v7356, 0
      %v7450 = vsel %vm230, %v7357, 0
      %v7453 = vsel %vm230, %v7358, 0
      %v7456 = vsel %vm230, %v7359, 0
      %v7459 = vsel %vm230, %v7360, 0
      %v7462 = vsel %vm230, %v7361, 0
      %v7465 = vsel %vm230, %v7362, 0
      %v7468 = vsel %vm230, %v7363, 0
      %v7471 = vsel %vm230, %v7364, 0
      %v7474 = vsel %vm230, %v7365, 0
      %v7477 = vsel %vm230, %v7366, 0
      %v7480 = vsel %vm230, %v7367, 0
      %v7483 = vsel %vm230, %v7368, 0
      %v7486 = vsel %vm230, %v7369, 0
      %v7489 = vsel %vm230, %v7370, 0
      %v7492 = vsel %vm230, %v7371, 0
      %v7495 = vsel %vm230, %v7372, 0
      %v7498 = vsel %vm230, %v7373, 0
      %v7501 = vsel %vm230, %v7374, 0
      %v7504 = vsel %vm230, %v7375, 0
      %v7507 = vsel %vm230, %v7376, 0
      %v7510 = vsel %vm230, %v7377, 0
      %v7513 = vsel %vm230, %v7378, 0
      %v7516 = vsel %vm230, %v7379, 0
      %v7519 = vsel %vm230, %v7380, 0
      %v7522 = vsel %vm230, %v7381, 0
      %v7525 = vsel %vm360, %v7394, 0
      %7527 = vmatpush.msra.mxu0 0.0
      %7528 = vmatpush.msra.mxu0 0.0
      %7529 = vmatpush.msra.mxu0 0.0
      %7530 = vmatpush.msra.mxu0 0.0
      %7531 = vmatpush.msra.mxu0 %v7525
      %7532 = vmatpush.msra.mxu0 %v7393
      %7533 = vmatpush.msra.mxu0 %v7392
      %7534 = vmatpush.msra.mxu0 %v7391
      %7535 = vmatpush.msra.mxu0 %v7390
      %7536 = vmatpush.msra.mxu0 %v7389
      %7537 = vmatpush.msra.mxu0 %v7388
      %7538 = vmatpush.msra.mxu0 %v7387
      %7539 = vmatpush.msra.mxu0 %v7386
      %7540 = vmatpush.msra.mxu0 %v7385
      %7541 = vmatpush.msra.mxu0 %v7384
      %7542 = vmatpush.msra.mxu0 %v7383
      %7543 = vmatmul.f32.gmra.mxu0 %v7396
      %v7544 = vpop.f32.mrf.mxu0
      %v7545 = vadd.f32 0.0, %v7544
      %7546 = vmatmul.f32.gmra.mxu0 %v7399
      %v7547 = vpop.f32.mrf.mxu0
      %v7548 = vadd.f32 0.0, %v7547
      %7549 = vmatmul.f32.gmra.mxu0 %v7402
      %v7550 = vpop.f32.mrf.mxu0
      %v7551 = vadd.f32 0.0, %v7550
      %7552 = vmatmul.f32.gmra.mxu0 %v7405
      %v7553 = vpop.f32.mrf.mxu0
      %v7554 = vadd.f32 0.0, %v7553
      %7555 = vmatmul.f32.gmra.mxu0 %v7408
      %v7556 = vpop.f32.mrf.mxu0
      %v7557 = vadd.f32 0.0, %v7556
      %7558 = vmatmul.f32.gmra.mxu0 %v7411
      %v7559 = vpop.f32.mrf.mxu0
      %v7560 = vadd.f32 0.0, %v7559
      %7561 = vmatmul.f32.gmra.mxu0 %v7414
      %v7562 = vpop.f32.mrf.mxu0
      %v7563 = vadd.f32 0.0, %v7562
      %7564 = vmatmul.f32.gmra.mxu0 %v7417
      %v7565 = vpop.f32.mrf.mxu0
      %v7566 = vadd.f32 0.0, %v7565
      %7567 = vmatmul.f32.gmra.mxu0 %v7420
      %v7568 = vpop.f32.mrf.mxu0
      %v7569 = vadd.f32 0.0, %v7568
      %7570 = vmatmul.f32.gmra.mxu0 %v7423
      %v7571 = vpop.f32.mrf.mxu0
      %v7572 = vadd.f32 0.0, %v7571
      %7573 = vmatmul.f32.gmra.mxu0 %v7426
      %v7574 = vpop.f32.mrf.mxu0
      %v7575 = vadd.f32 0.0, %v7574
      %7576 = vmatmul.f32.gmra.mxu0 %v7429
      %v7577 = vpop.f32.mrf.mxu0
      %v7578 = vadd.f32 0.0, %v7577
      %7579 = vmatmul.f32.gmra.mxu0 %v7432
      %v7580 = vpop.f32.mrf.mxu0
      %v7581 = vadd.f32 0.0, %v7580
      %7582 = vmatmul.f32.gmra.mxu0 %v7435
      %v7583 = vpop.f32.mrf.mxu0
      %v7584 = vadd.f32 0.0, %v7583
      %7585 = vmatmul.f32.gmra.mxu0 %v7438
      %v7586 = vpop.f32.mrf.mxu0
      %v7587 = vadd.f32 0.0, %v7586
      %7588 = vmatmul.f32.gmra.mxu0 %v7441
      %v7589 = vpop.f32.mrf.mxu0
      %v7590 = vadd.f32 0.0, %v7589
      %7591 = vmatmul.f32.gmra.mxu0 %v7444
      %v7592 = vpop.f32.mrf.mxu0
      %v7593 = vadd.f32 0.0, %v7592
      %7594 = vmatmul.f32.gmra.mxu0 %v7447
      %v7595 = vpop.f32.mrf.mxu0
      %v7596 = vadd.f32 0.0, %v7595
      %7597 = vmatmul.f32.gmra.mxu0 %v7450
      %v7598 = vpop.f32.mrf.mxu0
      %v7599 = vadd.f32 0.0, %v7598
      %7600 = vmatmul.f32.gmra.mxu0 %v7453
      %v7601 = vpop.f32.mrf.mxu0
      %v7602 = vadd.f32 0.0, %v7601
      %7603 = vmatmul.f32.gmra.mxu0 %v7456
      %v7604 = vpop.f32.mrf.mxu0
      %v7605 = vadd.f32 0.0, %v7604
      %7606 = vmatmul.f32.gmra.mxu0 %v7459
      %v7607 = vpop.f32.mrf.mxu0
      %v7608 = vadd.f32 0.0, %v7607
      %7609 = vmatmul.f32.gmra.mxu0 %v7462
      %v7610 = vpop.f32.mrf.mxu0
      %v7611 = vadd.f32 0.0, %v7610
      %7612 = vmatmul.f32.gmra.mxu0 %v7465
      %v7613 = vpop.f32.mrf.mxu0
      %v7614 = vadd.f32 0.0, %v7613
      %7615 = vmatmul.f32.gmra.mxu0 %v7468
      %v7616 = vpop.f32.mrf.mxu0
      %v7617 = vadd.f32 0.0, %v7616
      %7618 = vmatmul.f32.gmra.mxu0 %v7471
      %v7619 = vpop.f32.mrf.mxu0
      %v7620 = vadd.f32 0.0, %v7619
      %7621 = vmatmul.f32.gmra.mxu0 %v7474
      %v7622 = vpop.f32.mrf.mxu0
      %v7623 = vadd.f32 0.0, %v7622
      %7624 = vmatmul.f32.gmra.mxu0 %v7477
      %v7625 = vpop.f32.mrf.mxu0
      %v7626 = vadd.f32 0.0, %v7625
      %7627 = vmatmul.f32.gmra.mxu0 %v7480
      %v7628 = vpop.f32.mrf.mxu0
      %v7629 = vadd.f32 0.0, %v7628
      %7630 = vmatmul.f32.gmra.mxu0 %v7483
      %v7631 = vpop.f32.mrf.mxu0
      %v7632 = vadd.f32 0.0, %v7631
      %7633 = vmatmul.f32.gmra.mxu0 %v7486
      %v7634 = vpop.f32.mrf.mxu0
      %v7635 = vadd.f32 0.0, %v7634
      %7636 = vmatmul.f32.gmra.mxu0 %v7489
      %v7637 = vpop.f32.mrf.mxu0
      %v7638 = vadd.f32 0.0, %v7637
      %7639 = vmatmul.f32.gmra.mxu0 %v7492
      %v7640 = vpop.f32.mrf.mxu0
      %v7641 = vadd.f32 0.0, %v7640
      %7642 = vmatmul.f32.gmra.mxu0 %v7495
      %v7643 = vpop.f32.mrf.mxu0
      %v7644 = vadd.f32 0.0, %v7643
      %7645 = vmatmul.f32.gmra.mxu0 %v7498
      %v7646 = vpop.f32.mrf.mxu0
      %v7647 = vadd.f32 0.0, %v7646
      %7648 = vmatmul.f32.gmra.mxu0 %v7501
      %v7649 = vpop.f32.mrf.mxu0
      %v7650 = vadd.f32 0.0, %v7649
      %7651 = vmatmul.f32.gmra.mxu0 %v7504
      %v7652 = vpop.f32.mrf.mxu0
      %v7653 = vadd.f32 0.0, %v7652
      %7654 = vmatmul.f32.gmra.mxu0 %v7507
      %v7655 = vpop.f32.mrf.mxu0
      %v7656 = vadd.f32 0.0, %v7655
      %7657 = vmatmul.f32.gmra.mxu0 %v7510
      %v7658 = vpop.f32.mrf.mxu0
      %v7659 = vadd.f32 0.0, %v7658
      %7660 = vmatmul.f32.gmra.mxu0 %v7513
      %v7661 = vpop.f32.mrf.mxu0
      %v7662 = vadd.f32 0.0, %v7661
      %7663 = vmatmul.f32.gmra.mxu0 %v7516
      %v7664 = vpop.f32.mrf.mxu0
      %v7665 = vadd.f32 0.0, %v7664
      %7666 = vmatmul.f32.gmra.mxu0 %v7519
      %v7667 = vpop.f32.mrf.mxu0
      %v7668 = vadd.f32 0.0, %v7667
      %7669 = vmatmul.f32.gmra.mxu0 %v7522
      %v7670 = vpop.f32.mrf.mxu0
      %v7671 = vadd.f32 0.0, %v7670
      %7672 = vdwg.mxu0
      %v7673 = vadd.f32 %v7296, %v7545
      %v7674 = vadd.f32 %v7297, %v7548
      %v7675 = vadd.f32 %v7298, %v7551
      %v7676 = vadd.f32 %v7299, %v7554
      %v7677 = vadd.f32 %v7300, %v7557
      %v7678 = vadd.f32 %v7301, %v7560
      %v7679 = vadd.f32 %v7302, %v7563
      %v7680 = vadd.f32 %v7303, %v7566
      %v7681 = vadd.f32 %v7304, %v7569
      %v7682 = vadd.f32 %v7305, %v7572
      %v7683 = vadd.f32 %v7306, %v7575
      %v7684 = vadd.f32 %v7307, %v7578
      %v7685 = vadd.f32 %v7308, %v7581
      %v7686 = vadd.f32 %v7309, %v7584
      %v7687 = vadd.f32 %v7310, %v7587
      %v7688 = vadd.f32 %v7311, %v7590
      %v7689 = vadd.f32 %v7312, %v7593
      %v7690 = vadd.f32 %v7313, %v7596
      %v7691 = vadd.f32 %v7314, %v7599
      %v7692 = vadd.f32 %v7315, %v7602
      %v7693 = vadd.f32 %v7316, %v7605
      %v7694 = vadd.f32 %v7317, %v7608
      %v7695 = vadd.f32 %v7318, %v7611
      %v7696 = vadd.f32 %v7319, %v7614
      %v7697 = vadd.f32 %v7320, %v7617
      %v7698 = vadd.f32 %v7321, %v7620
      %v7699 = vadd.f32 %v7322, %v7623
      %v7700 = vadd.f32 %v7323, %v7626
      %v7701 = vadd.f32 %v7324, %v7629
      %v7702 = vadd.f32 %v7325, %v7632
      %v7703 = vadd.f32 %v7326, %v7635
      %v7704 = vadd.f32 %v7327, %v7638
      %v7705 = vadd.f32 %v7328, %v7641
      %v7706 = vadd.f32 %v7329, %v7644
      %v7707 = vadd.f32 %v7330, %v7647
      %v7708 = vadd.f32 %v7331, %v7650
      %v7709 = vadd.f32 %v7332, %v7653
      %v7710 = vadd.f32 %v7333, %v7656
      %v7711 = vadd.f32 %v7334, %v7659
      %v7712 = vadd.f32 %v7335, %v7662
      %v7713 = vadd.f32 %v7336, %v7665
      %v7714 = vadd.f32 %v7337, %v7668
      %v7715 = vadd.f32 %v7338, %v7671
      %v7716 = vld [vmem:[%s165 + $0x64] sm:$0xff]
      %v7717 = vld [vmem:[%s165 + $0x6c] sm:$0xff]
      %v7718 = vld [vmem:[%s165 + $0x74] sm:$0xff]
      %v7719 = vld [vmem:[%s165 + $0x7c] sm:$0xff]
      %v7720 = vld [vmem:[%s165 + $0x84] sm:$0xff]
      %v7721 = vld [vmem:[%s165 + $0x8c] sm:$0xff]
      %v7722 = vld [vmem:[%s165 + $0x94] sm:$0xff]
      %v7723 = vld [vmem:[%s165 + $0x9c] sm:$0xff]
      %v7724 = vld [vmem:[%s165 + $0xa4] sm:$0xff]
      %v7725 = vld [vmem:[%s165 + $0xac] sm:$0xff]
      %v7726 = vld [vmem:[%s165 + $0xb4] sm:$0xff]
      %v7727 = vld [vmem:[%s165 + $0xbc] sm:$0xff]
      %v7728 = vld [vmem:[%s165 + $0xc4] sm:$0xff]
      %v7729 = vld [vmem:[%s165 + $0xcc] sm:$0xff]
      %v7730 = vld [vmem:[%s165 + $0xd4] sm:$0xff]
      %v7731 = vld [vmem:[%s165 + $0xdc] sm:$0xff]
      %v7732 = vld [vmem:[%s165 + $0xe4] sm:$0xff]
      %v7733 = vld [vmem:[%s165 + $0xec] sm:$0xff]
      %v7734 = vld [vmem:[%s165 + $0xf4] sm:$0xff]
      %v7735 = vld [vmem:[%s165 + $0xfc] sm:$0xff]
      %v7736 = vld [vmem:[%s165 + $0x104] sm:$0xff]
      %v7737 = vld [vmem:[%s165 + $0x10c] sm:$0xff]
      %v7738 = vld [vmem:[%s165 + $0x114] sm:$0xff]
      %v7739 = vld [vmem:[%s165 + $0x11c] sm:$0xff]
      %v7740 = vld [vmem:[%s165 + $0x124] sm:$0xff]
      %v7741 = vld [vmem:[%s165 + $0x12c] sm:$0xff]
      %v7742 = vld [vmem:[%s165 + $0x134] sm:$0xff]
      %v7743 = vld [vmem:[%s165 + $0x13c] sm:$0xff]
      %v7744 = vld [vmem:[%s165 + $0x144] sm:$0xff]
      %v7745 = vld [vmem:[%s165 + $0x14c] sm:$0xff]
      %v7746 = vld [vmem:[%s165 + $0x154] sm:$0xff]
      %v7747 = vld [vmem:[%s165 + $0x15c] sm:$0xff]
      %v7748 = vld [vmem:[%s165 + $0x164] sm:$0xff]
      %v7749 = vld [vmem:[%s165 + $0x16c] sm:$0xff]
      %v7750 = vld [vmem:[%s165 + $0x174] sm:$0xff]
      %v7751 = vld [vmem:[%s165 + $0x17c] sm:$0xff]
      %v7752 = vld [vmem:[%s165 + $0x184] sm:$0xff]
      %v7753 = vld [vmem:[%s165 + $0x18c] sm:$0xff]
      %v7754 = vld [vmem:[%s165 + $0x194] sm:$0xff]
      %v7755 = vld [vmem:[%s165 + $0x19c] sm:$0xff]
      %v7756 = vld [vmem:[%s165 + $0x1a4] sm:$0xff]
      %v7757 = vld [vmem:[%s165 + $0x1ac] sm:$0xff]
      %v7758 = vld [vmem:[%s165 + $0x1b4] sm:$0xff]
      %s7759 = scalar_lea.vmem %s1, 1920
      %v7760 = vld [vmem:[%s7759] sm:$0xff]
      %v7761 = vld [vmem:[%s7759 + $0x8] sm:$0xff]
      %v7762 = vld [vmem:[%s7759 + $0x10] sm:$0xff]
      %v7763 = vld [vmem:[%s7759 + $0x18] sm:$0xff]
      %v7764 = vld [vmem:[%s7759 + $0x20] sm:$0xff]
      %v7765 = vld [vmem:[%s7759 + $0x28] sm:$0xff]
      %v7766 = vld [vmem:[%s7759 + $0x30] sm:$0xff]
      %v7767 = vld [vmem:[%s7759 + $0x38] sm:$0xff]
      %v7768 = vld [vmem:[%s7759 + $0x40] sm:$0xff]
      %v7769 = vld [vmem:[%s7759 + $0x48] sm:$0xff]
      %v7770 = vld [vmem:[%s7759 + $0x50] sm:$0xff]
      %v7771 = vld [vmem:[%s7759 + $0x58] sm:$0x3]
      %v7773 = vsel %vm230, %v7716, 0
      %v7776 = vsel %vm230, %v7717, 0
      %v7779 = vsel %vm230, %v7718, 0
      %v7782 = vsel %vm230, %v7719, 0
      %v7785 = vsel %vm230, %v7720, 0
      %v7788 = vsel %vm230, %v7721, 0
      %v7791 = vsel %vm230, %v7722, 0
      %v7794 = vsel %vm230, %v7723, 0
      %v7797 = vsel %vm230, %v7724, 0
      %v7800 = vsel %vm230, %v7725, 0
      %v7803 = vsel %vm230, %v7726, 0
      %v7806 = vsel %vm230, %v7727, 0
      %v7809 = vsel %vm230, %v7728, 0
      %v7812 = vsel %vm230, %v7729, 0
      %v7815 = vsel %vm230, %v7730, 0
      %v7818 = vsel %vm230, %v7731, 0
      %v7821 = vsel %vm230, %v7732, 0
      %v7824 = vsel %vm230, %v7733, 0
      %v7827 = vsel %vm230, %v7734, 0
      %v7830 = vsel %vm230, %v7735, 0
      %v7833 = vsel %vm230, %v7736, 0
      %v7836 = vsel %vm230, %v7737, 0
      %v7839 = vsel %vm230, %v7738, 0
      %v7842 = vsel %vm230, %v7739, 0
      %v7845 = vsel %vm230, %v7740, 0
      %v7848 = vsel %vm230, %v7741, 0
      %v7851 = vsel %vm230, %v7742, 0
      %v7854 = vsel %vm230, %v7743, 0
      %v7857 = vsel %vm230, %v7744, 0
      %v7860 = vsel %vm230, %v7745, 0
      %v7863 = vsel %vm230, %v7746, 0
      %v7866 = vsel %vm230, %v7747, 0
      %v7869 = vsel %vm230, %v7748, 0
      %v7872 = vsel %vm230, %v7749, 0
      %v7875 = vsel %vm230, %v7750, 0
      %v7878 = vsel %vm230, %v7751, 0
      %v7881 = vsel %vm230, %v7752, 0
      %v7884 = vsel %vm230, %v7753, 0
      %v7887 = vsel %vm230, %v7754, 0
      %v7890 = vsel %vm230, %v7755, 0
      %v7893 = vsel %vm230, %v7756, 0
      %v7896 = vsel %vm230, %v7757, 0
      %v7899 = vsel %vm230, %v7758, 0
      %v7902 = vsel %vm360, %v7771, 0
      %7904 = vmatpush.msra.mxu0 0.0
      %7905 = vmatpush.msra.mxu0 0.0
      %7906 = vmatpush.msra.mxu0 0.0
      %7907 = vmatpush.msra.mxu0 0.0
      %7908 = vmatpush.msra.mxu0 %v7902
      %7909 = vmatpush.msra.mxu0 %v7770
      %7910 = vmatpush.msra.mxu0 %v7769
      %7911 = vmatpush.msra.mxu0 %v7768
      %7912 = vmatpush.msra.mxu0 %v7767
      %7913 = vmatpush.msra.mxu0 %v7766
      %7914 = vmatpush.msra.mxu0 %v7765
      %7915 = vmatpush.msra.mxu0 %v7764
      %7916 = vmatpush.msra.mxu0 %v7763
      %7917 = vmatpush.msra.mxu0 %v7762
      %7918 = vmatpush.msra.mxu0 %v7761
      %7919 = vmatpush.msra.mxu0 %v7760
      %7920 = vmatmul.f32.gmra.mxu0 %v7773
      %v7921 = vpop.f32.mrf.mxu0
      %v7922 = vadd.f32 0.0, %v7921
      %7923 = vmatmul.f32.gmra.mxu0 %v7776
      %v7924 = vpop.f32.mrf.mxu0
      %v7925 = vadd.f32 0.0, %v7924
      %7926 = vmatmul.f32.gmra.mxu0 %v7779
      %v7927 = vpop.f32.mrf.mxu0
      %v7928 = vadd.f32 0.0, %v7927
      %7929 = vmatmul.f32.gmra.mxu0 %v7782
      %v7930 = vpop.f32.mrf.mxu0
      %v7931 = vadd.f32 0.0, %v7930
      %7932 = vmatmul.f32.gmra.mxu0 %v7785
      %v7933 = vpop.f32.mrf.mxu0
      %v7934 = vadd.f32 0.0, %v7933
      %7935 = vmatmul.f32.gmra.mxu0 %v7788
      %v7936 = vpop.f32.mrf.mxu0
      %v7937 = vadd.f32 0.0, %v7936
      %7938 = vmatmul.f32.gmra.mxu0 %v7791
      %v7939 = vpop.f32.mrf.mxu0
      %v7940 = vadd.f32 0.0, %v7939
      %7941 = vmatmul.f32.gmra.mxu0 %v7794
      %v7942 = vpop.f32.mrf.mxu0
      %v7943 = vadd.f32 0.0, %v7942
      %7944 = vmatmul.f32.gmra.mxu0 %v7797
      %v7945 = vpop.f32.mrf.mxu0
      %v7946 = vadd.f32 0.0, %v7945
      %7947 = vmatmul.f32.gmra.mxu0 %v7800
      %v7948 = vpop.f32.mrf.mxu0
      %v7949 = vadd.f32 0.0, %v7948
      %7950 = vmatmul.f32.gmra.mxu0 %v7803
      %v7951 = vpop.f32.mrf.mxu0
      %v7952 = vadd.f32 0.0, %v7951
      %7953 = vmatmul.f32.gmra.mxu0 %v7806
      %v7954 = vpop.f32.mrf.mxu0
      %v7955 = vadd.f32 0.0, %v7954
      %7956 = vmatmul.f32.gmra.mxu0 %v7809
      %v7957 = vpop.f32.mrf.mxu0
      %v7958 = vadd.f32 0.0, %v7957
      %7959 = vmatmul.f32.gmra.mxu0 %v7812
      %v7960 = vpop.f32.mrf.mxu0
      %v7961 = vadd.f32 0.0, %v7960
      %7962 = vmatmul.f32.gmra.mxu0 %v7815
      %v7963 = vpop.f32.mrf.mxu0
      %v7964 = vadd.f32 0.0, %v7963
      %7965 = vmatmul.f32.gmra.mxu0 %v7818
      %v7966 = vpop.f32.mrf.mxu0
      %v7967 = vadd.f32 0.0, %v7966
      %7968 = vmatmul.f32.gmra.mxu0 %v7821
      %v7969 = vpop.f32.mrf.mxu0
      %v7970 = vadd.f32 0.0, %v7969
      %7971 = vmatmul.f32.gmra.mxu0 %v7824
      %v7972 = vpop.f32.mrf.mxu0
      %v7973 = vadd.f32 0.0, %v7972
      %7974 = vmatmul.f32.gmra.mxu0 %v7827
      %v7975 = vpop.f32.mrf.mxu0
      %v7976 = vadd.f32 0.0, %v7975
      %7977 = vmatmul.f32.gmra.mxu0 %v7830
      %v7978 = vpop.f32.mrf.mxu0
      %v7979 = vadd.f32 0.0, %v7978
      %7980 = vmatmul.f32.gmra.mxu0 %v7833
      %v7981 = vpop.f32.mrf.mxu0
      %v7982 = vadd.f32 0.0, %v7981
      %7983 = vmatmul.f32.gmra.mxu0 %v7836
      %v7984 = vpop.f32.mrf.mxu0
      %v7985 = vadd.f32 0.0, %v7984
      %7986 = vmatmul.f32.gmra.mxu0 %v7839
      %v7987 = vpop.f32.mrf.mxu0
      %v7988 = vadd.f32 0.0, %v7987
      %7989 = vmatmul.f32.gmra.mxu0 %v7842
      %v7990 = vpop.f32.mrf.mxu0
      %v7991 = vadd.f32 0.0, %v7990
      %7992 = vmatmul.f32.gmra.mxu0 %v7845
      %v7993 = vpop.f32.mrf.mxu0
      %v7994 = vadd.f32 0.0, %v7993
      %7995 = vmatmul.f32.gmra.mxu0 %v7848
      %v7996 = vpop.f32.mrf.mxu0
      %v7997 = vadd.f32 0.0, %v7996
      %7998 = vmatmul.f32.gmra.mxu0 %v7851
      %v7999 = vpop.f32.mrf.mxu0
      %v8000 = vadd.f32 0.0, %v7999
      %8001 = vmatmul.f32.gmra.mxu0 %v7854
      %v8002 = vpop.f32.mrf.mxu0
      %v8003 = vadd.f32 0.0, %v8002
      %8004 = vmatmul.f32.gmra.mxu0 %v7857
      %v8005 = vpop.f32.mrf.mxu0
      %v8006 = vadd.f32 0.0, %v8005
      %8007 = vmatmul.f32.gmra.mxu0 %v7860
      %v8008 = vpop.f32.mrf.mxu0
      %v8009 = vadd.f32 0.0, %v8008
      %8010 = vmatmul.f32.gmra.mxu0 %v7863
      %v8011 = vpop.f32.mrf.mxu0
      %v8012 = vadd.f32 0.0, %v8011
      %8013 = vmatmul.f32.gmra.mxu0 %v7866
      %v8014 = vpop.f32.mrf.mxu0
      %v8015 = vadd.f32 0.0, %v8014
      %8016 = vmatmul.f32.gmra.mxu0 %v7869
      %v8017 = vpop.f32.mrf.mxu0
      %v8018 = vadd.f32 0.0, %v8017
      %8019 = vmatmul.f32.gmra.mxu0 %v7872
      %v8020 = vpop.f32.mrf.mxu0
      %v8021 = vadd.f32 0.0, %v8020
      %8022 = vmatmul.f32.gmra.mxu0 %v7875
      %v8023 = vpop.f32.mrf.mxu0
      %v8024 = vadd.f32 0.0, %v8023
      %8025 = vmatmul.f32.gmra.mxu0 %v7878
      %v8026 = vpop.f32.mrf.mxu0
      %v8027 = vadd.f32 0.0, %v8026
      %8028 = vmatmul.f32.gmra.mxu0 %v7881
      %v8029 = vpop.f32.mrf.mxu0
      %v8030 = vadd.f32 0.0, %v8029
      %8031 = vmatmul.f32.gmra.mxu0 %v7884
      %v8032 = vpop.f32.mrf.mxu0
      %v8033 = vadd.f32 0.0, %v8032
      %8034 = vmatmul.f32.gmra.mxu0 %v7887
      %v8035 = vpop.f32.mrf.mxu0
      %v8036 = vadd.f32 0.0, %v8035
      %8037 = vmatmul.f32.gmra.mxu0 %v7890
      %v8038 = vpop.f32.mrf.mxu0
      %v8039 = vadd.f32 0.0, %v8038
      %8040 = vmatmul.f32.gmra.mxu0 %v7893
      %v8041 = vpop.f32.mrf.mxu0
      %v8042 = vadd.f32 0.0, %v8041
      %8043 = vmatmul.f32.gmra.mxu0 %v7896
      %v8044 = vpop.f32.mrf.mxu0
      %v8045 = vadd.f32 0.0, %v8044
      %8046 = vmatmul.f32.gmra.mxu0 %v7899
      %v8047 = vpop.f32.mrf.mxu0
      %v8048 = vadd.f32 0.0, %v8047
      %8049 = vdwg.mxu0
      %v8050 = vadd.f32 %v7673, %v7922
      %v8051 = vadd.f32 %v7674, %v7925
      %v8052 = vadd.f32 %v7675, %v7928
      %v8053 = vadd.f32 %v7676, %v7931
      %v8054 = vadd.f32 %v7677, %v7934
      %v8055 = vadd.f32 %v7678, %v7937
      %v8056 = vadd.f32 %v7679, %v7940
      %v8057 = vadd.f32 %v7680, %v7943
      %v8058 = vadd.f32 %v7681, %v7946
      %v8059 = vadd.f32 %v7682, %v7949
      %v8060 = vadd.f32 %v7683, %v7952
      %v8061 = vadd.f32 %v7684, %v7955
      %v8062 = vadd.f32 %v7685, %v7958
      %v8063 = vadd.f32 %v7686, %v7961
      %v8064 = vadd.f32 %v7687, %v7964
      %v8065 = vadd.f32 %v7688, %v7967
      %v8066 = vadd.f32 %v7689, %v7970
      %v8067 = vadd.f32 %v7690, %v7973
      %v8068 = vadd.f32 %v7691, %v7976
      %v8069 = vadd.f32 %v7692, %v7979
      %v8070 = vadd.f32 %v7693, %v7982
      %v8071 = vadd.f32 %v7694, %v7985
      %v8072 = vadd.f32 %v7695, %v7988
      %v8073 = vadd.f32 %v7696, %v7991
      %v8074 = vadd.f32 %v7697, %v7994
      %v8075 = vadd.f32 %v7698, %v7997
      %v8076 = vadd.f32 %v7699, %v8000
      %v8077 = vadd.f32 %v7700, %v8003
      %v8078 = vadd.f32 %v7701, %v8006
      %v8079 = vadd.f32 %v7702, %v8009
      %v8080 = vadd.f32 %v7703, %v8012
      %v8081 = vadd.f32 %v7704, %v8015
      %v8082 = vadd.f32 %v7705, %v8018
      %v8083 = vadd.f32 %v7706, %v8021
      %v8084 = vadd.f32 %v7707, %v8024
      %v8085 = vadd.f32 %v7708, %v8027
      %v8086 = vadd.f32 %v7709, %v8030
      %v8087 = vadd.f32 %v7710, %v8033
      %v8088 = vadd.f32 %v7711, %v8036
      %v8089 = vadd.f32 %v7712, %v8039
      %v8090 = vadd.f32 %v7713, %v8042
      %v8091 = vadd.f32 %v7714, %v8045
      %v8092 = vadd.f32 %v7715, %v8048
      %v8093 = vld [vmem:[%s165 + $0x69] sm:$0xff]
      %v8094 = vld [vmem:[%s165 + $0x71] sm:$0xff]
      %v8095 = vld [vmem:[%s165 + $0x79] sm:$0xff]
      %v8096 = vld [vmem:[%s165 + $0x81] sm:$0xff]
      %v8097 = vld [vmem:[%s165 + $0x89] sm:$0xff]
      %v8098 = vld [vmem:[%s165 + $0x91] sm:$0xff]
      %v8099 = vld [vmem:[%s165 + $0x99] sm:$0xff]
      %v8100 = vld [vmem:[%s165 + $0xa1] sm:$0xff]
      %v8101 = vld [vmem:[%s165 + $0xa9] sm:$0xff]
      %v8102 = vld [vmem:[%s165 + $0xb1] sm:$0xff]
      %v8103 = vld [vmem:[%s165 + $0xb9] sm:$0xff]
      %v8104 = vld [vmem:[%s165 + $0xc1] sm:$0xff]
      %v8105 = vld [vmem:[%s165 + $0xc9] sm:$0xff]
      %v8106 = vld [vmem:[%s165 + $0xd1] sm:$0xff]
      %v8107 = vld [vmem:[%s165 + $0xd9] sm:$0xff]
      %v8108 = vld [vmem:[%s165 + $0xe1] sm:$0xff]
      %v8109 = vld [vmem:[%s165 + $0xe9] sm:$0xff]
      %v8110 = vld [vmem:[%s165 + $0xf1] sm:$0xff]
      %v8111 = vld [vmem:[%s165 + $0xf9] sm:$0xff]
      %v8112 = vld [vmem:[%s165 + $0x101] sm:$0xff]
      %v8113 = vld [vmem:[%s165 + $0x109] sm:$0xff]
      %v8114 = vld [vmem:[%s165 + $0x111] sm:$0xff]
      %v8115 = vld [vmem:[%s165 + $0x119] sm:$0xff]
      %v8116 = vld [vmem:[%s165 + $0x121] sm:$0xff]
      %v8117 = vld [vmem:[%s165 + $0x129] sm:$0xff]
      %v8118 = vld [vmem:[%s165 + $0x131] sm:$0xff]
      %v8119 = vld [vmem:[%s165 + $0x139] sm:$0xff]
      %v8120 = vld [vmem:[%s165 + $0x141] sm:$0xff]
      %v8121 = vld [vmem:[%s165 + $0x149] sm:$0xff]
      %v8122 = vld [vmem:[%s165 + $0x151] sm:$0xff]
      %v8123 = vld [vmem:[%s165 + $0x159] sm:$0xff]
      %v8124 = vld [vmem:[%s165 + $0x161] sm:$0xff]
      %v8125 = vld [vmem:[%s165 + $0x169] sm:$0xff]
      %v8126 = vld [vmem:[%s165 + $0x171] sm:$0xff]
      %v8127 = vld [vmem:[%s165 + $0x179] sm:$0xff]
      %v8128 = vld [vmem:[%s165 + $0x181] sm:$0xff]
      %v8129 = vld [vmem:[%s165 + $0x189] sm:$0xff]
      %v8130 = vld [vmem:[%s165 + $0x191] sm:$0xff]
      %v8131 = vld [vmem:[%s165 + $0x199] sm:$0xff]
      %v8132 = vld [vmem:[%s165 + $0x1a1] sm:$0xff]
      %v8133 = vld [vmem:[%s165 + $0x1a9] sm:$0xff]
      %v8134 = vld [vmem:[%s165 + $0x1b1] sm:$0xff]
      %v8135 = vld [vmem:[%s165 + $0x1b9] sm:$0xff]
      %s8136 = scalar_lea.vmem %s1, 2016
      %v8137 = vld [vmem:[%s8136] sm:$0xff]
      %v8138 = vld [vmem:[%s8136 + $0x8] sm:$0xff]
      %v8139 = vld [vmem:[%s8136 + $0x10] sm:$0xff]
      %v8140 = vld [vmem:[%s8136 + $0x18] sm:$0xff]
      %v8141 = vld [vmem:[%s8136 + $0x20] sm:$0xff]
      %v8142 = vld [vmem:[%s8136 + $0x28] sm:$0xff]
      %v8143 = vld [vmem:[%s8136 + $0x30] sm:$0xff]
      %v8144 = vld [vmem:[%s8136 + $0x38] sm:$0xff]
      %v8145 = vld [vmem:[%s8136 + $0x40] sm:$0xff]
      %v8146 = vld [vmem:[%s8136 + $0x48] sm:$0xff]
      %v8147 = vld [vmem:[%s8136 + $0x50] sm:$0xff]
      %v8148 = vld [vmem:[%s8136 + $0x58] sm:$0x3]
      %v8150 = vsel %vm230, %v8093, 0
      %v8153 = vsel %vm230, %v8094, 0
      %v8156 = vsel %vm230, %v8095, 0
      %v8159 = vsel %vm230, %v8096, 0
      %v8162 = vsel %vm230, %v8097, 0
      %v8165 = vsel %vm230, %v8098, 0
      %v8168 = vsel %vm230, %v8099, 0
      %v8171 = vsel %vm230, %v8100, 0
      %v8174 = vsel %vm230, %v8101, 0
      %v8177 = vsel %vm230, %v8102, 0
      %v8180 = vsel %vm230, %v8103, 0
      %v8183 = vsel %vm230, %v8104, 0
      %v8186 = vsel %vm230, %v8105, 0
      %v8189 = vsel %vm230, %v8106, 0
      %v8192 = vsel %vm230, %v8107, 0
      %v8195 = vsel %vm230, %v8108, 0
      %v8198 = vsel %vm230, %v8109, 0
      %v8201 = vsel %vm230, %v8110, 0
      %v8204 = vsel %vm230, %v8111, 0
      %v8207 = vsel %vm230, %v8112, 0
      %v8210 = vsel %vm230, %v8113, 0
      %v8213 = vsel %vm230, %v8114, 0
      %v8216 = vsel %vm230, %v8115, 0
      %v8219 = vsel %vm230, %v8116, 0
      %v8222 = vsel %vm230, %v8117, 0
      %v8225 = vsel %vm230, %v8118, 0
      %v8228 = vsel %vm230, %v8119, 0
      %v8231 = vsel %vm230, %v8120, 0
      %v8234 = vsel %vm230, %v8121, 0
      %v8237 = vsel %vm230, %v8122, 0
      %v8240 = vsel %vm230, %v8123, 0
      %v8243 = vsel %vm230, %v8124, 0
      %v8246 = vsel %vm230, %v8125, 0
      %v8249 = vsel %vm230, %v8126, 0
      %v8252 = vsel %vm230, %v8127, 0
      %v8255 = vsel %vm230, %v8128, 0
      %v8258 = vsel %vm230, %v8129, 0
      %v8261 = vsel %vm230, %v8130, 0
      %v8264 = vsel %vm230, %v8131, 0
      %v8267 = vsel %vm230, %v8132, 0
      %v8270 = vsel %vm230, %v8133, 0
      %v8273 = vsel %vm230, %v8134, 0
      %v8276 = vsel %vm230, %v8135, 0
      %v8279 = vsel %vm360, %v8148, 0
      %8281 = vmatpush.msra.mxu0 0.0
      %8282 = vmatpush.msra.mxu0 0.0
      %8283 = vmatpush.msra.mxu0 0.0
      %8284 = vmatpush.msra.mxu0 0.0
      %8285 = vmatpush.msra.mxu0 %v8279
      %8286 = vmatpush.msra.mxu0 %v8147
      %8287 = vmatpush.msra.mxu0 %v8146
      %8288 = vmatpush.msra.mxu0 %v8145
      %8289 = vmatpush.msra.mxu0 %v8144
      %8290 = vmatpush.msra.mxu0 %v8143
      %8291 = vmatpush.msra.mxu0 %v8142
      %8292 = vmatpush.msra.mxu0 %v8141
      %8293 = vmatpush.msra.mxu0 %v8140
      %8294 = vmatpush.msra.mxu0 %v8139
      %8295 = vmatpush.msra.mxu0 %v8138
      %8296 = vmatpush.msra.mxu0 %v8137
      %8297 = vmatmul.f32.gmra.mxu0 %v8150
      %v8298 = vpop.f32.mrf.mxu0
      %v8299 = vadd.f32 0.0, %v8298
      %8300 = vmatmul.f32.gmra.mxu0 %v8153
      %v8301 = vpop.f32.mrf.mxu0
      %v8302 = vadd.f32 0.0, %v8301
      %8303 = vmatmul.f32.gmra.mxu0 %v8156
      %v8304 = vpop.f32.mrf.mxu0
      %v8305 = vadd.f32 0.0, %v8304
      %8306 = vmatmul.f32.gmra.mxu0 %v8159
      %v8307 = vpop.f32.mrf.mxu0
      %v8308 = vadd.f32 0.0, %v8307
      %8309 = vmatmul.f32.gmra.mxu0 %v8162
      %v8310 = vpop.f32.mrf.mxu0
      %v8311 = vadd.f32 0.0, %v8310
      %8312 = vmatmul.f32.gmra.mxu0 %v8165
      %v8313 = vpop.f32.mrf.mxu0
      %v8314 = vadd.f32 0.0, %v8313
      %8315 = vmatmul.f32.gmra.mxu0 %v8168
      %v8316 = vpop.f32.mrf.mxu0
      %v8317 = vadd.f32 0.0, %v8316
      %8318 = vmatmul.f32.gmra.mxu0 %v8171
      %v8319 = vpop.f32.mrf.mxu0
      %v8320 = vadd.f32 0.0, %v8319
      %8321 = vmatmul.f32.gmra.mxu0 %v8174
      %v8322 = vpop.f32.mrf.mxu0
      %v8323 = vadd.f32 0.0, %v8322
      %8324 = vmatmul.f32.gmra.mxu0 %v8177
      %v8325 = vpop.f32.mrf.mxu0
      %v8326 = vadd.f32 0.0, %v8325
      %8327 = vmatmul.f32.gmra.mxu0 %v8180
      %v8328 = vpop.f32.mrf.mxu0
      %v8329 = vadd.f32 0.0, %v8328
      %8330 = vmatmul.f32.gmra.mxu0 %v8183
      %v8331 = vpop.f32.mrf.mxu0
      %v8332 = vadd.f32 0.0, %v8331
      %8333 = vmatmul.f32.gmra.mxu0 %v8186
      %v8334 = vpop.f32.mrf.mxu0
      %v8335 = vadd.f32 0.0, %v8334
      %8336 = vmatmul.f32.gmra.mxu0 %v8189
      %v8337 = vpop.f32.mrf.mxu0
      %v8338 = vadd.f32 0.0, %v8337
      %8339 = vmatmul.f32.gmra.mxu0 %v8192
      %v8340 = vpop.f32.mrf.mxu0
      %v8341 = vadd.f32 0.0, %v8340
      %8342 = vmatmul.f32.gmra.mxu0 %v8195
      %v8343 = vpop.f32.mrf.mxu0
      %v8344 = vadd.f32 0.0, %v8343
      %8345 = vmatmul.f32.gmra.mxu0 %v8198
      %v8346 = vpop.f32.mrf.mxu0
      %v8347 = vadd.f32 0.0, %v8346
      %8348 = vmatmul.f32.gmra.mxu0 %v8201
      %v8349 = vpop.f32.mrf.mxu0
      %v8350 = vadd.f32 0.0, %v8349
      %8351 = vmatmul.f32.gmra.mxu0 %v8204
      %v8352 = vpop.f32.mrf.mxu0
      %v8353 = vadd.f32 0.0, %v8352
      %8354 = vmatmul.f32.gmra.mxu0 %v8207
      %v8355 = vpop.f32.mrf.mxu0
      %v8356 = vadd.f32 0.0, %v8355
      %8357 = vmatmul.f32.gmra.mxu0 %v8210
      %v8358 = vpop.f32.mrf.mxu0
      %v8359 = vadd.f32 0.0, %v8358
      %8360 = vmatmul.f32.gmra.mxu0 %v8213
      %v8361 = vpop.f32.mrf.mxu0
      %v8362 = vadd.f32 0.0, %v8361
      %8363 = vmatmul.f32.gmra.mxu0 %v8216
      %v8364 = vpop.f32.mrf.mxu0
      %v8365 = vadd.f32 0.0, %v8364
      %8366 = vmatmul.f32.gmra.mxu0 %v8219
      %v8367 = vpop.f32.mrf.mxu0
      %v8368 = vadd.f32 0.0, %v8367
      %8369 = vmatmul.f32.gmra.mxu0 %v8222
      %v8370 = vpop.f32.mrf.mxu0
      %v8371 = vadd.f32 0.0, %v8370
      %8372 = vmatmul.f32.gmra.mxu0 %v8225
      %v8373 = vpop.f32.mrf.mxu0
      %v8374 = vadd.f32 0.0, %v8373
      %8375 = vmatmul.f32.gmra.mxu0 %v8228
      %v8376 = vpop.f32.mrf.mxu0
      %v8377 = vadd.f32 0.0, %v8376
      %8378 = vmatmul.f32.gmra.mxu0 %v8231
      %v8379 = vpop.f32.mrf.mxu0
      %v8380 = vadd.f32 0.0, %v8379
      %8381 = vmatmul.f32.gmra.mxu0 %v8234
      %v8382 = vpop.f32.mrf.mxu0
      %v8383 = vadd.f32 0.0, %v8382
      %8384 = vmatmul.f32.gmra.mxu0 %v8237
      %v8385 = vpop.f32.mrf.mxu0
      %v8386 = vadd.f32 0.0, %v8385
      %8387 = vmatmul.f32.gmra.mxu0 %v8240
      %v8388 = vpop.f32.mrf.mxu0
      %v8389 = vadd.f32 0.0, %v8388
      %8390 = vmatmul.f32.gmra.mxu0 %v8243
      %v8391 = vpop.f32.mrf.mxu0
      %v8392 = vadd.f32 0.0, %v8391
      %8393 = vmatmul.f32.gmra.mxu0 %v8246
      %v8394 = vpop.f32.mrf.mxu0
      %v8395 = vadd.f32 0.0, %v8394
      %8396 = vmatmul.f32.gmra.mxu0 %v8249
      %v8397 = vpop.f32.mrf.mxu0
      %v8398 = vadd.f32 0.0, %v8397
      %8399 = vmatmul.f32.gmra.mxu0 %v8252
      %v8400 = vpop.f32.mrf.mxu0
      %v8401 = vadd.f32 0.0, %v8400
      %8402 = vmatmul.f32.gmra.mxu0 %v8255
      %v8403 = vpop.f32.mrf.mxu0
      %v8404 = vadd.f32 0.0, %v8403
      %8405 = vmatmul.f32.gmra.mxu0 %v8258
      %v8406 = vpop.f32.mrf.mxu0
      %v8407 = vadd.f32 0.0, %v8406
      %8408 = vmatmul.f32.gmra.mxu0 %v8261
      %v8409 = vpop.f32.mrf.mxu0
      %v8410 = vadd.f32 0.0, %v8409
      %8411 = vmatmul.f32.gmra.mxu0 %v8264
      %v8412 = vpop.f32.mrf.mxu0
      %v8413 = vadd.f32 0.0, %v8412
      %8414 = vmatmul.f32.gmra.mxu0 %v8267
      %v8415 = vpop.f32.mrf.mxu0
      %v8416 = vadd.f32 0.0, %v8415
      %8417 = vmatmul.f32.gmra.mxu0 %v8270
      %v8418 = vpop.f32.mrf.mxu0
      %v8419 = vadd.f32 0.0, %v8418
      %8420 = vmatmul.f32.gmra.mxu0 %v8273
      %v8421 = vpop.f32.mrf.mxu0
      %v8422 = vadd.f32 0.0, %v8421
      %8423 = vmatmul.f32.gmra.mxu0 %v8276
      %v8424 = vpop.f32.mrf.mxu0
      %v8425 = vadd.f32 0.0, %v8424
      %8426 = vdwg.mxu0
      %v8427 = vadd.f32 %v8050, %v8299
      %v8428 = vadd.f32 %v8051, %v8302
      %v8429 = vadd.f32 %v8052, %v8305
      %v8430 = vadd.f32 %v8053, %v8308
      %v8431 = vadd.f32 %v8054, %v8311
      %v8432 = vadd.f32 %v8055, %v8314
      %v8433 = vadd.f32 %v8056, %v8317
      %v8434 = vadd.f32 %v8057, %v8320
      %v8435 = vadd.f32 %v8058, %v8323
      %v8436 = vadd.f32 %v8059, %v8326
      %v8437 = vadd.f32 %v8060, %v8329
      %v8438 = vadd.f32 %v8061, %v8332
      %v8439 = vadd.f32 %v8062, %v8335
      %v8440 = vadd.f32 %v8063, %v8338
      %v8441 = vadd.f32 %v8064, %v8341
      %v8442 = vadd.f32 %v8065, %v8344
      %v8443 = vadd.f32 %v8066, %v8347
      %v8444 = vadd.f32 %v8067, %v8350
      %v8445 = vadd.f32 %v8068, %v8353
      %v8446 = vadd.f32 %v8069, %v8356
      %v8447 = vadd.f32 %v8070, %v8359
      %v8448 = vadd.f32 %v8071, %v8362
      %v8449 = vadd.f32 %v8072, %v8365
      %v8450 = vadd.f32 %v8073, %v8368
      %v8451 = vadd.f32 %v8074, %v8371
      %v8452 = vadd.f32 %v8075, %v8374
      %v8453 = vadd.f32 %v8076, %v8377
      %v8454 = vadd.f32 %v8077, %v8380
      %v8455 = vadd.f32 %v8078, %v8383
      %v8456 = vadd.f32 %v8079, %v8386
      %v8457 = vadd.f32 %v8080, %v8389
      %v8458 = vadd.f32 %v8081, %v8392
      %v8459 = vadd.f32 %v8082, %v8395
      %v8460 = vadd.f32 %v8083, %v8398
      %v8461 = vadd.f32 %v8084, %v8401
      %v8462 = vadd.f32 %v8085, %v8404
      %v8463 = vadd.f32 %v8086, %v8407
      %v8464 = vadd.f32 %v8087, %v8410
      %v8465 = vadd.f32 %v8088, %v8413
      %v8466 = vadd.f32 %v8089, %v8416
      %v8467 = vadd.f32 %v8090, %v8419
      %v8468 = vadd.f32 %v8091, %v8422
      %v8469 = vadd.f32 %v8092, %v8425
      %v8470 = vld [vmem:[%s165 + $0x6a] sm:$0xff]
      %v8471 = vld [vmem:[%s165 + $0x72] sm:$0xff]
      %v8472 = vld [vmem:[%s165 + $0x7a] sm:$0xff]
      %v8473 = vld [vmem:[%s165 + $0x82] sm:$0xff]
      %v8474 = vld [vmem:[%s165 + $0x8a] sm:$0xff]
      %v8475 = vld [vmem:[%s165 + $0x92] sm:$0xff]
      %v8476 = vld [vmem:[%s165 + $0x9a] sm:$0xff]
      %v8477 = vld [vmem:[%s165 + $0xa2] sm:$0xff]
      %v8478 = vld [vmem:[%s165 + $0xaa] sm:$0xff]
      %v8479 = vld [vmem:[%s165 + $0xb2] sm:$0xff]
      %v8480 = vld [vmem:[%s165 + $0xba] sm:$0xff]
      %v8481 = vld [vmem:[%s165 + $0xc2] sm:$0xff]
      %v8482 = vld [vmem:[%s165 + $0xca] sm:$0xff]
      %v8483 = vld [vmem:[%s165 + $0xd2] sm:$0xff]
      %v8484 = vld [vmem:[%s165 + $0xda] sm:$0xff]
      %v8485 = vld [vmem:[%s165 + $0xe2] sm:$0xff]
      %v8486 = vld [vmem:[%s165 + $0xea] sm:$0xff]
      %v8487 = vld [vmem:[%s165 + $0xf2] sm:$0xff]
      %v8488 = vld [vmem:[%s165 + $0xfa] sm:$0xff]
      %v8489 = vld [vmem:[%s165 + $0x102] sm:$0xff]
      %v8490 = vld [vmem:[%s165 + $0x10a] sm:$0xff]
      %v8491 = vld [vmem:[%s165 + $0x112] sm:$0xff]
      %v8492 = vld [vmem:[%s165 + $0x11a] sm:$0xff]
      %v8493 = vld [vmem:[%s165 + $0x122] sm:$0xff]
      %v8494 = vld [vmem:[%s165 + $0x12a] sm:$0xff]
      %v8495 = vld [vmem:[%s165 + $0x132] sm:$0xff]
      %v8496 = vld [vmem:[%s165 + $0x13a] sm:$0xff]
      %v8497 = vld [vmem:[%s165 + $0x142] sm:$0xff]
      %v8498 = vld [vmem:[%s165 + $0x14a] sm:$0xff]
      %v8499 = vld [vmem:[%s165 + $0x152] sm:$0xff]
      %v8500 = vld [vmem:[%s165 + $0x15a] sm:$0xff]
      %v8501 = vld [vmem:[%s165 + $0x162] sm:$0xff]
      %v8502 = vld [vmem:[%s165 + $0x16a] sm:$0xff]
      %v8503 = vld [vmem:[%s165 + $0x172] sm:$0xff]
      %v8504 = vld [vmem:[%s165 + $0x17a] sm:$0xff]
      %v8505 = vld [vmem:[%s165 + $0x182] sm:$0xff]
      %v8506 = vld [vmem:[%s165 + $0x18a] sm:$0xff]
      %v8507 = vld [vmem:[%s165 + $0x192] sm:$0xff]
      %v8508 = vld [vmem:[%s165 + $0x19a] sm:$0xff]
      %v8509 = vld [vmem:[%s165 + $0x1a2] sm:$0xff]
      %v8510 = vld [vmem:[%s165 + $0x1aa] sm:$0xff]
      %v8511 = vld [vmem:[%s165 + $0x1b2] sm:$0xff]
      %v8512 = vld [vmem:[%s165 + $0x1ba] sm:$0xff]
      %s8513 = scalar_lea.vmem %s1, 2112
      %v8514 = vld [vmem:[%s8513] sm:$0xff]
      %v8515 = vld [vmem:[%s8513 + $0x8] sm:$0xff]
      %v8516 = vld [vmem:[%s8513 + $0x10] sm:$0xff]
      %v8517 = vld [vmem:[%s8513 + $0x18] sm:$0xff]
      %v8518 = vld [vmem:[%s8513 + $0x20] sm:$0xff]
      %v8519 = vld [vmem:[%s8513 + $0x28] sm:$0xff]
      %v8520 = vld [vmem:[%s8513 + $0x30] sm:$0xff]
      %v8521 = vld [vmem:[%s8513 + $0x38] sm:$0xff]
      %v8522 = vld [vmem:[%s8513 + $0x40] sm:$0xff]
      %v8523 = vld [vmem:[%s8513 + $0x48] sm:$0xff]
      %v8524 = vld [vmem:[%s8513 + $0x50] sm:$0xff]
      %v8525 = vld [vmem:[%s8513 + $0x58] sm:$0x3]
      %v8527 = vsel %vm230, %v8470, 0
      %v8530 = vsel %vm230, %v8471, 0
      %v8533 = vsel %vm230, %v8472, 0
      %v8536 = vsel %vm230, %v8473, 0
      %v8539 = vsel %vm230, %v8474, 0
      %v8542 = vsel %vm230, %v8475, 0
      %v8545 = vsel %vm230, %v8476, 0
      %v8548 = vsel %vm230, %v8477, 0
      %v8551 = vsel %vm230, %v8478, 0
      %v8554 = vsel %vm230, %v8479, 0
      %v8557 = vsel %vm230, %v8480, 0
      %v8560 = vsel %vm230, %v8481, 0
      %v8563 = vsel %vm230, %v8482, 0
      %v8566 = vsel %vm230, %v8483, 0
      %v8569 = vsel %vm230, %v8484, 0
      %v8572 = vsel %vm230, %v8485, 0
      %v8575 = vsel %vm230, %v8486, 0
      %v8578 = vsel %vm230, %v8487, 0
      %v8581 = vsel %vm230, %v8488, 0
      %v8584 = vsel %vm230, %v8489, 0
      %v8587 = vsel %vm230, %v8490, 0
      %v8590 = vsel %vm230, %v8491, 0
      %v8593 = vsel %vm230, %v8492, 0
      %v8596 = vsel %vm230, %v8493, 0
      %v8599 = vsel %vm230, %v8494, 0
      %v8602 = vsel %vm230, %v8495, 0
      %v8605 = vsel %vm230, %v8496, 0
      %v8608 = vsel %vm230, %v8497, 0
      %v8611 = vsel %vm230, %v8498, 0
      %v8614 = vsel %vm230, %v8499, 0
      %v8617 = vsel %vm230, %v8500, 0
      %v8620 = vsel %vm230, %v8501, 0
      %v8623 = vsel %vm230, %v8502, 0
      %v8626 = vsel %vm230, %v8503, 0
      %v8629 = vsel %vm230, %v8504, 0
      %v8632 = vsel %vm230, %v8505, 0
      %v8635 = vsel %vm230, %v8506, 0
      %v8638 = vsel %vm230, %v8507, 0
      %v8641 = vsel %vm230, %v8508, 0
      %v8644 = vsel %vm230, %v8509, 0
      %v8647 = vsel %vm230, %v8510, 0
      %v8650 = vsel %vm230, %v8511, 0
      %v8653 = vsel %vm230, %v8512, 0
      %v8656 = vsel %vm360, %v8525, 0
      %8658 = vmatpush.msra.mxu0 0.0
      %8659 = vmatpush.msra.mxu0 0.0
      %8660 = vmatpush.msra.mxu0 0.0
      %8661 = vmatpush.msra.mxu0 0.0
      %8662 = vmatpush.msra.mxu0 %v8656
      %8663 = vmatpush.msra.mxu0 %v8524
      %8664 = vmatpush.msra.mxu0 %v8523
      %8665 = vmatpush.msra.mxu0 %v8522
      %8666 = vmatpush.msra.mxu0 %v8521
      %8667 = vmatpush.msra.mxu0 %v8520
      %8668 = vmatpush.msra.mxu0 %v8519
      %8669 = vmatpush.msra.mxu0 %v8518
      %8670 = vmatpush.msra.mxu0 %v8517
      %8671 = vmatpush.msra.mxu0 %v8516
      %8672 = vmatpush.msra.mxu0 %v8515
      %8673 = vmatpush.msra.mxu0 %v8514
      %8674 = vmatmul.f32.gmra.mxu0 %v8527
      %v8675 = vpop.f32.mrf.mxu0
      %v8676 = vadd.f32 0.0, %v8675
      %8677 = vmatmul.f32.gmra.mxu0 %v8530
      %v8678 = vpop.f32.mrf.mxu0
      %v8679 = vadd.f32 0.0, %v8678
      %8680 = vmatmul.f32.gmra.mxu0 %v8533
      %v8681 = vpop.f32.mrf.mxu0
      %v8682 = vadd.f32 0.0, %v8681
      %8683 = vmatmul.f32.gmra.mxu0 %v8536
      %v8684 = vpop.f32.mrf.mxu0
      %v8685 = vadd.f32 0.0, %v8684
      %8686 = vmatmul.f32.gmra.mxu0 %v8539
      %v8687 = vpop.f32.mrf.mxu0
      %v8688 = vadd.f32 0.0, %v8687
      %8689 = vmatmul.f32.gmra.mxu0 %v8542
      %v8690 = vpop.f32.mrf.mxu0
      %v8691 = vadd.f32 0.0, %v8690
      %8692 = vmatmul.f32.gmra.mxu0 %v8545
      %v8693 = vpop.f32.mrf.mxu0
      %v8694 = vadd.f32 0.0, %v8693
      %8695 = vmatmul.f32.gmra.mxu0 %v8548
      %v8696 = vpop.f32.mrf.mxu0
      %v8697 = vadd.f32 0.0, %v8696
      %8698 = vmatmul.f32.gmra.mxu0 %v8551
      %v8699 = vpop.f32.mrf.mxu0
      %v8700 = vadd.f32 0.0, %v8699
      %8701 = vmatmul.f32.gmra.mxu0 %v8554
      %v8702 = vpop.f32.mrf.mxu0
      %v8703 = vadd.f32 0.0, %v8702
      %8704 = vmatmul.f32.gmra.mxu0 %v8557
      %v8705 = vpop.f32.mrf.mxu0
      %v8706 = vadd.f32 0.0, %v8705
      %8707 = vmatmul.f32.gmra.mxu0 %v8560
      %v8708 = vpop.f32.mrf.mxu0
      %v8709 = vadd.f32 0.0, %v8708
      %8710 = vmatmul.f32.gmra.mxu0 %v8563
      %v8711 = vpop.f32.mrf.mxu0
      %v8712 = vadd.f32 0.0, %v8711
      %8713 = vmatmul.f32.gmra.mxu0 %v8566
      %v8714 = vpop.f32.mrf.mxu0
      %v8715 = vadd.f32 0.0, %v8714
      %8716 = vmatmul.f32.gmra.mxu0 %v8569
      %v8717 = vpop.f32.mrf.mxu0
      %v8718 = vadd.f32 0.0, %v8717
      %8719 = vmatmul.f32.gmra.mxu0 %v8572
      %v8720 = vpop.f32.mrf.mxu0
      %v8721 = vadd.f32 0.0, %v8720
      %8722 = vmatmul.f32.gmra.mxu0 %v8575
      %v8723 = vpop.f32.mrf.mxu0
      %v8724 = vadd.f32 0.0, %v8723
      %8725 = vmatmul.f32.gmra.mxu0 %v8578
      %v8726 = vpop.f32.mrf.mxu0
      %v8727 = vadd.f32 0.0, %v8726
      %8728 = vmatmul.f32.gmra.mxu0 %v8581
      %v8729 = vpop.f32.mrf.mxu0
      %v8730 = vadd.f32 0.0, %v8729
      %8731 = vmatmul.f32.gmra.mxu0 %v8584
      %v8732 = vpop.f32.mrf.mxu0
      %v8733 = vadd.f32 0.0, %v8732
      %8734 = vmatmul.f32.gmra.mxu0 %v8587
      %v8735 = vpop.f32.mrf.mxu0
      %v8736 = vadd.f32 0.0, %v8735
      %8737 = vmatmul.f32.gmra.mxu0 %v8590
      %v8738 = vpop.f32.mrf.mxu0
      %v8739 = vadd.f32 0.0, %v8738
      %8740 = vmatmul.f32.gmra.mxu0 %v8593
      %v8741 = vpop.f32.mrf.mxu0
      %v8742 = vadd.f32 0.0, %v8741
      %8743 = vmatmul.f32.gmra.mxu0 %v8596
      %v8744 = vpop.f32.mrf.mxu0
      %v8745 = vadd.f32 0.0, %v8744
      %8746 = vmatmul.f32.gmra.mxu0 %v8599
      %v8747 = vpop.f32.mrf.mxu0
      %v8748 = vadd.f32 0.0, %v8747
      %8749 = vmatmul.f32.gmra.mxu0 %v8602
      %v8750 = vpop.f32.mrf.mxu0
      %v8751 = vadd.f32 0.0, %v8750
      %8752 = vmatmul.f32.gmra.mxu0 %v8605
      %v8753 = vpop.f32.mrf.mxu0
      %v8754 = vadd.f32 0.0, %v8753
      %8755 = vmatmul.f32.gmra.mxu0 %v8608
      %v8756 = vpop.f32.mrf.mxu0
      %v8757 = vadd.f32 0.0, %v8756
      %8758 = vmatmul.f32.gmra.mxu0 %v8611
      %v8759 = vpop.f32.mrf.mxu0
      %v8760 = vadd.f32 0.0, %v8759
      %8761 = vmatmul.f32.gmra.mxu0 %v8614
      %v8762 = vpop.f32.mrf.mxu0
      %v8763 = vadd.f32 0.0, %v8762
      %8764 = vmatmul.f32.gmra.mxu0 %v8617
      %v8765 = vpop.f32.mrf.mxu0
      %v8766 = vadd.f32 0.0, %v8765
      %8767 = vmatmul.f32.gmra.mxu0 %v8620
      %v8768 = vpop.f32.mrf.mxu0
      %v8769 = vadd.f32 0.0, %v8768
      %8770 = vmatmul.f32.gmra.mxu0 %v8623
      %v8771 = vpop.f32.mrf.mxu0
      %v8772 = vadd.f32 0.0, %v8771
      %8773 = vmatmul.f32.gmra.mxu0 %v8626
      %v8774 = vpop.f32.mrf.mxu0
      %v8775 = vadd.f32 0.0, %v8774
      %8776 = vmatmul.f32.gmra.mxu0 %v8629
      %v8777 = vpop.f32.mrf.mxu0
      %v8778 = vadd.f32 0.0, %v8777
      %8779 = vmatmul.f32.gmra.mxu0 %v8632
      %v8780 = vpop.f32.mrf.mxu0
      %v8781 = vadd.f32 0.0, %v8780
      %8782 = vmatmul.f32.gmra.mxu0 %v8635
      %v8783 = vpop.f32.mrf.mxu0
      %v8784 = vadd.f32 0.0, %v8783
      %8785 = vmatmul.f32.gmra.mxu0 %v8638
      %v8786 = vpop.f32.mrf.mxu0
      %v8787 = vadd.f32 0.0, %v8786
      %8788 = vmatmul.f32.gmra.mxu0 %v8641
      %v8789 = vpop.f32.mrf.mxu0
      %v8790 = vadd.f32 0.0, %v8789
      %8791 = vmatmul.f32.gmra.mxu0 %v8644
      %v8792 = vpop.f32.mrf.mxu0
      %v8793 = vadd.f32 0.0, %v8792
      %8794 = vmatmul.f32.gmra.mxu0 %v8647
      %v8795 = vpop.f32.mrf.mxu0
      %v8796 = vadd.f32 0.0, %v8795
      %8797 = vmatmul.f32.gmra.mxu0 %v8650
      %v8798 = vpop.f32.mrf.mxu0
      %v8799 = vadd.f32 0.0, %v8798
      %8800 = vmatmul.f32.gmra.mxu0 %v8653
      %v8801 = vpop.f32.mrf.mxu0
      %v8802 = vadd.f32 0.0, %v8801
      %8803 = vdwg.mxu0
      %v8804 = vadd.f32 %v8427, %v8676
      %v8805 = vadd.f32 %v8428, %v8679
      %v8806 = vadd.f32 %v8429, %v8682
      %v8807 = vadd.f32 %v8430, %v8685
      %v8808 = vadd.f32 %v8431, %v8688
      %v8809 = vadd.f32 %v8432, %v8691
      %v8810 = vadd.f32 %v8433, %v8694
      %v8811 = vadd.f32 %v8434, %v8697
      %v8812 = vadd.f32 %v8435, %v8700
      %v8813 = vadd.f32 %v8436, %v8703
      %v8814 = vadd.f32 %v8437, %v8706
      %v8815 = vadd.f32 %v8438, %v8709
      %v8816 = vadd.f32 %v8439, %v8712
      %v8817 = vadd.f32 %v8440, %v8715
      %v8818 = vadd.f32 %v8441, %v8718
      %v8819 = vadd.f32 %v8442, %v8721
      %v8820 = vadd.f32 %v8443, %v8724
      %v8821 = vadd.f32 %v8444, %v8727
      %v8822 = vadd.f32 %v8445, %v8730
      %v8823 = vadd.f32 %v8446, %v8733
      %v8824 = vadd.f32 %v8447, %v8736
      %v8825 = vadd.f32 %v8448, %v8739
      %v8826 = vadd.f32 %v8449, %v8742
      %v8827 = vadd.f32 %v8450, %v8745
      %v8828 = vadd.f32 %v8451, %v8748
      %v8829 = vadd.f32 %v8452, %v8751
      %v8830 = vadd.f32 %v8453, %v8754
      %v8831 = vadd.f32 %v8454, %v8757
      %v8832 = vadd.f32 %v8455, %v8760
      %v8833 = vadd.f32 %v8456, %v8763
      %v8834 = vadd.f32 %v8457, %v8766
      %v8835 = vadd.f32 %v8458, %v8769
      %v8836 = vadd.f32 %v8459, %v8772
      %v8837 = vadd.f32 %v8460, %v8775
      %v8838 = vadd.f32 %v8461, %v8778
      %v8839 = vadd.f32 %v8462, %v8781
      %v8840 = vadd.f32 %v8463, %v8784
      %v8841 = vadd.f32 %v8464, %v8787
      %v8842 = vadd.f32 %v8465, %v8790
      %v8843 = vadd.f32 %v8466, %v8793
      %v8844 = vadd.f32 %v8467, %v8796
      %v8845 = vadd.f32 %v8468, %v8799
      %v8846 = vadd.f32 %v8469, %v8802
      %v8847 = vld [vmem:[%s165 + $0x6b] sm:$0xff]
      %v8848 = vld [vmem:[%s165 + $0x73] sm:$0xff]
      %v8849 = vld [vmem:[%s165 + $0x7b] sm:$0xff]
      %v8850 = vld [vmem:[%s165 + $0x83] sm:$0xff]
      %v8851 = vld [vmem:[%s165 + $0x8b] sm:$0xff]
      %v8852 = vld [vmem:[%s165 + $0x93] sm:$0xff]
      %v8853 = vld [vmem:[%s165 + $0x9b] sm:$0xff]
      %v8854 = vld [vmem:[%s165 + $0xa3] sm:$0xff]
      %v8855 = vld [vmem:[%s165 + $0xab] sm:$0xff]
      %v8856 = vld [vmem:[%s165 + $0xb3] sm:$0xff]
      %v8857 = vld [vmem:[%s165 + $0xbb] sm:$0xff]
      %v8858 = vld [vmem:[%s165 + $0xc3] sm:$0xff]
      %v8859 = vld [vmem:[%s165 + $0xcb] sm:$0xff]
      %v8860 = vld [vmem:[%s165 + $0xd3] sm:$0xff]
      %v8861 = vld [vmem:[%s165 + $0xdb] sm:$0xff]
      %v8862 = vld [vmem:[%s165 + $0xe3] sm:$0xff]
      %v8863 = vld [vmem:[%s165 + $0xeb] sm:$0xff]
      %v8864 = vld [vmem:[%s165 + $0xf3] sm:$0xff]
      %v8865 = vld [vmem:[%s165 + $0xfb] sm:$0xff]
      %v8866 = vld [vmem:[%s165 + $0x103] sm:$0xff]
      %v8867 = vld [vmem:[%s165 + $0x10b] sm:$0xff]
      %v8868 = vld [vmem:[%s165 + $0x113] sm:$0xff]
      %v8869 = vld [vmem:[%s165 + $0x11b] sm:$0xff]
      %v8870 = vld [vmem:[%s165 + $0x123] sm:$0xff]
      %v8871 = vld [vmem:[%s165 + $0x12b] sm:$0xff]
      %v8872 = vld [vmem:[%s165 + $0x133] sm:$0xff]
      %v8873 = vld [vmem:[%s165 + $0x13b] sm:$0xff]
      %v8874 = vld [vmem:[%s165 + $0x143] sm:$0xff]
      %v8875 = vld [vmem:[%s165 + $0x14b] sm:$0xff]
      %v8876 = vld [vmem:[%s165 + $0x153] sm:$0xff]
      %v8877 = vld [vmem:[%s165 + $0x15b] sm:$0xff]
      %v8878 = vld [vmem:[%s165 + $0x163] sm:$0xff]
      %v8879 = vld [vmem:[%s165 + $0x16b] sm:$0xff]
      %v8880 = vld [vmem:[%s165 + $0x173] sm:$0xff]
      %v8881 = vld [vmem:[%s165 + $0x17b] sm:$0xff]
      %v8882 = vld [vmem:[%s165 + $0x183] sm:$0xff]
      %v8883 = vld [vmem:[%s165 + $0x18b] sm:$0xff]
      %v8884 = vld [vmem:[%s165 + $0x193] sm:$0xff]
      %v8885 = vld [vmem:[%s165 + $0x19b] sm:$0xff]
      %v8886 = vld [vmem:[%s165 + $0x1a3] sm:$0xff]
      %v8887 = vld [vmem:[%s165 + $0x1ab] sm:$0xff]
      %v8888 = vld [vmem:[%s165 + $0x1b3] sm:$0xff]
      %v8889 = vld [vmem:[%s165 + $0x1bb] sm:$0xff]
      %s8890 = scalar_lea.vmem %s1, 2208
      %v8891 = vld [vmem:[%s8890] sm:$0xff]
      %v8892 = vld [vmem:[%s8890 + $0x8] sm:$0xff]
      %v8893 = vld [vmem:[%s8890 + $0x10] sm:$0xff]
      %v8894 = vld [vmem:[%s8890 + $0x18] sm:$0xff]
      %v8895 = vld [vmem:[%s8890 + $0x20] sm:$0xff]
      %v8896 = vld [vmem:[%s8890 + $0x28] sm:$0xff]
      %v8897 = vld [vmem:[%s8890 + $0x30] sm:$0xff]
      %v8898 = vld [vmem:[%s8890 + $0x38] sm:$0xff]
      %v8899 = vld [vmem:[%s8890 + $0x40] sm:$0xff]
      %v8900 = vld [vmem:[%s8890 + $0x48] sm:$0xff]
      %v8901 = vld [vmem:[%s8890 + $0x50] sm:$0xff]
      %v8902 = vld [vmem:[%s8890 + $0x58] sm:$0x3]
      %v8904 = vsel %vm230, %v8847, 0
      %v8907 = vsel %vm230, %v8848, 0
      %v8910 = vsel %vm230, %v8849, 0
      %v8913 = vsel %vm230, %v8850, 0
      %v8916 = vsel %vm230, %v8851, 0
      %v8919 = vsel %vm230, %v8852, 0
      %v8922 = vsel %vm230, %v8853, 0
      %v8925 = vsel %vm230, %v8854, 0
      %v8928 = vsel %vm230, %v8855, 0
      %v8931 = vsel %vm230, %v8856, 0
      %v8934 = vsel %vm230, %v8857, 0
      %v8937 = vsel %vm230, %v8858, 0
      %v8940 = vsel %vm230, %v8859, 0
      %v8943 = vsel %vm230, %v8860, 0
      %v8946 = vsel %vm230, %v8861, 0
      %v8949 = vsel %vm230, %v8862, 0
      %v8952 = vsel %vm230, %v8863, 0
      %v8955 = vsel %vm230, %v8864, 0
      %v8958 = vsel %vm230, %v8865, 0
      %v8961 = vsel %vm230, %v8866, 0
      %v8964 = vsel %vm230, %v8867, 0
      %v8967 = vsel %vm230, %v8868, 0
      %v8970 = vsel %vm230, %v8869, 0
      %v8973 = vsel %vm230, %v8870, 0
      %v8976 = vsel %vm230, %v8871, 0
      %v8979 = vsel %vm230, %v8872, 0
      %v8982 = vsel %vm230, %v8873, 0
      %v8985 = vsel %vm230, %v8874, 0
      %v8988 = vsel %vm230, %v8875, 0
      %v8991 = vsel %vm230, %v8876, 0
      %v8994 = vsel %vm230, %v8877, 0
      %v8997 = vsel %vm230, %v8878, 0
      %v9000 = vsel %vm230, %v8879, 0
      %v9003 = vsel %vm230, %v8880, 0
      %v9006 = vsel %vm230, %v8881, 0
      %v9009 = vsel %vm230, %v8882, 0
      %v9012 = vsel %vm230, %v8883, 0
      %v9015 = vsel %vm230, %v8884, 0
      %v9018 = vsel %vm230, %v8885, 0
      %v9021 = vsel %vm230, %v8886, 0
      %v9024 = vsel %vm230, %v8887, 0
      %v9027 = vsel %vm230, %v8888, 0
      %v9030 = vsel %vm230, %v8889, 0
      %v9033 = vsel %vm360, %v8902, 0
      %9035 = vmatpush.msra.mxu0 0.0
      %9036 = vmatpush.msra.mxu0 0.0
      %9037 = vmatpush.msra.mxu0 0.0
      %9038 = vmatpush.msra.mxu0 0.0
      %9039 = vmatpush.msra.mxu0 %v9033
      %9040 = vmatpush.msra.mxu0 %v8901
      %9041 = vmatpush.msra.mxu0 %v8900
      %9042 = vmatpush.msra.mxu0 %v8899
      %9043 = vmatpush.msra.mxu0 %v8898
      %9044 = vmatpush.msra.mxu0 %v8897
      %9045 = vmatpush.msra.mxu0 %v8896
      %9046 = vmatpush.msra.mxu0 %v8895
      %9047 = vmatpush.msra.mxu0 %v8894
      %9048 = vmatpush.msra.mxu0 %v8893
      %9049 = vmatpush.msra.mxu0 %v8892
      %9050 = vmatpush.msra.mxu0 %v8891
      %9051 = vmatmul.f32.gmra.mxu0 %v8904
      %v9052 = vpop.f32.mrf.mxu0
      %v9053 = vadd.f32 0.0, %v9052
      %9054 = vmatmul.f32.gmra.mxu0 %v8907
      %v9055 = vpop.f32.mrf.mxu0
      %v9056 = vadd.f32 0.0, %v9055
      %9057 = vmatmul.f32.gmra.mxu0 %v8910
      %v9058 = vpop.f32.mrf.mxu0
      %v9059 = vadd.f32 0.0, %v9058
      %9060 = vmatmul.f32.gmra.mxu0 %v8913
      %v9061 = vpop.f32.mrf.mxu0
      %v9062 = vadd.f32 0.0, %v9061
      %9063 = vmatmul.f32.gmra.mxu0 %v8916
      %v9064 = vpop.f32.mrf.mxu0
      %v9065 = vadd.f32 0.0, %v9064
      %9066 = vmatmul.f32.gmra.mxu0 %v8919
      %v9067 = vpop.f32.mrf.mxu0
      %v9068 = vadd.f32 0.0, %v9067
      %9069 = vmatmul.f32.gmra.mxu0 %v8922
      %v9070 = vpop.f32.mrf.mxu0
      %v9071 = vadd.f32 0.0, %v9070
      %9072 = vmatmul.f32.gmra.mxu0 %v8925
      %v9073 = vpop.f32.mrf.mxu0
      %v9074 = vadd.f32 0.0, %v9073
      %9075 = vmatmul.f32.gmra.mxu0 %v8928
      %v9076 = vpop.f32.mrf.mxu0
      %v9077 = vadd.f32 0.0, %v9076
      %9078 = vmatmul.f32.gmra.mxu0 %v8931
      %v9079 = vpop.f32.mrf.mxu0
      %v9080 = vadd.f32 0.0, %v9079
      %9081 = vmatmul.f32.gmra.mxu0 %v8934
      %v9082 = vpop.f32.mrf.mxu0
      %v9083 = vadd.f32 0.0, %v9082
      %9084 = vmatmul.f32.gmra.mxu0 %v8937
      %v9085 = vpop.f32.mrf.mxu0
      %v9086 = vadd.f32 0.0, %v9085
      %9087 = vmatmul.f32.gmra.mxu0 %v8940
      %v9088 = vpop.f32.mrf.mxu0
      %v9089 = vadd.f32 0.0, %v9088
      %9090 = vmatmul.f32.gmra.mxu0 %v8943
      %v9091 = vpop.f32.mrf.mxu0
      %v9092 = vadd.f32 0.0, %v9091
      %9093 = vmatmul.f32.gmra.mxu0 %v8946
      %v9094 = vpop.f32.mrf.mxu0
      %v9095 = vadd.f32 0.0, %v9094
      %9096 = vmatmul.f32.gmra.mxu0 %v8949
      %v9097 = vpop.f32.mrf.mxu0
      %v9098 = vadd.f32 0.0, %v9097
      %9099 = vmatmul.f32.gmra.mxu0 %v8952
      %v9100 = vpop.f32.mrf.mxu0
      %v9101 = vadd.f32 0.0, %v9100
      %9102 = vmatmul.f32.gmra.mxu0 %v8955
      %v9103 = vpop.f32.mrf.mxu0
      %v9104 = vadd.f32 0.0, %v9103
      %9105 = vmatmul.f32.gmra.mxu0 %v8958
      %v9106 = vpop.f32.mrf.mxu0
      %v9107 = vadd.f32 0.0, %v9106
      %9108 = vmatmul.f32.gmra.mxu0 %v8961
      %v9109 = vpop.f32.mrf.mxu0
      %v9110 = vadd.f32 0.0, %v9109
      %9111 = vmatmul.f32.gmra.mxu0 %v8964
      %v9112 = vpop.f32.mrf.mxu0
      %v9113 = vadd.f32 0.0, %v9112
      %9114 = vmatmul.f32.gmra.mxu0 %v8967
      %v9115 = vpop.f32.mrf.mxu0
      %v9116 = vadd.f32 0.0, %v9115
      %9117 = vmatmul.f32.gmra.mxu0 %v8970
      %v9118 = vpop.f32.mrf.mxu0
      %v9119 = vadd.f32 0.0, %v9118
      %9120 = vmatmul.f32.gmra.mxu0 %v8973
      %v9121 = vpop.f32.mrf.mxu0
      %v9122 = vadd.f32 0.0, %v9121
      %9123 = vmatmul.f32.gmra.mxu0 %v8976
      %v9124 = vpop.f32.mrf.mxu0
      %v9125 = vadd.f32 0.0, %v9124
      %9126 = vmatmul.f32.gmra.mxu0 %v8979
      %v9127 = vpop.f32.mrf.mxu0
      %v9128 = vadd.f32 0.0, %v9127
      %9129 = vmatmul.f32.gmra.mxu0 %v8982
      %v9130 = vpop.f32.mrf.mxu0
      %v9131 = vadd.f32 0.0, %v9130
      %9132 = vmatmul.f32.gmra.mxu0 %v8985
      %v9133 = vpop.f32.mrf.mxu0
      %v9134 = vadd.f32 0.0, %v9133
      %9135 = vmatmul.f32.gmra.mxu0 %v8988
      %v9136 = vpop.f32.mrf.mxu0
      %v9137 = vadd.f32 0.0, %v9136
      %9138 = vmatmul.f32.gmra.mxu0 %v8991
      %v9139 = vpop.f32.mrf.mxu0
      %v9140 = vadd.f32 0.0, %v9139
      %9141 = vmatmul.f32.gmra.mxu0 %v8994
      %v9142 = vpop.f32.mrf.mxu0
      %v9143 = vadd.f32 0.0, %v9142
      %9144 = vmatmul.f32.gmra.mxu0 %v8997
      %v9145 = vpop.f32.mrf.mxu0
      %v9146 = vadd.f32 0.0, %v9145
      %9147 = vmatmul.f32.gmra.mxu0 %v9000
      %v9148 = vpop.f32.mrf.mxu0
      %v9149 = vadd.f32 0.0, %v9148
      %9150 = vmatmul.f32.gmra.mxu0 %v9003
      %v9151 = vpop.f32.mrf.mxu0
      %v9152 = vadd.f32 0.0, %v9151
      %9153 = vmatmul.f32.gmra.mxu0 %v9006
      %v9154 = vpop.f32.mrf.mxu0
      %v9155 = vadd.f32 0.0, %v9154
      %9156 = vmatmul.f32.gmra.mxu0 %v9009
      %v9157 = vpop.f32.mrf.mxu0
      %v9158 = vadd.f32 0.0, %v9157
      %9159 = vmatmul.f32.gmra.mxu0 %v9012
      %v9160 = vpop.f32.mrf.mxu0
      %v9161 = vadd.f32 0.0, %v9160
      %9162 = vmatmul.f32.gmra.mxu0 %v9015
      %v9163 = vpop.f32.mrf.mxu0
      %v9164 = vadd.f32 0.0, %v9163
      %9165 = vmatmul.f32.gmra.mxu0 %v9018
      %v9166 = vpop.f32.mrf.mxu0
      %v9167 = vadd.f32 0.0, %v9166
      %9168 = vmatmul.f32.gmra.mxu0 %v9021
      %v9169 = vpop.f32.mrf.mxu0
      %v9170 = vadd.f32 0.0, %v9169
      %9171 = vmatmul.f32.gmra.mxu0 %v9024
      %v9172 = vpop.f32.mrf.mxu0
      %v9173 = vadd.f32 0.0, %v9172
      %9174 = vmatmul.f32.gmra.mxu0 %v9027
      %v9175 = vpop.f32.mrf.mxu0
      %v9176 = vadd.f32 0.0, %v9175
      %9177 = vmatmul.f32.gmra.mxu0 %v9030
      %v9178 = vpop.f32.mrf.mxu0
      %v9179 = vadd.f32 0.0, %v9178
      %9180 = vdwg.mxu0
      %v9181 = vadd.f32 %v8804, %v9053
      %v9182 = vadd.f32 %v8805, %v9056
      %v9183 = vadd.f32 %v8806, %v9059
      %v9184 = vadd.f32 %v8807, %v9062
      %v9185 = vadd.f32 %v8808, %v9065
      %v9186 = vadd.f32 %v8809, %v9068
      %v9187 = vadd.f32 %v8810, %v9071
      %v9188 = vadd.f32 %v8811, %v9074
      %v9189 = vadd.f32 %v8812, %v9077
      %v9190 = vadd.f32 %v8813, %v9080
      %v9191 = vadd.f32 %v8814, %v9083
      %v9192 = vadd.f32 %v8815, %v9086
      %v9193 = vadd.f32 %v8816, %v9089
      %v9194 = vadd.f32 %v8817, %v9092
      %v9195 = vadd.f32 %v8818, %v9095
      %v9196 = vadd.f32 %v8819, %v9098
      %v9197 = vadd.f32 %v8820, %v9101
      %v9198 = vadd.f32 %v8821, %v9104
      %v9199 = vadd.f32 %v8822, %v9107
      %v9200 = vadd.f32 %v8823, %v9110
      %v9201 = vadd.f32 %v8824, %v9113
      %v9202 = vadd.f32 %v8825, %v9116
      %v9203 = vadd.f32 %v8826, %v9119
      %v9204 = vadd.f32 %v8827, %v9122
      %v9205 = vadd.f32 %v8828, %v9125
      %v9206 = vadd.f32 %v8829, %v9128
      %v9207 = vadd.f32 %v8830, %v9131
      %v9208 = vadd.f32 %v8831, %v9134
      %v9209 = vadd.f32 %v8832, %v9137
      %v9210 = vadd.f32 %v8833, %v9140
      %v9211 = vadd.f32 %v8834, %v9143
      %v9212 = vadd.f32 %v8835, %v9146
      %v9213 = vadd.f32 %v8836, %v9149
      %v9214 = vadd.f32 %v8837, %v9152
      %v9215 = vadd.f32 %v8838, %v9155
      %v9216 = vadd.f32 %v8839, %v9158
      %v9217 = vadd.f32 %v8840, %v9161
      %v9218 = vadd.f32 %v8841, %v9164
      %v9219 = vadd.f32 %v8842, %v9167
      %v9220 = vadd.f32 %v8843, %v9170
      %v9221 = vadd.f32 %v8844, %v9173
      %v9222 = vadd.f32 %v8845, %v9176
      %v9223 = vadd.f32 %v8846, %v9179
      %v9224 = vld [vmem:[%s165 + $0x70] sm:$0xff]
      %v9225 = vld [vmem:[%s165 + $0x78] sm:$0xff]
      %v9226 = vld [vmem:[%s165 + $0x80] sm:$0xff]
      %v9227 = vld [vmem:[%s165 + $0x88] sm:$0xff]
      %v9228 = vld [vmem:[%s165 + $0x90] sm:$0xff]
      %v9229 = vld [vmem:[%s165 + $0x98] sm:$0xff]
      %v9230 = vld [vmem:[%s165 + $0xa0] sm:$0xff]
      %v9231 = vld [vmem:[%s165 + $0xa8] sm:$0xff]
      %v9232 = vld [vmem:[%s165 + $0xb0] sm:$0xff]
      %v9233 = vld [vmem:[%s165 + $0xb8] sm:$0xff]
      %v9234 = vld [vmem:[%s165 + $0xc0] sm:$0xff]
      %v9235 = vld [vmem:[%s165 + $0xc8] sm:$0xff]
      %v9236 = vld [vmem:[%s165 + $0xd0] sm:$0xff]
      %v9237 = vld [vmem:[%s165 + $0xd8] sm:$0xff]
      %v9238 = vld [vmem:[%s165 + $0xe0] sm:$0xff]
      %v9239 = vld [vmem:[%s165 + $0xe8] sm:$0xff]
      %v9240 = vld [vmem:[%s165 + $0xf0] sm:$0xff]
      %v9241 = vld [vmem:[%s165 + $0xf8] sm:$0xff]
      %v9242 = vld [vmem:[%s165 + $0x100] sm:$0xff]
      %v9243 = vld [vmem:[%s165 + $0x108] sm:$0xff]
      %v9244 = vld [vmem:[%s165 + $0x110] sm:$0xff]
      %v9245 = vld [vmem:[%s165 + $0x118] sm:$0xff]
      %v9246 = vld [vmem:[%s165 + $0x120] sm:$0xff]
      %v9247 = vld [vmem:[%s165 + $0x128] sm:$0xff]
      %v9248 = vld [vmem:[%s165 + $0x130] sm:$0xff]
      %v9249 = vld [vmem:[%s165 + $0x138] sm:$0xff]
      %v9250 = vld [vmem:[%s165 + $0x140] sm:$0xff]
      %v9251 = vld [vmem:[%s165 + $0x148] sm:$0xff]
      %v9252 = vld [vmem:[%s165 + $0x150] sm:$0xff]
      %v9253 = vld [vmem:[%s165 + $0x158] sm:$0xff]
      %v9254 = vld [vmem:[%s165 + $0x160] sm:$0xff]
      %v9255 = vld [vmem:[%s165 + $0x168] sm:$0xff]
      %v9256 = vld [vmem:[%s165 + $0x170] sm:$0xff]
      %v9257 = vld [vmem:[%s165 + $0x178] sm:$0xff]
      %v9258 = vld [vmem:[%s165 + $0x180] sm:$0xff]
      %v9259 = vld [vmem:[%s165 + $0x188] sm:$0xff]
      %v9260 = vld [vmem:[%s165 + $0x190] sm:$0xff]
      %v9261 = vld [vmem:[%s165 + $0x198] sm:$0xff]
      %v9262 = vld [vmem:[%s165 + $0x1a0] sm:$0xff]
      %v9263 = vld [vmem:[%s165 + $0x1a8] sm:$0xff]
      %v9264 = vld [vmem:[%s165 + $0x1b0] sm:$0xff]
      %v9265 = vld [vmem:[%s165 + $0x1b8] sm:$0xff]
      %v9266 = vld [vmem:[%s165 + $0x1c0] sm:$0xff]
      %s9267 = scalar_lea.vmem %s1, 2304
      %v9268 = vld [vmem:[%s9267] sm:$0xff]
      %v9269 = vld [vmem:[%s9267 + $0x8] sm:$0xff]
      %v9270 = vld [vmem:[%s9267 + $0x10] sm:$0xff]
      %v9271 = vld [vmem:[%s9267 + $0x18] sm:$0xff]
      %v9272 = vld [vmem:[%s9267 + $0x20] sm:$0xff]
      %v9273 = vld [vmem:[%s9267 + $0x28] sm:$0xff]
      %v9274 = vld [vmem:[%s9267 + $0x30] sm:$0xff]
      %v9275 = vld [vmem:[%s9267 + $0x38] sm:$0xff]
      %v9276 = vld [vmem:[%s9267 + $0x40] sm:$0xff]
      %v9277 = vld [vmem:[%s9267 + $0x48] sm:$0xff]
      %v9278 = vld [vmem:[%s9267 + $0x50] sm:$0xff]
      %v9279 = vld [vmem:[%s9267 + $0x58] sm:$0x3]
      %v9281 = vsel %vm230, %v9224, 0
      %v9284 = vsel %vm230, %v9225, 0
      %v9287 = vsel %vm230, %v9226, 0
      %v9290 = vsel %vm230, %v9227, 0
      %v9293 = vsel %vm230, %v9228, 0
      %v9296 = vsel %vm230, %v9229, 0
      %v9299 = vsel %vm230, %v9230, 0
      %v9302 = vsel %vm230, %v9231, 0
      %v9305 = vsel %vm230, %v9232, 0
      %v9308 = vsel %vm230, %v9233, 0
      %v9311 = vsel %vm230, %v9234, 0
      %v9314 = vsel %vm230, %v9235, 0
      %v9317 = vsel %vm230, %v9236, 0
      %v9320 = vsel %vm230, %v9237, 0
      %v9323 = vsel %vm230, %v9238, 0
      %v9326 = vsel %vm230, %v9239, 0
      %v9329 = vsel %vm230, %v9240, 0
      %v9332 = vsel %vm230, %v9241, 0
      %v9335 = vsel %vm230, %v9242, 0
      %v9338 = vsel %vm230, %v9243, 0
      %v9341 = vsel %vm230, %v9244, 0
      %v9344 = vsel %vm230, %v9245, 0
      %v9347 = vsel %vm230, %v9246, 0
      %v9350 = vsel %vm230, %v9247, 0
      %v9353 = vsel %vm230, %v9248, 0
      %v9356 = vsel %vm230, %v9249, 0
      %v9359 = vsel %vm230, %v9250, 0
      %v9362 = vsel %vm230, %v9251, 0
      %v9365 = vsel %vm230, %v9252, 0
      %v9368 = vsel %vm230, %v9253, 0
      %v9371 = vsel %vm230, %v9254, 0
      %v9374 = vsel %vm230, %v9255, 0
      %v9377 = vsel %vm230, %v9256, 0
      %v9380 = vsel %vm230, %v9257, 0
      %v9383 = vsel %vm230, %v9258, 0
      %v9386 = vsel %vm230, %v9259, 0
      %v9389 = vsel %vm230, %v9260, 0
      %v9392 = vsel %vm230, %v9261, 0
      %v9395 = vsel %vm230, %v9262, 0
      %v9398 = vsel %vm230, %v9263, 0
      %v9401 = vsel %vm230, %v9264, 0
      %v9404 = vsel %vm230, %v9265, 0
      %v9407 = vsel %vm230, %v9266, 0
      %v9410 = vsel %vm360, %v9279, 0
      %9412 = vmatpush.msra.mxu0 0.0
      %9413 = vmatpush.msra.mxu0 0.0
      %9414 = vmatpush.msra.mxu0 0.0
      %9415 = vmatpush.msra.mxu0 0.0
      %9416 = vmatpush.msra.mxu0 %v9410
      %9417 = vmatpush.msra.mxu0 %v9278
      %9418 = vmatpush.msra.mxu0 %v9277
      %9419 = vmatpush.msra.mxu0 %v9276
      %9420 = vmatpush.msra.mxu0 %v9275
      %9421 = vmatpush.msra.mxu0 %v9274
      %9422 = vmatpush.msra.mxu0 %v9273
      %9423 = vmatpush.msra.mxu0 %v9272
      %9424 = vmatpush.msra.mxu0 %v9271
      %9425 = vmatpush.msra.mxu0 %v9270
      %9426 = vmatpush.msra.mxu0 %v9269
      %9427 = vmatpush.msra.mxu0 %v9268
      %9428 = vmatmul.f32.gmra.mxu0 %v9281
      %v9429 = vpop.f32.mrf.mxu0
      %v9430 = vadd.f32 0.0, %v9429
      %9431 = vmatmul.f32.gmra.mxu0 %v9284
      %v9432 = vpop.f32.mrf.mxu0
      %v9433 = vadd.f32 0.0, %v9432
      %9434 = vmatmul.f32.gmra.mxu0 %v9287
      %v9435 = vpop.f32.mrf.mxu0
      %v9436 = vadd.f32 0.0, %v9435
      %9437 = vmatmul.f32.gmra.mxu0 %v9290
      %v9438 = vpop.f32.mrf.mxu0
      %v9439 = vadd.f32 0.0, %v9438
      %9440 = vmatmul.f32.gmra.mxu0 %v9293
      %v9441 = vpop.f32.mrf.mxu0
      %v9442 = vadd.f32 0.0, %v9441
      %9443 = vmatmul.f32.gmra.mxu0 %v9296
      %v9444 = vpop.f32.mrf.mxu0
      %v9445 = vadd.f32 0.0, %v9444
      %9446 = vmatmul.f32.gmra.mxu0 %v9299
      %v9447 = vpop.f32.mrf.mxu0
      %v9448 = vadd.f32 0.0, %v9447
      %9449 = vmatmul.f32.gmra.mxu0 %v9302
      %v9450 = vpop.f32.mrf.mxu0
      %v9451 = vadd.f32 0.0, %v9450
      %9452 = vmatmul.f32.gmra.mxu0 %v9305
      %v9453 = vpop.f32.mrf.mxu0
      %v9454 = vadd.f32 0.0, %v9453
      %9455 = vmatmul.f32.gmra.mxu0 %v9308
      %v9456 = vpop.f32.mrf.mxu0
      %v9457 = vadd.f32 0.0, %v9456
      %9458 = vmatmul.f32.gmra.mxu0 %v9311
      %v9459 = vpop.f32.mrf.mxu0
      %v9460 = vadd.f32 0.0, %v9459
      %9461 = vmatmul.f32.gmra.mxu0 %v9314
      %v9462 = vpop.f32.mrf.mxu0
      %v9463 = vadd.f32 0.0, %v9462
      %9464 = vmatmul.f32.gmra.mxu0 %v9317
      %v9465 = vpop.f32.mrf.mxu0
      %v9466 = vadd.f32 0.0, %v9465
      %9467 = vmatmul.f32.gmra.mxu0 %v9320
      %v9468 = vpop.f32.mrf.mxu0
      %v9469 = vadd.f32 0.0, %v9468
      %9470 = vmatmul.f32.gmra.mxu0 %v9323
      %v9471 = vpop.f32.mrf.mxu0
      %v9472 = vadd.f32 0.0, %v9471
      %9473 = vmatmul.f32.gmra.mxu0 %v9326
      %v9474 = vpop.f32.mrf.mxu0
      %v9475 = vadd.f32 0.0, %v9474
      %9476 = vmatmul.f32.gmra.mxu0 %v9329
      %v9477 = vpop.f32.mrf.mxu0
      %v9478 = vadd.f32 0.0, %v9477
      %9479 = vmatmul.f32.gmra.mxu0 %v9332
      %v9480 = vpop.f32.mrf.mxu0
      %v9481 = vadd.f32 0.0, %v9480
      %9482 = vmatmul.f32.gmra.mxu0 %v9335
      %v9483 = vpop.f32.mrf.mxu0
      %v9484 = vadd.f32 0.0, %v9483
      %9485 = vmatmul.f32.gmra.mxu0 %v9338
      %v9486 = vpop.f32.mrf.mxu0
      %v9487 = vadd.f32 0.0, %v9486
      %9488 = vmatmul.f32.gmra.mxu0 %v9341
      %v9489 = vpop.f32.mrf.mxu0
      %v9490 = vadd.f32 0.0, %v9489
      %9491 = vmatmul.f32.gmra.mxu0 %v9344
      %v9492 = vpop.f32.mrf.mxu0
      %v9493 = vadd.f32 0.0, %v9492
      %9494 = vmatmul.f32.gmra.mxu0 %v9347
      %v9495 = vpop.f32.mrf.mxu0
      %v9496 = vadd.f32 0.0, %v9495
      %9497 = vmatmul.f32.gmra.mxu0 %v9350
      %v9498 = vpop.f32.mrf.mxu0
      %v9499 = vadd.f32 0.0, %v9498
      %9500 = vmatmul.f32.gmra.mxu0 %v9353
      %v9501 = vpop.f32.mrf.mxu0
      %v9502 = vadd.f32 0.0, %v9501
      %9503 = vmatmul.f32.gmra.mxu0 %v9356
      %v9504 = vpop.f32.mrf.mxu0
      %v9505 = vadd.f32 0.0, %v9504
      %9506 = vmatmul.f32.gmra.mxu0 %v9359
      %v9507 = vpop.f32.mrf.mxu0
      %v9508 = vadd.f32 0.0, %v9507
      %9509 = vmatmul.f32.gmra.mxu0 %v9362
      %v9510 = vpop.f32.mrf.mxu0
      %v9511 = vadd.f32 0.0, %v9510
      %9512 = vmatmul.f32.gmra.mxu0 %v9365
      %v9513 = vpop.f32.mrf.mxu0
      %v9514 = vadd.f32 0.0, %v9513
      %9515 = vmatmul.f32.gmra.mxu0 %v9368
      %v9516 = vpop.f32.mrf.mxu0
      %v9517 = vadd.f32 0.0, %v9516
      %9518 = vmatmul.f32.gmra.mxu0 %v9371
      %v9519 = vpop.f32.mrf.mxu0
      %v9520 = vadd.f32 0.0, %v9519
      %9521 = vmatmul.f32.gmra.mxu0 %v9374
      %v9522 = vpop.f32.mrf.mxu0
      %v9523 = vadd.f32 0.0, %v9522
      %9524 = vmatmul.f32.gmra.mxu0 %v9377
      %v9525 = vpop.f32.mrf.mxu0
      %v9526 = vadd.f32 0.0, %v9525
      %9527 = vmatmul.f32.gmra.mxu0 %v9380
      %v9528 = vpop.f32.mrf.mxu0
      %v9529 = vadd.f32 0.0, %v9528
      %9530 = vmatmul.f32.gmra.mxu0 %v9383
      %v9531 = vpop.f32.mrf.mxu0
      %v9532 = vadd.f32 0.0, %v9531
      %9533 = vmatmul.f32.gmra.mxu0 %v9386
      %v9534 = vpop.f32.mrf.mxu0
      %v9535 = vadd.f32 0.0, %v9534
      %9536 = vmatmul.f32.gmra.mxu0 %v9389
      %v9537 = vpop.f32.mrf.mxu0
      %v9538 = vadd.f32 0.0, %v9537
      %9539 = vmatmul.f32.gmra.mxu0 %v9392
      %v9540 = vpop.f32.mrf.mxu0
      %v9541 = vadd.f32 0.0, %v9540
      %9542 = vmatmul.f32.gmra.mxu0 %v9395
      %v9543 = vpop.f32.mrf.mxu0
      %v9544 = vadd.f32 0.0, %v9543
      %9545 = vmatmul.f32.gmra.mxu0 %v9398
      %v9546 = vpop.f32.mrf.mxu0
      %v9547 = vadd.f32 0.0, %v9546
      %9548 = vmatmul.f32.gmra.mxu0 %v9401
      %v9549 = vpop.f32.mrf.mxu0
      %v9550 = vadd.f32 0.0, %v9549
      %9551 = vmatmul.f32.gmra.mxu0 %v9404
      %v9552 = vpop.f32.mrf.mxu0
      %v9553 = vadd.f32 0.0, %v9552
      %9554 = vmatmul.f32.gmra.mxu0 %v9407
      %v9555 = vpop.f32.mrf.mxu0
      %v9556 = vadd.f32 0.0, %v9555
      %9557 = vdwg.mxu0
      %v9558 = vadd.f32 %v9181, %v9430
      %v9559 = vadd.f32 %v9182, %v9433
      %v9560 = vadd.f32 %v9183, %v9436
      %v9561 = vadd.f32 %v9184, %v9439
      %v9562 = vadd.f32 %v9185, %v9442
      %v9563 = vadd.f32 %v9186, %v9445
      %v9564 = vadd.f32 %v9187, %v9448
      %v9565 = vadd.f32 %v9188, %v9451
      %v9566 = vadd.f32 %v9189, %v9454
      %v9567 = vadd.f32 %v9190, %v9457
      %v9568 = vadd.f32 %v9191, %v9460
      %v9569 = vadd.f32 %v9192, %v9463
      %v9570 = vadd.f32 %v9193, %v9466
      %v9571 = vadd.f32 %v9194, %v9469
      %v9572 = vadd.f32 %v9195, %v9472
      %v9573 = vadd.f32 %v9196, %v9475
      %v9574 = vadd.f32 %v9197, %v9478
      %v9575 = vadd.f32 %v9198, %v9481
      %v9576 = vadd.f32 %v9199, %v9484
      %v9577 = vadd.f32 %v9200, %v9487
      %v9578 = vadd.f32 %v9201, %v9490
      %v9579 = vadd.f32 %v9202, %v9493
      %v9580 = vadd.f32 %v9203, %v9496
      %v9581 = vadd.f32 %v9204, %v9499
      %v9582 = vadd.f32 %v9205, %v9502
      %v9583 = vadd.f32 %v9206, %v9505
      %v9584 = vadd.f32 %v9207, %v9508
      %v9585 = vadd.f32 %v9208, %v9511
      %v9586 = vadd.f32 %v9209, %v9514
      %v9587 = vadd.f32 %v9210, %v9517
      %v9588 = vadd.f32 %v9211, %v9520
      %v9589 = vadd.f32 %v9212, %v9523
      %v9590 = vadd.f32 %v9213, %v9526
      %v9591 = vadd.f32 %v9214, %v9529
      %v9592 = vadd.f32 %v9215, %v9532
      %v9593 = vadd.f32 %v9216, %v9535
      %v9594 = vadd.f32 %v9217, %v9538
      %v9595 = vadd.f32 %v9218, %v9541
      %v9596 = vadd.f32 %v9219, %v9544
      %v9597 = vadd.f32 %v9220, %v9547
      %v9598 = vadd.f32 %v9221, %v9550
      %v9599 = vadd.f32 %v9222, %v9553
      %v9600 = vadd.f32 %v9223, %v9556
      %v9601 = vld [vmem:[%s165 + $0x71] sm:$0xff]
      %v9602 = vld [vmem:[%s165 + $0x79] sm:$0xff]
      %v9603 = vld [vmem:[%s165 + $0x81] sm:$0xff]
      %v9604 = vld [vmem:[%s165 + $0x89] sm:$0xff]
      %v9605 = vld [vmem:[%s165 + $0x91] sm:$0xff]
      %v9606 = vld [vmem:[%s165 + $0x99] sm:$0xff]
      %v9607 = vld [vmem:[%s165 + $0xa1] sm:$0xff]
      %v9608 = vld [vmem:[%s165 + $0xa9] sm:$0xff]
      %v9609 = vld [vmem:[%s165 + $0xb1] sm:$0xff]
      %v9610 = vld [vmem:[%s165 + $0xb9] sm:$0xff]
      %v9611 = vld [vmem:[%s165 + $0xc1] sm:$0xff]
      %v9612 = vld [vmem:[%s165 + $0xc9] sm:$0xff]
      %v9613 = vld [vmem:[%s165 + $0xd1] sm:$0xff]
      %v9614 = vld [vmem:[%s165 + $0xd9] sm:$0xff]
      %v9615 = vld [vmem:[%s165 + $0xe1] sm:$0xff]
      %v9616 = vld [vmem:[%s165 + $0xe9] sm:$0xff]
      %v9617 = vld [vmem:[%s165 + $0xf1] sm:$0xff]
      %v9618 = vld [vmem:[%s165 + $0xf9] sm:$0xff]
      %v9619 = vld [vmem:[%s165 + $0x101] sm:$0xff]
      %v9620 = vld [vmem:[%s165 + $0x109] sm:$0xff]
      %v9621 = vld [vmem:[%s165 + $0x111] sm:$0xff]
      %v9622 = vld [vmem:[%s165 + $0x119] sm:$0xff]
      %v9623 = vld [vmem:[%s165 + $0x121] sm:$0xff]
      %v9624 = vld [vmem:[%s165 + $0x129] sm:$0xff]
      %v9625 = vld [vmem:[%s165 + $0x131] sm:$0xff]
      %v9626 = vld [vmem:[%s165 + $0x139] sm:$0xff]
      %v9627 = vld [vmem:[%s165 + $0x141] sm:$0xff]
      %v9628 = vld [vmem:[%s165 + $0x149] sm:$0xff]
      %v9629 = vld [vmem:[%s165 + $0x151] sm:$0xff]
      %v9630 = vld [vmem:[%s165 + $0x159] sm:$0xff]
      %v9631 = vld [vmem:[%s165 + $0x161] sm:$0xff]
      %v9632 = vld [vmem:[%s165 + $0x169] sm:$0xff]
      %v9633 = vld [vmem:[%s165 + $0x171] sm:$0xff]
      %v9634 = vld [vmem:[%s165 + $0x179] sm:$0xff]
      %v9635 = vld [vmem:[%s165 + $0x181] sm:$0xff]
      %v9636 = vld [vmem:[%s165 + $0x189] sm:$0xff]
      %v9637 = vld [vmem:[%s165 + $0x191] sm:$0xff]
      %v9638 = vld [vmem:[%s165 + $0x199] sm:$0xff]
      %v9639 = vld [vmem:[%s165 + $0x1a1] sm:$0xff]
      %v9640 = vld [vmem:[%s165 + $0x1a9] sm:$0xff]
      %v9641 = vld [vmem:[%s165 + $0x1b1] sm:$0xff]
      %v9642 = vld [vmem:[%s165 + $0x1b9] sm:$0xff]
      %v9643 = vld [vmem:[%s165 + $0x1c1] sm:$0xff]
      %s9644 = scalar_lea.vmem %s1, 2400
      %v9645 = vld [vmem:[%s9644] sm:$0xff]
      %v9646 = vld [vmem:[%s9644 + $0x8] sm:$0xff]
      %v9647 = vld [vmem:[%s9644 + $0x10] sm:$0xff]
      %v9648 = vld [vmem:[%s9644 + $0x18] sm:$0xff]
      %v9649 = vld [vmem:[%s9644 + $0x20] sm:$0xff]
      %v9650 = vld [vmem:[%s9644 + $0x28] sm:$0xff]
      %v9651 = vld [vmem:[%s9644 + $0x30] sm:$0xff]
      %v9652 = vld [vmem:[%s9644 + $0x38] sm:$0xff]
      %v9653 = vld [vmem:[%s9644 + $0x40] sm:$0xff]
      %v9654 = vld [vmem:[%s9644 + $0x48] sm:$0xff]
      %v9655 = vld [vmem:[%s9644 + $0x50] sm:$0xff]
      %v9656 = vld [vmem:[%s9644 + $0x58] sm:$0x3]
      %v9658 = vsel %vm230, %v9601, 0
      %v9661 = vsel %vm230, %v9602, 0
      %v9664 = vsel %vm230, %v9603, 0
      %v9667 = vsel %vm230, %v9604, 0
      %v9670 = vsel %vm230, %v9605, 0
      %v9673 = vsel %vm230, %v9606, 0
      %v9676 = vsel %vm230, %v9607, 0
      %v9679 = vsel %vm230, %v9608, 0
      %v9682 = vsel %vm230, %v9609, 0
      %v9685 = vsel %vm230, %v9610, 0
      %v9688 = vsel %vm230, %v9611, 0
      %v9691 = vsel %vm230, %v9612, 0
      %v9694 = vsel %vm230, %v9613, 0
      %v9697 = vsel %vm230, %v9614, 0
      %v9700 = vsel %vm230, %v9615, 0
      %v9703 = vsel %vm230, %v9616, 0
      %v9706 = vsel %vm230, %v9617, 0
      %v9709 = vsel %vm230, %v9618, 0
      %v9712 = vsel %vm230, %v9619, 0
      %v9715 = vsel %vm230, %v9620, 0
      %v9718 = vsel %vm230, %v9621, 0
      %v9721 = vsel %vm230, %v9622, 0
      %v9724 = vsel %vm230, %v9623, 0
      %v9727 = vsel %vm230, %v9624, 0
      %v9730 = vsel %vm230, %v9625, 0
      %v9733 = vsel %vm230, %v9626, 0
      %v9736 = vsel %vm230, %v9627, 0
      %v9739 = vsel %vm230, %v9628, 0
      %v9742 = vsel %vm230, %v9629, 0
      %v9745 = vsel %vm230, %v9630, 0
      %v9748 = vsel %vm230, %v9631, 0
      %v9751 = vsel %vm230, %v9632, 0
      %v9754 = vsel %vm230, %v9633, 0
      %v9757 = vsel %vm230, %v9634, 0
      %v9760 = vsel %vm230, %v9635, 0
      %v9763 = vsel %vm230, %v9636, 0
      %v9766 = vsel %vm230, %v9637, 0
      %v9769 = vsel %vm230, %v9638, 0
      %v9772 = vsel %vm230, %v9639, 0
      %v9775 = vsel %vm230, %v9640, 0
      %v9778 = vsel %vm230, %v9641, 0
      %v9781 = vsel %vm230, %v9642, 0
      %v9784 = vsel %vm230, %v9643, 0
      %v9787 = vsel %vm360, %v9656, 0
      %9789 = vmatpush.msra.mxu0 0.0
      %9790 = vmatpush.msra.mxu0 0.0
      %9791 = vmatpush.msra.mxu0 0.0
      %9792 = vmatpush.msra.mxu0 0.0
      %9793 = vmatpush.msra.mxu0 %v9787
      %9794 = vmatpush.msra.mxu0 %v9655
      %9795 = vmatpush.msra.mxu0 %v9654
      %9796 = vmatpush.msra.mxu0 %v9653
      %9797 = vmatpush.msra.mxu0 %v9652
      %9798 = vmatpush.msra.mxu0 %v9651
      %9799 = vmatpush.msra.mxu0 %v9650
      %9800 = vmatpush.msra.mxu0 %v9649
      %9801 = vmatpush.msra.mxu0 %v9648
      %9802 = vmatpush.msra.mxu0 %v9647
      %9803 = vmatpush.msra.mxu0 %v9646
      %9804 = vmatpush.msra.mxu0 %v9645
      %9805 = vmatmul.f32.gmra.mxu0 %v9658
      %v9806 = vpop.f32.mrf.mxu0
      %v9807 = vadd.f32 0.0, %v9806
      %9808 = vmatmul.f32.gmra.mxu0 %v9661
      %v9809 = vpop.f32.mrf.mxu0
      %v9810 = vadd.f32 0.0, %v9809
      %9811 = vmatmul.f32.gmra.mxu0 %v9664
      %v9812 = vpop.f32.mrf.mxu0
      %v9813 = vadd.f32 0.0, %v9812
      %9814 = vmatmul.f32.gmra.mxu0 %v9667
      %v9815 = vpop.f32.mrf.mxu0
      %v9816 = vadd.f32 0.0, %v9815
      %9817 = vmatmul.f32.gmra.mxu0 %v9670
      %v9818 = vpop.f32.mrf.mxu0
      %v9819 = vadd.f32 0.0, %v9818
      %9820 = vmatmul.f32.gmra.mxu0 %v9673
      %v9821 = vpop.f32.mrf.mxu0
      %v9822 = vadd.f32 0.0, %v9821
      %9823 = vmatmul.f32.gmra.mxu0 %v9676
      %v9824 = vpop.f32.mrf.mxu0
      %v9825 = vadd.f32 0.0, %v9824
      %9826 = vmatmul.f32.gmra.mxu0 %v9679
      %v9827 = vpop.f32.mrf.mxu0
      %v9828 = vadd.f32 0.0, %v9827
      %9829 = vmatmul.f32.gmra.mxu0 %v9682
      %v9830 = vpop.f32.mrf.mxu0
      %v9831 = vadd.f32 0.0, %v9830
      %9832 = vmatmul.f32.gmra.mxu0 %v9685
      %v9833 = vpop.f32.mrf.mxu0
      %v9834 = vadd.f32 0.0, %v9833
      %9835 = vmatmul.f32.gmra.mxu0 %v9688
      %v9836 = vpop.f32.mrf.mxu0
      %v9837 = vadd.f32 0.0, %v9836
      %9838 = vmatmul.f32.gmra.mxu0 %v9691
      %v9839 = vpop.f32.mrf.mxu0
      %v9840 = vadd.f32 0.0, %v9839
      %9841 = vmatmul.f32.gmra.mxu0 %v9694
      %v9842 = vpop.f32.mrf.mxu0
      %v9843 = vadd.f32 0.0, %v9842
      %9844 = vmatmul.f32.gmra.mxu0 %v9697
      %v9845 = vpop.f32.mrf.mxu0
      %v9846 = vadd.f32 0.0, %v9845
      %9847 = vmatmul.f32.gmra.mxu0 %v9700
      %v9848 = vpop.f32.mrf.mxu0
      %v9849 = vadd.f32 0.0, %v9848
      %9850 = vmatmul.f32.gmra.mxu0 %v9703
      %v9851 = vpop.f32.mrf.mxu0
      %v9852 = vadd.f32 0.0, %v9851
      %9853 = vmatmul.f32.gmra.mxu0 %v9706
      %v9854 = vpop.f32.mrf.mxu0
      %v9855 = vadd.f32 0.0, %v9854
      %9856 = vmatmul.f32.gmra.mxu0 %v9709
      %v9857 = vpop.f32.mrf.mxu0
      %v9858 = vadd.f32 0.0, %v9857
      %9859 = vmatmul.f32.gmra.mxu0 %v9712
      %v9860 = vpop.f32.mrf.mxu0
      %v9861 = vadd.f32 0.0, %v9860
      %9862 = vmatmul.f32.gmra.mxu0 %v9715
      %v9863 = vpop.f32.mrf.mxu0
      %v9864 = vadd.f32 0.0, %v9863
      %9865 = vmatmul.f32.gmra.mxu0 %v9718
      %v9866 = vpop.f32.mrf.mxu0
      %v9867 = vadd.f32 0.0, %v9866
      %9868 = vmatmul.f32.gmra.mxu0 %v9721
      %v9869 = vpop.f32.mrf.mxu0
      %v9870 = vadd.f32 0.0, %v9869
      %9871 = vmatmul.f32.gmra.mxu0 %v9724
      %v9872 = vpop.f32.mrf.mxu0
      %v9873 = vadd.f32 0.0, %v9872
      %9874 = vmatmul.f32.gmra.mxu0 %v9727
      %v9875 = vpop.f32.mrf.mxu0
      %v9876 = vadd.f32 0.0, %v9875
      %9877 = vmatmul.f32.gmra.mxu0 %v9730
      %v9878 = vpop.f32.mrf.mxu0
      %v9879 = vadd.f32 0.0, %v9878
      %9880 = vmatmul.f32.gmra.mxu0 %v9733
      %v9881 = vpop.f32.mrf.mxu0
      %v9882 = vadd.f32 0.0, %v9881
      %9883 = vmatmul.f32.gmra.mxu0 %v9736
      %v9884 = vpop.f32.mrf.mxu0
      %v9885 = vadd.f32 0.0, %v9884
      %9886 = vmatmul.f32.gmra.mxu0 %v9739
      %v9887 = vpop.f32.mrf.mxu0
      %v9888 = vadd.f32 0.0, %v9887
      %9889 = vmatmul.f32.gmra.mxu0 %v9742
      %v9890 = vpop.f32.mrf.mxu0
      %v9891 = vadd.f32 0.0, %v9890
      %9892 = vmatmul.f32.gmra.mxu0 %v9745
      %v9893 = vpop.f32.mrf.mxu0
      %v9894 = vadd.f32 0.0, %v9893
      %9895 = vmatmul.f32.gmra.mxu0 %v9748
      %v9896 = vpop.f32.mrf.mxu0
      %v9897 = vadd.f32 0.0, %v9896
      %9898 = vmatmul.f32.gmra.mxu0 %v9751
      %v9899 = vpop.f32.mrf.mxu0
      %v9900 = vadd.f32 0.0, %v9899
      %9901 = vmatmul.f32.gmra.mxu0 %v9754
      %v9902 = vpop.f32.mrf.mxu0
      %v9903 = vadd.f32 0.0, %v9902
      %9904 = vmatmul.f32.gmra.mxu0 %v9757
      %v9905 = vpop.f32.mrf.mxu0
      %v9906 = vadd.f32 0.0, %v9905
      %9907 = vmatmul.f32.gmra.mxu0 %v9760
      %v9908 = vpop.f32.mrf.mxu0
      %v9909 = vadd.f32 0.0, %v9908
      %9910 = vmatmul.f32.gmra.mxu0 %v9763
      %v9911 = vpop.f32.mrf.mxu0
      %v9912 = vadd.f32 0.0, %v9911
      %9913 = vmatmul.f32.gmra.mxu0 %v9766
      %v9914 = vpop.f32.mrf.mxu0
      %v9915 = vadd.f32 0.0, %v9914
      %9916 = vmatmul.f32.gmra.mxu0 %v9769
      %v9917 = vpop.f32.mrf.mxu0
      %v9918 = vadd.f32 0.0, %v9917
      %9919 = vmatmul.f32.gmra.mxu0 %v9772
      %v9920 = vpop.f32.mrf.mxu0
      %v9921 = vadd.f32 0.0, %v9920
      %9922 = vmatmul.f32.gmra.mxu0 %v9775
      %v9923 = vpop.f32.mrf.mxu0
      %v9924 = vadd.f32 0.0, %v9923
      %9925 = vmatmul.f32.gmra.mxu0 %v9778
      %v9926 = vpop.f32.mrf.mxu0
      %v9927 = vadd.f32 0.0, %v9926
      %9928 = vmatmul.f32.gmra.mxu0 %v9781
      %v9929 = vpop.f32.mrf.mxu0
      %v9930 = vadd.f32 0.0, %v9929
      %9931 = vmatmul.f32.gmra.mxu0 %v9784
      %v9932 = vpop.f32.mrf.mxu0
      %v9933 = vadd.f32 0.0, %v9932
      %9934 = vdwg.mxu0
      %v9935 = vadd.f32 %v9558, %v9807
      %v9936 = vadd.f32 %v9559, %v9810
      %v9937 = vadd.f32 %v9560, %v9813
      %v9938 = vadd.f32 %v9561, %v9816
      %v9939 = vadd.f32 %v9562, %v9819
      %v9940 = vadd.f32 %v9563, %v9822
      %v9941 = vadd.f32 %v9564, %v9825
      %v9942 = vadd.f32 %v9565, %v9828
      %v9943 = vadd.f32 %v9566, %v9831
      %v9944 = vadd.f32 %v9567, %v9834
      %v9945 = vadd.f32 %v9568, %v9837
      %v9946 = vadd.f32 %v9569, %v9840
      %v9947 = vadd.f32 %v9570, %v9843
      %v9948 = vadd.f32 %v9571, %v9846
      %v9949 = vadd.f32 %v9572, %v9849
      %v9950 = vadd.f32 %v9573, %v9852
      %v9951 = vadd.f32 %v9574, %v9855
      %v9952 = vadd.f32 %v9575, %v9858
      %v9953 = vadd.f32 %v9576, %v9861
      %v9954 = vadd.f32 %v9577, %v9864
      %v9955 = vadd.f32 %v9578, %v9867
      %v9956 = vadd.f32 %v9579, %v9870
      %v9957 = vadd.f32 %v9580, %v9873
      %v9958 = vadd.f32 %v9581, %v9876
      %v9959 = vadd.f32 %v9582, %v9879
      %v9960 = vadd.f32 %v9583, %v9882
      %v9961 = vadd.f32 %v9584, %v9885
      %v9962 = vadd.f32 %v9585, %v9888
      %v9963 = vadd.f32 %v9586, %v9891
      %v9964 = vadd.f32 %v9587, %v9894
      %v9965 = vadd.f32 %v9588, %v9897
      %v9966 = vadd.f32 %v9589, %v9900
      %v9967 = vadd.f32 %v9590, %v9903
      %v9968 = vadd.f32 %v9591, %v9906
      %v9969 = vadd.f32 %v9592, %v9909
      %v9970 = vadd.f32 %v9593, %v9912
      %v9971 = vadd.f32 %v9594, %v9915
      %v9972 = vadd.f32 %v9595, %v9918
      %v9973 = vadd.f32 %v9596, %v9921
      %v9974 = vadd.f32 %v9597, %v9924
      %v9975 = vadd.f32 %v9598, %v9927
      %v9976 = vadd.f32 %v9599, %v9930
      %v9977 = vadd.f32 %v9600, %v9933
      %v9978 = vld [vmem:[%s165 + $0x72] sm:$0xff]
      %v9979 = vld [vmem:[%s165 + $0x7a] sm:$0xff]
      %v9980 = vld [vmem:[%s165 + $0x82] sm:$0xff]
      %v9981 = vld [vmem:[%s165 + $0x8a] sm:$0xff]
      %v9982 = vld [vmem:[%s165 + $0x92] sm:$0xff]
      %v9983 = vld [vmem:[%s165 + $0x9a] sm:$0xff]
      %v9984 = vld [vmem:[%s165 + $0xa2] sm:$0xff]
      %v9985 = vld [vmem:[%s165 + $0xaa] sm:$0xff]
      %v9986 = vld [vmem:[%s165 + $0xb2] sm:$0xff]
      %v9987 = vld [vmem:[%s165 + $0xba] sm:$0xff]
      %v9988 = vld [vmem:[%s165 + $0xc2] sm:$0xff]
      %v9989 = vld [vmem:[%s165 + $0xca] sm:$0xff]
      %v9990 = vld [vmem:[%s165 + $0xd2] sm:$0xff]
      %v9991 = vld [vmem:[%s165 + $0xda] sm:$0xff]
      %v9992 = vld [vmem:[%s165 + $0xe2] sm:$0xff]
      %v9993 = vld [vmem:[%s165 + $0xea] sm:$0xff]
      %v9994 = vld [vmem:[%s165 + $0xf2] sm:$0xff]
      %v9995 = vld [vmem:[%s165 + $0xfa] sm:$0xff]
      %v9996 = vld [vmem:[%s165 + $0x102] sm:$0xff]
      %v9997 = vld [vmem:[%s165 + $0x10a] sm:$0xff]
      %v9998 = vld [vmem:[%s165 + $0x112] sm:$0xff]
      %v9999 = vld [vmem:[%s165 + $0x11a] sm:$0xff]
      %v10000 = vld [vmem:[%s165 + $0x122] sm:$0xff]
      %v10001 = vld [vmem:[%s165 + $0x12a] sm:$0xff]
      %v10002 = vld [vmem:[%s165 + $0x132] sm:$0xff]
      %v10003 = vld [vmem:[%s165 + $0x13a] sm:$0xff]
      %v10004 = vld [vmem:[%s165 + $0x142] sm:$0xff]
      %v10005 = vld [vmem:[%s165 + $0x14a] sm:$0xff]
      %v10006 = vld [vmem:[%s165 + $0x152] sm:$0xff]
      %v10007 = vld [vmem:[%s165 + $0x15a] sm:$0xff]
      %v10008 = vld [vmem:[%s165 + $0x162] sm:$0xff]
      %v10009 = vld [vmem:[%s165 + $0x16a] sm:$0xff]
      %v10010 = vld [vmem:[%s165 + $0x172] sm:$0xff]
      %v10011 = vld [vmem:[%s165 + $0x17a] sm:$0xff]
      %v10012 = vld [vmem:[%s165 + $0x182] sm:$0xff]
      %v10013 = vld [vmem:[%s165 + $0x18a] sm:$0xff]
      %v10014 = vld [vmem:[%s165 + $0x192] sm:$0xff]
      %v10015 = vld [vmem:[%s165 + $0x19a] sm:$0xff]
      %v10016 = vld [vmem:[%s165 + $0x1a2] sm:$0xff]
      %v10017 = vld [vmem:[%s165 + $0x1aa] sm:$0xff]
      %v10018 = vld [vmem:[%s165 + $0x1b2] sm:$0xff]
      %v10019 = vld [vmem:[%s165 + $0x1ba] sm:$0xff]
      %v10020 = vld [vmem:[%s165 + $0x1c2] sm:$0xff]
      %s10021 = scalar_lea.vmem %s1, 2496
      %v10022 = vld [vmem:[%s10021] sm:$0xff]
      %v10023 = vld [vmem:[%s10021 + $0x8] sm:$0xff]
      %v10024 = vld [vmem:[%s10021 + $0x10] sm:$0xff]
      %v10025 = vld [vmem:[%s10021 + $0x18] sm:$0xff]
      %v10026 = vld [vmem:[%s10021 + $0x20] sm:$0xff]
      %v10027 = vld [vmem:[%s10021 + $0x28] sm:$0xff]
      %v10028 = vld [vmem:[%s10021 + $0x30] sm:$0xff]
      %v10029 = vld [vmem:[%s10021 + $0x38] sm:$0xff]
      %v10030 = vld [vmem:[%s10021 + $0x40] sm:$0xff]
      %v10031 = vld [vmem:[%s10021 + $0x48] sm:$0xff]
      %v10032 = vld [vmem:[%s10021 + $0x50] sm:$0xff]
      %v10033 = vld [vmem:[%s10021 + $0x58] sm:$0x3]
      %v10035 = vsel %vm230, %v9978, 0
      %v10038 = vsel %vm230, %v9979, 0
      %v10041 = vsel %vm230, %v9980, 0
      %v10044 = vsel %vm230, %v9981, 0
      %v10047 = vsel %vm230, %v9982, 0
      %v10050 = vsel %vm230, %v9983, 0
      %v10053 = vsel %vm230, %v9984, 0
      %v10056 = vsel %vm230, %v9985, 0
      %v10059 = vsel %vm230, %v9986, 0
      %v10062 = vsel %vm230, %v9987, 0
      %v10065 = vsel %vm230, %v9988, 0
      %v10068 = vsel %vm230, %v9989, 0
      %v10071 = vsel %vm230, %v9990, 0
      %v10074 = vsel %vm230, %v9991, 0
      %v10077 = vsel %vm230, %v9992, 0
      %v10080 = vsel %vm230, %v9993, 0
      %v10083 = vsel %vm230, %v9994, 0
      %v10086 = vsel %vm230, %v9995, 0
      %v10089 = vsel %vm230, %v9996, 0
      %v10092 = vsel %vm230, %v9997, 0
      %v10095 = vsel %vm230, %v9998, 0
      %v10098 = vsel %vm230, %v9999, 0
      %v10101 = vsel %vm230, %v10000, 0
      %v10104 = vsel %vm230, %v10001, 0
      %v10107 = vsel %vm230, %v10002, 0
      %v10110 = vsel %vm230, %v10003, 0
      %v10113 = vsel %vm230, %v10004, 0
      %v10116 = vsel %vm230, %v10005, 0
      %v10119 = vsel %vm230, %v10006, 0
      %v10122 = vsel %vm230, %v10007, 0
      %v10125 = vsel %vm230, %v10008, 0
      %v10128 = vsel %vm230, %v10009, 0
      %v10131 = vsel %vm230, %v10010, 0
      %v10134 = vsel %vm230, %v10011, 0
      %v10137 = vsel %vm230, %v10012, 0
      %v10140 = vsel %vm230, %v10013, 0
      %v10143 = vsel %vm230, %v10014, 0
      %v10146 = vsel %vm230, %v10015, 0
      %v10149 = vsel %vm230, %v10016, 0
      %v10152 = vsel %vm230, %v10017, 0
      %v10155 = vsel %vm230, %v10018, 0
      %v10158 = vsel %vm230, %v10019, 0
      %v10161 = vsel %vm230, %v10020, 0
      %v10164 = vsel %vm360, %v10033, 0
      %10166 = vmatpush.msra.mxu0 0.0
      %10167 = vmatpush.msra.mxu0 0.0
      %10168 = vmatpush.msra.mxu0 0.0
      %10169 = vmatpush.msra.mxu0 0.0
      %10170 = vmatpush.msra.mxu0 %v10164
      %10171 = vmatpush.msra.mxu0 %v10032
      %10172 = vmatpush.msra.mxu0 %v10031
      %10173 = vmatpush.msra.mxu0 %v10030
      %10174 = vmatpush.msra.mxu0 %v10029
      %10175 = vmatpush.msra.mxu0 %v10028
      %10176 = vmatpush.msra.mxu0 %v10027
      %10177 = vmatpush.msra.mxu0 %v10026
      %10178 = vmatpush.msra.mxu0 %v10025
      %10179 = vmatpush.msra.mxu0 %v10024
      %10180 = vmatpush.msra.mxu0 %v10023
      %10181 = vmatpush.msra.mxu0 %v10022
      %10182 = vmatmul.f32.gmra.mxu0 %v10035
      %v10183 = vpop.f32.mrf.mxu0
      %v10184 = vadd.f32 0.0, %v10183
      %10185 = vmatmul.f32.gmra.mxu0 %v10038
      %v10186 = vpop.f32.mrf.mxu0
      %v10187 = vadd.f32 0.0, %v10186
      %10188 = vmatmul.f32.gmra.mxu0 %v10041
      %v10189 = vpop.f32.mrf.mxu0
      %v10190 = vadd.f32 0.0, %v10189
      %10191 = vmatmul.f32.gmra.mxu0 %v10044
      %v10192 = vpop.f32.mrf.mxu0
      %v10193 = vadd.f32 0.0, %v10192
      %10194 = vmatmul.f32.gmra.mxu0 %v10047
      %v10195 = vpop.f32.mrf.mxu0
      %v10196 = vadd.f32 0.0, %v10195
      %10197 = vmatmul.f32.gmra.mxu0 %v10050
      %v10198 = vpop.f32.mrf.mxu0
      %v10199 = vadd.f32 0.0, %v10198
      %10200 = vmatmul.f32.gmra.mxu0 %v10053
      %v10201 = vpop.f32.mrf.mxu0
      %v10202 = vadd.f32 0.0, %v10201
      %10203 = vmatmul.f32.gmra.mxu0 %v10056
      %v10204 = vpop.f32.mrf.mxu0
      %v10205 = vadd.f32 0.0, %v10204
      %10206 = vmatmul.f32.gmra.mxu0 %v10059
      %v10207 = vpop.f32.mrf.mxu0
      %v10208 = vadd.f32 0.0, %v10207
      %10209 = vmatmul.f32.gmra.mxu0 %v10062
      %v10210 = vpop.f32.mrf.mxu0
      %v10211 = vadd.f32 0.0, %v10210
      %10212 = vmatmul.f32.gmra.mxu0 %v10065
      %v10213 = vpop.f32.mrf.mxu0
      %v10214 = vadd.f32 0.0, %v10213
      %10215 = vmatmul.f32.gmra.mxu0 %v10068
      %v10216 = vpop.f32.mrf.mxu0
      %v10217 = vadd.f32 0.0, %v10216
      %10218 = vmatmul.f32.gmra.mxu0 %v10071
      %v10219 = vpop.f32.mrf.mxu0
      %v10220 = vadd.f32 0.0, %v10219
      %10221 = vmatmul.f32.gmra.mxu0 %v10074
      %v10222 = vpop.f32.mrf.mxu0
      %v10223 = vadd.f32 0.0, %v10222
      %10224 = vmatmul.f32.gmra.mxu0 %v10077
      %v10225 = vpop.f32.mrf.mxu0
      %v10226 = vadd.f32 0.0, %v10225
      %10227 = vmatmul.f32.gmra.mxu0 %v10080
      %v10228 = vpop.f32.mrf.mxu0
      %v10229 = vadd.f32 0.0, %v10228
      %10230 = vmatmul.f32.gmra.mxu0 %v10083
      %v10231 = vpop.f32.mrf.mxu0
      %v10232 = vadd.f32 0.0, %v10231
      %10233 = vmatmul.f32.gmra.mxu0 %v10086
      %v10234 = vpop.f32.mrf.mxu0
      %v10235 = vadd.f32 0.0, %v10234
      %10236 = vmatmul.f32.gmra.mxu0 %v10089
      %v10237 = vpop.f32.mrf.mxu0
      %v10238 = vadd.f32 0.0, %v10237
      %10239 = vmatmul.f32.gmra.mxu0 %v10092
      %v10240 = vpop.f32.mrf.mxu0
      %v10241 = vadd.f32 0.0, %v10240
      %10242 = vmatmul.f32.gmra.mxu0 %v10095
      %v10243 = vpop.f32.mrf.mxu0
      %v10244 = vadd.f32 0.0, %v10243
      %10245 = vmatmul.f32.gmra.mxu0 %v10098
      %v10246 = vpop.f32.mrf.mxu0
      %v10247 = vadd.f32 0.0, %v10246
      %10248 = vmatmul.f32.gmra.mxu0 %v10101
      %v10249 = vpop.f32.mrf.mxu0
      %v10250 = vadd.f32 0.0, %v10249
      %10251 = vmatmul.f32.gmra.mxu0 %v10104
      %v10252 = vpop.f32.mrf.mxu0
      %v10253 = vadd.f32 0.0, %v10252
      %10254 = vmatmul.f32.gmra.mxu0 %v10107
      %v10255 = vpop.f32.mrf.mxu0
      %v10256 = vadd.f32 0.0, %v10255
      %10257 = vmatmul.f32.gmra.mxu0 %v10110
      %v10258 = vpop.f32.mrf.mxu0
      %v10259 = vadd.f32 0.0, %v10258
      %10260 = vmatmul.f32.gmra.mxu0 %v10113
      %v10261 = vpop.f32.mrf.mxu0
      %v10262 = vadd.f32 0.0, %v10261
      %10263 = vmatmul.f32.gmra.mxu0 %v10116
      %v10264 = vpop.f32.mrf.mxu0
      %v10265 = vadd.f32 0.0, %v10264
      %10266 = vmatmul.f32.gmra.mxu0 %v10119
      %v10267 = vpop.f32.mrf.mxu0
      %v10268 = vadd.f32 0.0, %v10267
      %10269 = vmatmul.f32.gmra.mxu0 %v10122
      %v10270 = vpop.f32.mrf.mxu0
      %v10271 = vadd.f32 0.0, %v10270
      %10272 = vmatmul.f32.gmra.mxu0 %v10125
      %v10273 = vpop.f32.mrf.mxu0
      %v10274 = vadd.f32 0.0, %v10273
      %10275 = vmatmul.f32.gmra.mxu0 %v10128
      %v10276 = vpop.f32.mrf.mxu0
      %v10277 = vadd.f32 0.0, %v10276
      %10278 = vmatmul.f32.gmra.mxu0 %v10131
      %v10279 = vpop.f32.mrf.mxu0
      %v10280 = vadd.f32 0.0, %v10279
      %10281 = vmatmul.f32.gmra.mxu0 %v10134
      %v10282 = vpop.f32.mrf.mxu0
      %v10283 = vadd.f32 0.0, %v10282
      %10284 = vmatmul.f32.gmra.mxu0 %v10137
      %v10285 = vpop.f32.mrf.mxu0
      %v10286 = vadd.f32 0.0, %v10285
      %10287 = vmatmul.f32.gmra.mxu0 %v10140
      %v10288 = vpop.f32.mrf.mxu0
      %v10289 = vadd.f32 0.0, %v10288
      %10290 = vmatmul.f32.gmra.mxu0 %v10143
      %v10291 = vpop.f32.mrf.mxu0
      %v10292 = vadd.f32 0.0, %v10291
      %10293 = vmatmul.f32.gmra.mxu0 %v10146
      %v10294 = vpop.f32.mrf.mxu0
      %v10295 = vadd.f32 0.0, %v10294
      %10296 = vmatmul.f32.gmra.mxu0 %v10149
      %v10297 = vpop.f32.mrf.mxu0
      %v10298 = vadd.f32 0.0, %v10297
      %10299 = vmatmul.f32.gmra.mxu0 %v10152
      %v10300 = vpop.f32.mrf.mxu0
      %v10301 = vadd.f32 0.0, %v10300
      %10302 = vmatmul.f32.gmra.mxu0 %v10155
      %v10303 = vpop.f32.mrf.mxu0
      %v10304 = vadd.f32 0.0, %v10303
      %10305 = vmatmul.f32.gmra.mxu0 %v10158
      %v10306 = vpop.f32.mrf.mxu0
      %v10307 = vadd.f32 0.0, %v10306
      %10308 = vmatmul.f32.gmra.mxu0 %v10161
      %v10309 = vpop.f32.mrf.mxu0
      %v10310 = vadd.f32 0.0, %v10309
      %10311 = vdwg.mxu0
      %v10312 = vadd.f32 %v9935, %v10184
      %v10313 = vadd.f32 %v9936, %v10187
      %v10314 = vadd.f32 %v9937, %v10190
      %v10315 = vadd.f32 %v9938, %v10193
      %v10316 = vadd.f32 %v9939, %v10196
      %v10317 = vadd.f32 %v9940, %v10199
      %v10318 = vadd.f32 %v9941, %v10202
      %v10319 = vadd.f32 %v9942, %v10205
      %v10320 = vadd.f32 %v9943, %v10208
      %v10321 = vadd.f32 %v9944, %v10211
      %v10322 = vadd.f32 %v9945, %v10214
      %v10323 = vadd.f32 %v9946, %v10217
      %v10324 = vadd.f32 %v9947, %v10220
      %v10325 = vadd.f32 %v9948, %v10223
      %v10326 = vadd.f32 %v9949, %v10226
      %v10327 = vadd.f32 %v9950, %v10229
      %v10328 = vadd.f32 %v9951, %v10232
      %v10329 = vadd.f32 %v9952, %v10235
      %v10330 = vadd.f32 %v9953, %v10238
      %v10331 = vadd.f32 %v9954, %v10241
      %v10332 = vadd.f32 %v9955, %v10244
      %v10333 = vadd.f32 %v9956, %v10247
      %v10334 = vadd.f32 %v9957, %v10250
      %v10335 = vadd.f32 %v9958, %v10253
      %v10336 = vadd.f32 %v9959, %v10256
      %v10337 = vadd.f32 %v9960, %v10259
      %v10338 = vadd.f32 %v9961, %v10262
      %v10339 = vadd.f32 %v9962, %v10265
      %v10340 = vadd.f32 %v9963, %v10268
      %v10341 = vadd.f32 %v9964, %v10271
      %v10342 = vadd.f32 %v9965, %v10274
      %v10343 = vadd.f32 %v9966, %v10277
      %v10344 = vadd.f32 %v9967, %v10280
      %v10345 = vadd.f32 %v9968, %v10283
      %v10346 = vadd.f32 %v9969, %v10286
      %v10347 = vadd.f32 %v9970, %v10289
      %v10348 = vadd.f32 %v9971, %v10292
      %v10349 = vadd.f32 %v9972, %v10295
      %v10350 = vadd.f32 %v9973, %v10298
      %v10351 = vadd.f32 %v9974, %v10301
      %v10352 = vadd.f32 %v9975, %v10304
      %v10353 = vadd.f32 %v9976, %v10307
      %v10354 = vadd.f32 %v9977, %v10310
      %vm10355 = vcmask 162816
      %10356 = vst.msk [vmem:[%s170] sm:$0xff] %vm10355, %v10312
      %10357 = vst.msk [vmem:[%s170 + $0x8] sm:$0xff] %vm10355, %v10313
      %10358 = vst.msk [vmem:[%s170 + $0x10] sm:$0xff] %vm10355, %v10314
      %10359 = vst.msk [vmem:[%s170 + $0x18] sm:$0xff] %vm10355, %v10315
      %10360 = vst.msk [vmem:[%s170 + $0x20] sm:$0xff] %vm10355, %v10316
      %10361 = vst.msk [vmem:[%s170 + $0x28] sm:$0xff] %vm10355, %v10317
      %10362 = vst.msk [vmem:[%s170 + $0x30] sm:$0xff] %vm10355, %v10318
      %10363 = vst.msk [vmem:[%s170 + $0x38] sm:$0xff] %vm10355, %v10319
      %10364 = vst.msk [vmem:[%s170 + $0x40] sm:$0xff] %vm10355, %v10320
      %10365 = vst.msk [vmem:[%s170 + $0x48] sm:$0xff] %vm10355, %v10321
      %10366 = vst.msk [vmem:[%s170 + $0x50] sm:$0xff] %vm10355, %v10322
      %10367 = vst.msk [vmem:[%s170 + $0x58] sm:$0xff] %vm10355, %v10323
      %10368 = vst.msk [vmem:[%s170 + $0x60] sm:$0xff] %vm10355, %v10324
      %10369 = vst.msk [vmem:[%s170 + $0x68] sm:$0xff] %vm10355, %v10325
      %10370 = vst.msk [vmem:[%s170 + $0x70] sm:$0xff] %vm10355, %v10326
      %10371 = vst.msk [vmem:[%s170 + $0x78] sm:$0xff] %vm10355, %v10327
      %10372 = vst.msk [vmem:[%s170 + $0x80] sm:$0xff] %vm10355, %v10328
      %10373 = vst.msk [vmem:[%s170 + $0x88] sm:$0xff] %vm10355, %v10329
      %10374 = vst.msk [vmem:[%s170 + $0x90] sm:$0xff] %vm10355, %v10330
      %10375 = vst.msk [vmem:[%s170 + $0x98] sm:$0xff] %vm10355, %v10331
      %10376 = vst.msk [vmem:[%s170 + $0xa0] sm:$0xff] %vm10355, %v10332
      %10377 = vst.msk [vmem:[%s170 + $0xa8] sm:$0xff] %vm10355, %v10333
      %10378 = vst.msk [vmem:[%s170 + $0xb0] sm:$0xff] %vm10355, %v10334
      %10379 = vst.msk [vmem:[%s170 + $0xb8] sm:$0xff] %vm10355, %v10335
      %10380 = vst.msk [vmem:[%s170 + $0xc0] sm:$0xff] %vm10355, %v10336
      %10381 = vst.msk [vmem:[%s170 + $0xc8] sm:$0xff] %vm10355, %v10337
      %10382 = vst.msk [vmem:[%s170 + $0xd0] sm:$0xff] %vm10355, %v10338
      %10383 = vst.msk [vmem:[%s170 + $0xd8] sm:$0xff] %vm10355, %v10339
      %10384 = vst.msk [vmem:[%s170 + $0xe0] sm:$0xff] %vm10355, %v10340
      %10385 = vst.msk [vmem:[%s170 + $0xe8] sm:$0xff] %vm10355, %v10341
      %10386 = vst.msk [vmem:[%s170 + $0xf0] sm:$0xff] %vm10355, %v10342
      %10387 = vst.msk [vmem:[%s170 + $0xf8] sm:$0xff] %vm10355, %v10343
      %10388 = vst.msk [vmem:[%s170 + $0x100] sm:$0xff] %vm10355, %v10344
      %10389 = vst.msk [vmem:[%s170 + $0x108] sm:$0xff] %vm10355, %v10345
      %10390 = vst.msk [vmem:[%s170 + $0x110] sm:$0xff] %vm10355, %v10346
      %10391 = vst.msk [vmem:[%s170 + $0x118] sm:$0xff] %vm10355, %v10347
      %10392 = vst.msk [vmem:[%s170 + $0x120] sm:$0xff] %vm10355, %v10348
      %10393 = vst.msk [vmem:[%s170 + $0x128] sm:$0xff] %vm10355, %v10349
      %10394 = vst.msk [vmem:[%s170 + $0x130] sm:$0xff] %vm10355, %v10350
      %10395 = vst.msk [vmem:[%s170 + $0x138] sm:$0xff] %vm10355, %v10351
      %10396 = vst.msk [vmem:[%s170 + $0x140] sm:$0xff] %vm10355, %v10352
      %10397 = vst.msk [vmem:[%s170 + $0x148] sm:$0xff] %vm10355, %v10353
      %10398 = vst.msk [vmem:[%s170 + $0x150] sm:$0xff] %vm10355, %v10354
      %p10399 = scmp.lt.s32.totalorder %s14, 1
      %s10400 = scalar_select %p10399, %s14, 1
      %s10401 = smul.addr %s10400, 43
      %s10402 = smul.addr %s10401, 8
      %s10403 = scalar_lea.vmem %s3, %s10402
      // Predicated region
      $region33: #{classical_lifting_forward.1} parent=31 // pred_check
        %p10404 = pneg %p100
      $region34: #{classical_lifting_forward.1} parent=31 // pred_check_branch
        %10406 = sbr.rel (%p10404) target = $region36
      $region35: #{classical_lifting_forward.1} parent=31 // pred_region
        _
      $region36: #{classical_lifting_forward.1} parent=31 // pred_fallthru
        _
    $region32: #{classical_lifting_forward.1} parent=5 // pred_fallthru
      _
    %p10407 = scmp.le.s32.totalorder 2, %s9
    // Predicated region
    $region37: #{classical_lifting_forward.1} parent=5 // pred_check
      %p10408 = pneg %p10407
    $region38: #{classical_lifting_forward.1} parent=5 // pred_check_branch
      %10410 = sbr.rel (%p10408) target = $region40
    $region39: #{classical_lifting_forward.1} parent=5 // pred_region
      %s10411 = ssub.s32 %s9, 2
      // Predicated region
      $region41: #{classical_lifting_forward.1} parent=39 // pred_check
        %p10412 = pneg %p106
      $region42: #{classical_lifting_forward.1} parent=39 // pred_check_branch
        %10414 = sbr.rel (%p10412) target = $region44
      $region43: #{classical_lifting_forward.1} parent=39 // pred_region
        %p10415 = scmp.lt.s32.totalorder %s15, 1
        %s10416 = scalar_select %p10415, %s15, 1
        %s10417 = smul.addr %s10416, 43
        %s10418 = smul.addr %s10417, 8
        %s10419 = scalar_lea.vmem %s3, %s10418
      $region44: #{classical_lifting_forward.1} parent=39 // pred_fallthru
        _
    $region40: #{classical_lifting_forward.1} parent=5 // pred_fallthru
      _
  $region6: #{classical_lifting_forward.1} parent=0 // loop_footer
    %s13 = sadd.s32 1, %s9
  $region7: #{classical_lifting_forward.1} parent=0 // loop_footer_branch
    %8 = sbr.rel target = $region3
  $region8: #{classical_lifting_forward.1} parent=0 // loop_exit
    _

</llo_original>
